<compile_context>
chip_gen: v5e
topology: v5e:2x2
jax: 0.10.0
libtpu: 0.0.40
codegen_flags: <defaults>
</compile_context>

<pallas_src>
import math

import jax
import jax.numpy as jnp
from jax import lax
from jax.experimental import pallas as pl
from jax.experimental.pallas import tpu as pltpu

# ----------------------------- hyper-parameters -----------------------------
C_IN = 5            # cnn_input_channels
L = 32              # sequence length == transformer_input_size
C_OUT1 = 8          # cnn_output_channels
C_OUT2 = 16         # cnn_output_channels * 2
LSTM_IN = 16        # lstm_input_size (== C_OUT2)
H = 16              # lstm_hidden_size
T8 = 8              # LSTM sequence length after the two MaxPool1d(2)
D_MODEL = 32        # transformer_input_size
CONV_HIDDEN = 64    # transformer_hidden_dim

_VMEM = pl.BlockSpec(memory_space=pltpu.MemorySpace.VMEM)

_PARAM_ORDER = (
    # DynamicConvAttention 1 / 2: conv taps (3, C_in, C_out), bias row, SE-gate fcs
    "d1_w", "d1_b", "d1_f1w", "d1_f1b", "d1_f2w", "d1_f2b",
    "d2_w", "d2_b", "d2_f1w", "d2_f1b", "d2_f2w", "d2_f2b",
    # bidirectional LSTM layer 1 / 2 (pre-transposed: wih (F,4H), whh (H,4H), b = b_ih+b_hh)
    "l1_wih_f", "l1_whh_f", "l1_b_f", "l1_wih_b", "l1_whh_b", "l1_b_b",
    "l2_wih_f", "l2_whh_f", "l2_b_f", "l2_wih_b", "l2_whh_b", "l2_b_b",
    # LSTM LayerNorm
    "ln_g", "ln_b",
    # ConformerLayer (column orientation, PyTorch-native weight shapes)
    "cf_wv", "cf_bv", "cf_wo", "cf_bo", "cf_g1", "cf_be1",
    "cf_wc1", "cf_bc1", "cf_wc2", "cf_bc2", "cf_g2", "cf_be2",
    # fc head (column orientation); fc1 weight split into the three concat segments
    "fc_w1a", "fc_w1b", "fc_w1c", "fc_b1", "fc_w2", "fc_b2", "fc_w3", "fc_b3",
)


# ------------------------------ in-kernel helpers ------------------------------
def _iota(shape, dim):
    return lax.broadcasted_iota(jnp.int32, shape, dim)


def _shift_mat(n, delta):
    """(n, n) 0/1 matrix S with (S @ X)[j] = X[j + delta]; out-of-range rows are zero."""
    return (_iota((n, n), 1) == _iota((n, n), 0) + delta).astype(jnp.float32)


def _pool_sel(n_in, offset):
    """(n_in//2, n_in) 0/1 matrix P with (P @ X)[j] = X[2*j + offset]."""
    n_out = n_in // 2
    return (_iota((n_out, n_in), 1) == 2 * _iota((n_out, n_in), 0) + offset).astype(jnp.float32)


def _mm(a, b):
    return jnp.dot(a, b, preferred_element_type=jnp.float32)


def _sigmoid(x):
    return 1.0 / (1.0 + jnp.exp(-x))


def _erf(z):
    # Abramowitz & Stegun 7.1.26 (max abs error ~1.5e-7): exact-erf GELU to f32 noise,
    # built only from exp / mul / add / where so it lowers on every TPU generation.
    a1, a2, a3, a4, a5 = 0.254829592, -0.284496736, 1.421413741, -1.453152027, 1.061405429
    pp = 0.3275911
    az = jnp.where(z >= 0.0, z, -z)
    t = 1.0 / (1.0 + pp * az)
    poly = ((((a5 * t + a4) * t + a3) * t + a2) * t + a1) * t
    y = 1.0 - poly * jnp.exp(-az * az)
    return jnp.where(z >= 0.0, y, -y)


def _gelu(x):
    # PyTorch nn.GELU() exact (erf) form.
    return 0.5 * x * (1.0 + _erf(x * 0.7071067811865476))


def _ln_cols(z, g, b, eps=1e-5):
    """LayerNorm over axis 0 of a (D, 1) column."""
    mu = jnp.mean(z, axis=0, keepdims=True)
    zc = z - mu
    var = jnp.mean(zc * zc, axis=0, keepdims=True)
    return zc * lax.rsqrt(var + eps) * g + b


# --------------------------------- fused kernel --------------------------------
def fused_kernel(*refs):
    n = len(_PARAM_ORDER)
    xT_ref, pe_ref = refs[0], refs[1]
    p = dict(zip(_PARAM_ORDER, refs[2:2 + n]))
    out_ref = refs[2 + n]
    outf1_ref, outb1_ref, outf2_ref, outb2_ref = refs[3 + n:]

    # ---------- DynamicConvAttention -> MaxPool1d(2)  (x2), (position, channel) layout ----------
    def dca_pool(x_lc, w_ref, b_ref, f1w_ref, f1b_ref, f2w_ref, f2b_ref):
        n_pos = x_lc.shape[0]
        # Conv1d(k=3, pad=1): three taps; the +/-1 shifts (with zero padding) are exact
        # 0/1-matrix matmuls, so no in-kernel pad/concat is needed.
        conv = (_mm(_mm(_shift_mat(n_pos, -1), x_lc), w_ref[0])
                + _mm(x_lc, w_ref[1])
                + _mm(_mm(_shift_mat(n_pos, +1), x_lc), w_ref[2])
                + b_ref[...])                                           # (n_pos, C_out)
        # squeeze/excite gate: adaptive_avg_pool1d -> fc1 -> relu -> fc2 -> softmax(channels)
        pooled = jnp.mean(conv, axis=0, keepdims=True)                  # (1, C_out)
        hid = jnp.maximum(_mm(pooled, f1w_ref[...]) + f1b_ref[...], 0.0)
        logits = _mm(hid, f2w_ref[...]) + f2b_ref[...]
        e = jnp.exp(logits - jnp.max(logits, axis=-1, keepdims=True))
        att = e * pl.reciprocal(jnp.sum(e, axis=-1, keepdims=True), approx=True)
        gated = conv * att                                              # (n_pos, C_out)
        # MaxPool1d(2) over positions via even/odd row selection (exact 0/1 matmuls).
        return jnp.maximum(_mm(_pool_sel(n_pos, 0), gated),
                           _mm(_pool_sel(n_pos, 1), gated))             # (n_pos//2, C_out)

    xT = xT_ref[...]                                                    # (32, 5) = x.T
    x2 = dca_pool(xT, p["d1_w"], p["d1_b"], p["d1_f1w"], p["d1_f1b"],
                  p["d1_f2w"], p["d1_f2b"])                             # (16, 8)
    x_cnn = dca_pool(x2, p["d2_w"], p["d2_b"], p["d2_f1w"], p["d2_f1b"],
                     p["d2_f2w"], p["d2_f2b"])                          # (8, 16) == permuted CNN out

    # ---------------- 2-layer bidirectional LSTM (fully unrolled, T = 8) -----------------
    def bilstm(xp_f, xp_b, whh_f, whh_b, of_ref, ob_ref):
        """xp_*: hoisted input projections (T, 4H) incl. both biases; whh_*: (H, 4H)."""
        hf = jnp.zeros((1, H), jnp.float32)
        cf = jnp.zeros((1, H), jnp.float32)
        hb = jnp.zeros((1, H), jnp.float32)
        cb = jnp.zeros((1, H), jnp.float32)
        for t in range(T8):                      # static unroll; fwd/bwd chains interleave
            tb = T8 - 1 - t
            gf = xp_f[t:t + 1, :] + _mm(hf, whh_f)
            gb = xp_b[tb:tb + 1, :] + _mm(hb, whh_b)
            i_f = _sigmoid(gf[:, 0:H]);          i_b = _sigmoid(gb[:, 0:H])
            f_f = _sigmoid(gf[:, H:2 * H]);      f_b = _sigmoid(gb[:, H:2 * H])
            g_f = jnp.tanh(gf[:, 2 * H:3 * H]);  g_b = jnp.tanh(gb[:, 2 * H:3 * H])
            o_f = _sigmoid(gf[:, 3 * H:4 * H]);  o_b = _sigmoid(gb[:, 3 * H:4 * H])
            cf = f_f * cf + i_f * g_f
            cb = f_b * cb + i_b * g_b
            hf = o_f * jnp.tanh(cf)
            hb = o_b * jnp.tanh(cb)
            of_ref[t:t + 1, :] = hf              # static-index VMEM scratch stores
            ob_ref[tb:tb + 1, :] = hb

    # layer 1: hoist x @ W_ih (+ combined bias) out of the recurrence
    xp_f1 = _mm(x_cnn, p["l1_wih_f"][...]) + p["l1_b_f"][...]           # (8, 64)
    xp_b1 = _mm(x_cnn, p["l1_wih_b"][...]) + p["l1_b_b"][...]
    bilstm(xp_f1, xp_b1, p["l1_whh_f"][...], p["l1_whh_b"][...], outf1_ref, outb1_ref)

    of1 = outf1_ref[...]                                                # (8, 16)
    ob1 = outb1_ref[...]
    # layer 2: the [fwd | bwd] feature concat is folded into split weight rows (no concat).
    wih_f2 = p["l2_wih_f"][...]
    wih_b2 = p["l2_wih_b"][...]                                         # (32, 64)
    xp_f2 = _mm(of1, wih_f2[0:H, :]) + _mm(ob1, wih_f2[H:2 * H, :]) + p["l2_b_f"][...]
    xp_b2 = _mm(of1, wih_b2[0:H, :]) + _mm(ob1, wih_b2[H:2 * H, :]) + p["l2_b_b"][...]
    bilstm(xp_f2, xp_b2, p["l2_whh_f"][...], p["l2_whh_b"][...], outf2_ref, outb2_ref)

    # LayerNorm(32) per timestep; only feature 31 (last of the backward half) is consumed.
    of2 = outf2_ref[...]
    ob2 = outb2_ref[...]                                                # (8, 16) each
    mu = (jnp.sum(of2, axis=1, keepdims=True)
          + jnp.sum(ob2, axis=1, keepdims=True)) * (1.0 / (2 * H))      # (8, 1)
    dfo = of2 - mu
    dbo = ob2 - mu
    var = (jnp.sum(dfo * dfo, axis=1, keepdims=True)
           + jnp.sum(dbo * dbo, axis=1, keepdims=True)) * (1.0 / (2 * H))
    ln_g = p["ln_g"][...]
    ln_b = p["ln_b"][...]                                               # (1, 32)
    rb = ((ob2[:, H - 1:H] - mu) * lax.rsqrt(var + 1e-5)
          * ln_g[0:1, 2 * H - 1:2 * H] + ln_b[0:1, 2 * H - 1:2 * H])    # (8,1) = lstm_out[:, -1]
    ra = x_cnn[:, C_OUT2 - 1:C_OUT2]                                    # (8,1) = x_cnn[:, -1]

    # ------------------- Conformer on x[4:, :]  (seq = 1, batch = 1) ---------------------
    # Softmax over a length-1 key axis is identically 1, so multi-head self-attention
    # reduces EXACTLY to out_proj(v_proj(x)), independent of the number of heads.
    x_tf = xT[:, 4:5] + pe_ref[...]                                     # (32, 1) + PE(position 0)
    v = _mm(p["cf_wv"][...], x_tf) + p["cf_bv"][...]
    attn = _mm(p["cf_wo"][...], v) + p["cf_bo"][...]
    x1 = _ln_cols(x_tf + attn, p["cf_g1"][...], p["cf_be1"][...])
    # conv module: two kernel-size-1 Conv1d == two linears over the channel dim
    hcv = _gelu(_mm(p["cf_wc1"][...], x1) + p["cf_bc1"][...])           # (64, 1)
    cv = _mm(p["cf_wc2"][...], hcv) + p["cf_bc2"][...]                  # (32, 1)
    tf_col = _ln_cols(x1 + cv, p["cf_g2"][...], p["cf_be2"][...])       # (32, 1)

    # ---------- fc head on result = cat(x_cnn[:, -1], lstm_out[:, -1], conformer) ----------
    h1 = jnp.maximum(_mm(p["fc_w1a"][...], ra) + _mm(p["fc_w1b"][...], rb)
                     + _mm(p["fc_w1c"][...], tf_col) + p["fc_b1"][...], 0.0)   # (64, 1)
    h2 = jnp.maximum(_mm(p["fc_w2"][...], h1) + p["fc_b2"][...], 0.0)          # (128, 1)
    out_ref[...] = _mm(p["fc_w3"][...], h2) + p["fc_b3"][...]                  # (1, 1)


# ----------------------------------- forward -----------------------------------
def forward(x, params):
    """x: (5, 32) float32, the module's unbatched (channels, length) layout. Returns (1,)."""
    xT = jnp.transpose(x)                                               # (32, 5)
    # positional encoding at position 0 is the constant [0, 1, 0, 1, ...]
    pe0 = (jnp.arange(D_MODEL) % 2).astype(jnp.float32).reshape(D_MODEL, 1)
    args = (xT, pe0) + tuple(params[k] for k in _PARAM_ORDER)
    out = pl.pallas_call(
        fused_kernel,
        out_shape=jax.ShapeDtypeStruct((1, 1), jnp.float32),
        in_specs=[_VMEM] * len(args),
        out_specs=_VMEM,
        scratch_shapes=[pltpu.VMEM((T8, H), jnp.float32) for _ in range(4)],
    )(*args)
    return out[0]                                                       # shape (1,)


# ------------------------------ deterministic init ------------------------------
def init_params(key):
    keys = iter(jax.random.split(key, len(_PARAM_ORDER) + 8))

    def u(shape, fan_in):
        bound = 1.0 / math.sqrt(fan_in)
        return jax.random.uniform(next(keys), shape, jnp.float32, -bound, bound)

    p = {}

    def add_dca(prefix, c_in, c_out, r=2):
        c_mid = c_out // r
        p[prefix + "_w"] = u((3, c_in, c_out), c_in * 3)        # per-tap, stored (in, out)
        p[prefix + "_b"] = u((1, c_out), c_in * 3)
        p[prefix + "_f1w"] = u((c_out, c_mid), c_out)
        p[prefix + "_f1b"] = u((1, c_mid), c_out)
        p[prefix + "_f2w"] = u((c_mid, c_out), c_mid)
        p[prefix + "_f2b"] = u((1, c_out), c_mid)

    add_dca("d1", C_IN, C_OUT1)
    add_dca("d2", C_OUT1, C_OUT2)

    def add_lstm(prefix, in_dim, h):
        p[prefix + "_wih_f"] = u((in_dim, 4 * h), h)
        p[prefix + "_whh_f"] = u((h, 4 * h), h)
        p[prefix + "_b_f"] = u((1, 4 * h), h)
        p[prefix + "_wih_b"] = u((in_dim, 4 * h), h)
        p[prefix + "_whh_b"] = u((h, 4 * h), h)
        p[prefix + "_b_b"] = u((1, 4 * h), h)

    add_lstm("l1", LSTM_IN, H)
    add_lstm("l2", 2 * H, H)

    p["ln_g"] = jnp.ones((1, 2 * H), jnp.float32)
    p["ln_b"] = jnp.zeros((1, 2 * H), jnp.float32)

    d, hid = D_MODEL, CONV_HIDDEN
    p["cf_wv"] = u((d, d), d)
    p["cf_bv"] = u((d, 1), d)
    p["cf_wo"] = u((d, d), d)
    p["cf_bo"] = u((d, 1), d)
    p["cf_g1"] = jnp.ones((d, 1), jnp.float32)
    p["cf_be1"] = jnp.zeros((d, 1), jnp.float32)
    p["cf_wc1"] = u((hid, d), d)
    p["cf_bc1"] = u((hid, 1), d)
    p["cf_wc2"] = u((d, hid), hid)
    p["cf_bc2"] = u((d, 1), hid)
    p["cf_g2"] = jnp.ones((d, 1), jnp.float32)
    p["cf_be2"] = jnp.zeros((d, 1), jnp.float32)

    p["fc_w1a"] = u((64, 8), 48)     # multiplies x_cnn[:, -1]
    p["fc_w1b"] = u((64, 8), 48)     # multiplies lstm_out[:, -1]
    p["fc_w1c"] = u((64, 32), 48)    # multiplies the conformer output
    p["fc_b1"] = u((64, 1), 48)
    p["fc_w2"] = u((128, 64), 64)
    p["fc_b2"] = u((128, 1), 64)
    p["fc_w3"] = u((1, 128), 128)
    p["fc_b3"] = u((1, 1), 128)
    return p


if __name__ == "__main__":
    x = jax.random.normal(jax.random.PRNGKey(0), (C_IN, L), dtype=jnp.float32)
    params = init_params(jax.random.PRNGKey(42))
    out = jax.jit(forward)(x, params)
    out = jax.block_until_ready(out)
    assert out.shape == (1,), out.shape
    print("KERNEL_OK")
</pallas_src>

<mosaic_0001>
module attributes {stable_mosaic.version = 11 : i64} {
  func.func @fused_kernel(%arg0: memref<32x5xf32, #tpu.memory_space<vmem>>, %arg1: memref<32x1xf32, #tpu.memory_space<vmem>>, %arg2: memref<3x5x8xf32, #tpu.memory_space<vmem>>, %arg3: memref<1x8xf32, #tpu.memory_space<vmem>>, %arg4: memref<8x4xf32, #tpu.memory_space<vmem>>, %arg5: memref<1x4xf32, #tpu.memory_space<vmem>>, %arg6: memref<4x8xf32, #tpu.memory_space<vmem>>, %arg7: memref<1x8xf32, #tpu.memory_space<vmem>>, %arg8: memref<3x8x16xf32, #tpu.memory_space<vmem>>, %arg9: memref<1x16xf32, #tpu.memory_space<vmem>>, %arg10: memref<16x8xf32, #tpu.memory_space<vmem>>, %arg11: memref<1x8xf32, #tpu.memory_space<vmem>>, %arg12: memref<8x16xf32, #tpu.memory_space<vmem>>, %arg13: memref<1x16xf32, #tpu.memory_space<vmem>>, %arg14: memref<16x64xf32, #tpu.memory_space<vmem>>, %arg15: memref<16x64xf32, #tpu.memory_space<vmem>>, %arg16: memref<1x64xf32, #tpu.memory_space<vmem>>, %arg17: memref<16x64xf32, #tpu.memory_space<vmem>>, %arg18: memref<16x64xf32, #tpu.memory_space<vmem>>, %arg19: memref<1x64xf32, #tpu.memory_space<vmem>>, %arg20: memref<32x64xf32, #tpu.memory_space<vmem>>, %arg21: memref<16x64xf32, #tpu.memory_space<vmem>>, %arg22: memref<1x64xf32, #tpu.memory_space<vmem>>, %arg23: memref<32x64xf32, #tpu.memory_space<vmem>>, %arg24: memref<16x64xf32, #tpu.memory_space<vmem>>, %arg25: memref<1x64xf32, #tpu.memory_space<vmem>>, %arg26: memref<1x32xf32, #tpu.memory_space<vmem>>, %arg27: memref<1x32xf32, #tpu.memory_space<vmem>>, %arg28: memref<32x32xf32, #tpu.memory_space<vmem>>, %arg29: memref<32x1xf32, #tpu.memory_space<vmem>>, %arg30: memref<32x32xf32, #tpu.memory_space<vmem>>, %arg31: memref<32x1xf32, #tpu.memory_space<vmem>>, %arg32: memref<32x1xf32, #tpu.memory_space<vmem>>, %arg33: memref<32x1xf32, #tpu.memory_space<vmem>>, %arg34: memref<64x32xf32, #tpu.memory_space<vmem>>, %arg35: memref<64x1xf32, #tpu.memory_space<vmem>>, %arg36: memref<32x64xf32, #tpu.memory_space<vmem>>, %arg37: memref<32x1xf32, #tpu.memory_space<vmem>>, %arg38: memref<32x1xf32, #tpu.memory_space<vmem>>, %arg39: memref<32x1xf32, #tpu.memory_space<vmem>>, %arg40: memref<64x8xf32, #tpu.memory_space<vmem>>, %arg41: memref<64x8xf32, #tpu.memory_space<vmem>>, %arg42: memref<64x32xf32, #tpu.memory_space<vmem>>, %arg43: memref<64x1xf32, #tpu.memory_space<vmem>>, %arg44: memref<128x64xf32, #tpu.memory_space<vmem>>, %arg45: memref<128x1xf32, #tpu.memory_space<vmem>>, %arg46: memref<1x128xf32, #tpu.memory_space<vmem>>, %arg47: memref<1x1xf32, #tpu.memory_space<vmem>>, %arg48: memref<1x1xf32, #tpu.memory_space<vmem>>, %arg49: memref<8x16xf32, #tpu.memory_space<vmem>>, %arg50: memref<8x16xf32, #tpu.memory_space<vmem>>, %arg51: memref<8x16xf32, #tpu.memory_space<vmem>>, %arg52: memref<8x16xf32, #tpu.memory_space<vmem>>) attributes {dimension_semantics = [], scalar_prefetch = 0 : i64, scratch_operands = 4 : i64, tpu.core_type = #tpu.core_type<tc>} {
    %c0 = arith.constant 0 : index
    %c0_0 = arith.constant 0 : index
    %0 = vector.load %arg0[%c0, %c0_0] : memref<32x5xf32, #tpu.memory_space<vmem>>, vector<32x5xf32>
    %1 = tpu.iota {dimensions = array<i32: 1>} : vector<32x32xi32>
    %2 = tpu.iota {dimensions = array<i32: 0>} : vector<32x32xi32>
    %c-1_i32 = arith.constant -1 : i32
    %3 = vector.broadcast %c-1_i32 : i32 to vector<32x32xi32>
    %4 = arith.addi %2, %3 : vector<32x32xi32>
    %5 = arith.cmpi eq, %1, %4 : vector<32x32xi32>
    %6 = arith.extui %5 : vector<32x32xi1> to vector<32x32xi32>
    %7 = arith.sitofp %6 : vector<32x32xi32> to vector<32x32xf32>
    %cst = arith.constant dense<0.000000e+00> : vector<32x5xf32>
    %8 = tpu.matmul %7, %0, %cst {dimension_numbers = #tpu.dot_dimension_numbers<[1], [0], [0], [1], [0, 0, 1, 1], [], []>} : vector<32x32xf32>, vector<32x5xf32>, vector<32x5xf32> -> vector<32x5xf32>
    %c0_1 = arith.constant 0 : index
    %c0_2 = arith.constant 0 : index
    %c0_3 = arith.constant 0 : index
    %9 = vector.load %arg2[%c0_1, %c0_2, %c0_3] : memref<3x5x8xf32, #tpu.memory_space<vmem>>, vector<1x5x8xf32>
    %10 = vector.shape_cast %9 : vector<1x5x8xf32> to vector<5x8xf32>
    %cst_4 = arith.constant dense<0.000000e+00> : vector<32x8xf32>
    %11 = tpu.matmul %8, %10, %cst_4 {dimension_numbers = #tpu.dot_dimension_numbers<[1], [0], [0], [1], [0, 0, 1, 1], [], []>} : vector<32x5xf32>, vector<5x8xf32>, vector<32x8xf32> -> vector<32x8xf32>
    %c1 = arith.constant 1 : index
    %c0_5 = arith.constant 0 : index
    %c0_6 = arith.constant 0 : index
    %12 = vector.load %arg2[%c1, %c0_5, %c0_6] : memref<3x5x8xf32, #tpu.memory_space<vmem>>, vector<1x5x8xf32>
    %13 = vector.shape_cast %12 : vector<1x5x8xf32> to vector<5x8xf32>
    %cst_7 = arith.constant dense<0.000000e+00> : vector<32x8xf32>
    %14 = tpu.matmul %0, %13, %cst_7 {dimension_numbers = #tpu.dot_dimension_numbers<[1], [0], [0], [1], [0, 0, 1, 1], [], []>} : vector<32x5xf32>, vector<5x8xf32>, vector<32x8xf32> -> vector<32x8xf32>
    %15 = arith.addf %11, %14 : vector<32x8xf32>
    %16 = tpu.iota {dimensions = array<i32: 1>} : vector<32x32xi32>
    %17 = tpu.iota {dimensions = array<i32: 0>} : vector<32x32xi32>
    %c1_i32 = arith.constant 1 : i32
    %18 = vector.broadcast %c1_i32 : i32 to vector<32x32xi32>
    %19 = arith.addi %17, %18 : vector<32x32xi32>
    %20 = arith.cmpi eq, %16, %19 : vector<32x32xi32>
    %21 = arith.extui %20 : vector<32x32xi1> to vector<32x32xi32>
    %22 = arith.sitofp %21 : vector<32x32xi32> to vector<32x32xf32>
    %cst_8 = arith.constant dense<0.000000e+00> : vector<32x5xf32>
    %23 = tpu.matmul %22, %0, %cst_8 {dimension_numbers = #tpu.dot_dimension_numbers<[1], [0], [0], [1], [0, 0, 1, 1], [], []>} : vector<32x32xf32>, vector<32x5xf32>, vector<32x5xf32> -> vector<32x5xf32>
    %c2 = arith.constant 2 : index
    %c0_9 = arith.constant 0 : index
    %c0_10 = arith.constant 0 : index
    %24 = vector.load %arg2[%c2, %c0_9, %c0_10] : memref<3x5x8xf32, #tpu.memory_space<vmem>>, vector<1x5x8xf32>
    %25 = vector.shape_cast %24 : vector<1x5x8xf32> to vector<5x8xf32>
    %cst_11 = arith.constant dense<0.000000e+00> : vector<32x8xf32>
    %26 = tpu.matmul %23, %25, %cst_11 {dimension_numbers = #tpu.dot_dimension_numbers<[1], [0], [0], [1], [0, 0, 1, 1], [], []>} : vector<32x5xf32>, vector<5x8xf32>, vector<32x8xf32> -> vector<32x8xf32>
    %27 = arith.addf %15, %26 : vector<32x8xf32>
    %c0_12 = arith.constant 0 : index
    %c0_13 = arith.constant 0 : index
    %28 = vector.load %arg3[%c0_12, %c0_13] : memref<1x8xf32, #tpu.memory_space<vmem>>, vector<1x8xf32>
    %29 = vector.broadcast %28 : vector<1x8xf32> to vector<32x8xf32>
    %30 = arith.addf %27, %29 : vector<32x8xf32>
    %cst_14 = arith.constant dense<0.000000e+00> : vector<8xf32>
    %31 = vector.multi_reduction <add>, %30, %cst_14 [0] : vector<32x8xf32> to vector<8xf32>
    %32 = vector.shape_cast %31 : vector<8xf32> to vector<1x8xf32>
    %cst_15 = arith.constant 3.200000e+01 : f32
    %33 = vector.broadcast %cst_15 : f32 to vector<1x8xf32>
    %34 = arith.divf %32, %33 : vector<1x8xf32>
    %c0_16 = arith.constant 0 : index
    %c0_17 = arith.constant 0 : index
    %35 = vector.load %arg4[%c0_16, %c0_17] : memref<8x4xf32, #tpu.memory_space<vmem>>, vector<8x4xf32>
    %cst_18 = arith.constant dense<0.000000e+00> : vector<1x4xf32>
    %36 = tpu.matmul %34, %35, %cst_18 {dimension_numbers = #tpu.dot_dimension_numbers<[1], [0], [0], [1], [0, 0, 1, 1], [], []>} : vector<1x8xf32>, vector<8x4xf32>, vector<1x4xf32> -> vector<1x4xf32>
    %c0_19 = arith.constant 0 : index
    %c0_20 = arith.constant 0 : index
    %37 = vector.load %arg5[%c0_19, %c0_20] : memref<1x4xf32, #tpu.memory_space<vmem>>, vector<1x4xf32>
    %38 = arith.addf %36, %37 : vector<1x4xf32>
    %cst_21 = arith.constant 0.000000e+00 : f32
    %39 = vector.broadcast %cst_21 : f32 to vector<1x4xf32>
    %40 = arith.maximumf %38, %39 : vector<1x4xf32>
    %c0_22 = arith.constant 0 : index
    %c0_23 = arith.constant 0 : index
    %41 = vector.load %arg6[%c0_22, %c0_23] : memref<4x8xf32, #tpu.memory_space<vmem>>, vector<4x8xf32>
    %cst_24 = arith.constant dense<0.000000e+00> : vector<1x8xf32>
    %42 = tpu.matmul %40, %41, %cst_24 {dimension_numbers = #tpu.dot_dimension_numbers<[1], [0], [0], [1], [0, 0, 1, 1], [], []>} : vector<1x4xf32>, vector<4x8xf32>, vector<1x8xf32> -> vector<1x8xf32>
    %c0_25 = arith.constant 0 : index
    %c0_26 = arith.constant 0 : index
    %43 = vector.load %arg7[%c0_25, %c0_26] : memref<1x8xf32, #tpu.memory_space<vmem>>, vector<1x8xf32>
    %44 = arith.addf %42, %43 : vector<1x8xf32>
    %cst_27 = arith.constant dense<0xFF800000> : vector<1xf32>
    %45 = vector.multi_reduction <maximumf>, %44, %cst_27 [1] : vector<1x8xf32> to vector<1xf32>
    %46 = vector.shape_cast %45 : vector<1xf32> to vector<1x1xf32>
    %47 = vector.broadcast %46 : vector<1x1xf32> to vector<1x8xf32>
    %48 = arith.subf %44, %47 : vector<1x8xf32>
    %49 = math.exp %48 : vector<1x8xf32>
    %cst_28 = arith.constant dense<0.000000e+00> : vector<1xf32>
    %50 = vector.multi_reduction <add>, %49, %cst_28 [1] : vector<1x8xf32> to vector<1xf32>
    %51 = vector.shape_cast %50 : vector<1xf32> to vector<1x1xf32>
    %52 = tpu.reciprocal %51 {approx = true} : vector<1x1xf32> -> vector<1x1xf32>
    %53 = vector.broadcast %52 : vector<1x1xf32> to vector<1x8xf32>
    %54 = arith.mulf %49, %53 : vector<1x8xf32>
    %55 = vector.broadcast %54 : vector<1x8xf32> to vector<32x8xf32>
    %56 = arith.mulf %30, %55 : vector<32x8xf32>
    %57 = tpu.iota {dimensions = array<i32: 1>} : vector<16x32xi32>
    %58 = tpu.iota {dimensions = array<i32: 0>} : vector<16x32xi32>
    %c2_i32 = arith.constant 2 : i32
    %59 = vector.broadcast %c2_i32 : i32 to vector<16x32xi32>
    %60 = arith.muli %59, %58 : vector<16x32xi32>
    %c0_i32 = arith.constant 0 : i32
    %61 = vector.broadcast %c0_i32 : i32 to vector<16x32xi32>
    %62 = arith.addi %60, %61 : vector<16x32xi32>
    %63 = arith.cmpi eq, %57, %62 : vector<16x32xi32>
    %64 = arith.extui %63 : vector<16x32xi1> to vector<16x32xi32>
    %65 = arith.sitofp %64 : vector<16x32xi32> to vector<16x32xf32>
    %cst_29 = arith.constant dense<0.000000e+00> : vector<16x8xf32>
    %66 = tpu.matmul %65, %56, %cst_29 {dimension_numbers = #tpu.dot_dimension_numbers<[1], [0], [0], [1], [0, 0, 1, 1], [], []>} : vector<16x32xf32>, vector<32x8xf32>, vector<16x8xf32> -> vector<16x8xf32>
    %67 = tpu.iota {dimensions = array<i32: 1>} : vector<16x32xi32>
    %68 = tpu.iota {dimensions = array<i32: 0>} : vector<16x32xi32>
    %c2_i32_30 = arith.constant 2 : i32
    %69 = vector.broadcast %c2_i32_30 : i32 to vector<16x32xi32>
    %70 = arith.muli %69, %68 : vector<16x32xi32>
    %c1_i32_31 = arith.constant 1 : i32
    %71 = vector.broadcast %c1_i32_31 : i32 to vector<16x32xi32>
    %72 = arith.addi %70, %71 : vector<16x32xi32>
    %73 = arith.cmpi eq, %67, %72 : vector<16x32xi32>
    %74 = arith.extui %73 : vector<16x32xi1> to vector<16x32xi32>
    %75 = arith.sitofp %74 : vector<16x32xi32> to vector<16x32xf32>
    %cst_32 = arith.constant dense<0.000000e+00> : vector<16x8xf32>
    %76 = tpu.matmul %75, %56, %cst_32 {dimension_numbers = #tpu.dot_dimension_numbers<[1], [0], [0], [1], [0, 0, 1, 1], [], []>} : vector<16x32xf32>, vector<32x8xf32>, vector<16x8xf32> -> vector<16x8xf32>
    %77 = arith.maximumf %66, %76 : vector<16x8xf32>
    %78 = tpu.iota {dimensions = array<i32: 1>} : vector<16x16xi32>
    %79 = tpu.iota {dimensions = array<i32: 0>} : vector<16x16xi32>
    %c-1_i32_33 = arith.constant -1 : i32
    %80 = vector.broadcast %c-1_i32_33 : i32 to vector<16x16xi32>
    %81 = arith.addi %79, %80 : vector<16x16xi32>
    %82 = arith.cmpi eq, %78, %81 : vector<16x16xi32>
    %83 = arith.extui %82 : vector<16x16xi1> to vector<16x16xi32>
    %84 = arith.sitofp %83 : vector<16x16xi32> to vector<16x16xf32>
    %cst_34 = arith.constant dense<0.000000e+00> : vector<16x8xf32>
    %85 = tpu.matmul %84, %77, %cst_34 {dimension_numbers = #tpu.dot_dimension_numbers<[1], [0], [0], [1], [0, 0, 1, 1], [], []>} : vector<16x16xf32>, vector<16x8xf32>, vector<16x8xf32> -> vector<16x8xf32>
    %c0_35 = arith.constant 0 : index
    %c0_36 = arith.constant 0 : index
    %c0_37 = arith.constant 0 : index
    %86 = vector.load %arg8[%c0_35, %c0_36, %c0_37] : memref<3x8x16xf32, #tpu.memory_space<vmem>>, vector<1x8x16xf32>
    %87 = vector.shape_cast %86 : vector<1x8x16xf32> to vector<8x16xf32>
    %cst_38 = arith.constant dense<0.000000e+00> : vector<16x16xf32>
    %88 = tpu.matmul %85, %87, %cst_38 {dimension_numbers = #tpu.dot_dimension_numbers<[1], [0], [0], [1], [0, 0, 1, 1], [], []>} : vector<16x8xf32>, vector<8x16xf32>, vector<16x16xf32> -> vector<16x16xf32>
    %c1_39 = arith.constant 1 : index
    %c0_40 = arith.constant 0 : index
    %c0_41 = arith.constant 0 : index
    %89 = vector.load %arg8[%c1_39, %c0_40, %c0_41] : memref<3x8x16xf32, #tpu.memory_space<vmem>>, vector<1x8x16xf32>
    %90 = vector.shape_cast %89 : vector<1x8x16xf32> to vector<8x16xf32>
    %cst_42 = arith.constant dense<0.000000e+00> : vector<16x16xf32>
    %91 = tpu.matmul %77, %90, %cst_42 {dimension_numbers = #tpu.dot_dimension_numbers<[1], [0], [0], [1], [0, 0, 1, 1], [], []>} : vector<16x8xf32>, vector<8x16xf32>, vector<16x16xf32> -> vector<16x16xf32>
    %92 = arith.addf %88, %91 : vector<16x16xf32>
    %93 = tpu.iota {dimensions = array<i32: 1>} : vector<16x16xi32>
    %94 = tpu.iota {dimensions = array<i32: 0>} : vector<16x16xi32>
    %c1_i32_43 = arith.constant 1 : i32
    %95 = vector.broadcast %c1_i32_43 : i32 to vector<16x16xi32>
    %96 = arith.addi %94, %95 : vector<16x16xi32>
    %97 = arith.cmpi eq, %93, %96 : vector<16x16xi32>
    %98 = arith.extui %97 : vector<16x16xi1> to vector<16x16xi32>
    %99 = arith.sitofp %98 : vector<16x16xi32> to vector<16x16xf32>
    %cst_44 = arith.constant dense<0.000000e+00> : vector<16x8xf32>
    %100 = tpu.matmul %99, %77, %cst_44 {dimension_numbers = #tpu.dot_dimension_numbers<[1], [0], [0], [1], [0, 0, 1, 1], [], []>} : vector<16x16xf32>, vector<16x8xf32>, vector<16x8xf32> -> vector<16x8xf32>
    %c2_45 = arith.constant 2 : index
    %c0_46 = arith.constant 0 : index
    %c0_47 = arith.constant 0 : index
    %101 = vector.load %arg8[%c2_45, %c0_46, %c0_47] : memref<3x8x16xf32, #tpu.memory_space<vmem>>, vector<1x8x16xf32>
    %102 = vector.shape_cast %101 : vector<1x8x16xf32> to vector<8x16xf32>
    %cst_48 = arith.constant dense<0.000000e+00> : vector<16x16xf32>
    %103 = tpu.matmul %100, %102, %cst_48 {dimension_numbers = #tpu.dot_dimension_numbers<[1], [0], [0], [1], [0, 0, 1, 1], [], []>} : vector<16x8xf32>, vector<8x16xf32>, vector<16x16xf32> -> vector<16x16xf32>
    %104 = arith.addf %92, %103 : vector<16x16xf32>
    %c0_49 = arith.constant 0 : index
    %c0_50 = arith.constant 0 : index
    %105 = vector.load %arg9[%c0_49, %c0_50] : memref<1x16xf32, #tpu.memory_space<vmem>>, vector<1x16xf32>
    %106 = vector.broadcast %105 : vector<1x16xf32> to vector<16x16xf32>
    %107 = arith.addf %104, %106 : vector<16x16xf32>
    %cst_51 = arith.constant dense<0.000000e+00> : vector<16xf32>
    %108 = vector.multi_reduction <add>, %107, %cst_51 [0] : vector<16x16xf32> to vector<16xf32>
    %109 = vector.shape_cast %108 : vector<16xf32> to vector<1x16xf32>
    %cst_52 = arith.constant 1.600000e+01 : f32
    %110 = vector.broadcast %cst_52 : f32 to vector<1x16xf32>
    %111 = arith.divf %109, %110 : vector<1x16xf32>
    %c0_53 = arith.constant 0 : index
    %c0_54 = arith.constant 0 : index
    %112 = vector.load %arg10[%c0_53, %c0_54] : memref<16x8xf32, #tpu.memory_space<vmem>>, vector<16x8xf32>
    %cst_55 = arith.constant dense<0.000000e+00> : vector<1x8xf32>
    %113 = tpu.matmul %111, %112, %cst_55 {dimension_numbers = #tpu.dot_dimension_numbers<[1], [0], [0], [1], [0, 0, 1, 1], [], []>} : vector<1x16xf32>, vector<16x8xf32>, vector<1x8xf32> -> vector<1x8xf32>
    %c0_56 = arith.constant 0 : index
    %c0_57 = arith.constant 0 : index
    %114 = vector.load %arg11[%c0_56, %c0_57] : memref<1x8xf32, #tpu.memory_space<vmem>>, vector<1x8xf32>
    %115 = arith.addf %113, %114 : vector<1x8xf32>
    %cst_58 = arith.constant 0.000000e+00 : f32
    %116 = vector.broadcast %cst_58 : f32 to vector<1x8xf32>
    %117 = arith.maximumf %115, %116 : vector<1x8xf32>
    %c0_59 = arith.constant 0 : index
    %c0_60 = arith.constant 0 : index
    %118 = vector.load %arg12[%c0_59, %c0_60] : memref<8x16xf32, #tpu.memory_space<vmem>>, vector<8x16xf32>
    %cst_61 = arith.constant dense<0.000000e+00> : vector<1x16xf32>
    %119 = tpu.matmul %117, %118, %cst_61 {dimension_numbers = #tpu.dot_dimension_numbers<[1], [0], [0], [1], [0, 0, 1, 1], [], []>} : vector<1x8xf32>, vector<8x16xf32>, vector<1x16xf32> -> vector<1x16xf32>
    %c0_62 = arith.constant 0 : index
    %c0_63 = arith.constant 0 : index
    %120 = vector.load %arg13[%c0_62, %c0_63] : memref<1x16xf32, #tpu.memory_space<vmem>>, vector<1x16xf32>
    %121 = arith.addf %119, %120 : vector<1x16xf32>
    %cst_64 = arith.constant dense<0xFF800000> : vector<1xf32>
    %122 = vector.multi_reduction <maximumf>, %121, %cst_64 [1] : vector<1x16xf32> to vector<1xf32>
    %123 = vector.shape_cast %122 : vector<1xf32> to vector<1x1xf32>
    %124 = vector.broadcast %123 : vector<1x1xf32> to vector<1x16xf32>
    %125 = arith.subf %121, %124 : vector<1x16xf32>
    %126 = math.exp %125 : vector<1x16xf32>
    %cst_65 = arith.constant dense<0.000000e+00> : vector<1xf32>
    %127 = vector.multi_reduction <add>, %126, %cst_65 [1] : vector<1x16xf32> to vector<1xf32>
    %128 = vector.shape_cast %127 : vector<1xf32> to vector<1x1xf32>
    %129 = tpu.reciprocal %128 {approx = true} : vector<1x1xf32> -> vector<1x1xf32>
    %130 = vector.broadcast %129 : vector<1x1xf32> to vector<1x16xf32>
    %131 = arith.mulf %126, %130 : vector<1x16xf32>
    %132 = vector.broadcast %131 : vector<1x16xf32> to vector<16x16xf32>
    %133 = arith.mulf %107, %132 : vector<16x16xf32>
    %134 = tpu.iota {dimensions = array<i32: 1>} : vector<8x16xi32>
    %135 = tpu.iota {dimensions = array<i32: 0>} : vector<8x16xi32>
    %c2_i32_66 = arith.constant 2 : i32
    %136 = vector.broadcast %c2_i32_66 : i32 to vector<8x16xi32>
    %137 = arith.muli %136, %135 : vector<8x16xi32>
    %c0_i32_67 = arith.constant 0 : i32
    %138 = vector.broadcast %c0_i32_67 : i32 to vector<8x16xi32>
    %139 = arith.addi %137, %138 : vector<8x16xi32>
    %140 = arith.cmpi eq, %134, %139 : vector<8x16xi32>
    %141 = arith.extui %140 : vector<8x16xi1> to vector<8x16xi32>
    %142 = arith.sitofp %141 : vector<8x16xi32> to vector<8x16xf32>
    %cst_68 = arith.constant dense<0.000000e+00> : vector<8x16xf32>
    %143 = tpu.matmul %142, %133, %cst_68 {dimension_numbers = #tpu.dot_dimension_numbers<[1], [0], [0], [1], [0, 0, 1, 1], [], []>} : vector<8x16xf32>, vector<16x16xf32>, vector<8x16xf32> -> vector<8x16xf32>
    %144 = tpu.iota {dimensions = array<i32: 1>} : vector<8x16xi32>
    %145 = tpu.iota {dimensions = array<i32: 0>} : vector<8x16xi32>
    %c2_i32_69 = arith.constant 2 : i32
    %146 = vector.broadcast %c2_i32_69 : i32 to vector<8x16xi32>
    %147 = arith.muli %146, %145 : vector<8x16xi32>
    %c1_i32_70 = arith.constant 1 : i32
    %148 = vector.broadcast %c1_i32_70 : i32 to vector<8x16xi32>
    %149 = arith.addi %147, %148 : vector<8x16xi32>
    %150 = arith.cmpi eq, %144, %149 : vector<8x16xi32>
    %151 = arith.extui %150 : vector<8x16xi1> to vector<8x16xi32>
    %152 = arith.sitofp %151 : vector<8x16xi32> to vector<8x16xf32>
    %cst_71 = arith.constant dense<0.000000e+00> : vector<8x16xf32>
    %153 = tpu.matmul %152, %133, %cst_71 {dimension_numbers = #tpu.dot_dimension_numbers<[1], [0], [0], [1], [0, 0, 1, 1], [], []>} : vector<8x16xf32>, vector<16x16xf32>, vector<8x16xf32> -> vector<8x16xf32>
    %154 = arith.maximumf %143, %153 : vector<8x16xf32>
    %c0_72 = arith.constant 0 : index
    %c0_73 = arith.constant 0 : index
    %155 = vector.load %arg14[%c0_72, %c0_73] : memref<16x64xf32, #tpu.memory_space<vmem>>, vector<16x64xf32>
    %cst_74 = arith.constant dense<0.000000e+00> : vector<8x64xf32>
    %156 = tpu.matmul %154, %155, %cst_74 {dimension_numbers = #tpu.dot_dimension_numbers<[1], [0], [0], [1], [0, 0, 1, 1], [], []>} : vector<8x16xf32>, vector<16x64xf32>, vector<8x64xf32> -> vector<8x64xf32>
    %c0_75 = arith.constant 0 : index
    %c0_76 = arith.constant 0 : index
    %157 = vector.load %arg16[%c0_75, %c0_76] : memref<1x64xf32, #tpu.memory_space<vmem>>, vector<1x64xf32>
    %158 = vector.broadcast %157 : vector<1x64xf32> to vector<8x64xf32>
    %159 = arith.addf %156, %158 : vector<8x64xf32>
    %c0_77 = arith.constant 0 : index
    %c0_78 = arith.constant 0 : index
    %160 = vector.load %arg17[%c0_77, %c0_78] : memref<16x64xf32, #tpu.memory_space<vmem>>, vector<16x64xf32>
    %cst_79 = arith.constant dense<0.000000e+00> : vector<8x64xf32>
    %161 = tpu.matmul %154, %160, %cst_79 {dimension_numbers = #tpu.dot_dimension_numbers<[1], [0], [0], [1], [0, 0, 1, 1], [], []>} : vector<8x16xf32>, vector<16x64xf32>, vector<8x64xf32> -> vector<8x64xf32>
    %c0_80 = arith.constant 0 : index
    %c0_81 = arith.constant 0 : index
    %162 = vector.load %arg19[%c0_80, %c0_81] : memref<1x64xf32, #tpu.memory_space<vmem>>, vector<1x64xf32>
    %163 = vector.broadcast %162 : vector<1x64xf32> to vector<8x64xf32>
    %164 = arith.addf %161, %163 : vector<8x64xf32>
    %c0_82 = arith.constant 0 : index
    %c0_83 = arith.constant 0 : index
    %165 = vector.load %arg15[%c0_82, %c0_83] : memref<16x64xf32, #tpu.memory_space<vmem>>, vector<16x64xf32>
    %c0_84 = arith.constant 0 : index
    %c0_85 = arith.constant 0 : index
    %166 = vector.load %arg18[%c0_84, %c0_85] : memref<16x64xf32, #tpu.memory_space<vmem>>, vector<16x64xf32>
    %cst_86 = arith.constant 0.000000e+00 : f32
    %167 = vector.broadcast %cst_86 : f32 to vector<1x16xf32>
    %cst_87 = arith.constant 0.000000e+00 : f32
    %168 = vector.broadcast %cst_87 : f32 to vector<1x16xf32>
    %cst_88 = arith.constant 0.000000e+00 : f32
    %169 = vector.broadcast %cst_88 : f32 to vector<1x16xf32>
    %cst_89 = arith.constant 0.000000e+00 : f32
    %170 = vector.broadcast %cst_89 : f32 to vector<1x16xf32>
    %171 = vector.extract_strided_slice %159 {offsets = [0, 0], sizes = [1, 64], strides = [1, 1]} : vector<8x64xf32> to vector<1x64xf32>
    %cst_90 = arith.constant dense<0.000000e+00> : vector<1x64xf32>
    %172 = tpu.matmul %167, %165, %cst_90 {dimension_numbers = #tpu.dot_dimension_numbers<[1], [0], [0], [1], [0, 0, 1, 1], [], []>} : vector<1x16xf32>, vector<16x64xf32>, vector<1x64xf32> -> vector<1x64xf32>
    %173 = arith.addf %171, %172 : vector<1x64xf32>
    %174 = vector.extract_strided_slice %164 {offsets = [7, 0], sizes = [1, 64], strides = [1, 1]} : vector<8x64xf32> to vector<1x64xf32>
    %cst_91 = arith.constant dense<0.000000e+00> : vector<1x64xf32>
    %175 = tpu.matmul %169, %166, %cst_91 {dimension_numbers = #tpu.dot_dimension_numbers<[1], [0], [0], [1], [0, 0, 1, 1], [], []>} : vector<1x16xf32>, vector<16x64xf32>, vector<1x64xf32> -> vector<1x64xf32>
    %176 = arith.addf %174, %175 : vector<1x64xf32>
    %177 = vector.extract_strided_slice %173 {offsets = [0, 0], sizes = [1, 16], strides = [1, 1]} : vector<1x64xf32> to vector<1x16xf32>
    %cst_92 = arith.constant 0.000000e+00 : f32
    %178 = vector.broadcast %cst_92 : f32 to vector<1x16xf32>
    %179 = arith.subf %178, %177 : vector<1x16xf32>
    %180 = math.exp %179 : vector<1x16xf32>
    %cst_93 = arith.constant 1.000000e+00 : f32
    %181 = vector.broadcast %cst_93 : f32 to vector<1x16xf32>
    %182 = arith.addf %181, %180 : vector<1x16xf32>
    %cst_94 = arith.constant 1.000000e+00 : f32
    %183 = vector.broadcast %cst_94 : f32 to vector<1x16xf32>
    %184 = arith.divf %183, %182 : vector<1x16xf32>
    %185 = vector.extract_strided_slice %176 {offsets = [0, 0], sizes = [1, 16], strides = [1, 1]} : vector<1x64xf32> to vector<1x16xf32>
    %cst_95 = arith.constant 0.000000e+00 : f32
    %186 = vector.broadcast %cst_95 : f32 to vector<1x16xf32>
    %187 = arith.subf %186, %185 : vector<1x16xf32>
    %188 = math.exp %187 : vector<1x16xf32>
    %cst_96 = arith.constant 1.000000e+00 : f32
    %189 = vector.broadcast %cst_96 : f32 to vector<1x16xf32>
    %190 = arith.addf %189, %188 : vector<1x16xf32>
    %cst_97 = arith.constant 1.000000e+00 : f32
    %191 = vector.broadcast %cst_97 : f32 to vector<1x16xf32>
    %192 = arith.divf %191, %190 : vector<1x16xf32>
    %193 = vector.extract_strided_slice %173 {offsets = [0, 16], sizes = [1, 16], strides = [1, 1]} : vector<1x64xf32> to vector<1x16xf32>
    %cst_98 = arith.constant 0.000000e+00 : f32
    %194 = vector.broadcast %cst_98 : f32 to vector<1x16xf32>
    %195 = arith.subf %194, %193 : vector<1x16xf32>
    %196 = math.exp %195 : vector<1x16xf32>
    %cst_99 = arith.constant 1.000000e+00 : f32
    %197 = vector.broadcast %cst_99 : f32 to vector<1x16xf32>
    %198 = arith.addf %197, %196 : vector<1x16xf32>
    %cst_100 = arith.constant 1.000000e+00 : f32
    %199 = vector.broadcast %cst_100 : f32 to vector<1x16xf32>
    %200 = arith.divf %199, %198 : vector<1x16xf32>
    %201 = vector.extract_strided_slice %176 {offsets = [0, 16], sizes = [1, 16], strides = [1, 1]} : vector<1x64xf32> to vector<1x16xf32>
    %cst_101 = arith.constant 0.000000e+00 : f32
    %202 = vector.broadcast %cst_101 : f32 to vector<1x16xf32>
    %203 = arith.subf %202, %201 : vector<1x16xf32>
    %204 = math.exp %203 : vector<1x16xf32>
    %cst_102 = arith.constant 1.000000e+00 : f32
    %205 = vector.broadcast %cst_102 : f32 to vector<1x16xf32>
    %206 = arith.addf %205, %204 : vector<1x16xf32>
    %cst_103 = arith.constant 1.000000e+00 : f32
    %207 = vector.broadcast %cst_103 : f32 to vector<1x16xf32>
    %208 = arith.divf %207, %206 : vector<1x16xf32>
    %209 = vector.extract_strided_slice %173 {offsets = [0, 32], sizes = [1, 16], strides = [1, 1]} : vector<1x64xf32> to vector<1x16xf32>
    %210 = math.tanh %209 : vector<1x16xf32>
    %211 = vector.extract_strided_slice %176 {offsets = [0, 32], sizes = [1, 16], strides = [1, 1]} : vector<1x64xf32> to vector<1x16xf32>
    %212 = math.tanh %211 : vector<1x16xf32>
    %213 = vector.extract_strided_slice %173 {offsets = [0, 48], sizes = [1, 16], strides = [1, 1]} : vector<1x64xf32> to vector<1x16xf32>
    %cst_104 = arith.constant 0.000000e+00 : f32
    %214 = vector.broadcast %cst_104 : f32 to vector<1x16xf32>
    %215 = arith.subf %214, %213 : vector<1x16xf32>
    %216 = math.exp %215 : vector<1x16xf32>
    %cst_105 = arith.constant 1.000000e+00 : f32
    %217 = vector.broadcast %cst_105 : f32 to vector<1x16xf32>
    %218 = arith.addf %217, %216 : vector<1x16xf32>
    %cst_106 = arith.constant 1.000000e+00 : f32
    %219 = vector.broadcast %cst_106 : f32 to vector<1x16xf32>
    %220 = arith.divf %219, %218 : vector<1x16xf32>
    %221 = vector.extract_strided_slice %176 {offsets = [0, 48], sizes = [1, 16], strides = [1, 1]} : vector<1x64xf32> to vector<1x16xf32>
    %cst_107 = arith.constant 0.000000e+00 : f32
    %222 = vector.broadcast %cst_107 : f32 to vector<1x16xf32>
    %223 = arith.subf %222, %221 : vector<1x16xf32>
    %224 = math.exp %223 : vector<1x16xf32>
    %cst_108 = arith.constant 1.000000e+00 : f32
    %225 = vector.broadcast %cst_108 : f32 to vector<1x16xf32>
    %226 = arith.addf %225, %224 : vector<1x16xf32>
    %cst_109 = arith.constant 1.000000e+00 : f32
    %227 = vector.broadcast %cst_109 : f32 to vector<1x16xf32>
    %228 = arith.divf %227, %226 : vector<1x16xf32>
    %229 = arith.mulf %200, %168 : vector<1x16xf32>
    %230 = arith.mulf %184, %210 : vector<1x16xf32>
    %231 = arith.addf %229, %230 : vector<1x16xf32>
    %232 = arith.mulf %208, %170 : vector<1x16xf32>
    %233 = arith.mulf %192, %212 : vector<1x16xf32>
    %234 = arith.addf %232, %233 : vector<1x16xf32>
    %235 = math.tanh %231 : vector<1x16xf32>
    %236 = arith.mulf %220, %235 : vector<1x16xf32>
    %237 = math.tanh %234 : vector<1x16xf32>
    %238 = arith.mulf %228, %237 : vector<1x16xf32>
    %c0_110 = arith.constant 0 : index
    %c0_111 = arith.constant 0 : index
    %239 = vector.load %arg49[%c0_110, %c0_111] : memref<8x16xf32, #tpu.memory_space<vmem>>, vector<1x16xf32>
    tpu.vector_store %arg49[%c0_110, %c0_111], %236 {strides = array<i32>} : memref<8x16xf32, #tpu.memory_space<vmem>>, vector<1x16xf32>,
    %c7 = arith.constant 7 : index
    %c0_112 = arith.constant 0 : index
    %240 = vector.load %arg50[%c7, %c0_112] : memref<8x16xf32, #tpu.memory_space<vmem>>, vector<1x16xf32>
    tpu.vector_store %arg50[%c7, %c0_112], %238 {strides = array<i32>} : memref<8x16xf32, #tpu.memory_space<vmem>>, vector<1x16xf32>,
    %241 = vector.extract_strided_slice %159 {offsets = [1, 0], sizes = [1, 64], strides = [1, 1]} : vector<8x64xf32> to vector<1x64xf32>
    %cst_113 = arith.constant dense<0.000000e+00> : vector<1x64xf32>
    %242 = tpu.matmul %236, %165, %cst_113 {dimension_numbers = #tpu.dot_dimension_numbers<[1], [0], [0], [1], [0, 0, 1, 1], [], []>} : vector<1x16xf32>, vector<16x64xf32>, vector<1x64xf32> -> vector<1x64xf32>
    %243 = arith.addf %241, %242 : vector<1x64xf32>
    %244 = vector.extract_strided_slice %164 {offsets = [6, 0], sizes = [1, 64], strides = [1, 1]} : vector<8x64xf32> to vector<1x64xf32>
    %cst_114 = arith.constant dense<0.000000e+00> : vector<1x64xf32>
    %245 = tpu.matmul %238, %166, %cst_114 {dimension_numbers = #tpu.dot_dimension_numbers<[1], [0], [0], [1], [0, 0, 1, 1], [], []>} : vector<1x16xf32>, vector<16x64xf32>, vector<1x64xf32> -> vector<1x64xf32>
    %246 = arith.addf %244, %245 : vector<1x64xf32>
    %247 = vector.extract_strided_slice %243 {offsets = [0, 0], sizes = [1, 16], strides = [1, 1]} : vector<1x64xf32> to vector<1x16xf32>
    %cst_115 = arith.constant 0.000000e+00 : f32
    %248 = vector.broadcast %cst_115 : f32 to vector<1x16xf32>
    %249 = arith.subf %248, %247 : vector<1x16xf32>
    %250 = math.exp %249 : vector<1x16xf32>
    %cst_116 = arith.constant 1.000000e+00 : f32
    %251 = vector.broadcast %cst_116 : f32 to vector<1x16xf32>
    %252 = arith.addf %251, %250 : vector<1x16xf32>
    %cst_117 = arith.constant 1.000000e+00 : f32
    %253 = vector.broadcast %cst_117 : f32 to vector<1x16xf32>
    %254 = arith.divf %253, %252 : vector<1x16xf32>
    %255 = vector.extract_strided_slice %246 {offsets = [0, 0], sizes = [1, 16], strides = [1, 1]} : vector<1x64xf32> to vector<1x16xf32>
    %cst_118 = arith.constant 0.000000e+00 : f32
    %256 = vector.broadcast %cst_118 : f32 to vector<1x16xf32>
    %257 = arith.subf %256, %255 : vector<1x16xf32>
    %258 = math.exp %257 : vector<1x16xf32>
    %cst_119 = arith.constant 1.000000e+00 : f32
    %259 = vector.broadcast %cst_119 : f32 to vector<1x16xf32>
    %260 = arith.addf %259, %258 : vector<1x16xf32>
    %cst_120 = arith.constant 1.000000e+00 : f32
    %261 = vector.broadcast %cst_120 : f32 to vector<1x16xf32>
    %262 = arith.divf %261, %260 : vector<1x16xf32>
    %263 = vector.extract_strided_slice %243 {offsets = [0, 16], sizes = [1, 16], strides = [1, 1]} : vector<1x64xf32> to vector<1x16xf32>
    %cst_121 = arith.constant 0.000000e+00 : f32
    %264 = vector.broadcast %cst_121 : f32 to vector<1x16xf32>
    %265 = arith.subf %264, %263 : vector<1x16xf32>
    %266 = math.exp %265 : vector<1x16xf32>
    %cst_122 = arith.constant 1.000000e+00 : f32
    %267 = vector.broadcast %cst_122 : f32 to vector<1x16xf32>
    %268 = arith.addf %267, %266 : vector<1x16xf32>
    %cst_123 = arith.constant 1.000000e+00 : f32
    %269 = vector.broadcast %cst_123 : f32 to vector<1x16xf32>
    %270 = arith.divf %269, %268 : vector<1x16xf32>
    %271 = vector.extract_strided_slice %246 {offsets = [0, 16], sizes = [1, 16], strides = [1, 1]} : vector<1x64xf32> to vector<1x16xf32>
    %cst_124 = arith.constant 0.000000e+00 : f32
    %272 = vector.broadcast %cst_124 : f32 to vector<1x16xf32>
    %273 = arith.subf %272, %271 : vector<1x16xf32>
    %274 = math.exp %273 : vector<1x16xf32>
    %cst_125 = arith.constant 1.000000e+00 : f32
    %275 = vector.broadcast %cst_125 : f32 to vector<1x16xf32>
    %276 = arith.addf %275, %274 : vector<1x16xf32>
    %cst_126 = arith.constant 1.000000e+00 : f32
    %277 = vector.broadcast %cst_126 : f32 to vector<1x16xf32>
    %278 = arith.divf %277, %276 : vector<1x16xf32>
    %279 = vector.extract_strided_slice %243 {offsets = [0, 32], sizes = [1, 16], strides = [1, 1]} : vector<1x64xf32> to vector<1x16xf32>
    %280 = math.tanh %279 : vector<1x16xf32>
    %281 = vector.extract_strided_slice %246 {offsets = [0, 32], sizes = [1, 16], strides = [1, 1]} : vector<1x64xf32> to vector<1x16xf32>
    %282 = math.tanh %281 : vector<1x16xf32>
    %283 = vector.extract_strided_slice %243 {offsets = [0, 48], sizes = [1, 16], strides = [1, 1]} : vector<1x64xf32> to vector<1x16xf32>
    %cst_127 = arith.constant 0.000000e+00 : f32
    %284 = vector.broadcast %cst_127 : f32 to vector<1x16xf32>
    %285 = arith.subf %284, %283 : vector<1x16xf32>
    %286 = math.exp %285 : vector<1x16xf32>
    %cst_128 = arith.constant 1.000000e+00 : f32
    %287 = vector.broadcast %cst_128 : f32 to vector<1x16xf32>
    %288 = arith.addf %287, %286 : vector<1x16xf32>
    %cst_129 = arith.constant 1.000000e+00 : f32
    %289 = vector.broadcast %cst_129 : f32 to vector<1x16xf32>
    %290 = arith.divf %289, %288 : vector<1x16xf32>
    %291 = vector.extract_strided_slice %246 {offsets = [0, 48], sizes = [1, 16], strides = [1, 1]} : vector<1x64xf32> to vector<1x16xf32>
    %cst_130 = arith.constant 0.000000e+00 : f32
    %292 = vector.broadcast %cst_130 : f32 to vector<1x16xf32>
    %293 = arith.subf %292, %291 : vector<1x16xf32>
    %294 = math.exp %293 : vector<1x16xf32>
    %cst_131 = arith.constant 1.000000e+00 : f32
    %295 = vector.broadcast %cst_131 : f32 to vector<1x16xf32>
    %296 = arith.addf %295, %294 : vector<1x16xf32>
    %cst_132 = arith.constant 1.000000e+00 : f32
    %297 = vector.broadcast %cst_132 : f32 to vector<1x16xf32>
    %298 = arith.divf %297, %296 : vector<1x16xf32>
    %299 = arith.mulf %270, %231 : vector<1x16xf32>
    %300 = arith.mulf %254, %280 : vector<1x16xf32>
    %301 = arith.addf %299, %300 : vector<1x16xf32>
    %302 = arith.mulf %278, %234 : vector<1x16xf32>
    %303 = arith.mulf %262, %282 : vector<1x16xf32>
    %304 = arith.addf %302, %303 : vector<1x16xf32>
    %305 = math.tanh %301 : vector<1x16xf32>
    %306 = arith.mulf %290, %305 : vector<1x16xf32>
    %307 = math.tanh %304 : vector<1x16xf32>
    %308 = arith.mulf %298, %307 : vector<1x16xf32>
    %c1_133 = arith.constant 1 : index
    %c0_134 = arith.constant 0 : index
    %309 = vector.load %arg49[%c1_133, %c0_134] : memref<8x16xf32, #tpu.memory_space<vmem>>, vector<1x16xf32>
    tpu.vector_store %arg49[%c1_133, %c0_134], %306 {strides = array<i32>} : memref<8x16xf32, #tpu.memory_space<vmem>>, vector<1x16xf32>,
    %c6 = arith.constant 6 : index
    %c0_135 = arith.constant 0 : index
    %310 = vector.load %arg50[%c6, %c0_135] : memref<8x16xf32, #tpu.memory_space<vmem>>, vector<1x16xf32>
    tpu.vector_store %arg50[%c6, %c0_135], %308 {strides = array<i32>} : memref<8x16xf32, #tpu.memory_space<vmem>>, vector<1x16xf32>,
    %311 = vector.extract_strided_slice %159 {offsets = [2, 0], sizes = [1, 64], strides = [1, 1]} : vector<8x64xf32> to vector<1x64xf32>
    %cst_136 = arith.constant dense<0.000000e+00> : vector<1x64xf32>
    %312 = tpu.matmul %306, %165, %cst_136 {dimension_numbers = #tpu.dot_dimension_numbers<[1], [0], [0], [1], [0, 0, 1, 1], [], []>} : vector<1x16xf32>, vector<16x64xf32>, vector<1x64xf32> -> vector<1x64xf32>
    %313 = arith.addf %311, %312 : vector<1x64xf32>
    %314 = vector.extract_strided_slice %164 {offsets = [5, 0], sizes = [1, 64], strides = [1, 1]} : vector<8x64xf32> to vector<1x64xf32>
    %cst_137 = arith.constant dense<0.000000e+00> : vector<1x64xf32>
    %315 = tpu.matmul %308, %166, %cst_137 {dimension_numbers = #tpu.dot_dimension_numbers<[1], [0], [0], [1], [0, 0, 1, 1], [], []>} : vector<1x16xf32>, vector<16x64xf32>, vector<1x64xf32> -> vector<1x64xf32>
    %316 = arith.addf %314, %315 : vector<1x64xf32>
    %317 = vector.extract_strided_slice %313 {offsets = [0, 0], sizes = [1, 16], strides = [1, 1]} : vector<1x64xf32> to vector<1x16xf32>
    %cst_138 = arith.constant 0.000000e+00 : f32
    %318 = vector.broadcast %cst_138 : f32 to vector<1x16xf32>
    %319 = arith.subf %318, %317 : vector<1x16xf32>
    %320 = math.exp %319 : vector<1x16xf32>
    %cst_139 = arith.constant 1.000000e+00 : f32
    %321 = vector.broadcast %cst_139 : f32 to vector<1x16xf32>
    %322 = arith.addf %321, %320 : vector<1x16xf32>
    %cst_140 = arith.constant 1.000000e+00 : f32
    %323 = vector.broadcast %cst_140 : f32 to vector<1x16xf32>
    %324 = arith.divf %323, %322 : vector<1x16xf32>
    %325 = vector.extract_strided_slice %316 {offsets = [0, 0], sizes = [1, 16], strides = [1, 1]} : vector<1x64xf32> to vector<1x16xf32>
    %cst_141 = arith.constant 0.000000e+00 : f32
    %326 = vector.broadcast %cst_141 : f32 to vector<1x16xf32>
    %327 = arith.subf %326, %325 : vector<1x16xf32>
    %328 = math.exp %327 : vector<1x16xf32>
    %cst_142 = arith.constant 1.000000e+00 : f32
    %329 = vector.broadcast %cst_142 : f32 to vector<1x16xf32>
    %330 = arith.addf %329, %328 : vector<1x16xf32>
    %cst_143 = arith.constant 1.000000e+00 : f32
    %331 = vector.broadcast %cst_143 : f32 to vector<1x16xf32>
    %332 = arith.divf %331, %330 : vector<1x16xf32>
    %333 = vector.extract_strided_slice %313 {offsets = [0, 16], sizes = [1, 16], strides = [1, 1]} : vector<1x64xf32> to vector<1x16xf32>
    %cst_144 = arith.constant 0.000000e+00 : f32
    %334 = vector.broadcast %cst_144 : f32 to vector<1x16xf32>
    %335 = arith.subf %334, %333 : vector<1x16xf32>
    %336 = math.exp %335 : vector<1x16xf32>
    %cst_145 = arith.constant 1.000000e+00 : f32
    %337 = vector.broadcast %cst_145 : f32 to vector<1x16xf32>
    %338 = arith.addf %337, %336 : vector<1x16xf32>
    %cst_146 = arith.constant 1.000000e+00 : f32
    %339 = vector.broadcast %cst_146 : f32 to vector<1x16xf32>
    %340 = arith.divf %339, %338 : vector<1x16xf32>
    %341 = vector.extract_strided_slice %316 {offsets = [0, 16], sizes = [1, 16], strides = [1, 1]} : vector<1x64xf32> to vector<1x16xf32>
    %cst_147 = arith.constant 0.000000e+00 : f32
    %342 = vector.broadcast %cst_147 : f32 to vector<1x16xf32>
    %343 = arith.subf %342, %341 : vector<1x16xf32>
    %344 = math.exp %343 : vector<1x16xf32>
    %cst_148 = arith.constant 1.000000e+00 : f32
    %345 = vector.broadcast %cst_148 : f32 to vector<1x16xf32>
    %346 = arith.addf %345, %344 : vector<1x16xf32>
    %cst_149 = arith.constant 1.000000e+00 : f32
    %347 = vector.broadcast %cst_149 : f32 to vector<1x16xf32>
    %348 = arith.divf %347, %346 : vector<1x16xf32>
    %349 = vector.extract_strided_slice %313 {offsets = [0, 32], sizes = [1, 16], strides = [1, 1]} : vector<1x64xf32> to vector<1x16xf32>
    %350 = math.tanh %349 : vector<1x16xf32>
    %351 = vector.extract_strided_slice %316 {offsets = [0, 32], sizes = [1, 16], strides = [1, 1]} : vector<1x64xf32> to vector<1x16xf32>
    %352 = math.tanh %351 : vector<1x16xf32>
    %353 = vector.extract_strided_slice %313 {offsets = [0, 48], sizes = [1, 16], strides = [1, 1]} : vector<1x64xf32> to vector<1x16xf32>
    %cst_150 = arith.constant 0.000000e+00 : f32
    %354 = vector.broadcast %cst_150 : f32 to vector<1x16xf32>
    %355 = arith.subf %354, %353 : vector<1x16xf32>
    %356 = math.exp %355 : vector<1x16xf32>
    %cst_151 = arith.constant 1.000000e+00 : f32
    %357 = vector.broadcast %cst_151 : f32 to vector<1x16xf32>
    %358 = arith.addf %357, %356 : vector<1x16xf32>
    %cst_152 = arith.constant 1.000000e+00 : f32
    %359 = vector.broadcast %cst_152 : f32 to vector<1x16xf32>
    %360 = arith.divf %359, %358 : vector<1x16xf32>
    %361 = vector.extract_strided_slice %316 {offsets = [0, 48], sizes = [1, 16], strides = [1, 1]} : vector<1x64xf32> to vector<1x16xf32>
    %cst_153 = arith.constant 0.000000e+00 : f32
    %362 = vector.broadcast %cst_153 : f32 to vector<1x16xf32>
    %363 = arith.subf %362, %361 : vector<1x16xf32>
    %364 = math.exp %363 : vector<1x16xf32>
    %cst_154 = arith.constant 1.000000e+00 : f32
    %365 = vector.broadcast %cst_154 : f32 to vector<1x16xf32>
    %366 = arith.addf %365, %364 : vector<1x16xf32>
    %cst_155 = arith.constant 1.000000e+00 : f32
    %367 = vector.broadcast %cst_155 : f32 to vector<1x16xf32>
    %368 = arith.divf %367, %366 : vector<1x16xf32>
    %369 = arith.mulf %340, %301 : vector<1x16xf32>
    %370 = arith.mulf %324, %350 : vector<1x16xf32>
    %371 = arith.addf %369, %370 : vector<1x16xf32>
    %372 = arith.mulf %348, %304 : vector<1x16xf32>
    %373 = arith.mulf %332, %352 : vector<1x16xf32>
    %374 = arith.addf %372, %373 : vector<1x16xf32>
    %375 = math.tanh %371 : vector<1x16xf32>
    %376 = arith.mulf %360, %375 : vector<1x16xf32>
    %377 = math.tanh %374 : vector<1x16xf32>
    %378 = arith.mulf %368, %377 : vector<1x16xf32>
    %c2_156 = arith.constant 2 : index
    %c0_157 = arith.constant 0 : index
    %379 = vector.load %arg49[%c2_156, %c0_157] : memref<8x16xf32, #tpu.memory_space<vmem>>, vector<1x16xf32>
    tpu.vector_store %arg49[%c2_156, %c0_157], %376 {strides = array<i32>} : memref<8x16xf32, #tpu.memory_space<vmem>>, vector<1x16xf32>,
    %c5 = arith.constant 5 : index
    %c0_158 = arith.constant 0 : index
    %380 = vector.load %arg50[%c5, %c0_158] : memref<8x16xf32, #tpu.memory_space<vmem>>, vector<1x16xf32>
    tpu.vector_store %arg50[%c5, %c0_158], %378 {strides = array<i32>} : memref<8x16xf32, #tpu.memory_space<vmem>>, vector<1x16xf32>,
    %381 = vector.extract_strided_slice %159 {offsets = [3, 0], sizes = [1, 64], strides = [1, 1]} : vector<8x64xf32> to vector<1x64xf32>
    %cst_159 = arith.constant dense<0.000000e+00> : vector<1x64xf32>
    %382 = tpu.matmul %376, %165, %cst_159 {dimension_numbers = #tpu.dot_dimension_numbers<[1], [0], [0], [1], [0, 0, 1, 1], [], []>} : vector<1x16xf32>, vector<16x64xf32>, vector<1x64xf32> -> vector<1x64xf32>
    %383 = arith.addf %381, %382 : vector<1x64xf32>
    %384 = vector.extract_strided_slice %164 {offsets = [4, 0], sizes = [1, 64], strides = [1, 1]} : vector<8x64xf32> to vector<1x64xf32>
    %cst_160 = arith.constant dense<0.000000e+00> : vector<1x64xf32>
    %385 = tpu.matmul %378, %166, %cst_160 {dimension_numbers = #tpu.dot_dimension_numbers<[1], [0], [0], [1], [0, 0, 1, 1], [], []>} : vector<1x16xf32>, vector<16x64xf32>, vector<1x64xf32> -> vector<1x64xf32>
    %386 = arith.addf %384, %385 : vector<1x64xf32>
    %387 = vector.extract_strided_slice %383 {offsets = [0, 0], sizes = [1, 16], strides = [1, 1]} : vector<1x64xf32> to vector<1x16xf32>
    %cst_161 = arith.constant 0.000000e+00 : f32
    %388 = vector.broadcast %cst_161 : f32 to vector<1x16xf32>
    %389 = arith.subf %388, %387 : vector<1x16xf32>
    %390 = math.exp %389 : vector<1x16xf32>
    %cst_162 = arith.constant 1.000000e+00 : f32
    %391 = vector.broadcast %cst_162 : f32 to vector<1x16xf32>
    %392 = arith.addf %391, %390 : vector<1x16xf32>
    %cst_163 = arith.constant 1.000000e+00 : f32
    %393 = vector.broadcast %cst_163 : f32 to vector<1x16xf32>
    %394 = arith.divf %393, %392 : vector<1x16xf32>
    %395 = vector.extract_strided_slice %386 {offsets = [0, 0], sizes = [1, 16], strides = [1, 1]} : vector<1x64xf32> to vector<1x16xf32>
    %cst_164 = arith.constant 0.000000e+00 : f32
    %396 = vector.broadcast %cst_164 : f32 to vector<1x16xf32>
    %397 = arith.subf %396, %395 : vector<1x16xf32>
    %398 = math.exp %397 : vector<1x16xf32>
    %cst_165 = arith.constant 1.000000e+00 : f32
    %399 = vector.broadcast %cst_165 : f32 to vector<1x16xf32>
    %400 = arith.addf %399, %398 : vector<1x16xf32>
    %cst_166 = arith.constant 1.000000e+00 : f32
    %401 = vector.broadcast %cst_166 : f32 to vector<1x16xf32>
    %402 = arith.divf %401, %400 : vector<1x16xf32>
    %403 = vector.extract_strided_slice %383 {offsets = [0, 16], sizes = [1, 16], strides = [1, 1]} : vector<1x64xf32> to vector<1x16xf32>
    %cst_167 = arith.constant 0.000000e+00 : f32
    %404 = vector.broadcast %cst_167 : f32 to vector<1x16xf32>
    %405 = arith.subf %404, %403 : vector<1x16xf32>
    %406 = math.exp %405 : vector<1x16xf32>
    %cst_168 = arith.constant 1.000000e+00 : f32
    %407 = vector.broadcast %cst_168 : f32 to vector<1x16xf32>
    %408 = arith.addf %407, %406 : vector<1x16xf32>
    %cst_169 = arith.constant 1.000000e+00 : f32
    %409 = vector.broadcast %cst_169 : f32 to vector<1x16xf32>
    %410 = arith.divf %409, %408 : vector<1x16xf32>
    %411 = vector.extract_strided_slice %386 {offsets = [0, 16], sizes = [1, 16], strides = [1, 1]} : vector<1x64xf32> to vector<1x16xf32>
    %cst_170 = arith.constant 0.000000e+00 : f32
    %412 = vector.broadcast %cst_170 : f32 to vector<1x16xf32>
    %413 = arith.subf %412, %411 : vector<1x16xf32>
    %414 = math.exp %413 : vector<1x16xf32>
    %cst_171 = arith.constant 1.000000e+00 : f32
    %415 = vector.broadcast %cst_171 : f32 to vector<1x16xf32>
    %416 = arith.addf %415, %414 : vector<1x16xf32>
    %cst_172 = arith.constant 1.000000e+00 : f32
    %417 = vector.broadcast %cst_172 : f32 to vector<1x16xf32>
    %418 = arith.divf %417, %416 : vector<1x16xf32>
    %419 = vector.extract_strided_slice %383 {offsets = [0, 32], sizes = [1, 16], strides = [1, 1]} : vector<1x64xf32> to vector<1x16xf32>
    %420 = math.tanh %419 : vector<1x16xf32>
    %421 = vector.extract_strided_slice %386 {offsets = [0, 32], sizes = [1, 16], strides = [1, 1]} : vector<1x64xf32> to vector<1x16xf32>
    %422 = math.tanh %421 : vector<1x16xf32>
    %423 = vector.extract_strided_slice %383 {offsets = [0, 48], sizes = [1, 16], strides = [1, 1]} : vector<1x64xf32> to vector<1x16xf32>
    %cst_173 = arith.constant 0.000000e+00 : f32
    %424 = vector.broadcast %cst_173 : f32 to vector<1x16xf32>
    %425 = arith.subf %424, %423 : vector<1x16xf32>
    %426 = math.exp %425 : vector<1x16xf32>
    %cst_174 = arith.constant 1.000000e+00 : f32
    %427 = vector.broadcast %cst_174 : f32 to vector<1x16xf32>
    %428 = arith.addf %427, %426 : vector<1x16xf32>
    %cst_175 = arith.constant 1.000000e+00 : f32
    %429 = vector.broadcast %cst_175 : f32 to vector<1x16xf32>
    %430 = arith.divf %429, %428 : vector<1x16xf32>
    %431 = vector.extract_strided_slice %386 {offsets = [0, 48], sizes = [1, 16], strides = [1, 1]} : vector<1x64xf32> to vector<1x16xf32>
    %cst_176 = arith.constant 0.000000e+00 : f32
    %432 = vector.broadcast %cst_176 : f32 to vector<1x16xf32>
    %433 = arith.subf %432, %431 : vector<1x16xf32>
    %434 = math.exp %433 : vector<1x16xf32>
    %cst_177 = arith.constant 1.000000e+00 : f32
    %435 = vector.broadcast %cst_177 : f32 to vector<1x16xf32>
    %436 = arith.addf %435, %434 : vector<1x16xf32>
    %cst_178 = arith.constant 1.000000e+00 : f32
    %437 = vector.broadcast %cst_178 : f32 to vector<1x16xf32>
    %438 = arith.divf %437, %436 : vector<1x16xf32>
    %439 = arith.mulf %410, %371 : vector<1x16xf32>
    %440 = arith.mulf %394, %420 : vector<1x16xf32>
    %441 = arith.addf %439, %440 : vector<1x16xf32>
    %442 = arith.mulf %418, %374 : vector<1x16xf32>
    %443 = arith.mulf %402, %422 : vector<1x16xf32>
    %444 = arith.addf %442, %443 : vector<1x16xf32>
    %445 = math.tanh %441 : vector<1x16xf32>
    %446 = arith.mulf %430, %445 : vector<1x16xf32>
    %447 = math.tanh %444 : vector<1x16xf32>
    %448 = arith.mulf %438, %447 : vector<1x16xf32>
    %c3 = arith.constant 3 : index
    %c0_179 = arith.constant 0 : index
    %449 = vector.load %arg49[%c3, %c0_179] : memref<8x16xf32, #tpu.memory_space<vmem>>, vector<1x16xf32>
    tpu.vector_store %arg49[%c3, %c0_179], %446 {strides = array<i32>} : memref<8x16xf32, #tpu.memory_space<vmem>>, vector<1x16xf32>,
    %c4 = arith.constant 4 : index
    %c0_180 = arith.constant 0 : index
    %450 = vector.load %arg50[%c4, %c0_180] : memref<8x16xf32, #tpu.memory_space<vmem>>, vector<1x16xf32>
    tpu.vector_store %arg50[%c4, %c0_180], %448 {strides = array<i32>} : memref<8x16xf32, #tpu.memory_space<vmem>>, vector<1x16xf32>,
    %451 = vector.extract_strided_slice %159 {offsets = [4, 0], sizes = [1, 64], strides = [1, 1]} : vector<8x64xf32> to vector<1x64xf32>
    %cst_181 = arith.constant dense<0.000000e+00> : vector<1x64xf32>
    %452 = tpu.matmul %446, %165, %cst_181 {dimension_numbers = #tpu.dot_dimension_numbers<[1], [0], [0], [1], [0, 0, 1, 1], [], []>} : vector<1x16xf32>, vector<16x64xf32>, vector<1x64xf32> -> vector<1x64xf32>
    %453 = arith.addf %451, %452 : vector<1x64xf32>
    %454 = vector.extract_strided_slice %164 {offsets = [3, 0], sizes = [1, 64], strides = [1, 1]} : vector<8x64xf32> to vector<1x64xf32>
    %cst_182 = arith.constant dense<0.000000e+00> : vector<1x64xf32>
    %455 = tpu.matmul %448, %166, %cst_182 {dimension_numbers = #tpu.dot_dimension_numbers<[1], [0], [0], [1], [0, 0, 1, 1], [], []>} : vector<1x16xf32>, vector<16x64xf32>, vector<1x64xf32> -> vector<1x64xf32>
    %456 = arith.addf %454, %455 : vector<1x64xf32>
    %457 = vector.extract_strided_slice %453 {offsets = [0, 0], sizes = [1, 16], strides = [1, 1]} : vector<1x64xf32> to vector<1x16xf32>
    %cst_183 = arith.constant 0.000000e+00 : f32
    %458 = vector.broadcast %cst_183 : f32 to vector<1x16xf32>
    %459 = arith.subf %458, %457 : vector<1x16xf32>
    %460 = math.exp %459 : vector<1x16xf32>
    %cst_184 = arith.constant 1.000000e+00 : f32
    %461 = vector.broadcast %cst_184 : f32 to vector<1x16xf32>
    %462 = arith.addf %461, %460 : vector<1x16xf32>
    %cst_185 = arith.constant 1.000000e+00 : f32
    %463 = vector.broadcast %cst_185 : f32 to vector<1x16xf32>
    %464 = arith.divf %463, %462 : vector<1x16xf32>
    %465 = vector.extract_strided_slice %456 {offsets = [0, 0], sizes = [1, 16], strides = [1, 1]} : vector<1x64xf32> to vector<1x16xf32>
    %cst_186 = arith.constant 0.000000e+00 : f32
    %466 = vector.broadcast %cst_186 : f32 to vector<1x16xf32>
    %467 = arith.subf %466, %465 : vector<1x16xf32>
    %468 = math.exp %467 : vector<1x16xf32>
    %cst_187 = arith.constant 1.000000e+00 : f32
    %469 = vector.broadcast %cst_187 : f32 to vector<1x16xf32>
    %470 = arith.addf %469, %468 : vector<1x16xf32>
    %cst_188 = arith.constant 1.000000e+00 : f32
    %471 = vector.broadcast %cst_188 : f32 to vector<1x16xf32>
    %472 = arith.divf %471, %470 : vector<1x16xf32>
    %473 = vector.extract_strided_slice %453 {offsets = [0, 16], sizes = [1, 16], strides = [1, 1]} : vector<1x64xf32> to vector<1x16xf32>
    %cst_189 = arith.constant 0.000000e+00 : f32
    %474 = vector.broadcast %cst_189 : f32 to vector<1x16xf32>
    %475 = arith.subf %474, %473 : vector<1x16xf32>
    %476 = math.exp %475 : vector<1x16xf32>
    %cst_190 = arith.constant 1.000000e+00 : f32
    %477 = vector.broadcast %cst_190 : f32 to vector<1x16xf32>
    %478 = arith.addf %477, %476 : vector<1x16xf32>
    %cst_191 = arith.constant 1.000000e+00 : f32
    %479 = vector.broadcast %cst_191 : f32 to vector<1x16xf32>
    %480 = arith.divf %479, %478 : vector<1x16xf32>
    %481 = vector.extract_strided_slice %456 {offsets = [0, 16], sizes = [1, 16], strides = [1, 1]} : vector<1x64xf32> to vector<1x16xf32>
    %cst_192 = arith.constant 0.000000e+00 : f32
    %482 = vector.broadcast %cst_192 : f32 to vector<1x16xf32>
    %483 = arith.subf %482, %481 : vector<1x16xf32>
    %484 = math.exp %483 : vector<1x16xf32>
    %cst_193 = arith.constant 1.000000e+00 : f32
    %485 = vector.broadcast %cst_193 : f32 to vector<1x16xf32>
    %486 = arith.addf %485, %484 : vector<1x16xf32>
    %cst_194 = arith.constant 1.000000e+00 : f32
    %487 = vector.broadcast %cst_194 : f32 to vector<1x16xf32>
    %488 = arith.divf %487, %486 : vector<1x16xf32>
    %489 = vector.extract_strided_slice %453 {offsets = [0, 32], sizes = [1, 16], strides = [1, 1]} : vector<1x64xf32> to vector<1x16xf32>
    %490 = math.tanh %489 : vector<1x16xf32>
    %491 = vector.extract_strided_slice %456 {offsets = [0, 32], sizes = [1, 16], strides = [1, 1]} : vector<1x64xf32> to vector<1x16xf32>
    %492 = math.tanh %491 : vector<1x16xf32>
    %493 = vector.extract_strided_slice %453 {offsets = [0, 48], sizes = [1, 16], strides = [1, 1]} : vector<1x64xf32> to vector<1x16xf32>
    %cst_195 = arith.constant 0.000000e+00 : f32
    %494 = vector.broadcast %cst_195 : f32 to vector<1x16xf32>
    %495 = arith.subf %494, %493 : vector<1x16xf32>
    %496 = math.exp %495 : vector<1x16xf32>
    %cst_196 = arith.constant 1.000000e+00 : f32
    %497 = vector.broadcast %cst_196 : f32 to vector<1x16xf32>
    %498 = arith.addf %497, %496 : vector<1x16xf32>
    %cst_197 = arith.constant 1.000000e+00 : f32
    %499 = vector.broadcast %cst_197 : f32 to vector<1x16xf32>
    %500 = arith.divf %499, %498 : vector<1x16xf32>
    %501 = vector.extract_strided_slice %456 {offsets = [0, 48], sizes = [1, 16], strides = [1, 1]} : vector<1x64xf32> to vector<1x16xf32>
    %cst_198 = arith.constant 0.000000e+00 : f32
    %502 = vector.broadcast %cst_198 : f32 to vector<1x16xf32>
    %503 = arith.subf %502, %501 : vector<1x16xf32>
    %504 = math.exp %503 : vector<1x16xf32>
    %cst_199 = arith.constant 1.000000e+00 : f32
    %505 = vector.broadcast %cst_199 : f32 to vector<1x16xf32>
    %506 = arith.addf %505, %504 : vector<1x16xf32>
    %cst_200 = arith.constant 1.000000e+00 : f32
    %507 = vector.broadcast %cst_200 : f32 to vector<1x16xf32>
    %508 = arith.divf %507, %506 : vector<1x16xf32>
    %509 = arith.mulf %480, %441 : vector<1x16xf32>
    %510 = arith.mulf %464, %490 : vector<1x16xf32>
    %511 = arith.addf %509, %510 : vector<1x16xf32>
    %512 = arith.mulf %488, %444 : vector<1x16xf32>
    %513 = arith.mulf %472, %492 : vector<1x16xf32>
    %514 = arith.addf %512, %513 : vector<1x16xf32>
    %515 = math.tanh %511 : vector<1x16xf32>
    %516 = arith.mulf %500, %515 : vector<1x16xf32>
    %517 = math.tanh %514 : vector<1x16xf32>
    %518 = arith.mulf %508, %517 : vector<1x16xf32>
    %c4_201 = arith.constant 4 : index
    %c0_202 = arith.constant 0 : index
    %519 = vector.load %arg49[%c4_201, %c0_202] : memref<8x16xf32, #tpu.memory_space<vmem>>, vector<1x16xf32>
    tpu.vector_store %arg49[%c4_201, %c0_202], %516 {strides = array<i32>} : memref<8x16xf32, #tpu.memory_space<vmem>>, vector<1x16xf32>,
    %c3_203 = arith.constant 3 : index
    %c0_204 = arith.constant 0 : index
    %520 = vector.load %arg50[%c3_203, %c0_204] : memref<8x16xf32, #tpu.memory_space<vmem>>, vector<1x16xf32>
    tpu.vector_store %arg50[%c3_203, %c0_204], %518 {strides = array<i32>} : memref<8x16xf32, #tpu.memory_space<vmem>>, vector<1x16xf32>,
    %521 = vector.extract_strided_slice %159 {offsets = [5, 0], sizes = [1, 64], strides = [1, 1]} : vector<8x64xf32> to vector<1x64xf32>
    %cst_205 = arith.constant dense<0.000000e+00> : vector<1x64xf32>
    %522 = tpu.matmul %516, %165, %cst_205 {dimension_numbers = #tpu.dot_dimension_numbers<[1], [0], [0], [1], [0, 0, 1, 1], [], []>} : vector<1x16xf32>, vector<16x64xf32>, vector<1x64xf32> -> vector<1x64xf32>
    %523 = arith.addf %521, %522 : vector<1x64xf32>
    %524 = vector.extract_strided_slice %164 {offsets = [2, 0], sizes = [1, 64], strides = [1, 1]} : vector<8x64xf32> to vector<1x64xf32>
    %cst_206 = arith.constant dense<0.000000e+00> : vector<1x64xf32>
    %525 = tpu.matmul %518, %166, %cst_206 {dimension_numbers = #tpu.dot_dimension_numbers<[1], [0], [0], [1], [0, 0, 1, 1], [], []>} : vector<1x16xf32>, vector<16x64xf32>, vector<1x64xf32> -> vector<1x64xf32>
    %526 = arith.addf %524, %525 : vector<1x64xf32>
    %527 = vector.extract_strided_slice %523 {offsets = [0, 0], sizes = [1, 16], strides = [1, 1]} : vector<1x64xf32> to vector<1x16xf32>
    %cst_207 = arith.constant 0.000000e+00 : f32
    %528 = vector.broadcast %cst_207 : f32 to vector<1x16xf32>
    %529 = arith.subf %528, %527 : vector<1x16xf32>
    %530 = math.exp %529 : vector<1x16xf32>
    %cst_208 = arith.constant 1.000000e+00 : f32
    %531 = vector.broadcast %cst_208 : f32 to vector<1x16xf32>
    %532 = arith.addf %531, %530 : vector<1x16xf32>
    %cst_209 = arith.constant 1.000000e+00 : f32
    %533 = vector.broadcast %cst_209 : f32 to vector<1x16xf32>
    %534 = arith.divf %533, %532 : vector<1x16xf32>
    %535 = vector.extract_strided_slice %526 {offsets = [0, 0], sizes = [1, 16], strides = [1, 1]} : vector<1x64xf32> to vector<1x16xf32>
    %cst_210 = arith.constant 0.000000e+00 : f32
    %536 = vector.broadcast %cst_210 : f32 to vector<1x16xf32>
    %537 = arith.subf %536, %535 : vector<1x16xf32>
    %538 = math.exp %537 : vector<1x16xf32>
    %cst_211 = arith.constant 1.000000e+00 : f32
    %539 = vector.broadcast %cst_211 : f32 to vector<1x16xf32>
    %540 = arith.addf %539, %538 : vector<1x16xf32>
    %cst_212 = arith.constant 1.000000e+00 : f32
    %541 = vector.broadcast %cst_212 : f32 to vector<1x16xf32>
    %542 = arith.divf %541, %540 : vector<1x16xf32>
    %543 = vector.extract_strided_slice %523 {offsets = [0, 16], sizes = [1, 16], strides = [1, 1]} : vector<1x64xf32> to vector<1x16xf32>
    %cst_213 = arith.constant 0.000000e+00 : f32
    %544 = vector.broadcast %cst_213 : f32 to vector<1x16xf32>
    %545 = arith.subf %544, %543 : vector<1x16xf32>
    %546 = math.exp %545 : vector<1x16xf32>
    %cst_214 = arith.constant 1.000000e+00 : f32
    %547 = vector.broadcast %cst_214 : f32 to vector<1x16xf32>
    %548 = arith.addf %547, %546 : vector<1x16xf32>
    %cst_215 = arith.constant 1.000000e+00 : f32
    %549 = vector.broadcast %cst_215 : f32 to vector<1x16xf32>
    %550 = arith.divf %549, %548 : vector<1x16xf32>
    %551 = vector.extract_strided_slice %526 {offsets = [0, 16], sizes = [1, 16], strides = [1, 1]} : vector<1x64xf32> to vector<1x16xf32>
    %cst_216 = arith.constant 0.000000e+00 : f32
    %552 = vector.broadcast %cst_216 : f32 to vector<1x16xf32>
    %553 = arith.subf %552, %551 : vector<1x16xf32>
    %554 = math.exp %553 : vector<1x16xf32>
    %cst_217 = arith.constant 1.000000e+00 : f32
    %555 = vector.broadcast %cst_217 : f32 to vector<1x16xf32>
    %556 = arith.addf %555, %554 : vector<1x16xf32>
    %cst_218 = arith.constant 1.000000e+00 : f32
    %557 = vector.broadcast %cst_218 : f32 to vector<1x16xf32>
    %558 = arith.divf %557, %556 : vector<1x16xf32>
    %559 = vector.extract_strided_slice %523 {offsets = [0, 32], sizes = [1, 16], strides = [1, 1]} : vector<1x64xf32> to vector<1x16xf32>
    %560 = math.tanh %559 : vector<1x16xf32>
    %561 = vector.extract_strided_slice %526 {offsets = [0, 32], sizes = [1, 16], strides = [1, 1]} : vector<1x64xf32> to vector<1x16xf32>
    %562 = math.tanh %561 : vector<1x16xf32>
    %563 = vector.extract_strided_slice %523 {offsets = [0, 48], sizes = [1, 16], strides = [1, 1]} : vector<1x64xf32> to vector<1x16xf32>
    %cst_219 = arith.constant 0.000000e+00 : f32
    %564 = vector.broadcast %cst_219 : f32 to vector<1x16xf32>
    %565 = arith.subf %564, %563 : vector<1x16xf32>
    %566 = math.exp %565 : vector<1x16xf32>
    %cst_220 = arith.constant 1.000000e+00 : f32
    %567 = vector.broadcast %cst_220 : f32 to vector<1x16xf32>
    %568 = arith.addf %567, %566 : vector<1x16xf32>
    %cst_221 = arith.constant 1.000000e+00 : f32
    %569 = vector.broadcast %cst_221 : f32 to vector<1x16xf32>
    %570 = arith.divf %569, %568 : vector<1x16xf32>
    %571 = vector.extract_strided_slice %526 {offsets = [0, 48], sizes = [1, 16], strides = [1, 1]} : vector<1x64xf32> to vector<1x16xf32>
    %cst_222 = arith.constant 0.000000e+00 : f32
    %572 = vector.broadcast %cst_222 : f32 to vector<1x16xf32>
    %573 = arith.subf %572, %571 : vector<1x16xf32>
    %574 = math.exp %573 : vector<1x16xf32>
    %cst_223 = arith.constant 1.000000e+00 : f32
    %575 = vector.broadcast %cst_223 : f32 to vector<1x16xf32>
    %576 = arith.addf %575, %574 : vector<1x16xf32>
    %cst_224 = arith.constant 1.000000e+00 : f32
    %577 = vector.broadcast %cst_224 : f32 to vector<1x16xf32>
    %578 = arith.divf %577, %576 : vector<1x16xf32>
    %579 = arith.mulf %550, %511 : vector<1x16xf32>
    %580 = arith.mulf %534, %560 : vector<1x16xf32>
    %581 = arith.addf %579, %580 : vector<1x16xf32>
    %582 = arith.mulf %558, %514 : vector<1x16xf32>
    %583 = arith.mulf %542, %562 : vector<1x16xf32>
    %584 = arith.addf %582, %583 : vector<1x16xf32>
    %585 = math.tanh %581 : vector<1x16xf32>
    %586 = arith.mulf %570, %585 : vector<1x16xf32>
    %587 = math.tanh %584 : vector<1x16xf32>
    %588 = arith.mulf %578, %587 : vector<1x16xf32>
    %c5_225 = arith.constant 5 : index
    %c0_226 = arith.constant 0 : index
    %589 = vector.load %arg49[%c5_225, %c0_226] : memref<8x16xf32, #tpu.memory_space<vmem>>, vector<1x16xf32>
    tpu.vector_store %arg49[%c5_225, %c0_226], %586 {strides = array<i32>} : memref<8x16xf32, #tpu.memory_space<vmem>>, vector<1x16xf32>,
    %c2_227 = arith.constant 2 : index
    %c0_228 = arith.constant 0 : index
    %590 = vector.load %arg50[%c2_227, %c0_228] : memref<8x16xf32, #tpu.memory_space<vmem>>, vector<1x16xf32>
    tpu.vector_store %arg50[%c2_227, %c0_228], %588 {strides = array<i32>} : memref<8x16xf32, #tpu.memory_space<vmem>>, vector<1x16xf32>,
    %591 = vector.extract_strided_slice %159 {offsets = [6, 0], sizes = [1, 64], strides = [1, 1]} : vector<8x64xf32> to vector<1x64xf32>
    %cst_229 = arith.constant dense<0.000000e+00> : vector<1x64xf32>
    %592 = tpu.matmul %586, %165, %cst_229 {dimension_numbers = #tpu.dot_dimension_numbers<[1], [0], [0], [1], [0, 0, 1, 1], [], []>} : vector<1x16xf32>, vector<16x64xf32>, vector<1x64xf32> -> vector<1x64xf32>
    %593 = arith.addf %591, %592 : vector<1x64xf32>
    %594 = vector.extract_strided_slice %164 {offsets = [1, 0], sizes = [1, 64], strides = [1, 1]} : vector<8x64xf32> to vector<1x64xf32>
    %cst_230 = arith.constant dense<0.000000e+00> : vector<1x64xf32>
    %595 = tpu.matmul %588, %166, %cst_230 {dimension_numbers = #tpu.dot_dimension_numbers<[1], [0], [0], [1], [0, 0, 1, 1], [], []>} : vector<1x16xf32>, vector<16x64xf32>, vector<1x64xf32> -> vector<1x64xf32>
    %596 = arith.addf %594, %595 : vector<1x64xf32>
    %597 = vector.extract_strided_slice %593 {offsets = [0, 0], sizes = [1, 16], strides = [1, 1]} : vector<1x64xf32> to vector<1x16xf32>
    %cst_231 = arith.constant 0.000000e+00 : f32
    %598 = vector.broadcast %cst_231 : f32 to vector<1x16xf32>
    %599 = arith.subf %598, %597 : vector<1x16xf32>
    %600 = math.exp %599 : vector<1x16xf32>
    %cst_232 = arith.constant 1.000000e+00 : f32
    %601 = vector.broadcast %cst_232 : f32 to vector<1x16xf32>
    %602 = arith.addf %601, %600 : vector<1x16xf32>
    %cst_233 = arith.constant 1.000000e+00 : f32
    %603 = vector.broadcast %cst_233 : f32 to vector<1x16xf32>
    %604 = arith.divf %603, %602 : vector<1x16xf32>
    %605 = vector.extract_strided_slice %596 {offsets = [0, 0], sizes = [1, 16], strides = [1, 1]} : vector<1x64xf32> to vector<1x16xf32>
    %cst_234 = arith.constant 0.000000e+00 : f32
    %606 = vector.broadcast %cst_234 : f32 to vector<1x16xf32>
    %607 = arith.subf %606, %605 : vector<1x16xf32>
    %608 = math.exp %607 : vector<1x16xf32>
    %cst_235 = arith.constant 1.000000e+00 : f32
    %609 = vector.broadcast %cst_235 : f32 to vector<1x16xf32>
    %610 = arith.addf %609, %608 : vector<1x16xf32>
    %cst_236 = arith.constant 1.000000e+00 : f32
    %611 = vector.broadcast %cst_236 : f32 to vector<1x16xf32>
    %612 = arith.divf %611, %610 : vector<1x16xf32>
    %613 = vector.extract_strided_slice %593 {offsets = [0, 16], sizes = [1, 16], strides = [1, 1]} : vector<1x64xf32> to vector<1x16xf32>
    %cst_237 = arith.constant 0.000000e+00 : f32
    %614 = vector.broadcast %cst_237 : f32 to vector<1x16xf32>
    %615 = arith.subf %614, %613 : vector<1x16xf32>
    %616 = math.exp %615 : vector<1x16xf32>
    %cst_238 = arith.constant 1.000000e+00 : f32
    %617 = vector.broadcast %cst_238 : f32 to vector<1x16xf32>
    %618 = arith.addf %617, %616 : vector<1x16xf32>
    %cst_239 = arith.constant 1.000000e+00 : f32
    %619 = vector.broadcast %cst_239 : f32 to vector<1x16xf32>
    %620 = arith.divf %619, %618 : vector<1x16xf32>
    %621 = vector.extract_strided_slice %596 {offsets = [0, 16], sizes = [1, 16], strides = [1, 1]} : vector<1x64xf32> to vector<1x16xf32>
    %cst_240 = arith.constant 0.000000e+00 : f32
    %622 = vector.broadcast %cst_240 : f32 to vector<1x16xf32>
    %623 = arith.subf %622, %621 : vector<1x16xf32>
    %624 = math.exp %623 : vector<1x16xf32>
    %cst_241 = arith.constant 1.000000e+00 : f32
    %625 = vector.broadcast %cst_241 : f32 to vector<1x16xf32>
    %626 = arith.addf %625, %624 : vector<1x16xf32>
    %cst_242 = arith.constant 1.000000e+00 : f32
    %627 = vector.broadcast %cst_242 : f32 to vector<1x16xf32>
    %628 = arith.divf %627, %626 : vector<1x16xf32>
    %629 = vector.extract_strided_slice %593 {offsets = [0, 32], sizes = [1, 16], strides = [1, 1]} : vector<1x64xf32> to vector<1x16xf32>
    %630 = math.tanh %629 : vector<1x16xf32>
    %631 = vector.extract_strided_slice %596 {offsets = [0, 32], sizes = [1, 16], strides = [1, 1]} : vector<1x64xf32> to vector<1x16xf32>
    %632 = math.tanh %631 : vector<1x16xf32>
    %633 = vector.extract_strided_slice %593 {offsets = [0, 48], sizes = [1, 16], strides = [1, 1]} : vector<1x64xf32> to vector<1x16xf32>
    %cst_243 = arith.constant 0.000000e+00 : f32
    %634 = vector.broadcast %cst_243 : f32 to vector<1x16xf32>
    %635 = arith.subf %634, %633 : vector<1x16xf32>
    %636 = math.exp %635 : vector<1x16xf32>
    %cst_244 = arith.constant 1.000000e+00 : f32
    %637 = vector.broadcast %cst_244 : f32 to vector<1x16xf32>
    %638 = arith.addf %637, %636 : vector<1x16xf32>
    %cst_245 = arith.constant 1.000000e+00 : f32
    %639 = vector.broadcast %cst_245 : f32 to vector<1x16xf32>
    %640 = arith.divf %639, %638 : vector<1x16xf32>
    %641 = vector.extract_strided_slice %596 {offsets = [0, 48], sizes = [1, 16], strides = [1, 1]} : vector<1x64xf32> to vector<1x16xf32>
    %cst_246 = arith.constant 0.000000e+00 : f32
    %642 = vector.broadcast %cst_246 : f32 to vector<1x16xf32>
    %643 = arith.subf %642, %641 : vector<1x16xf32>
    %644 = math.exp %643 : vector<1x16xf32>
    %cst_247 = arith.constant 1.000000e+00 : f32
    %645 = vector.broadcast %cst_247 : f32 to vector<1x16xf32>
    %646 = arith.addf %645, %644 : vector<1x16xf32>
    %cst_248 = arith.constant 1.000000e+00 : f32
    %647 = vector.broadcast %cst_248 : f32 to vector<1x16xf32>
    %648 = arith.divf %647, %646 : vector<1x16xf32>
    %649 = arith.mulf %620, %581 : vector<1x16xf32>
    %650 = arith.mulf %604, %630 : vector<1x16xf32>
    %651 = arith.addf %649, %650 : vector<1x16xf32>
    %652 = arith.mulf %628, %584 : vector<1x16xf32>
    %653 = arith.mulf %612, %632 : vector<1x16xf32>
    %654 = arith.addf %652, %653 : vector<1x16xf32>
    %655 = math.tanh %651 : vector<1x16xf32>
    %656 = arith.mulf %640, %655 : vector<1x16xf32>
    %657 = math.tanh %654 : vector<1x16xf32>
    %658 = arith.mulf %648, %657 : vector<1x16xf32>
    %c6_249 = arith.constant 6 : index
    %c0_250 = arith.constant 0 : index
    %659 = vector.load %arg49[%c6_249, %c0_250] : memref<8x16xf32, #tpu.memory_space<vmem>>, vector<1x16xf32>
    tpu.vector_store %arg49[%c6_249, %c0_250], %656 {strides = array<i32>} : memref<8x16xf32, #tpu.memory_space<vmem>>, vector<1x16xf32>,
    %c1_251 = arith.constant 1 : index
    %c0_252 = arith.constant 0 : index
    %660 = vector.load %arg50[%c1_251, %c0_252] : memref<8x16xf32, #tpu.memory_space<vmem>>, vector<1x16xf32>
    tpu.vector_store %arg50[%c1_251, %c0_252], %658 {strides = array<i32>} : memref<8x16xf32, #tpu.memory_space<vmem>>, vector<1x16xf32>,
    %661 = vector.extract_strided_slice %159 {offsets = [7, 0], sizes = [1, 64], strides = [1, 1]} : vector<8x64xf32> to vector<1x64xf32>
    %cst_253 = arith.constant dense<0.000000e+00> : vector<1x64xf32>
    %662 = tpu.matmul %656, %165, %cst_253 {dimension_numbers = #tpu.dot_dimension_numbers<[1], [0], [0], [1], [0, 0, 1, 1], [], []>} : vector<1x16xf32>, vector<16x64xf32>, vector<1x64xf32> -> vector<1x64xf32>
    %663 = arith.addf %661, %662 : vector<1x64xf32>
    %664 = vector.extract_strided_slice %164 {offsets = [0, 0], sizes = [1, 64], strides = [1, 1]} : vector<8x64xf32> to vector<1x64xf32>
    %cst_254 = arith.constant dense<0.000000e+00> : vector<1x64xf32>
    %665 = tpu.matmul %658, %166, %cst_254 {dimension_numbers = #tpu.dot_dimension_numbers<[1], [0], [0], [1], [0, 0, 1, 1], [], []>} : vector<1x16xf32>, vector<16x64xf32>, vector<1x64xf32> -> vector<1x64xf32>
    %666 = arith.addf %664, %665 : vector<1x64xf32>
    %667 = vector.extract_strided_slice %663 {offsets = [0, 0], sizes = [1, 16], strides = [1, 1]} : vector<1x64xf32> to vector<1x16xf32>
    %cst_255 = arith.constant 0.000000e+00 : f32
    %668 = vector.broadcast %cst_255 : f32 to vector<1x16xf32>
    %669 = arith.subf %668, %667 : vector<1x16xf32>
    %670 = math.exp %669 : vector<1x16xf32>
    %cst_256 = arith.constant 1.000000e+00 : f32
    %671 = vector.broadcast %cst_256 : f32 to vector<1x16xf32>
    %672 = arith.addf %671, %670 : vector<1x16xf32>
    %cst_257 = arith.constant 1.000000e+00 : f32
    %673 = vector.broadcast %cst_257 : f32 to vector<1x16xf32>
    %674 = arith.divf %673, %672 : vector<1x16xf32>
    %675 = vector.extract_strided_slice %666 {offsets = [0, 0], sizes = [1, 16], strides = [1, 1]} : vector<1x64xf32> to vector<1x16xf32>
    %cst_258 = arith.constant 0.000000e+00 : f32
    %676 = vector.broadcast %cst_258 : f32 to vector<1x16xf32>
    %677 = arith.subf %676, %675 : vector<1x16xf32>
    %678 = math.exp %677 : vector<1x16xf32>
    %cst_259 = arith.constant 1.000000e+00 : f32
    %679 = vector.broadcast %cst_259 : f32 to vector<1x16xf32>
    %680 = arith.addf %679, %678 : vector<1x16xf32>
    %cst_260 = arith.constant 1.000000e+00 : f32
    %681 = vector.broadcast %cst_260 : f32 to vector<1x16xf32>
    %682 = arith.divf %681, %680 : vector<1x16xf32>
    %683 = vector.extract_strided_slice %663 {offsets = [0, 16], sizes = [1, 16], strides = [1, 1]} : vector<1x64xf32> to vector<1x16xf32>
    %cst_261 = arith.constant 0.000000e+00 : f32
    %684 = vector.broadcast %cst_261 : f32 to vector<1x16xf32>
    %685 = arith.subf %684, %683 : vector<1x16xf32>
    %686 = math.exp %685 : vector<1x16xf32>
    %cst_262 = arith.constant 1.000000e+00 : f32
    %687 = vector.broadcast %cst_262 : f32 to vector<1x16xf32>
    %688 = arith.addf %687, %686 : vector<1x16xf32>
    %cst_263 = arith.constant 1.000000e+00 : f32
    %689 = vector.broadcast %cst_263 : f32 to vector<1x16xf32>
    %690 = arith.divf %689, %688 : vector<1x16xf32>
    %691 = vector.extract_strided_slice %666 {offsets = [0, 16], sizes = [1, 16], strides = [1, 1]} : vector<1x64xf32> to vector<1x16xf32>
    %cst_264 = arith.constant 0.000000e+00 : f32
    %692 = vector.broadcast %cst_264 : f32 to vector<1x16xf32>
    %693 = arith.subf %692, %691 : vector<1x16xf32>
    %694 = math.exp %693 : vector<1x16xf32>
    %cst_265 = arith.constant 1.000000e+00 : f32
    %695 = vector.broadcast %cst_265 : f32 to vector<1x16xf32>
    %696 = arith.addf %695, %694 : vector<1x16xf32>
    %cst_266 = arith.constant 1.000000e+00 : f32
    %697 = vector.broadcast %cst_266 : f32 to vector<1x16xf32>
    %698 = arith.divf %697, %696 : vector<1x16xf32>
    %699 = vector.extract_strided_slice %663 {offsets = [0, 32], sizes = [1, 16], strides = [1, 1]} : vector<1x64xf32> to vector<1x16xf32>
    %700 = math.tanh %699 : vector<1x16xf32>
    %701 = vector.extract_strided_slice %666 {offsets = [0, 32], sizes = [1, 16], strides = [1, 1]} : vector<1x64xf32> to vector<1x16xf32>
    %702 = math.tanh %701 : vector<1x16xf32>
    %703 = vector.extract_strided_slice %663 {offsets = [0, 48], sizes = [1, 16], strides = [1, 1]} : vector<1x64xf32> to vector<1x16xf32>
    %cst_267 = arith.constant 0.000000e+00 : f32
    %704 = vector.broadcast %cst_267 : f32 to vector<1x16xf32>
    %705 = arith.subf %704, %703 : vector<1x16xf32>
    %706 = math.exp %705 : vector<1x16xf32>
    %cst_268 = arith.constant 1.000000e+00 : f32
    %707 = vector.broadcast %cst_268 : f32 to vector<1x16xf32>
    %708 = arith.addf %707, %706 : vector<1x16xf32>
    %cst_269 = arith.constant 1.000000e+00 : f32
    %709 = vector.broadcast %cst_269 : f32 to vector<1x16xf32>
    %710 = arith.divf %709, %708 : vector<1x16xf32>
    %711 = vector.extract_strided_slice %666 {offsets = [0, 48], sizes = [1, 16], strides = [1, 1]} : vector<1x64xf32> to vector<1x16xf32>
    %cst_270 = arith.constant 0.000000e+00 : f32
    %712 = vector.broadcast %cst_270 : f32 to vector<1x16xf32>
    %713 = arith.subf %712, %711 : vector<1x16xf32>
    %714 = math.exp %713 : vector<1x16xf32>
    %cst_271 = arith.constant 1.000000e+00 : f32
    %715 = vector.broadcast %cst_271 : f32 to vector<1x16xf32>
    %716 = arith.addf %715, %714 : vector<1x16xf32>
    %cst_272 = arith.constant 1.000000e+00 : f32
    %717 = vector.broadcast %cst_272 : f32 to vector<1x16xf32>
    %718 = arith.divf %717, %716 : vector<1x16xf32>
    %719 = arith.mulf %690, %651 : vector<1x16xf32>
    %720 = arith.mulf %674, %700 : vector<1x16xf32>
    %721 = arith.addf %719, %720 : vector<1x16xf32>
    %722 = arith.mulf %698, %654 : vector<1x16xf32>
    %723 = arith.mulf %682, %702 : vector<1x16xf32>
    %724 = arith.addf %722, %723 : vector<1x16xf32>
    %725 = math.tanh %721 : vector<1x16xf32>
    %726 = arith.mulf %710, %725 : vector<1x16xf32>
    %727 = math.tanh %724 : vector<1x16xf32>
    %728 = arith.mulf %718, %727 : vector<1x16xf32>
    %c7_273 = arith.constant 7 : index
    %c0_274 = arith.constant 0 : index
    %729 = vector.load %arg49[%c7_273, %c0_274] : memref<8x16xf32, #tpu.memory_space<vmem>>, vector<1x16xf32>
    tpu.vector_store %arg49[%c7_273, %c0_274], %726 {strides = array<i32>} : memref<8x16xf32, #tpu.memory_space<vmem>>, vector<1x16xf32>,
    %c0_275 = arith.constant 0 : index
    %c0_276 = arith.constant 0 : index
    %730 = vector.load %arg50[%c0_275, %c0_276] : memref<8x16xf32, #tpu.memory_space<vmem>>, vector<1x16xf32>
    tpu.vector_store %arg50[%c0_275, %c0_276], %728 {strides = array<i32>} : memref<8x16xf32, #tpu.memory_space<vmem>>, vector<1x16xf32>,
    %c0_277 = arith.constant 0 : index
    %c0_278 = arith.constant 0 : index
    %731 = vector.load %arg49[%c0_277, %c0_278] : memref<8x16xf32, #tpu.memory_space<vmem>>, vector<8x16xf32>
    %c0_279 = arith.constant 0 : index
    %c0_280 = arith.constant 0 : index
    %732 = vector.load %arg50[%c0_279, %c0_280] : memref<8x16xf32, #tpu.memory_space<vmem>>, vector<8x16xf32>
    %c0_281 = arith.constant 0 : index
    %c0_282 = arith.constant 0 : index
    %733 = vector.load %arg20[%c0_281, %c0_282] : memref<32x64xf32, #tpu.memory_space<vmem>>, vector<32x64xf32>
    %c0_283 = arith.constant 0 : index
    %c0_284 = arith.constant 0 : index
    %734 = vector.load %arg23[%c0_283, %c0_284] : memref<32x64xf32, #tpu.memory_space<vmem>>, vector<32x64xf32>
    %735 = vector.extract_strided_slice %733 {offsets = [0, 0], sizes = [16, 64], strides = [1, 1]} : vector<32x64xf32> to vector<16x64xf32>
    %cst_285 = arith.constant dense<0.000000e+00> : vector<8x64xf32>
    %736 = tpu.matmul %731, %735, %cst_285 {dimension_numbers = #tpu.dot_dimension_numbers<[1], [0], [0], [1], [0, 0, 1, 1], [], []>} : vector<8x16xf32>, vector<16x64xf32>, vector<8x64xf32> -> vector<8x64xf32>
    %737 = vector.extract_strided_slice %733 {offsets = [16, 0], sizes = [16, 64], strides = [1, 1]} : vector<32x64xf32> to vector<16x64xf32>
    %cst_286 = arith.constant dense<0.000000e+00> : vector<8x64xf32>
    %738 = tpu.matmul %732, %737, %cst_286 {dimension_numbers = #tpu.dot_dimension_numbers<[1], [0], [0], [1], [0, 0, 1, 1], [], []>} : vector<8x16xf32>, vector<16x64xf32>, vector<8x64xf32> -> vector<8x64xf32>
    %739 = arith.addf %736, %738 : vector<8x64xf32>
    %c0_287 = arith.constant 0 : index
    %c0_288 = arith.constant 0 : index
    %740 = vector.load %arg22[%c0_287, %c0_288] : memref<1x64xf32, #tpu.memory_space<vmem>>, vector<1x64xf32>
    %741 = vector.broadcast %740 : vector<1x64xf32> to vector<8x64xf32>
    %742 = arith.addf %739, %741 : vector<8x64xf32>
    %743 = vector.extract_strided_slice %734 {offsets = [0, 0], sizes = [16, 64], strides = [1, 1]} : vector<32x64xf32> to vector<16x64xf32>
    %cst_289 = arith.constant dense<0.000000e+00> : vector<8x64xf32>
    %744 = tpu.matmul %731, %743, %cst_289 {dimension_numbers = #tpu.dot_dimension_numbers<[1], [0], [0], [1], [0, 0, 1, 1], [], []>} : vector<8x16xf32>, vector<16x64xf32>, vector<8x64xf32> -> vector<8x64xf32>
    %745 = vector.extract_strided_slice %734 {offsets = [16, 0], sizes = [16, 64], strides = [1, 1]} : vector<32x64xf32> to vector<16x64xf32>
    %cst_290 = arith.constant dense<0.000000e+00> : vector<8x64xf32>
    %746 = tpu.matmul %732, %745, %cst_290 {dimension_numbers = #tpu.dot_dimension_numbers<[1], [0], [0], [1], [0, 0, 1, 1], [], []>} : vector<8x16xf32>, vector<16x64xf32>, vector<8x64xf32> -> vector<8x64xf32>
    %747 = arith.addf %744, %746 : vector<8x64xf32>
    %c0_291 = arith.constant 0 : index
    %c0_292 = arith.constant 0 : index
    %748 = vector.load %arg25[%c0_291, %c0_292] : memref<1x64xf32, #tpu.memory_space<vmem>>, vector<1x64xf32>
    %749 = vector.broadcast %748 : vector<1x64xf32> to vector<8x64xf32>
    %750 = arith.addf %747, %749 : vector<8x64xf32>
    %c0_293 = arith.constant 0 : index
    %c0_294 = arith.constant 0 : index
    %751 = vector.load %arg21[%c0_293, %c0_294] : memref<16x64xf32, #tpu.memory_space<vmem>>, vector<16x64xf32>
    %c0_295 = arith.constant 0 : index
    %c0_296 = arith.constant 0 : index
    %752 = vector.load %arg24[%c0_295, %c0_296] : memref<16x64xf32, #tpu.memory_space<vmem>>, vector<16x64xf32>
    %cst_297 = arith.constant 0.000000e+00 : f32
    %753 = vector.broadcast %cst_297 : f32 to vector<1x16xf32>
    %cst_298 = arith.constant 0.000000e+00 : f32
    %754 = vector.broadcast %cst_298 : f32 to vector<1x16xf32>
    %cst_299 = arith.constant 0.000000e+00 : f32
    %755 = vector.broadcast %cst_299 : f32 to vector<1x16xf32>
    %cst_300 = arith.constant 0.000000e+00 : f32
    %756 = vector.broadcast %cst_300 : f32 to vector<1x16xf32>
    %757 = vector.extract_strided_slice %742 {offsets = [0, 0], sizes = [1, 64], strides = [1, 1]} : vector<8x64xf32> to vector<1x64xf32>
    %cst_301 = arith.constant dense<0.000000e+00> : vector<1x64xf32>
    %758 = tpu.matmul %753, %751, %cst_301 {dimension_numbers = #tpu.dot_dimension_numbers<[1], [0], [0], [1], [0, 0, 1, 1], [], []>} : vector<1x16xf32>, vector<16x64xf32>, vector<1x64xf32> -> vector<1x64xf32>
    %759 = arith.addf %757, %758 : vector<1x64xf32>
    %760 = vector.extract_strided_slice %750 {offsets = [7, 0], sizes = [1, 64], strides = [1, 1]} : vector<8x64xf32> to vector<1x64xf32>
    %cst_302 = arith.constant dense<0.000000e+00> : vector<1x64xf32>
    %761 = tpu.matmul %755, %752, %cst_302 {dimension_numbers = #tpu.dot_dimension_numbers<[1], [0], [0], [1], [0, 0, 1, 1], [], []>} : vector<1x16xf32>, vector<16x64xf32>, vector<1x64xf32> -> vector<1x64xf32>
    %762 = arith.addf %760, %761 : vector<1x64xf32>
    %763 = vector.extract_strided_slice %759 {offsets = [0, 0], sizes = [1, 16], strides = [1, 1]} : vector<1x64xf32> to vector<1x16xf32>
    %cst_303 = arith.constant 0.000000e+00 : f32
    %764 = vector.broadcast %cst_303 : f32 to vector<1x16xf32>
    %765 = arith.subf %764, %763 : vector<1x16xf32>
    %766 = math.exp %765 : vector<1x16xf32>
    %cst_304 = arith.constant 1.000000e+00 : f32
    %767 = vector.broadcast %cst_304 : f32 to vector<1x16xf32>
    %768 = arith.addf %767, %766 : vector<1x16xf32>
    %cst_305 = arith.constant 1.000000e+00 : f32
    %769 = vector.broadcast %cst_305 : f32 to vector<1x16xf32>
    %770 = arith.divf %769, %768 : vector<1x16xf32>
    %771 = vector.extract_strided_slice %762 {offsets = [0, 0], sizes = [1, 16], strides = [1, 1]} : vector<1x64xf32> to vector<1x16xf32>
    %cst_306 = arith.constant 0.000000e+00 : f32
    %772 = vector.broadcast %cst_306 : f32 to vector<1x16xf32>
    %773 = arith.subf %772, %771 : vector<1x16xf32>
    %774 = math.exp %773 : vector<1x16xf32>
    %cst_307 = arith.constant 1.000000e+00 : f32
    %775 = vector.broadcast %cst_307 : f32 to vector<1x16xf32>
    %776 = arith.addf %775, %774 : vector<1x16xf32>
    %cst_308 = arith.constant 1.000000e+00 : f32
    %777 = vector.broadcast %cst_308 : f32 to vector<1x16xf32>
    %778 = arith.divf %777, %776 : vector<1x16xf32>
    %779 = vector.extract_strided_slice %759 {offsets = [0, 16], sizes = [1, 16], strides = [1, 1]} : vector<1x64xf32> to vector<1x16xf32>
    %cst_309 = arith.constant 0.000000e+00 : f32
    %780 = vector.broadcast %cst_309 : f32 to vector<1x16xf32>
    %781 = arith.subf %780, %779 : vector<1x16xf32>
    %782 = math.exp %781 : vector<1x16xf32>
    %cst_310 = arith.constant 1.000000e+00 : f32
    %783 = vector.broadcast %cst_310 : f32 to vector<1x16xf32>
    %784 = arith.addf %783, %782 : vector<1x16xf32>
    %cst_311 = arith.constant 1.000000e+00 : f32
    %785 = vector.broadcast %cst_311 : f32 to vector<1x16xf32>
    %786 = arith.divf %785, %784 : vector<1x16xf32>
    %787 = vector.extract_strided_slice %762 {offsets = [0, 16], sizes = [1, 16], strides = [1, 1]} : vector<1x64xf32> to vector<1x16xf32>
    %cst_312 = arith.constant 0.000000e+00 : f32
    %788 = vector.broadcast %cst_312 : f32 to vector<1x16xf32>
    %789 = arith.subf %788, %787 : vector<1x16xf32>
    %790 = math.exp %789 : vector<1x16xf32>
    %cst_313 = arith.constant 1.000000e+00 : f32
    %791 = vector.broadcast %cst_313 : f32 to vector<1x16xf32>
    %792 = arith.addf %791, %790 : vector<1x16xf32>
    %cst_314 = arith.constant 1.000000e+00 : f32
    %793 = vector.broadcast %cst_314 : f32 to vector<1x16xf32>
    %794 = arith.divf %793, %792 : vector<1x16xf32>
    %795 = vector.extract_strided_slice %759 {offsets = [0, 32], sizes = [1, 16], strides = [1, 1]} : vector<1x64xf32> to vector<1x16xf32>
    %796 = math.tanh %795 : vector<1x16xf32>
    %797 = vector.extract_strided_slice %762 {offsets = [0, 32], sizes = [1, 16], strides = [1, 1]} : vector<1x64xf32> to vector<1x16xf32>
    %798 = math.tanh %797 : vector<1x16xf32>
    %799 = vector.extract_strided_slice %759 {offsets = [0, 48], sizes = [1, 16], strides = [1, 1]} : vector<1x64xf32> to vector<1x16xf32>
    %cst_315 = arith.constant 0.000000e+00 : f32
    %800 = vector.broadcast %cst_315 : f32 to vector<1x16xf32>
    %801 = arith.subf %800, %799 : vector<1x16xf32>
    %802 = math.exp %801 : vector<1x16xf32>
    %cst_316 = arith.constant 1.000000e+00 : f32
    %803 = vector.broadcast %cst_316 : f32 to vector<1x16xf32>
    %804 = arith.addf %803, %802 : vector<1x16xf32>
    %cst_317 = arith.constant 1.000000e+00 : f32
    %805 = vector.broadcast %cst_317 : f32 to vector<1x16xf32>
    %806 = arith.divf %805, %804 : vector<1x16xf32>
    %807 = vector.extract_strided_slice %762 {offsets = [0, 48], sizes = [1, 16], strides = [1, 1]} : vector<1x64xf32> to vector<1x16xf32>
    %cst_318 = arith.constant 0.000000e+00 : f32
    %808 = vector.broadcast %cst_318 : f32 to vector<1x16xf32>
    %809 = arith.subf %808, %807 : vector<1x16xf32>
    %810 = math.exp %809 : vector<1x16xf32>
    %cst_319 = arith.constant 1.000000e+00 : f32
    %811 = vector.broadcast %cst_319 : f32 to vector<1x16xf32>
    %812 = arith.addf %811, %810 : vector<1x16xf32>
    %cst_320 = arith.constant 1.000000e+00 : f32
    %813 = vector.broadcast %cst_320 : f32 to vector<1x16xf32>
    %814 = arith.divf %813, %812 : vector<1x16xf32>
    %815 = arith.mulf %786, %754 : vector<1x16xf32>
    %816 = arith.mulf %770, %796 : vector<1x16xf32>
    %817 = arith.addf %815, %816 : vector<1x16xf32>
    %818 = arith.mulf %794, %756 : vector<1x16xf32>
    %819 = arith.mulf %778, %798 : vector<1x16xf32>
    %820 = arith.addf %818, %819 : vector<1x16xf32>
    %821 = math.tanh %817 : vector<1x16xf32>
    %822 = arith.mulf %806, %821 : vector<1x16xf32>
    %823 = math.tanh %820 : vector<1x16xf32>
    %824 = arith.mulf %814, %823 : vector<1x16xf32>
    %c0_321 = arith.constant 0 : index
    %c0_322 = arith.constant 0 : index
    %825 = vector.load %arg51[%c0_321, %c0_322] : memref<8x16xf32, #tpu.memory_space<vmem>>, vector<1x16xf32>
    tpu.vector_store %arg51[%c0_321, %c0_322], %822 {strides = array<i32>} : memref<8x16xf32, #tpu.memory_space<vmem>>, vector<1x16xf32>,
    %c7_323 = arith.constant 7 : index
    %c0_324 = arith.constant 0 : index
    %826 = vector.load %arg52[%c7_323, %c0_324] : memref<8x16xf32, #tpu.memory_space<vmem>>, vector<1x16xf32>
    tpu.vector_store %arg52[%c7_323, %c0_324], %824 {strides = array<i32>} : memref<8x16xf32, #tpu.memory_space<vmem>>, vector<1x16xf32>,
    %827 = vector.extract_strided_slice %742 {offsets = [1, 0], sizes = [1, 64], strides = [1, 1]} : vector<8x64xf32> to vector<1x64xf32>
    %cst_325 = arith.constant dense<0.000000e+00> : vector<1x64xf32>
    %828 = tpu.matmul %822, %751, %cst_325 {dimension_numbers = #tpu.dot_dimension_numbers<[1], [0], [0], [1], [0, 0, 1, 1], [], []>} : vector<1x16xf32>, vector<16x64xf32>, vector<1x64xf32> -> vector<1x64xf32>
    %829 = arith.addf %827, %828 : vector<1x64xf32>
    %830 = vector.extract_strided_slice %750 {offsets = [6, 0], sizes = [1, 64], strides = [1, 1]} : vector<8x64xf32> to vector<1x64xf32>
    %cst_326 = arith.constant dense<0.000000e+00> : vector<1x64xf32>
    %831 = tpu.matmul %824, %752, %cst_326 {dimension_numbers = #tpu.dot_dimension_numbers<[1], [0], [0], [1], [0, 0, 1, 1], [], []>} : vector<1x16xf32>, vector<16x64xf32>, vector<1x64xf32> -> vector<1x64xf32>
    %832 = arith.addf %830, %831 : vector<1x64xf32>
    %833 = vector.extract_strided_slice %829 {offsets = [0, 0], sizes = [1, 16], strides = [1, 1]} : vector<1x64xf32> to vector<1x16xf32>
    %cst_327 = arith.constant 0.000000e+00 : f32
    %834 = vector.broadcast %cst_327 : f32 to vector<1x16xf32>
    %835 = arith.subf %834, %833 : vector<1x16xf32>
    %836 = math.exp %835 : vector<1x16xf32>
    %cst_328 = arith.constant 1.000000e+00 : f32
    %837 = vector.broadcast %cst_328 : f32 to vector<1x16xf32>
    %838 = arith.addf %837, %836 : vector<1x16xf32>
    %cst_329 = arith.constant 1.000000e+00 : f32
    %839 = vector.broadcast %cst_329 : f32 to vector<1x16xf32>
    %840 = arith.divf %839, %838 : vector<1x16xf32>
    %841 = vector.extract_strided_slice %832 {offsets = [0, 0], sizes = [1, 16], strides = [1, 1]} : vector<1x64xf32> to vector<1x16xf32>
    %cst_330 = arith.constant 0.000000e+00 : f32
    %842 = vector.broadcast %cst_330 : f32 to vector<1x16xf32>
    %843 = arith.subf %842, %841 : vector<1x16xf32>
    %844 = math.exp %843 : vector<1x16xf32>
    %cst_331 = arith.constant 1.000000e+00 : f32
    %845 = vector.broadcast %cst_331 : f32 to vector<1x16xf32>
    %846 = arith.addf %845, %844 : vector<1x16xf32>
    %cst_332 = arith.constant 1.000000e+00 : f32
    %847 = vector.broadcast %cst_332 : f32 to vector<1x16xf32>
    %848 = arith.divf %847, %846 : vector<1x16xf32>
    %849 = vector.extract_strided_slice %829 {offsets = [0, 16], sizes = [1, 16], strides = [1, 1]} : vector<1x64xf32> to vector<1x16xf32>
    %cst_333 = arith.constant 0.000000e+00 : f32
    %850 = vector.broadcast %cst_333 : f32 to vector<1x16xf32>
    %851 = arith.subf %850, %849 : vector<1x16xf32>
    %852 = math.exp %851 : vector<1x16xf32>
    %cst_334 = arith.constant 1.000000e+00 : f32
    %853 = vector.broadcast %cst_334 : f32 to vector<1x16xf32>
    %854 = arith.addf %853, %852 : vector<1x16xf32>
    %cst_335 = arith.constant 1.000000e+00 : f32
    %855 = vector.broadcast %cst_335 : f32 to vector<1x16xf32>
    %856 = arith.divf %855, %854 : vector<1x16xf32>
    %857 = vector.extract_strided_slice %832 {offsets = [0, 16], sizes = [1, 16], strides = [1, 1]} : vector<1x64xf32> to vector<1x16xf32>
    %cst_336 = arith.constant 0.000000e+00 : f32
    %858 = vector.broadcast %cst_336 : f32 to vector<1x16xf32>
    %859 = arith.subf %858, %857 : vector<1x16xf32>
    %860 = math.exp %859 : vector<1x16xf32>
    %cst_337 = arith.constant 1.000000e+00 : f32
    %861 = vector.broadcast %cst_337 : f32 to vector<1x16xf32>
    %862 = arith.addf %861, %860 : vector<1x16xf32>
    %cst_338 = arith.constant 1.000000e+00 : f32
    %863 = vector.broadcast %cst_338 : f32 to vector<1x16xf32>
    %864 = arith.divf %863, %862 : vector<1x16xf32>
    %865 = vector.extract_strided_slice %829 {offsets = [0, 32], sizes = [1, 16], strides = [1, 1]} : vector<1x64xf32> to vector<1x16xf32>
    %866 = math.tanh %865 : vector<1x16xf32>
    %867 = vector.extract_strided_slice %832 {offsets = [0, 32], sizes = [1, 16], strides = [1, 1]} : vector<1x64xf32> to vector<1x16xf32>
    %868 = math.tanh %867 : vector<1x16xf32>
    %869 = vector.extract_strided_slice %829 {offsets = [0, 48], sizes = [1, 16], strides = [1, 1]} : vector<1x64xf32> to vector<1x16xf32>
    %cst_339 = arith.constant 0.000000e+00 : f32
    %870 = vector.broadcast %cst_339 : f32 to vector<1x16xf32>
    %871 = arith.subf %870, %869 : vector<1x16xf32>
    %872 = math.exp %871 : vector<1x16xf32>
    %cst_340 = arith.constant 1.000000e+00 : f32
    %873 = vector.broadcast %cst_340 : f32 to vector<1x16xf32>
    %874 = arith.addf %873, %872 : vector<1x16xf32>
    %cst_341 = arith.constant 1.000000e+00 : f32
    %875 = vector.broadcast %cst_341 : f32 to vector<1x16xf32>
    %876 = arith.divf %875, %874 : vector<1x16xf32>
    %877 = vector.extract_strided_slice %832 {offsets = [0, 48], sizes = [1, 16], strides = [1, 1]} : vector<1x64xf32> to vector<1x16xf32>
    %cst_342 = arith.constant 0.000000e+00 : f32
    %878 = vector.broadcast %cst_342 : f32 to vector<1x16xf32>
    %879 = arith.subf %878, %877 : vector<1x16xf32>
    %880 = math.exp %879 : vector<1x16xf32>
    %cst_343 = arith.constant 1.000000e+00 : f32
    %881 = vector.broadcast %cst_343 : f32 to vector<1x16xf32>
    %882 = arith.addf %881, %880 : vector<1x16xf32>
    %cst_344 = arith.constant 1.000000e+00 : f32
    %883 = vector.broadcast %cst_344 : f32 to vector<1x16xf32>
    %884 = arith.divf %883, %882 : vector<1x16xf32>
    %885 = arith.mulf %856, %817 : vector<1x16xf32>
    %886 = arith.mulf %840, %866 : vector<1x16xf32>
    %887 = arith.addf %885, %886 : vector<1x16xf32>
    %888 = arith.mulf %864, %820 : vector<1x16xf32>
    %889 = arith.mulf %848, %868 : vector<1x16xf32>
    %890 = arith.addf %888, %889 : vector<1x16xf32>
    %891 = math.tanh %887 : vector<1x16xf32>
    %892 = arith.mulf %876, %891 : vector<1x16xf32>
    %893 = math.tanh %890 : vector<1x16xf32>
    %894 = arith.mulf %884, %893 : vector<1x16xf32>
    %c1_345 = arith.constant 1 : index
    %c0_346 = arith.constant 0 : index
    %895 = vector.load %arg51[%c1_345, %c0_346] : memref<8x16xf32, #tpu.memory_space<vmem>>, vector<1x16xf32>
    tpu.vector_store %arg51[%c1_345, %c0_346], %892 {strides = array<i32>} : memref<8x16xf32, #tpu.memory_space<vmem>>, vector<1x16xf32>,
    %c6_347 = arith.constant 6 : index
    %c0_348 = arith.constant 0 : index
    %896 = vector.load %arg52[%c6_347, %c0_348] : memref<8x16xf32, #tpu.memory_space<vmem>>, vector<1x16xf32>
    tpu.vector_store %arg52[%c6_347, %c0_348], %894 {strides = array<i32>} : memref<8x16xf32, #tpu.memory_space<vmem>>, vector<1x16xf32>,
    %897 = vector.extract_strided_slice %742 {offsets = [2, 0], sizes = [1, 64], strides = [1, 1]} : vector<8x64xf32> to vector<1x64xf32>
    %cst_349 = arith.constant dense<0.000000e+00> : vector<1x64xf32>
    %898 = tpu.matmul %892, %751, %cst_349 {dimension_numbers = #tpu.dot_dimension_numbers<[1], [0], [0], [1], [0, 0, 1, 1], [], []>} : vector<1x16xf32>, vector<16x64xf32>, vector<1x64xf32> -> vector<1x64xf32>
    %899 = arith.addf %897, %898 : vector<1x64xf32>
    %900 = vector.extract_strided_slice %750 {offsets = [5, 0], sizes = [1, 64], strides = [1, 1]} : vector<8x64xf32> to vector<1x64xf32>
    %cst_350 = arith.constant dense<0.000000e+00> : vector<1x64xf32>
    %901 = tpu.matmul %894, %752, %cst_350 {dimension_numbers = #tpu.dot_dimension_numbers<[1], [0], [0], [1], [0, 0, 1, 1], [], []>} : vector<1x16xf32>, vector<16x64xf32>, vector<1x64xf32> -> vector<1x64xf32>
    %902 = arith.addf %900, %901 : vector<1x64xf32>
    %903 = vector.extract_strided_slice %899 {offsets = [0, 0], sizes = [1, 16], strides = [1, 1]} : vector<1x64xf32> to vector<1x16xf32>
    %cst_351 = arith.constant 0.000000e+00 : f32
    %904 = vector.broadcast %cst_351 : f32 to vector<1x16xf32>
    %905 = arith.subf %904, %903 : vector<1x16xf32>
    %906 = math.exp %905 : vector<1x16xf32>
    %cst_352 = arith.constant 1.000000e+00 : f32
    %907 = vector.broadcast %cst_352 : f32 to vector<1x16xf32>
    %908 = arith.addf %907, %906 : vector<1x16xf32>
    %cst_353 = arith.constant 1.000000e+00 : f32
    %909 = vector.broadcast %cst_353 : f32 to vector<1x16xf32>
    %910 = arith.divf %909, %908 : vector<1x16xf32>
    %911 = vector.extract_strided_slice %902 {offsets = [0, 0], sizes = [1, 16], strides = [1, 1]} : vector<1x64xf32> to vector<1x16xf32>
    %cst_354 = arith.constant 0.000000e+00 : f32
    %912 = vector.broadcast %cst_354 : f32 to vector<1x16xf32>
    %913 = arith.subf %912, %911 : vector<1x16xf32>
    %914 = math.exp %913 : vector<1x16xf32>
    %cst_355 = arith.constant 1.000000e+00 : f32
    %915 = vector.broadcast %cst_355 : f32 to vector<1x16xf32>
    %916 = arith.addf %915, %914 : vector<1x16xf32>
    %cst_356 = arith.constant 1.000000e+00 : f32
    %917 = vector.broadcast %cst_356 : f32 to vector<1x16xf32>
    %918 = arith.divf %917, %916 : vector<1x16xf32>
    %919 = vector.extract_strided_slice %899 {offsets = [0, 16], sizes = [1, 16], strides = [1, 1]} : vector<1x64xf32> to vector<1x16xf32>
    %cst_357 = arith.constant 0.000000e+00 : f32
    %920 = vector.broadcast %cst_357 : f32 to vector<1x16xf32>
    %921 = arith.subf %920, %919 : vector<1x16xf32>
    %922 = math.exp %921 : vector<1x16xf32>
    %cst_358 = arith.constant 1.000000e+00 : f32
    %923 = vector.broadcast %cst_358 : f32 to vector<1x16xf32>
    %924 = arith.addf %923, %922 : vector<1x16xf32>
    %cst_359 = arith.constant 1.000000e+00 : f32
    %925 = vector.broadcast %cst_359 : f32 to vector<1x16xf32>
    %926 = arith.divf %925, %924 : vector<1x16xf32>
    %927 = vector.extract_strided_slice %902 {offsets = [0, 16], sizes = [1, 16], strides = [1, 1]} : vector<1x64xf32> to vector<1x16xf32>
    %cst_360 = arith.constant 0.000000e+00 : f32
    %928 = vector.broadcast %cst_360 : f32 to vector<1x16xf32>
    %929 = arith.subf %928, %927 : vector<1x16xf32>
    %930 = math.exp %929 : vector<1x16xf32>
    %cst_361 = arith.constant 1.000000e+00 : f32
    %931 = vector.broadcast %cst_361 : f32 to vector<1x16xf32>
    %932 = arith.addf %931, %930 : vector<1x16xf32>
    %cst_362 = arith.constant 1.000000e+00 : f32
    %933 = vector.broadcast %cst_362 : f32 to vector<1x16xf32>
    %934 = arith.divf %933, %932 : vector<1x16xf32>
    %935 = vector.extract_strided_slice %899 {offsets = [0, 32], sizes = [1, 16], strides = [1, 1]} : vector<1x64xf32> to vector<1x16xf32>
    %936 = math.tanh %935 : vector<1x16xf32>
    %937 = vector.extract_strided_slice %902 {offsets = [0, 32], sizes = [1, 16], strides = [1, 1]} : vector<1x64xf32> to vector<1x16xf32>
    %938 = math.tanh %937 : vector<1x16xf32>
    %939 = vector.extract_strided_slice %899 {offsets = [0, 48], sizes = [1, 16], strides = [1, 1]} : vector<1x64xf32> to vector<1x16xf32>
    %cst_363 = arith.constant 0.000000e+00 : f32
    %940 = vector.broadcast %cst_363 : f32 to vector<1x16xf32>
    %941 = arith.subf %940, %939 : vector<1x16xf32>
    %942 = math.exp %941 : vector<1x16xf32>
    %cst_364 = arith.constant 1.000000e+00 : f32
    %943 = vector.broadcast %cst_364 : f32 to vector<1x16xf32>
    %944 = arith.addf %943, %942 : vector<1x16xf32>
    %cst_365 = arith.constant 1.000000e+00 : f32
    %945 = vector.broadcast %cst_365 : f32 to vector<1x16xf32>
    %946 = arith.divf %945, %944 : vector<1x16xf32>
    %947 = vector.extract_strided_slice %902 {offsets = [0, 48], sizes = [1, 16], strides = [1, 1]} : vector<1x64xf32> to vector<1x16xf32>
    %cst_366 = arith.constant 0.000000e+00 : f32
    %948 = vector.broadcast %cst_366 : f32 to vector<1x16xf32>
    %949 = arith.subf %948, %947 : vector<1x16xf32>
    %950 = math.exp %949 : vector<1x16xf32>
    %cst_367 = arith.constant 1.000000e+00 : f32
    %951 = vector.broadcast %cst_367 : f32 to vector<1x16xf32>
    %952 = arith.addf %951, %950 : vector<1x16xf32>
    %cst_368 = arith.constant 1.000000e+00 : f32
    %953 = vector.broadcast %cst_368 : f32 to vector<1x16xf32>
    %954 = arith.divf %953, %952 : vector<1x16xf32>
    %955 = arith.mulf %926, %887 : vector<1x16xf32>
    %956 = arith.mulf %910, %936 : vector<1x16xf32>
    %957 = arith.addf %955, %956 : vector<1x16xf32>
    %958 = arith.mulf %934, %890 : vector<1x16xf32>
    %959 = arith.mulf %918, %938 : vector<1x16xf32>
    %960 = arith.addf %958, %959 : vector<1x16xf32>
    %961 = math.tanh %957 : vector<1x16xf32>
    %962 = arith.mulf %946, %961 : vector<1x16xf32>
    %963 = math.tanh %960 : vector<1x16xf32>
    %964 = arith.mulf %954, %963 : vector<1x16xf32>
    %c2_369 = arith.constant 2 : index
    %c0_370 = arith.constant 0 : index
    %965 = vector.load %arg51[%c2_369, %c0_370] : memref<8x16xf32, #tpu.memory_space<vmem>>, vector<1x16xf32>
    tpu.vector_store %arg51[%c2_369, %c0_370], %962 {strides = array<i32>} : memref<8x16xf32, #tpu.memory_space<vmem>>, vector<1x16xf32>,
    %c5_371 = arith.constant 5 : index
    %c0_372 = arith.constant 0 : index
    %966 = vector.load %arg52[%c5_371, %c0_372] : memref<8x16xf32, #tpu.memory_space<vmem>>, vector<1x16xf32>
    tpu.vector_store %arg52[%c5_371, %c0_372], %964 {strides = array<i32>} : memref<8x16xf32, #tpu.memory_space<vmem>>, vector<1x16xf32>,
    %967 = vector.extract_strided_slice %742 {offsets = [3, 0], sizes = [1, 64], strides = [1, 1]} : vector<8x64xf32> to vector<1x64xf32>
    %cst_373 = arith.constant dense<0.000000e+00> : vector<1x64xf32>
    %968 = tpu.matmul %962, %751, %cst_373 {dimension_numbers = #tpu.dot_dimension_numbers<[1], [0], [0], [1], [0, 0, 1, 1], [], []>} : vector<1x16xf32>, vector<16x64xf32>, vector<1x64xf32> -> vector<1x64xf32>
    %969 = arith.addf %967, %968 : vector<1x64xf32>
    %970 = vector.extract_strided_slice %750 {offsets = [4, 0], sizes = [1, 64], strides = [1, 1]} : vector<8x64xf32> to vector<1x64xf32>
    %cst_374 = arith.constant dense<0.000000e+00> : vector<1x64xf32>
    %971 = tpu.matmul %964, %752, %cst_374 {dimension_numbers = #tpu.dot_dimension_numbers<[1], [0], [0], [1], [0, 0, 1, 1], [], []>} : vector<1x16xf32>, vector<16x64xf32>, vector<1x64xf32> -> vector<1x64xf32>
    %972 = arith.addf %970, %971 : vector<1x64xf32>
    %973 = vector.extract_strided_slice %969 {offsets = [0, 0], sizes = [1, 16], strides = [1, 1]} : vector<1x64xf32> to vector<1x16xf32>
    %cst_375 = arith.constant 0.000000e+00 : f32
    %974 = vector.broadcast %cst_375 : f32 to vector<1x16xf32>
    %975 = arith.subf %974, %973 : vector<1x16xf32>
    %976 = math.exp %975 : vector<1x16xf32>
    %cst_376 = arith.constant 1.000000e+00 : f32
    %977 = vector.broadcast %cst_376 : f32 to vector<1x16xf32>
    %978 = arith.addf %977, %976 : vector<1x16xf32>
    %cst_377 = arith.constant 1.000000e+00 : f32
    %979 = vector.broadcast %cst_377 : f32 to vector<1x16xf32>
    %980 = arith.divf %979, %978 : vector<1x16xf32>
    %981 = vector.extract_strided_slice %972 {offsets = [0, 0], sizes = [1, 16], strides = [1, 1]} : vector<1x64xf32> to vector<1x16xf32>
    %cst_378 = arith.constant 0.000000e+00 : f32
    %982 = vector.broadcast %cst_378 : f32 to vector<1x16xf32>
    %983 = arith.subf %982, %981 : vector<1x16xf32>
    %984 = math.exp %983 : vector<1x16xf32>
    %cst_379 = arith.constant 1.000000e+00 : f32
    %985 = vector.broadcast %cst_379 : f32 to vector<1x16xf32>
    %986 = arith.addf %985, %984 : vector<1x16xf32>
    %cst_380 = arith.constant 1.000000e+00 : f32
    %987 = vector.broadcast %cst_380 : f32 to vector<1x16xf32>
    %988 = arith.divf %987, %986 : vector<1x16xf32>
    %989 = vector.extract_strided_slice %969 {offsets = [0, 16], sizes = [1, 16], strides = [1, 1]} : vector<1x64xf32> to vector<1x16xf32>
    %cst_381 = arith.constant 0.000000e+00 : f32
    %990 = vector.broadcast %cst_381 : f32 to vector<1x16xf32>
    %991 = arith.subf %990, %989 : vector<1x16xf32>
    %992 = math.exp %991 : vector<1x16xf32>
    %cst_382 = arith.constant 1.000000e+00 : f32
    %993 = vector.broadcast %cst_382 : f32 to vector<1x16xf32>
    %994 = arith.addf %993, %992 : vector<1x16xf32>
    %cst_383 = arith.constant 1.000000e+00 : f32
    %995 = vector.broadcast %cst_383 : f32 to vector<1x16xf32>
    %996 = arith.divf %995, %994 : vector<1x16xf32>
    %997 = vector.extract_strided_slice %972 {offsets = [0, 16], sizes = [1, 16], strides = [1, 1]} : vector<1x64xf32> to vector<1x16xf32>
    %cst_384 = arith.constant 0.000000e+00 : f32
    %998 = vector.broadcast %cst_384 : f32 to vector<1x16xf32>
    %999 = arith.subf %998, %997 : vector<1x16xf32>
    %1000 = math.exp %999 : vector<1x16xf32>
    %cst_385 = arith.constant 1.000000e+00 : f32
    %1001 = vector.broadcast %cst_385 : f32 to vector<1x16xf32>
    %1002 = arith.addf %1001, %1000 : vector<1x16xf32>
    %cst_386 = arith.constant 1.000000e+00 : f32
    %1003 = vector.broadcast %cst_386 : f32 to vector<1x16xf32>
    %1004 = arith.divf %1003, %1002 : vector<1x16xf32>
    %1005 = vector.extract_strided_slice %969 {offsets = [0, 32], sizes = [1, 16], strides = [1, 1]} : vector<1x64xf32> to vector<1x16xf32>
    %1006 = math.tanh %1005 : vector<1x16xf32>
    %1007 = vector.extract_strided_slice %972 {offsets = [0, 32], sizes = [1, 16], strides = [1, 1]} : vector<1x64xf32> to vector<1x16xf32>
    %1008 = math.tanh %1007 : vector<1x16xf32>
    %1009 = vector.extract_strided_slice %969 {offsets = [0, 48], sizes = [1, 16], strides = [1, 1]} : vector<1x64xf32> to vector<1x16xf32>
    %cst_387 = arith.constant 0.000000e+00 : f32
    %1010 = vector.broadcast %cst_387 : f32 to vector<1x16xf32>
    %1011 = arith.subf %1010, %1009 : vector<1x16xf32>
    %1012 = math.exp %1011 : vector<1x16xf32>
    %cst_388 = arith.constant 1.000000e+00 : f32
    %1013 = vector.broadcast %cst_388 : f32 to vector<1x16xf32>
    %1014 = arith.addf %1013, %1012 : vector<1x16xf32>
    %cst_389 = arith.constant 1.000000e+00 : f32
    %1015 = vector.broadcast %cst_389 : f32 to vector<1x16xf32>
    %1016 = arith.divf %1015, %1014 : vector<1x16xf32>
    %1017 = vector.extract_strided_slice %972 {offsets = [0, 48], sizes = [1, 16], strides = [1, 1]} : vector<1x64xf32> to vector<1x16xf32>
    %cst_390 = arith.constant 0.000000e+00 : f32
    %1018 = vector.broadcast %cst_390 : f32 to vector<1x16xf32>
    %1019 = arith.subf %1018, %1017 : vector<1x16xf32>
    %1020 = math.exp %1019 : vector<1x16xf32>
    %cst_391 = arith.constant 1.000000e+00 : f32
    %1021 = vector.broadcast %cst_391 : f32 to vector<1x16xf32>
    %1022 = arith.addf %1021, %1020 : vector<1x16xf32>
    %cst_392 = arith.constant 1.000000e+00 : f32
    %1023 = vector.broadcast %cst_392 : f32 to vector<1x16xf32>
    %1024 = arith.divf %1023, %1022 : vector<1x16xf32>
    %1025 = arith.mulf %996, %957 : vector<1x16xf32>
    %1026 = arith.mulf %980, %1006 : vector<1x16xf32>
    %1027 = arith.addf %1025, %1026 : vector<1x16xf32>
    %1028 = arith.mulf %1004, %960 : vector<1x16xf32>
    %1029 = arith.mulf %988, %1008 : vector<1x16xf32>
    %1030 = arith.addf %1028, %1029 : vector<1x16xf32>
    %1031 = math.tanh %1027 : vector<1x16xf32>
    %1032 = arith.mulf %1016, %1031 : vector<1x16xf32>
    %1033 = math.tanh %1030 : vector<1x16xf32>
    %1034 = arith.mulf %1024, %1033 : vector<1x16xf32>
    %c3_393 = arith.constant 3 : index
    %c0_394 = arith.constant 0 : index
    %1035 = vector.load %arg51[%c3_393, %c0_394] : memref<8x16xf32, #tpu.memory_space<vmem>>, vector<1x16xf32>
    tpu.vector_store %arg51[%c3_393, %c0_394], %1032 {strides = array<i32>} : memref<8x16xf32, #tpu.memory_space<vmem>>, vector<1x16xf32>,
    %c4_395 = arith.constant 4 : index
    %c0_396 = arith.constant 0 : index
    %1036 = vector.load %arg52[%c4_395, %c0_396] : memref<8x16xf32, #tpu.memory_space<vmem>>, vector<1x16xf32>
    tpu.vector_store %arg52[%c4_395, %c0_396], %1034 {strides = array<i32>} : memref<8x16xf32, #tpu.memory_space<vmem>>, vector<1x16xf32>,
    %1037 = vector.extract_strided_slice %742 {offsets = [4, 0], sizes = [1, 64], strides = [1, 1]} : vector<8x64xf32> to vector<1x64xf32>
    %cst_397 = arith.constant dense<0.000000e+00> : vector<1x64xf32>
    %1038 = tpu.matmul %1032, %751, %cst_397 {dimension_numbers = #tpu.dot_dimension_numbers<[1], [0], [0], [1], [0, 0, 1, 1], [], []>} : vector<1x16xf32>, vector<16x64xf32>, vector<1x64xf32> -> vector<1x64xf32>
    %1039 = arith.addf %1037, %1038 : vector<1x64xf32>
    %1040 = vector.extract_strided_slice %750 {offsets = [3, 0], sizes = [1, 64], strides = [1, 1]} : vector<8x64xf32> to vector<1x64xf32>
    %cst_398 = arith.constant dense<0.000000e+00> : vector<1x64xf32>
    %1041 = tpu.matmul %1034, %752, %cst_398 {dimension_numbers = #tpu.dot_dimension_numbers<[1], [0], [0], [1], [0, 0, 1, 1], [], []>} : vector<1x16xf32>, vector<16x64xf32>, vector<1x64xf32> -> vector<1x64xf32>
    %1042 = arith.addf %1040, %1041 : vector<1x64xf32>
    %1043 = vector.extract_strided_slice %1039 {offsets = [0, 0], sizes = [1, 16], strides = [1, 1]} : vector<1x64xf32> to vector<1x16xf32>
    %cst_399 = arith.constant 0.000000e+00 : f32
    %1044 = vector.broadcast %cst_399 : f32 to vector<1x16xf32>
    %1045 = arith.subf %1044, %1043 : vector<1x16xf32>
    %1046 = math.exp %1045 : vector<1x16xf32>
    %cst_400 = arith.constant 1.000000e+00 : f32
    %1047 = vector.broadcast %cst_400 : f32 to vector<1x16xf32>
    %1048 = arith.addf %1047, %1046 : vector<1x16xf32>
    %cst_401 = arith.constant 1.000000e+00 : f32
    %1049 = vector.broadcast %cst_401 : f32 to vector<1x16xf32>
    %1050 = arith.divf %1049, %1048 : vector<1x16xf32>
    %1051 = vector.extract_strided_slice %1042 {offsets = [0, 0], sizes = [1, 16], strides = [1, 1]} : vector<1x64xf32> to vector<1x16xf32>
    %cst_402 = arith.constant 0.000000e+00 : f32
    %1052 = vector.broadcast %cst_402 : f32 to vector<1x16xf32>
    %1053 = arith.subf %1052, %1051 : vector<1x16xf32>
    %1054 = math.exp %1053 : vector<1x16xf32>
    %cst_403 = arith.constant 1.000000e+00 : f32
    %1055 = vector.broadcast %cst_403 : f32 to vector<1x16xf32>
    %1056 = arith.addf %1055, %1054 : vector<1x16xf32>
    %cst_404 = arith.constant 1.000000e+00 : f32
    %1057 = vector.broadcast %cst_404 : f32 to vector<1x16xf32>
    %1058 = arith.divf %1057, %1056 : vector<1x16xf32>
    %1059 = vector.extract_strided_slice %1039 {offsets = [0, 16], sizes = [1, 16], strides = [1, 1]} : vector<1x64xf32> to vector<1x16xf32>
    %cst_405 = arith.constant 0.000000e+00 : f32
    %1060 = vector.broadcast %cst_405 : f32 to vector<1x16xf32>
    %1061 = arith.subf %1060, %1059 : vector<1x16xf32>
    %1062 = math.exp %1061 : vector<1x16xf32>
    %cst_406 = arith.constant 1.000000e+00 : f32
    %1063 = vector.broadcast %cst_406 : f32 to vector<1x16xf32>
    %1064 = arith.addf %1063, %1062 : vector<1x16xf32>
    %cst_407 = arith.constant 1.000000e+00 : f32
    %1065 = vector.broadcast %cst_407 : f32 to vector<1x16xf32>
    %1066 = arith.divf %1065, %1064 : vector<1x16xf32>
    %1067 = vector.extract_strided_slice %1042 {offsets = [0, 16], sizes = [1, 16], strides = [1, 1]} : vector<1x64xf32> to vector<1x16xf32>
    %cst_408 = arith.constant 0.000000e+00 : f32
    %1068 = vector.broadcast %cst_408 : f32 to vector<1x16xf32>
    %1069 = arith.subf %1068, %1067 : vector<1x16xf32>
    %1070 = math.exp %1069 : vector<1x16xf32>
    %cst_409 = arith.constant 1.000000e+00 : f32
    %1071 = vector.broadcast %cst_409 : f32 to vector<1x16xf32>
    %1072 = arith.addf %1071, %1070 : vector<1x16xf32>
    %cst_410 = arith.constant 1.000000e+00 : f32
    %1073 = vector.broadcast %cst_410 : f32 to vector<1x16xf32>
    %1074 = arith.divf %1073, %1072 : vector<1x16xf32>
    %1075 = vector.extract_strided_slice %1039 {offsets = [0, 32], sizes = [1, 16], strides = [1, 1]} : vector<1x64xf32> to vector<1x16xf32>
    %1076 = math.tanh %1075 : vector<1x16xf32>
    %1077 = vector.extract_strided_slice %1042 {offsets = [0, 32], sizes = [1, 16], strides = [1, 1]} : vector<1x64xf32> to vector<1x16xf32>
    %1078 = math.tanh %1077 : vector<1x16xf32>
    %1079 = vector.extract_strided_slice %1039 {offsets = [0, 48], sizes = [1, 16], strides = [1, 1]} : vector<1x64xf32> to vector<1x16xf32>
    %cst_411 = arith.constant 0.000000e+00 : f32
    %1080 = vector.broadcast %cst_411 : f32 to vector<1x16xf32>
    %1081 = arith.subf %1080, %1079 : vector<1x16xf32>
    %1082 = math.exp %1081 : vector<1x16xf32>
    %cst_412 = arith.constant 1.000000e+00 : f32
    %1083 = vector.broadcast %cst_412 : f32 to vector<1x16xf32>
    %1084 = arith.addf %1083, %1082 : vector<1x16xf32>
    %cst_413 = arith.constant 1.000000e+00 : f32
    %1085 = vector.broadcast %cst_413 : f32 to vector<1x16xf32>
    %1086 = arith.divf %1085, %1084 : vector<1x16xf32>
    %1087 = vector.extract_strided_slice %1042 {offsets = [0, 48], sizes = [1, 16], strides = [1, 1]} : vector<1x64xf32> to vector<1x16xf32>
    %cst_414 = arith.constant 0.000000e+00 : f32
    %1088 = vector.broadcast %cst_414 : f32 to vector<1x16xf32>
    %1089 = arith.subf %1088, %1087 : vector<1x16xf32>
    %1090 = math.exp %1089 : vector<1x16xf32>
    %cst_415 = arith.constant 1.000000e+00 : f32
    %1091 = vector.broadcast %cst_415 : f32 to vector<1x16xf32>
    %1092 = arith.addf %1091, %1090 : vector<1x16xf32>
    %cst_416 = arith.constant 1.000000e+00 : f32
    %1093 = vector.broadcast %cst_416 : f32 to vector<1x16xf32>
    %1094 = arith.divf %1093, %1092 : vector<1x16xf32>
    %1095 = arith.mulf %1066, %1027 : vector<1x16xf32>
    %1096 = arith.mulf %1050, %1076 : vector<1x16xf32>
    %1097 = arith.addf %1095, %1096 : vector<1x16xf32>
    %1098 = arith.mulf %1074, %1030 : vector<1x16xf32>
    %1099 = arith.mulf %1058, %1078 : vector<1x16xf32>
    %1100 = arith.addf %1098, %1099 : vector<1x16xf32>
    %1101 = math.tanh %1097 : vector<1x16xf32>
    %1102 = arith.mulf %1086, %1101 : vector<1x16xf32>
    %1103 = math.tanh %1100 : vector<1x16xf32>
    %1104 = arith.mulf %1094, %1103 : vector<1x16xf32>
    %c4_417 = arith.constant 4 : index
    %c0_418 = arith.constant 0 : index
    %1105 = vector.load %arg51[%c4_417, %c0_418] : memref<8x16xf32, #tpu.memory_space<vmem>>, vector<1x16xf32>
    tpu.vector_store %arg51[%c4_417, %c0_418], %1102 {strides = array<i32>} : memref<8x16xf32, #tpu.memory_space<vmem>>, vector<1x16xf32>,
    %c3_419 = arith.constant 3 : index
    %c0_420 = arith.constant 0 : index
    %1106 = vector.load %arg52[%c3_419, %c0_420] : memref<8x16xf32, #tpu.memory_space<vmem>>, vector<1x16xf32>
    tpu.vector_store %arg52[%c3_419, %c0_420], %1104 {strides = array<i32>} : memref<8x16xf32, #tpu.memory_space<vmem>>, vector<1x16xf32>,
    %1107 = vector.extract_strided_slice %742 {offsets = [5, 0], sizes = [1, 64], strides = [1, 1]} : vector<8x64xf32> to vector<1x64xf32>
    %cst_421 = arith.constant dense<0.000000e+00> : vector<1x64xf32>
    %1108 = tpu.matmul %1102, %751, %cst_421 {dimension_numbers = #tpu.dot_dimension_numbers<[1], [0], [0], [1], [0, 0, 1, 1], [], []>} : vector<1x16xf32>, vector<16x64xf32>, vector<1x64xf32> -> vector<1x64xf32>
    %1109 = arith.addf %1107, %1108 : vector<1x64xf32>
    %1110 = vector.extract_strided_slice %750 {offsets = [2, 0], sizes = [1, 64], strides = [1, 1]} : vector<8x64xf32> to vector<1x64xf32>
    %cst_422 = arith.constant dense<0.000000e+00> : vector<1x64xf32>
    %1111 = tpu.matmul %1104, %752, %cst_422 {dimension_numbers = #tpu.dot_dimension_numbers<[1], [0], [0], [1], [0, 0, 1, 1], [], []>} : vector<1x16xf32>, vector<16x64xf32>, vector<1x64xf32> -> vector<1x64xf32>
    %1112 = arith.addf %1110, %1111 : vector<1x64xf32>
    %1113 = vector.extract_strided_slice %1109 {offsets = [0, 0], sizes = [1, 16], strides = [1, 1]} : vector<1x64xf32> to vector<1x16xf32>
    %cst_423 = arith.constant 0.000000e+00 : f32
    %1114 = vector.broadcast %cst_423 : f32 to vector<1x16xf32>
    %1115 = arith.subf %1114, %1113 : vector<1x16xf32>
    %1116 = math.exp %1115 : vector<1x16xf32>
    %cst_424 = arith.constant 1.000000e+00 : f32
    %1117 = vector.broadcast %cst_424 : f32 to vector<1x16xf32>
    %1118 = arith.addf %1117, %1116 : vector<1x16xf32>
    %cst_425 = arith.constant 1.000000e+00 : f32
    %1119 = vector.broadcast %cst_425 : f32 to vector<1x16xf32>
    %1120 = arith.divf %1119, %1118 : vector<1x16xf32>
    %1121 = vector.extract_strided_slice %1112 {offsets = [0, 0], sizes = [1, 16], strides = [1, 1]} : vector<1x64xf32> to vector<1x16xf32>
    %cst_426 = arith.constant 0.000000e+00 : f32
    %1122 = vector.broadcast %cst_426 : f32 to vector<1x16xf32>
    %1123 = arith.subf %1122, %1121 : vector<1x16xf32>
    %1124 = math.exp %1123 : vector<1x16xf32>
    %cst_427 = arith.constant 1.000000e+00 : f32
    %1125 = vector.broadcast %cst_427 : f32 to vector<1x16xf32>
    %1126 = arith.addf %1125, %1124 : vector<1x16xf32>
    %cst_428 = arith.constant 1.000000e+00 : f32
    %1127 = vector.broadcast %cst_428 : f32 to vector<1x16xf32>
    %1128 = arith.divf %1127, %1126 : vector<1x16xf32>
    %1129 = vector.extract_strided_slice %1109 {offsets = [0, 16], sizes = [1, 16], strides = [1, 1]} : vector<1x64xf32> to vector<1x16xf32>
    %cst_429 = arith.constant 0.000000e+00 : f32
    %1130 = vector.broadcast %cst_429 : f32 to vector<1x16xf32>
    %1131 = arith.subf %1130, %1129 : vector<1x16xf32>
    %1132 = math.exp %1131 : vector<1x16xf32>
    %cst_430 = arith.constant 1.000000e+00 : f32
    %1133 = vector.broadcast %cst_430 : f32 to vector<1x16xf32>
    %1134 = arith.addf %1133, %1132 : vector<1x16xf32>
    %cst_431 = arith.constant 1.000000e+00 : f32
    %1135 = vector.broadcast %cst_431 : f32 to vector<1x16xf32>
    %1136 = arith.divf %1135, %1134 : vector<1x16xf32>
    %1137 = vector.extract_strided_slice %1112 {offsets = [0, 16], sizes = [1, 16], strides = [1, 1]} : vector<1x64xf32> to vector<1x16xf32>
    %cst_432 = arith.constant 0.000000e+00 : f32
    %1138 = vector.broadcast %cst_432 : f32 to vector<1x16xf32>
    %1139 = arith.subf %1138, %1137 : vector<1x16xf32>
    %1140 = math.exp %1139 : vector<1x16xf32>
    %cst_433 = arith.constant 1.000000e+00 : f32
    %1141 = vector.broadcast %cst_433 : f32 to vector<1x16xf32>
    %1142 = arith.addf %1141, %1140 : vector<1x16xf32>
    %cst_434 = arith.constant 1.000000e+00 : f32
    %1143 = vector.broadcast %cst_434 : f32 to vector<1x16xf32>
    %1144 = arith.divf %1143, %1142 : vector<1x16xf32>
    %1145 = vector.extract_strided_slice %1109 {offsets = [0, 32], sizes = [1, 16], strides = [1, 1]} : vector<1x64xf32> to vector<1x16xf32>
    %1146 = math.tanh %1145 : vector<1x16xf32>
    %1147 = vector.extract_strided_slice %1112 {offsets = [0, 32], sizes = [1, 16], strides = [1, 1]} : vector<1x64xf32> to vector<1x16xf32>
    %1148 = math.tanh %1147 : vector<1x16xf32>
    %1149 = vector.extract_strided_slice %1109 {offsets = [0, 48], sizes = [1, 16], strides = [1, 1]} : vector<1x64xf32> to vector<1x16xf32>
    %cst_435 = arith.constant 0.000000e+00 : f32
    %1150 = vector.broadcast %cst_435 : f32 to vector<1x16xf32>
    %1151 = arith.subf %1150, %1149 : vector<1x16xf32>
    %1152 = math.exp %1151 : vector<1x16xf32>
    %cst_436 = arith.constant 1.000000e+00 : f32
    %1153 = vector.broadcast %cst_436 : f32 to vector<1x16xf32>
    %1154 = arith.addf %1153, %1152 : vector<1x16xf32>
    %cst_437 = arith.constant 1.000000e+00 : f32
    %1155 = vector.broadcast %cst_437 : f32 to vector<1x16xf32>
    %1156 = arith.divf %1155, %1154 : vector<1x16xf32>
    %1157 = vector.extract_strided_slice %1112 {offsets = [0, 48], sizes = [1, 16], strides = [1, 1]} : vector<1x64xf32> to vector<1x16xf32>
    %cst_438 = arith.constant 0.000000e+00 : f32
    %1158 = vector.broadcast %cst_438 : f32 to vector<1x16xf32>
    %1159 = arith.subf %1158, %1157 : vector<1x16xf32>
    %1160 = math.exp %1159 : vector<1x16xf32>
    %cst_439 = arith.constant 1.000000e+00 : f32
    %1161 = vector.broadcast %cst_439 : f32 to vector<1x16xf32>
    %1162 = arith.addf %1161, %1160 : vector<1x16xf32>
    %cst_440 = arith.constant 1.000000e+00 : f32
    %1163 = vector.broadcast %cst_440 : f32 to vector<1x16xf32>
    %1164 = arith.divf %1163, %1162 : vector<1x16xf32>
    %1165 = arith.mulf %1136, %1097 : vector<1x16xf32>
    %1166 = arith.mulf %1120, %1146 : vector<1x16xf32>
    %1167 = arith.addf %1165, %1166 : vector<1x16xf32>
    %1168 = arith.mulf %1144, %1100 : vector<1x16xf32>
    %1169 = arith.mulf %1128, %1148 : vector<1x16xf32>
    %1170 = arith.addf %1168, %1169 : vector<1x16xf32>
    %1171 = math.tanh %1167 : vector<1x16xf32>
    %1172 = arith.mulf %1156, %1171 : vector<1x16xf32>
    %1173 = math.tanh %1170 : vector<1x16xf32>
    %1174 = arith.mulf %1164, %1173 : vector<1x16xf32>
    %c5_441 = arith.constant 5 : index
    %c0_442 = arith.constant 0 : index
    %1175 = vector.load %arg51[%c5_441, %c0_442] : memref<8x16xf32, #tpu.memory_space<vmem>>, vector<1x16xf32>
    tpu.vector_store %arg51[%c5_441, %c0_442], %1172 {strides = array<i32>} : memref<8x16xf32, #tpu.memory_space<vmem>>, vector<1x16xf32>,
    %c2_443 = arith.constant 2 : index
    %c0_444 = arith.constant 0 : index
    %1176 = vector.load %arg52[%c2_443, %c0_444] : memref<8x16xf32, #tpu.memory_space<vmem>>, vector<1x16xf32>
    tpu.vector_store %arg52[%c2_443, %c0_444], %1174 {strides = array<i32>} : memref<8x16xf32, #tpu.memory_space<vmem>>, vector<1x16xf32>,
    %1177 = vector.extract_strided_slice %742 {offsets = [6, 0], sizes = [1, 64], strides = [1, 1]} : vector<8x64xf32> to vector<1x64xf32>
    %cst_445 = arith.constant dense<0.000000e+00> : vector<1x64xf32>
    %1178 = tpu.matmul %1172, %751, %cst_445 {dimension_numbers = #tpu.dot_dimension_numbers<[1], [0], [0], [1], [0, 0, 1, 1], [], []>} : vector<1x16xf32>, vector<16x64xf32>, vector<1x64xf32> -> vector<1x64xf32>
    %1179 = arith.addf %1177, %1178 : vector<1x64xf32>
    %1180 = vector.extract_strided_slice %750 {offsets = [1, 0], sizes = [1, 64], strides = [1, 1]} : vector<8x64xf32> to vector<1x64xf32>
    %cst_446 = arith.constant dense<0.000000e+00> : vector<1x64xf32>
    %1181 = tpu.matmul %1174, %752, %cst_446 {dimension_numbers = #tpu.dot_dimension_numbers<[1], [0], [0], [1], [0, 0, 1, 1], [], []>} : vector<1x16xf32>, vector<16x64xf32>, vector<1x64xf32> -> vector<1x64xf32>
    %1182 = arith.addf %1180, %1181 : vector<1x64xf32>
    %1183 = vector.extract_strided_slice %1179 {offsets = [0, 0], sizes = [1, 16], strides = [1, 1]} : vector<1x64xf32> to vector<1x16xf32>
    %cst_447 = arith.constant 0.000000e+00 : f32
    %1184 = vector.broadcast %cst_447 : f32 to vector<1x16xf32>
    %1185 = arith.subf %1184, %1183 : vector<1x16xf32>
    %1186 = math.exp %1185 : vector<1x16xf32>
    %cst_448 = arith.constant 1.000000e+00 : f32
    %1187 = vector.broadcast %cst_448 : f32 to vector<1x16xf32>
    %1188 = arith.addf %1187, %1186 : vector<1x16xf32>
    %cst_449 = arith.constant 1.000000e+00 : f32
    %1189 = vector.broadcast %cst_449 : f32 to vector<1x16xf32>
    %1190 = arith.divf %1189, %1188 : vector<1x16xf32>
    %1191 = vector.extract_strided_slice %1182 {offsets = [0, 0], sizes = [1, 16], strides = [1, 1]} : vector<1x64xf32> to vector<1x16xf32>
    %cst_450 = arith.constant 0.000000e+00 : f32
    %1192 = vector.broadcast %cst_450 : f32 to vector<1x16xf32>
    %1193 = arith.subf %1192, %1191 : vector<1x16xf32>
    %1194 = math.exp %1193 : vector<1x16xf32>
    %cst_451 = arith.constant 1.000000e+00 : f32
    %1195 = vector.broadcast %cst_451 : f32 to vector<1x16xf32>
    %1196 = arith.addf %1195, %1194 : vector<1x16xf32>
    %cst_452 = arith.constant 1.000000e+00 : f32
    %1197 = vector.broadcast %cst_452 : f32 to vector<1x16xf32>
    %1198 = arith.divf %1197, %1196 : vector<1x16xf32>
    %1199 = vector.extract_strided_slice %1179 {offsets = [0, 16], sizes = [1, 16], strides = [1, 1]} : vector<1x64xf32> to vector<1x16xf32>
    %cst_453 = arith.constant 0.000000e+00 : f32
    %1200 = vector.broadcast %cst_453 : f32 to vector<1x16xf32>
    %1201 = arith.subf %1200, %1199 : vector<1x16xf32>
    %1202 = math.exp %1201 : vector<1x16xf32>
    %cst_454 = arith.constant 1.000000e+00 : f32
    %1203 = vector.broadcast %cst_454 : f32 to vector<1x16xf32>
    %1204 = arith.addf %1203, %1202 : vector<1x16xf32>
    %cst_455 = arith.constant 1.000000e+00 : f32
    %1205 = vector.broadcast %cst_455 : f32 to vector<1x16xf32>
    %1206 = arith.divf %1205, %1204 : vector<1x16xf32>
    %1207 = vector.extract_strided_slice %1182 {offsets = [0, 16], sizes = [1, 16], strides = [1, 1]} : vector<1x64xf32> to vector<1x16xf32>
    %cst_456 = arith.constant 0.000000e+00 : f32
    %1208 = vector.broadcast %cst_456 : f32 to vector<1x16xf32>
    %1209 = arith.subf %1208, %1207 : vector<1x16xf32>
    %1210 = math.exp %1209 : vector<1x16xf32>
    %cst_457 = arith.constant 1.000000e+00 : f32
    %1211 = vector.broadcast %cst_457 : f32 to vector<1x16xf32>
    %1212 = arith.addf %1211, %1210 : vector<1x16xf32>
    %cst_458 = arith.constant 1.000000e+00 : f32
    %1213 = vector.broadcast %cst_458 : f32 to vector<1x16xf32>
    %1214 = arith.divf %1213, %1212 : vector<1x16xf32>
    %1215 = vector.extract_strided_slice %1179 {offsets = [0, 32], sizes = [1, 16], strides = [1, 1]} : vector<1x64xf32> to vector<1x16xf32>
    %1216 = math.tanh %1215 : vector<1x16xf32>
    %1217 = vector.extract_strided_slice %1182 {offsets = [0, 32], sizes = [1, 16], strides = [1, 1]} : vector<1x64xf32> to vector<1x16xf32>
    %1218 = math.tanh %1217 : vector<1x16xf32>
    %1219 = vector.extract_strided_slice %1179 {offsets = [0, 48], sizes = [1, 16], strides = [1, 1]} : vector<1x64xf32> to vector<1x16xf32>
    %cst_459 = arith.constant 0.000000e+00 : f32
    %1220 = vector.broadcast %cst_459 : f32 to vector<1x16xf32>
    %1221 = arith.subf %1220, %1219 : vector<1x16xf32>
    %1222 = math.exp %1221 : vector<1x16xf32>
    %cst_460 = arith.constant 1.000000e+00 : f32
    %1223 = vector.broadcast %cst_460 : f32 to vector<1x16xf32>
    %1224 = arith.addf %1223, %1222 : vector<1x16xf32>
    %cst_461 = arith.constant 1.000000e+00 : f32
    %1225 = vector.broadcast %cst_461 : f32 to vector<1x16xf32>
    %1226 = arith.divf %1225, %1224 : vector<1x16xf32>
    %1227 = vector.extract_strided_slice %1182 {offsets = [0, 48], sizes = [1, 16], strides = [1, 1]} : vector<1x64xf32> to vector<1x16xf32>
    %cst_462 = arith.constant 0.000000e+00 : f32
    %1228 = vector.broadcast %cst_462 : f32 to vector<1x16xf32>
    %1229 = arith.subf %1228, %1227 : vector<1x16xf32>
    %1230 = math.exp %1229 : vector<1x16xf32>
    %cst_463 = arith.constant 1.000000e+00 : f32
    %1231 = vector.broadcast %cst_463 : f32 to vector<1x16xf32>
    %1232 = arith.addf %1231, %1230 : vector<1x16xf32>
    %cst_464 = arith.constant 1.000000e+00 : f32
    %1233 = vector.broadcast %cst_464 : f32 to vector<1x16xf32>
    %1234 = arith.divf %1233, %1232 : vector<1x16xf32>
    %1235 = arith.mulf %1206, %1167 : vector<1x16xf32>
    %1236 = arith.mulf %1190, %1216 : vector<1x16xf32>
    %1237 = arith.addf %1235, %1236 : vector<1x16xf32>
    %1238 = arith.mulf %1214, %1170 : vector<1x16xf32>
    %1239 = arith.mulf %1198, %1218 : vector<1x16xf32>
    %1240 = arith.addf %1238, %1239 : vector<1x16xf32>
    %1241 = math.tanh %1237 : vector<1x16xf32>
    %1242 = arith.mulf %1226, %1241 : vector<1x16xf32>
    %1243 = math.tanh %1240 : vector<1x16xf32>
    %1244 = arith.mulf %1234, %1243 : vector<1x16xf32>
    %c6_465 = arith.constant 6 : index
    %c0_466 = arith.constant 0 : index
    %1245 = vector.load %arg51[%c6_465, %c0_466] : memref<8x16xf32, #tpu.memory_space<vmem>>, vector<1x16xf32>
    tpu.vector_store %arg51[%c6_465, %c0_466], %1242 {strides = array<i32>} : memref<8x16xf32, #tpu.memory_space<vmem>>, vector<1x16xf32>,
    %c1_467 = arith.constant 1 : index
    %c0_468 = arith.constant 0 : index
    %1246 = vector.load %arg52[%c1_467, %c0_468] : memref<8x16xf32, #tpu.memory_space<vmem>>, vector<1x16xf32>
    tpu.vector_store %arg52[%c1_467, %c0_468], %1244 {strides = array<i32>} : memref<8x16xf32, #tpu.memory_space<vmem>>, vector<1x16xf32>,
    %1247 = vector.extract_strided_slice %742 {offsets = [7, 0], sizes = [1, 64], strides = [1, 1]} : vector<8x64xf32> to vector<1x64xf32>
    %cst_469 = arith.constant dense<0.000000e+00> : vector<1x64xf32>
    %1248 = tpu.matmul %1242, %751, %cst_469 {dimension_numbers = #tpu.dot_dimension_numbers<[1], [0], [0], [1], [0, 0, 1, 1], [], []>} : vector<1x16xf32>, vector<16x64xf32>, vector<1x64xf32> -> vector<1x64xf32>
    %1249 = arith.addf %1247, %1248 : vector<1x64xf32>
    %1250 = vector.extract_strided_slice %750 {offsets = [0, 0], sizes = [1, 64], strides = [1, 1]} : vector<8x64xf32> to vector<1x64xf32>
    %cst_470 = arith.constant dense<0.000000e+00> : vector<1x64xf32>
    %1251 = tpu.matmul %1244, %752, %cst_470 {dimension_numbers = #tpu.dot_dimension_numbers<[1], [0], [0], [1], [0, 0, 1, 1], [], []>} : vector<1x16xf32>, vector<16x64xf32>, vector<1x64xf32> -> vector<1x64xf32>
    %1252 = arith.addf %1250, %1251 : vector<1x64xf32>
    %1253 = vector.extract_strided_slice %1249 {offsets = [0, 0], sizes = [1, 16], strides = [1, 1]} : vector<1x64xf32> to vector<1x16xf32>
    %cst_471 = arith.constant 0.000000e+00 : f32
    %1254 = vector.broadcast %cst_471 : f32 to vector<1x16xf32>
    %1255 = arith.subf %1254, %1253 : vector<1x16xf32>
    %1256 = math.exp %1255 : vector<1x16xf32>
    %cst_472 = arith.constant 1.000000e+00 : f32
    %1257 = vector.broadcast %cst_472 : f32 to vector<1x16xf32>
    %1258 = arith.addf %1257, %1256 : vector<1x16xf32>
    %cst_473 = arith.constant 1.000000e+00 : f32
    %1259 = vector.broadcast %cst_473 : f32 to vector<1x16xf32>
    %1260 = arith.divf %1259, %1258 : vector<1x16xf32>
    %1261 = vector.extract_strided_slice %1252 {offsets = [0, 0], sizes = [1, 16], strides = [1, 1]} : vector<1x64xf32> to vector<1x16xf32>
    %cst_474 = arith.constant 0.000000e+00 : f32
    %1262 = vector.broadcast %cst_474 : f32 to vector<1x16xf32>
    %1263 = arith.subf %1262, %1261 : vector<1x16xf32>
    %1264 = math.exp %1263 : vector<1x16xf32>
    %cst_475 = arith.constant 1.000000e+00 : f32
    %1265 = vector.broadcast %cst_475 : f32 to vector<1x16xf32>
    %1266 = arith.addf %1265, %1264 : vector<1x16xf32>
    %cst_476 = arith.constant 1.000000e+00 : f32
    %1267 = vector.broadcast %cst_476 : f32 to vector<1x16xf32>
    %1268 = arith.divf %1267, %1266 : vector<1x16xf32>
    %1269 = vector.extract_strided_slice %1249 {offsets = [0, 16], sizes = [1, 16], strides = [1, 1]} : vector<1x64xf32> to vector<1x16xf32>
    %cst_477 = arith.constant 0.000000e+00 : f32
    %1270 = vector.broadcast %cst_477 : f32 to vector<1x16xf32>
    %1271 = arith.subf %1270, %1269 : vector<1x16xf32>
    %1272 = math.exp %1271 : vector<1x16xf32>
    %cst_478 = arith.constant 1.000000e+00 : f32
    %1273 = vector.broadcast %cst_478 : f32 to vector<1x16xf32>
    %1274 = arith.addf %1273, %1272 : vector<1x16xf32>
    %cst_479 = arith.constant 1.000000e+00 : f32
    %1275 = vector.broadcast %cst_479 : f32 to vector<1x16xf32>
    %1276 = arith.divf %1275, %1274 : vector<1x16xf32>
    %1277 = vector.extract_strided_slice %1252 {offsets = [0, 16], sizes = [1, 16], strides = [1, 1]} : vector<1x64xf32> to vector<1x16xf32>
    %cst_480 = arith.constant 0.000000e+00 : f32
    %1278 = vector.broadcast %cst_480 : f32 to vector<1x16xf32>
    %1279 = arith.subf %1278, %1277 : vector<1x16xf32>
    %1280 = math.exp %1279 : vector<1x16xf32>
    %cst_481 = arith.constant 1.000000e+00 : f32
    %1281 = vector.broadcast %cst_481 : f32 to vector<1x16xf32>
    %1282 = arith.addf %1281, %1280 : vector<1x16xf32>
    %cst_482 = arith.constant 1.000000e+00 : f32
    %1283 = vector.broadcast %cst_482 : f32 to vector<1x16xf32>
    %1284 = arith.divf %1283, %1282 : vector<1x16xf32>
    %1285 = vector.extract_strided_slice %1249 {offsets = [0, 32], sizes = [1, 16], strides = [1, 1]} : vector<1x64xf32> to vector<1x16xf32>
    %1286 = math.tanh %1285 : vector<1x16xf32>
    %1287 = vector.extract_strided_slice %1252 {offsets = [0, 32], sizes = [1, 16], strides = [1, 1]} : vector<1x64xf32> to vector<1x16xf32>
    %1288 = math.tanh %1287 : vector<1x16xf32>
    %1289 = vector.extract_strided_slice %1249 {offsets = [0, 48], sizes = [1, 16], strides = [1, 1]} : vector<1x64xf32> to vector<1x16xf32>
    %cst_483 = arith.constant 0.000000e+00 : f32
    %1290 = vector.broadcast %cst_483 : f32 to vector<1x16xf32>
    %1291 = arith.subf %1290, %1289 : vector<1x16xf32>
    %1292 = math.exp %1291 : vector<1x16xf32>
    %cst_484 = arith.constant 1.000000e+00 : f32
    %1293 = vector.broadcast %cst_484 : f32 to vector<1x16xf32>
    %1294 = arith.addf %1293, %1292 : vector<1x16xf32>
    %cst_485 = arith.constant 1.000000e+00 : f32
    %1295 = vector.broadcast %cst_485 : f32 to vector<1x16xf32>
    %1296 = arith.divf %1295, %1294 : vector<1x16xf32>
    %1297 = vector.extract_strided_slice %1252 {offsets = [0, 48], sizes = [1, 16], strides = [1, 1]} : vector<1x64xf32> to vector<1x16xf32>
    %cst_486 = arith.constant 0.000000e+00 : f32
    %1298 = vector.broadcast %cst_486 : f32 to vector<1x16xf32>
    %1299 = arith.subf %1298, %1297 : vector<1x16xf32>
    %1300 = math.exp %1299 : vector<1x16xf32>
    %cst_487 = arith.constant 1.000000e+00 : f32
    %1301 = vector.broadcast %cst_487 : f32 to vector<1x16xf32>
    %1302 = arith.addf %1301, %1300 : vector<1x16xf32>
    %cst_488 = arith.constant 1.000000e+00 : f32
    %1303 = vector.broadcast %cst_488 : f32 to vector<1x16xf32>
    %1304 = arith.divf %1303, %1302 : vector<1x16xf32>
    %1305 = arith.mulf %1276, %1237 : vector<1x16xf32>
    %1306 = arith.mulf %1260, %1286 : vector<1x16xf32>
    %1307 = arith.addf %1305, %1306 : vector<1x16xf32>
    %1308 = arith.mulf %1284, %1240 : vector<1x16xf32>
    %1309 = arith.mulf %1268, %1288 : vector<1x16xf32>
    %1310 = arith.addf %1308, %1309 : vector<1x16xf32>
    %1311 = math.tanh %1307 : vector<1x16xf32>
    %1312 = arith.mulf %1296, %1311 : vector<1x16xf32>
    %1313 = math.tanh %1310 : vector<1x16xf32>
    %1314 = arith.mulf %1304, %1313 : vector<1x16xf32>
    %c7_489 = arith.constant 7 : index
    %c0_490 = arith.constant 0 : index
    %1315 = vector.load %arg51[%c7_489, %c0_490] : memref<8x16xf32, #tpu.memory_space<vmem>>, vector<1x16xf32>
    tpu.vector_store %arg51[%c7_489, %c0_490], %1312 {strides = array<i32>} : memref<8x16xf32, #tpu.memory_space<vmem>>, vector<1x16xf32>,
    %c0_491 = arith.constant 0 : index
    %c0_492 = arith.constant 0 : index
    %1316 = vector.load %arg52[%c0_491, %c0_492] : memref<8x16xf32, #tpu.memory_space<vmem>>, vector<1x16xf32>
    tpu.vector_store %arg52[%c0_491, %c0_492], %1314 {strides = array<i32>} : memref<8x16xf32, #tpu.memory_space<vmem>>, vector<1x16xf32>,
    %c0_493 = arith.constant 0 : index
    %c0_494 = arith.constant 0 : index
    %1317 = vector.load %arg51[%c0_493, %c0_494] : memref<8x16xf32, #tpu.memory_space<vmem>>, vector<8x16xf32>
    %c0_495 = arith.constant 0 : index
    %c0_496 = arith.constant 0 : index
    %1318 = vector.load %arg52[%c0_495, %c0_496] : memref<8x16xf32, #tpu.memory_space<vmem>>, vector<8x16xf32>
    %cst_497 = arith.constant dense<0.000000e+00> : vector<8xf32>
    %1319 = vector.multi_reduction <add>, %1317, %cst_497 [1] : vector<8x16xf32> to vector<8xf32>
    %1320 = vector.shape_cast %1319 : vector<8xf32> to vector<8x1xf32>
    %cst_498 = arith.constant dense<0.000000e+00> : vector<8xf32>
    %1321 = vector.multi_reduction <add>, %1318, %cst_498 [1] : vector<8x16xf32> to vector<8xf32>
    %1322 = vector.shape_cast %1321 : vector<8xf32> to vector<8x1xf32>
    %1323 = arith.addf %1320, %1322 : vector<8x1xf32>
    %cst_499 = arith.constant 3.125000e-02 : f32
    %1324 = vector.broadcast %cst_499 : f32 to vector<8x1xf32>
    %1325 = arith.mulf %1323, %1324 : vector<8x1xf32>
    %1326 = vector.broadcast %1325 : vector<8x1xf32> to vector<8x16xf32>
    %1327 = arith.subf %1317, %1326 : vector<8x16xf32>
    %1328 = vector.broadcast %1325 : vector<8x1xf32> to vector<8x16xf32>
    %1329 = arith.subf %1318, %1328 : vector<8x16xf32>
    %1330 = arith.mulf %1327, %1327 : vector<8x16xf32>
    %cst_500 = arith.constant dense<0.000000e+00> : vector<8xf32>
    %1331 = vector.multi_reduction <add>, %1330, %cst_500 [1] : vector<8x16xf32> to vector<8xf32>
    %1332 = vector.shape_cast %1331 : vector<8xf32> to vector<8x1xf32>
    %1333 = arith.mulf %1329, %1329 : vector<8x16xf32>
    %cst_501 = arith.constant dense<0.000000e+00> : vector<8xf32>
    %1334 = vector.multi_reduction <add>, %1333, %cst_501 [1] : vector<8x16xf32> to vector<8xf32>
    %1335 = vector.shape_cast %1334 : vector<8xf32> to vector<8x1xf32>
    %1336 = arith.addf %1332, %1335 : vector<8x1xf32>
    %cst_502 = arith.constant 3.125000e-02 : f32
    %1337 = vector.broadcast %cst_502 : f32 to vector<8x1xf32>
    %1338 = arith.mulf %1336, %1337 : vector<8x1xf32>
    %c0_503 = arith.constant 0 : index
    %c0_504 = arith.constant 0 : index
    %1339 = vector.load %arg26[%c0_503, %c0_504] : memref<1x32xf32, #tpu.memory_space<vmem>>, vector<1x32xf32>
    %c0_505 = arith.constant 0 : index
    %c0_506 = arith.constant 0 : index
    %1340 = vector.load %arg27[%c0_505, %c0_506] : memref<1x32xf32, #tpu.memory_space<vmem>>, vector<1x32xf32>
    %1341 = vector.extract_strided_slice %1318 {offsets = [0, 15], sizes = [8, 1], strides = [1, 1]} : vector<8x16xf32> to vector<8x1xf32>
    %1342 = arith.subf %1341, %1325 : vector<8x1xf32>
    %cst_507 = arith.constant 9.99999974E-6 : f32
    %1343 = vector.broadcast %cst_507 : f32 to vector<8x1xf32>
    %1344 = arith.addf %1338, %1343 : vector<8x1xf32>
    %1345 = math.rsqrt %1344 : vector<8x1xf32>
    %1346 = arith.mulf %1342, %1345 : vector<8x1xf32>
    %1347 = vector.extract_strided_slice %1339 {offsets = [0, 31], sizes = [1, 1], strides = [1, 1]} : vector<1x32xf32> to vector<1x1xf32>
    %1348 = vector.broadcast %1347 : vector<1x1xf32> to vector<8x1xf32>
    %1349 = arith.mulf %1346, %1348 : vector<8x1xf32>
    %1350 = vector.extract_strided_slice %1340 {offsets = [0, 31], sizes = [1, 1], strides = [1, 1]} : vector<1x32xf32> to vector<1x1xf32>
    %1351 = vector.broadcast %1350 : vector<1x1xf32> to vector<8x1xf32>
    %1352 = arith.addf %1349, %1351 : vector<8x1xf32>
    %1353 = vector.extract_strided_slice %154 {offsets = [0, 15], sizes = [8, 1], strides = [1, 1]} : vector<8x16xf32> to vector<8x1xf32>
    %1354 = vector.extract_strided_slice %0 {offsets = [0, 4], sizes = [32, 1], strides = [1, 1]} : vector<32x5xf32> to vector<32x1xf32>
    %c0_508 = arith.constant 0 : index
    %c0_509 = arith.constant 0 : index
    %1355 = vector.load %arg1[%c0_508, %c0_509] : memref<32x1xf32, #tpu.memory_space<vmem>>, vector<32x1xf32>
    %1356 = arith.addf %1354, %1355 : vector<32x1xf32>
    %c0_510 = arith.constant 0 : index
    %c0_511 = arith.constant 0 : index
    %1357 = vector.load %arg28[%c0_510, %c0_511] : memref<32x32xf32, #tpu.memory_space<vmem>>, vector<32x32xf32>
    %cst_512 = arith.constant dense<0.000000e+00> : vector<32x1xf32>
    %1358 = tpu.matmul %1357, %1356, %cst_512 {dimension_numbers = #tpu.dot_dimension_numbers<[1], [0], [0], [1], [0, 0, 1, 1], [], []>} : vector<32x32xf32>, vector<32x1xf32>, vector<32x1xf32> -> vector<32x1xf32>
    %c0_513 = arith.constant 0 : index
    %c0_514 = arith.constant 0 : index
    %1359 = vector.load %arg29[%c0_513, %c0_514] : memref<32x1xf32, #tpu.memory_space<vmem>>, vector<32x1xf32>
    %1360 = arith.addf %1358, %1359 : vector<32x1xf32>
    %c0_515 = arith.constant 0 : index
    %c0_516 = arith.constant 0 : index
    %1361 = vector.load %arg30[%c0_515, %c0_516] : memref<32x32xf32, #tpu.memory_space<vmem>>, vector<32x32xf32>
    %cst_517 = arith.constant dense<0.000000e+00> : vector<32x1xf32>
    %1362 = tpu.matmul %1361, %1360, %cst_517 {dimension_numbers = #tpu.dot_dimension_numbers<[1], [0], [0], [1], [0, 0, 1, 1], [], []>} : vector<32x32xf32>, vector<32x1xf32>, vector<32x1xf32> -> vector<32x1xf32>
    %c0_518 = arith.constant 0 : index
    %c0_519 = arith.constant 0 : index
    %1363 = vector.load %arg31[%c0_518, %c0_519] : memref<32x1xf32, #tpu.memory_space<vmem>>, vector<32x1xf32>
    %1364 = arith.addf %1362, %1363 : vector<32x1xf32>
    %1365 = arith.addf %1356, %1364 : vector<32x1xf32>
    %c0_520 = arith.constant 0 : index
    %c0_521 = arith.constant 0 : index
    %1366 = vector.load %arg32[%c0_520, %c0_521] : memref<32x1xf32, #tpu.memory_space<vmem>>, vector<32x1xf32>
    %c0_522 = arith.constant 0 : index
    %c0_523 = arith.constant 0 : index
    %1367 = vector.load %arg33[%c0_522, %c0_523] : memref<32x1xf32, #tpu.memory_space<vmem>>, vector<32x1xf32>
    %cst_524 = arith.constant dense<0.000000e+00> : vector<1xf32>
    %1368 = vector.multi_reduction <add>, %1365, %cst_524 [0] : vector<32x1xf32> to vector<1xf32>
    %1369 = vector.shape_cast %1368 : vector<1xf32> to vector<1x1xf32>
    %cst_525 = arith.constant 3.200000e+01 : f32
    %1370 = vector.broadcast %cst_525 : f32 to vector<1x1xf32>
    %1371 = arith.divf %1369, %1370 : vector<1x1xf32>
    %1372 = vector.broadcast %1371 : vector<1x1xf32> to vector<32x1xf32>
    %1373 = arith.subf %1365, %1372 : vector<32x1xf32>
    %1374 = arith.mulf %1373, %1373 : vector<32x1xf32>
    %cst_526 = arith.constant dense<0.000000e+00> : vector<1xf32>
    %1375 = vector.multi_reduction <add>, %1374, %cst_526 [0] : vector<32x1xf32> to vector<1xf32>
    %1376 = vector.shape_cast %1375 : vector<1xf32> to vector<1x1xf32>
    %cst_527 = arith.constant 3.200000e+01 : f32
    %1377 = vector.broadcast %cst_527 : f32 to vector<1x1xf32>
    %1378 = arith.divf %1376, %1377 : vector<1x1xf32>
    %cst_528 = arith.constant 9.99999974E-6 : f32
    %1379 = vector.broadcast %cst_528 : f32 to vector<1x1xf32>
    %1380 = arith.addf %1378, %1379 : vector<1x1xf32>
    %1381 = math.rsqrt %1380 : vector<1x1xf32>
    %1382 = vector.broadcast %1381 : vector<1x1xf32> to vector<32x1xf32>
    %1383 = arith.mulf %1373, %1382 : vector<32x1xf32>
    %1384 = arith.mulf %1383, %1366 : vector<32x1xf32>
    %1385 = arith.addf %1384, %1367 : vector<32x1xf32>
    %c0_529 = arith.constant 0 : index
    %c0_530 = arith.constant 0 : index
    %1386 = vector.load %arg34[%c0_529, %c0_530] : memref<64x32xf32, #tpu.memory_space<vmem>>, vector<64x32xf32>
    %cst_531 = arith.constant dense<0.000000e+00> : vector<64x1xf32>
    %1387 = tpu.matmul %1386, %1385, %cst_531 {dimension_numbers = #tpu.dot_dimension_numbers<[1], [0], [0], [1], [0, 0, 1, 1], [], []>} : vector<64x32xf32>, vector<32x1xf32>, vector<64x1xf32> -> vector<64x1xf32>
    %c0_532 = arith.constant 0 : index
    %c0_533 = arith.constant 0 : index
    %1388 = vector.load %arg35[%c0_532, %c0_533] : memref<64x1xf32, #tpu.memory_space<vmem>>, vector<64x1xf32>
    %1389 = arith.addf %1387, %1388 : vector<64x1xf32>
    %cst_534 = arith.constant 5.000000e-01 : f32
    %1390 = vector.broadcast %cst_534 : f32 to vector<64x1xf32>
    %1391 = arith.mulf %1390, %1389 : vector<64x1xf32>
    %cst_535 = arith.constant 0.707106769 : f32
    %1392 = vector.broadcast %cst_535 : f32 to vector<64x1xf32>
    %1393 = arith.mulf %1389, %1392 : vector<64x1xf32>
    %cst_536 = arith.constant 0.000000e+00 : f32
    %1394 = vector.broadcast %cst_536 : f32 to vector<64x1xf32>
    %1395 = arith.cmpf oge, %1393, %1394 : vector<64x1xf32>
    %cst_537 = arith.constant 0.000000e+00 : f32
    %1396 = vector.broadcast %cst_537 : f32 to vector<64x1xf32>
    %1397 = arith.subf %1396, %1393 : vector<64x1xf32>
    %1398 = arith.select %1395, %1393, %1397 : vector<64x1xi1>, vector<64x1xf32>
    %cst_538 = arith.constant 0.327591091 : f32
    %1399 = vector.broadcast %cst_538 : f32 to vector<64x1xf32>
    %1400 = arith.mulf %1399, %1398 : vector<64x1xf32>
    %cst_539 = arith.constant 1.000000e+00 : f32
    %1401 = vector.broadcast %cst_539 : f32 to vector<64x1xf32>
    %1402 = arith.addf %1401, %1400 : vector<64x1xf32>
    %cst_540 = arith.constant 1.000000e+00 : f32
    %1403 = vector.broadcast %cst_540 : f32 to vector<64x1xf32>
    %1404 = arith.divf %1403, %1402 : vector<64x1xf32>
    %cst_541 = arith.constant 1.06140542 : f32
    %1405 = vector.broadcast %cst_541 : f32 to vector<64x1xf32>
    %1406 = arith.mulf %1405, %1404 : vector<64x1xf32>
    %cst_542 = arith.constant -1.45315206 : f32
    %1407 = vector.broadcast %cst_542 : f32 to vector<64x1xf32>
    %1408 = arith.addf %1406, %1407 : vector<64x1xf32>
    %1409 = arith.mulf %1408, %1404 : vector<64x1xf32>
    %cst_543 = arith.constant 1.42141378 : f32
    %1410 = vector.broadcast %cst_543 : f32 to vector<64x1xf32>
    %1411 = arith.addf %1409, %1410 : vector<64x1xf32>
    %1412 = arith.mulf %1411, %1404 : vector<64x1xf32>
    %cst_544 = arith.constant -0.284496725 : f32
    %1413 = vector.broadcast %cst_544 : f32 to vector<64x1xf32>
    %1414 = arith.addf %1412, %1413 : vector<64x1xf32>
    %1415 = arith.mulf %1414, %1404 : vector<64x1xf32>
    %cst_545 = arith.constant 0.254829586 : f32
    %1416 = vector.broadcast %cst_545 : f32 to vector<64x1xf32>
    %1417 = arith.addf %1415, %1416 : vector<64x1xf32>
    %1418 = arith.mulf %1417, %1404 : vector<64x1xf32>
    %cst_546 = arith.constant 0.000000e+00 : f32
    %1419 = vector.broadcast %cst_546 : f32 to vector<64x1xf32>
    %1420 = arith.subf %1419, %1398 : vector<64x1xf32>
    %1421 = arith.mulf %1420, %1398 : vector<64x1xf32>
    %1422 = math.exp %1421 : vector<64x1xf32>
    %1423 = arith.mulf %1418, %1422 : vector<64x1xf32>
    %cst_547 = arith.constant 1.000000e+00 : f32
    %1424 = vector.broadcast %cst_547 : f32 to vector<64x1xf32>
    %1425 = arith.subf %1424, %1423 : vector<64x1xf32>
    %cst_548 = arith.constant 0.000000e+00 : f32
    %1426 = vector.broadcast %cst_548 : f32 to vector<64x1xf32>
    %1427 = arith.cmpf oge, %1393, %1426 : vector<64x1xf32>
    %cst_549 = arith.constant 0.000000e+00 : f32
    %1428 = vector.broadcast %cst_549 : f32 to vector<64x1xf32>
    %1429 = arith.subf %1428, %1425 : vector<64x1xf32>
    %1430 = arith.select %1427, %1425, %1429 : vector<64x1xi1>, vector<64x1xf32>
    %cst_550 = arith.constant 1.000000e+00 : f32
    %1431 = vector.broadcast %cst_550 : f32 to vector<64x1xf32>
    %1432 = arith.addf %1431, %1430 : vector<64x1xf32>
    %1433 = arith.mulf %1391, %1432 : vector<64x1xf32>
    %c0_551 = arith.constant 0 : index
    %c0_552 = arith.constant 0 : index
    %1434 = vector.load %arg36[%c0_551, %c0_552] : memref<32x64xf32, #tpu.memory_space<vmem>>, vector<32x64xf32>
    %cst_553 = arith.constant dense<0.000000e+00> : vector<32x1xf32>
    %1435 = tpu.matmul %1434, %1433, %cst_553 {dimension_numbers = #tpu.dot_dimension_numbers<[1], [0], [0], [1], [0, 0, 1, 1], [], []>} : vector<32x64xf32>, vector<64x1xf32>, vector<32x1xf32> -> vector<32x1xf32>
    %c0_554 = arith.constant 0 : index
    %c0_555 = arith.constant 0 : index
    %1436 = vector.load %arg37[%c0_554, %c0_555] : memref<32x1xf32, #tpu.memory_space<vmem>>, vector<32x1xf32>
    %1437 = arith.addf %1435, %1436 : vector<32x1xf32>
    %1438 = arith.addf %1385, %1437 : vector<32x1xf32>
    %c0_556 = arith.constant 0 : index
    %c0_557 = arith.constant 0 : index
    %1439 = vector.load %arg38[%c0_556, %c0_557] : memref<32x1xf32, #tpu.memory_space<vmem>>, vector<32x1xf32>
    %c0_558 = arith.constant 0 : index
    %c0_559 = arith.constant 0 : index
    %1440 = vector.load %arg39[%c0_558, %c0_559] : memref<32x1xf32, #tpu.memory_space<vmem>>, vector<32x1xf32>
    %cst_560 = arith.constant dense<0.000000e+00> : vector<1xf32>
    %1441 = vector.multi_reduction <add>, %1438, %cst_560 [0] : vector<32x1xf32> to vector<1xf32>
    %1442 = vector.shape_cast %1441 : vector<1xf32> to vector<1x1xf32>
    %cst_561 = arith.constant 3.200000e+01 : f32
    %1443 = vector.broadcast %cst_561 : f32 to vector<1x1xf32>
    %1444 = arith.divf %1442, %1443 : vector<1x1xf32>
    %1445 = vector.broadcast %1444 : vector<1x1xf32> to vector<32x1xf32>
    %1446 = arith.subf %1438, %1445 : vector<32x1xf32>
    %1447 = arith.mulf %1446, %1446 : vector<32x1xf32>
    %cst_562 = arith.constant dense<0.000000e+00> : vector<1xf32>
    %1448 = vector.multi_reduction <add>, %1447, %cst_562 [0] : vector<32x1xf32> to vector<1xf32>
    %1449 = vector.shape_cast %1448 : vector<1xf32> to vector<1x1xf32>
    %cst_563 = arith.constant 3.200000e+01 : f32
    %1450 = vector.broadcast %cst_563 : f32 to vector<1x1xf32>
    %1451 = arith.divf %1449, %1450 : vector<1x1xf32>
    %cst_564 = arith.constant 9.99999974E-6 : f32
    %1452 = vector.broadcast %cst_564 : f32 to vector<1x1xf32>
    %1453 = arith.addf %1451, %1452 : vector<1x1xf32>
    %1454 = math.rsqrt %1453 : vector<1x1xf32>
    %1455 = vector.broadcast %1454 : vector<1x1xf32> to vector<32x1xf32>
    %1456 = arith.mulf %1446, %1455 : vector<32x1xf32>
    %1457 = arith.mulf %1456, %1439 : vector<32x1xf32>
    %1458 = arith.addf %1457, %1440 : vector<32x1xf32>
    %c0_565 = arith.constant 0 : index
    %c0_566 = arith.constant 0 : index
    %1459 = vector.load %arg40[%c0_565, %c0_566] : memref<64x8xf32, #tpu.memory_space<vmem>>, vector<64x8xf32>
    %cst_567 = arith.constant dense<0.000000e+00> : vector<64x1xf32>
    %1460 = tpu.matmul %1459, %1353, %cst_567 {dimension_numbers = #tpu.dot_dimension_numbers<[1], [0], [0], [1], [0, 0, 1, 1], [], []>} : vector<64x8xf32>, vector<8x1xf32>, vector<64x1xf32> -> vector<64x1xf32>
    %c0_568 = arith.constant 0 : index
    %c0_569 = arith.constant 0 : index
    %1461 = vector.load %arg41[%c0_568, %c0_569] : memref<64x8xf32, #tpu.memory_space<vmem>>, vector<64x8xf32>
    %cst_570 = arith.constant dense<0.000000e+00> : vector<64x1xf32>
    %1462 = tpu.matmul %1461, %1352, %cst_570 {dimension_numbers = #tpu.dot_dimension_numbers<[1], [0], [0], [1], [0, 0, 1, 1], [], []>} : vector<64x8xf32>, vector<8x1xf32>, vector<64x1xf32> -> vector<64x1xf32>
    %1463 = arith.addf %1460, %1462 : vector<64x1xf32>
    %c0_571 = arith.constant 0 : index
    %c0_572 = arith.constant 0 : index
    %1464 = vector.load %arg42[%c0_571, %c0_572] : memref<64x32xf32, #tpu.memory_space<vmem>>, vector<64x32xf32>
    %cst_573 = arith.constant dense<0.000000e+00> : vector<64x1xf32>
    %1465 = tpu.matmul %1464, %1458, %cst_573 {dimension_numbers = #tpu.dot_dimension_numbers<[1], [0], [0], [1], [0, 0, 1, 1], [], []>} : vector<64x32xf32>, vector<32x1xf32>, vector<64x1xf32> -> vector<64x1xf32>
    %1466 = arith.addf %1463, %1465 : vector<64x1xf32>
    %c0_574 = arith.constant 0 : index
    %c0_575 = arith.constant 0 : index
    %1467 = vector.load %arg43[%c0_574, %c0_575] : memref<64x1xf32, #tpu.memory_space<vmem>>, vector<64x1xf32>
    %1468 = arith.addf %1466, %1467 : vector<64x1xf32>
    %cst_576 = arith.constant 0.000000e+00 : f32
    %1469 = vector.broadcast %cst_576 : f32 to vector<64x1xf32>
    %1470 = arith.maximumf %1468, %1469 : vector<64x1xf32>
    %c0_577 = arith.constant 0 : index
    %c0_578 = arith.constant 0 : index
    %1471 = vector.load %arg44[%c0_577, %c0_578] : memref<128x64xf32, #tpu.memory_space<vmem>>, vector<128x64xf32>
    %cst_579 = arith.constant dense<0.000000e+00> : vector<128x1xf32>
    %1472 = tpu.matmul %1471, %1470, %cst_579 {dimension_numbers = #tpu.dot_dimension_numbers<[1], [0], [0], [1], [0, 0, 1, 1], [], []>} : vector<128x64xf32>, vector<64x1xf32>, vector<128x1xf32> -> vector<128x1xf32>
    %c0_580 = arith.constant 0 : index
    %c0_581 = arith.constant 0 : index
    %1473 = vector.load %arg45[%c0_580, %c0_581] : memref<128x1xf32, #tpu.memory_space<vmem>>, vector<128x1xf32>
    %1474 = arith.addf %1472, %1473 : vector<128x1xf32>
    %cst_582 = arith.constant 0.000000e+00 : f32
    %1475 = vector.broadcast %cst_582 : f32 to vector<128x1xf32>
    %1476 = arith.maximumf %1474, %1475 : vector<128x1xf32>
    %c0_583 = arith.constant 0 : index
    %c0_584 = arith.constant 0 : index
    %1477 = vector.load %arg46[%c0_583, %c0_584] : memref<1x128xf32, #tpu.memory_space<vmem>>, vector<1x128xf32>
    %cst_585 = arith.constant dense<0.000000e+00> : vector<1x1xf32>
    %1478 = tpu.matmul %1477, %1476, %cst_585 {dimension_numbers = #tpu.dot_dimension_numbers<[1], [0], [0], [1], [0, 0, 1, 1], [], []>} : vector<1x128xf32>, vector<128x1xf32>, vector<1x1xf32> -> vector<1x1xf32>
    %c0_586 = arith.constant 0 : index
    %c0_587 = arith.constant 0 : index
    %1479 = vector.load %arg47[%c0_586, %c0_587] : memref<1x1xf32, #tpu.memory_space<vmem>>, vector<1x1xf32>
    %1480 = arith.addf %1478, %1479 : vector<1x1xf32>
    %c0_588 = arith.constant 0 : index
    %c0_589 = arith.constant 0 : index
    %1481 = vector.load %arg48[%c0_588, %c0_589] : memref<1x1xf32, #tpu.memory_space<vmem>>, vector<1x1xf32>
    tpu.vector_store %arg48[%c0_588, %c0_589], %1480 {strides = array<i32>} : memref<1x1xf32, #tpu.memory_space<vmem>>, vector<1x1xf32>,
    return
  }
}

</mosaic_0001>

<llo_original>
// kernel: forward.1
$region0: #{forward.1}
  #allocation0 [shape = 'u32[]', space=smem, size = 0x4, offset = 0x4, fixed_abs, tag = 'smem constant byte address 0x4 - core index']
  #allocation1 [shape = 'u32[72,128]{1,0:T(1,128)}', space=vmem, size = 0x9000, scoped, tag = 'internal scratch']
  #allocation2 [shape = 'f32[8,16]{1,0:T(8,128)}', space=vmem, size = 0x1000, scoped, tag = 'scratch operand']
  #allocation3 [shape = 'f32[8,16]{1,0:T(8,128)}', space=vmem, size = 0x1000, scoped, tag = 'scratch operand']
  #allocation4 [shape = 'f32[8,16]{1,0:T(8,128)}', space=vmem, size = 0x1000, scoped, tag = 'scratch operand']
  #allocation5 [shape = 'f32[8,16]{1,0:T(8,128)}', space=vmem, size = 0x1000, scoped, tag = 'scratch operand']
  #allocation6 [shape = 'f32[1,1]{1,0:T(1,128)S(1)}', space=vmem, size = 0x200, scoped, tag = 'scoped memory for forward.1']
  %s0 = inlined_call_operand.smem [shape: u32[49], index: -1, kind: input, shape index: {}]
  %s1 = sld [smem:[%s0]]
  %s2 = scalar_lea.smem %s0, 1
  %s3 = sld [smem:[%s2]]
  %s4 = scalar_lea.smem %s0, 2
  %s5 = sld [smem:[%s4]]
  %s6 = scalar_lea.smem %s0, 3
  %s7 = sld [smem:[%s6]]
  %s8 = scalar_lea.smem %s0, 4
  %s9 = sld [smem:[%s8]]
  %s10 = scalar_lea.smem %s0, 5
  %s11 = sld [smem:[%s10]]
  %s12 = scalar_lea.smem %s0, 6
  %s13 = sld [smem:[%s12]]
  %s14 = scalar_lea.smem %s0, 7
  %s15 = sld [smem:[%s14]]
  %s16 = scalar_lea.smem %s0, 8
  %s17 = sld [smem:[%s16]]
  %s18 = scalar_lea.smem %s0, 9
  %s19 = sld [smem:[%s18]]
  %s20 = scalar_lea.smem %s0, 10
  %s21 = sld [smem:[%s20]]
  %s22 = scalar_lea.smem %s0, 11
  %s23 = sld [smem:[%s22]]
  %s24 = scalar_lea.smem %s0, 12
  %s25 = sld [smem:[%s24]]
  %s26 = scalar_lea.smem %s0, 13
  %s27 = sld [smem:[%s26]]
  %s28 = scalar_lea.smem %s0, 14
  %s29 = sld [smem:[%s28]]
  %s30 = scalar_lea.smem %s0, 15
  %s31 = sld [smem:[%s30]]
  %s32 = scalar_lea.smem %s0, 16
  %s33 = sld [smem:[%s32]]
  %s34 = scalar_lea.smem %s0, 17
  %s35 = sld [smem:[%s34]]
  %s36 = scalar_lea.smem %s0, 18
  %s37 = sld [smem:[%s36]]
  %s38 = scalar_lea.smem %s0, 19
  %s39 = sld [smem:[%s38]]
  %s40 = scalar_lea.smem %s0, 20
  %s41 = sld [smem:[%s40]]
  %s42 = scalar_lea.smem %s0, 21
  %s43 = sld [smem:[%s42]]
  %s44 = scalar_lea.smem %s0, 22
  %s45 = sld [smem:[%s44]]
  %s46 = scalar_lea.smem %s0, 23
  %s47 = sld [smem:[%s46]]
  %s48 = scalar_lea.smem %s0, 24
  %s49 = sld [smem:[%s48]]
  %s50 = scalar_lea.smem %s0, 25
  %s51 = sld [smem:[%s50]]
  %s52 = scalar_lea.smem %s0, 26
  %s53 = sld [smem:[%s52]]
  %s54 = scalar_lea.smem %s0, 27
  %s55 = sld [smem:[%s54]]
  %s56 = scalar_lea.smem %s0, 28
  %s57 = sld [smem:[%s56]]
  %s58 = scalar_lea.smem %s0, 29
  %s59 = sld [smem:[%s58]]
  %s60 = scalar_lea.smem %s0, 30
  %s61 = sld [smem:[%s60]]
  %s62 = scalar_lea.smem %s0, 31
  %s63 = sld [smem:[%s62]]
  %s64 = scalar_lea.smem %s0, 32
  %s65 = sld [smem:[%s64]]
  %s66 = scalar_lea.smem %s0, 33
  %s67 = sld [smem:[%s66]]
  %s68 = scalar_lea.smem %s0, 34
  %s69 = sld [smem:[%s68]]
  %s70 = scalar_lea.smem %s0, 35
  %s71 = sld [smem:[%s70]]
  %s72 = scalar_lea.smem %s0, 36
  %s73 = sld [smem:[%s72]]
  %s74 = scalar_lea.smem %s0, 37
  %s75 = sld [smem:[%s74]]
  %s76 = scalar_lea.smem %s0, 38
  %s77 = sld [smem:[%s76]]
  %s78 = scalar_lea.smem %s0, 39
  %s79 = sld [smem:[%s78]]
  %s80 = scalar_lea.smem %s0, 40
  %s81 = sld [smem:[%s80]]
  %s82 = scalar_lea.smem %s0, 41
  %s83 = sld [smem:[%s82]]
  %s84 = scalar_lea.smem %s0, 42
  %s85 = sld [smem:[%s84]]
  %s86 = scalar_lea.smem %s0, 43
  %s87 = sld [smem:[%s86]]
  %s88 = scalar_lea.smem %s0, 44
  %s89 = sld [smem:[%s88]]
  %s90 = scalar_lea.smem %s0, 45
  %s91 = sld [smem:[%s90]]
  %s92 = scalar_lea.smem %s0, 46
  %s93 = sld [smem:[%s92]]
  %s94 = scalar_lea.smem %s0, 47
  %s95 = sld [smem:[%s94]]
  %s96 = scalar_lea.smem %s0, 48
  %s97 = sld [smem:[%s96]]
  %s98 = sld [smem:[#allocation0]]
  $region202: #{forward.1} parent=0
    _
  %s100 = ssub.s32 1, %s98
  %s101 = scalar_select 0, %s100, %s98
  %v102 = vstv %s95
  %103 = vst [vmem:[#allocation6] sm:$0x1] %v102
  $region1: #{forward.1} parent=0
    #allocation7 [shape = 'u8[512]{0}', space=vmem, size = 0x400, scoped, tag = 'output window, operand 0, single buffered']
    #allocation8 [shape = 's32[1]{0}', space=sflag, size = 0x4, scoped, tag = 'scoped memory for forward.1']
    %104 = vsyncpa [#allocation8], 0
    // Predicated region
    $region2: #{forward.1} parent=1 // pred_check
      _
    $region3: #{forward.1} parent=1 // pred_check_branch
      %106 = sbr.rel (0) target = $region5
    $region4: #{forward.1} parent=1 // pred_region
      _
    $region5: #{forward.1} parent=1 // pred_fallthru
      _
    // Predicated region
    $region6: #{forward.1} parent=1 // pred_check
      _
    $region7: #{forward.1} parent=1 // pred_check_branch
      %108 = sbr.rel (0) target = $region9
    $region8: #{forward.1} parent=1 // pred_region
      _
    $region9: #{forward.1} parent=1 // pred_fallthru
      _
    // Predicated region
    $region10: #{forward.1} parent=1 // pred_check
      _
    $region11: #{forward.1} parent=1 // pred_check_branch
      %110 = sbr.rel (0) target = $region13
    $region12: #{forward.1} parent=1 // pred_region
      _
    $region13: #{forward.1} parent=1 // pred_fallthru
      _
    // Predicated region
    $region14: #{forward.1} parent=1 // pred_check
      _
    $region15: #{forward.1} parent=1 // pred_check_branch
      %112 = sbr.rel (0) target = $region17
    $region16: #{forward.1} parent=1 // pred_region
      _
    $region17: #{forward.1} parent=1 // pred_fallthru
      _
    // Predicated region
    $region18: #{forward.1} parent=1 // pred_check
      _
    $region19: #{forward.1} parent=1 // pred_check_branch
      %114 = sbr.rel (0) target = $region21
    $region20: #{forward.1} parent=1 // pred_region
      _
    $region21: #{forward.1} parent=1 // pred_fallthru
      _
    // Predicated region
    $region22: #{forward.1} parent=1 // pred_check
      _
    $region23: #{forward.1} parent=1 // pred_check_branch
      %116 = sbr.rel (0) target = $region25
    $region24: #{forward.1} parent=1 // pred_region
      _
    $region25: #{forward.1} parent=1 // pred_fallthru
      _
    // Predicated region
    $region26: #{forward.1} parent=1 // pred_check
      _
    $region27: #{forward.1} parent=1 // pred_check_branch
      %118 = sbr.rel (0) target = $region29
    $region28: #{forward.1} parent=1 // pred_region
      _
    $region29: #{forward.1} parent=1 // pred_fallthru
      _
    // Predicated region
    $region30: #{forward.1} parent=1 // pred_check
      _
    $region31: #{forward.1} parent=1 // pred_check_branch
      %120 = sbr.rel (0) target = $region33
    $region32: #{forward.1} parent=1 // pred_region
      _
    $region33: #{forward.1} parent=1 // pred_fallthru
      _
    // Predicated region
    $region34: #{forward.1} parent=1 // pred_check
      _
    $region35: #{forward.1} parent=1 // pred_check_branch
      %122 = sbr.rel (0) target = $region37
    $region36: #{forward.1} parent=1 // pred_region
      _
    $region37: #{forward.1} parent=1 // pred_fallthru
      _
    // Predicated region
    $region38: #{forward.1} parent=1 // pred_check
      _
    $region39: #{forward.1} parent=1 // pred_check_branch
      %124 = sbr.rel (0) target = $region41
    $region40: #{forward.1} parent=1 // pred_region
      _
    $region41: #{forward.1} parent=1 // pred_fallthru
      _
    // Predicated region
    $region42: #{forward.1} parent=1 // pred_check
      _
    $region43: #{forward.1} parent=1 // pred_check_branch
      %126 = sbr.rel (0) target = $region45
    $region44: #{forward.1} parent=1 // pred_region
      _
    $region45: #{forward.1} parent=1 // pred_fallthru
      _
    // Predicated region
    $region46: #{forward.1} parent=1 // pred_check
      _
    $region47: #{forward.1} parent=1 // pred_check_branch
      %128 = sbr.rel (0) target = $region49
    $region48: #{forward.1} parent=1 // pred_region
      _
    $region49: #{forward.1} parent=1 // pred_fallthru
      _
    // Predicated region
    $region50: #{forward.1} parent=1 // pred_check
      _
    $region51: #{forward.1} parent=1 // pred_check_branch
      %130 = sbr.rel (0) target = $region53
    $region52: #{forward.1} parent=1 // pred_region
      _
    $region53: #{forward.1} parent=1 // pred_fallthru
      _
    // Predicated region
    $region54: #{forward.1} parent=1 // pred_check
      _
    $region55: #{forward.1} parent=1 // pred_check_branch
      %132 = sbr.rel (0) target = $region57
    $region56: #{forward.1} parent=1 // pred_region
      _
    $region57: #{forward.1} parent=1 // pred_fallthru
      _
    // Predicated region
    $region58: #{forward.1} parent=1 // pred_check
      _
    $region59: #{forward.1} parent=1 // pred_check_branch
      %134 = sbr.rel (0) target = $region61
    $region60: #{forward.1} parent=1 // pred_region
      _
    $region61: #{forward.1} parent=1 // pred_fallthru
      _
    // Predicated region
    $region62: #{forward.1} parent=1 // pred_check
      _
    $region63: #{forward.1} parent=1 // pred_check_branch
      %136 = sbr.rel (0) target = $region65
    $region64: #{forward.1} parent=1 // pred_region
      _
    $region65: #{forward.1} parent=1 // pred_fallthru
      _
    // Predicated region
    $region66: #{forward.1} parent=1 // pred_check
      _
    $region67: #{forward.1} parent=1 // pred_check_branch
      %138 = sbr.rel (0) target = $region69
    $region68: #{forward.1} parent=1 // pred_region
      _
    $region69: #{forward.1} parent=1 // pred_fallthru
      _
    // Predicated region
    $region70: #{forward.1} parent=1 // pred_check
      _
    $region71: #{forward.1} parent=1 // pred_check_branch
      %140 = sbr.rel (0) target = $region73
    $region72: #{forward.1} parent=1 // pred_region
      _
    $region73: #{forward.1} parent=1 // pred_fallthru
      _
    // Predicated region
    $region74: #{forward.1} parent=1 // pred_check
      _
    $region75: #{forward.1} parent=1 // pred_check_branch
      %142 = sbr.rel (0) target = $region77
    $region76: #{forward.1} parent=1 // pred_region
      _
    $region77: #{forward.1} parent=1 // pred_fallthru
      _
    // Predicated region
    $region78: #{forward.1} parent=1 // pred_check
      _
    $region79: #{forward.1} parent=1 // pred_check_branch
      %144 = sbr.rel (0) target = $region81
    $region80: #{forward.1} parent=1 // pred_region
      _
    $region81: #{forward.1} parent=1 // pred_fallthru
      _
    // Predicated region
    $region82: #{forward.1} parent=1 // pred_check
      _
    $region83: #{forward.1} parent=1 // pred_check_branch
      %146 = sbr.rel (0) target = $region85
    $region84: #{forward.1} parent=1 // pred_region
      _
    $region85: #{forward.1} parent=1 // pred_fallthru
      _
    // Predicated region
    $region86: #{forward.1} parent=1 // pred_check
      _
    $region87: #{forward.1} parent=1 // pred_check_branch
      %148 = sbr.rel (0) target = $region89
    $region88: #{forward.1} parent=1 // pred_region
      _
    $region89: #{forward.1} parent=1 // pred_fallthru
      _
    // Predicated region
    $region90: #{forward.1} parent=1 // pred_check
      _
    $region91: #{forward.1} parent=1 // pred_check_branch
      %150 = sbr.rel (0) target = $region93
    $region92: #{forward.1} parent=1 // pred_region
      _
    $region93: #{forward.1} parent=1 // pred_fallthru
      _
    // Predicated region
    $region94: #{forward.1} parent=1 // pred_check
      _
    $region95: #{forward.1} parent=1 // pred_check_branch
      %152 = sbr.rel (0) target = $region97
    $region96: #{forward.1} parent=1 // pred_region
      _
    $region97: #{forward.1} parent=1 // pred_fallthru
      _
    // Predicated region
    $region98: #{forward.1} parent=1 // pred_check
      _
    $region99: #{forward.1} parent=1 // pred_check_branch
      %154 = sbr.rel (0) target = $region101
    $region100: #{forward.1} parent=1 // pred_region
      _
    $region101: #{forward.1} parent=1 // pred_fallthru
      _
    // Predicated region
    $region102: #{forward.1} parent=1 // pred_check
      _
    $region103: #{forward.1} parent=1 // pred_check_branch
      %156 = sbr.rel (0) target = $region105
    $region104: #{forward.1} parent=1 // pred_region
      _
    $region105: #{forward.1} parent=1 // pred_fallthru
      _
    // Predicated region
    $region106: #{forward.1} parent=1 // pred_check
      _
    $region107: #{forward.1} parent=1 // pred_check_branch
      %158 = sbr.rel (0) target = $region109
    $region108: #{forward.1} parent=1 // pred_region
      _
    $region109: #{forward.1} parent=1 // pred_fallthru
      _
    // Predicated region
    $region110: #{forward.1} parent=1 // pred_check
      _
    $region111: #{forward.1} parent=1 // pred_check_branch
      %160 = sbr.rel (0) target = $region113
    $region112: #{forward.1} parent=1 // pred_region
      _
    $region113: #{forward.1} parent=1 // pred_fallthru
      _
    // Predicated region
    $region114: #{forward.1} parent=1 // pred_check
      _
    $region115: #{forward.1} parent=1 // pred_check_branch
      %162 = sbr.rel (0) target = $region117
    $region116: #{forward.1} parent=1 // pred_region
      _
    $region117: #{forward.1} parent=1 // pred_fallthru
      _
    // Predicated region
    $region118: #{forward.1} parent=1 // pred_check
      _
    $region119: #{forward.1} parent=1 // pred_check_branch
      %164 = sbr.rel (0) target = $region121
    $region120: #{forward.1} parent=1 // pred_region
      _
    $region121: #{forward.1} parent=1 // pred_fallthru
      _
    // Predicated region
    $region122: #{forward.1} parent=1 // pred_check
      _
    $region123: #{forward.1} parent=1 // pred_check_branch
      %166 = sbr.rel (0) target = $region125
    $region124: #{forward.1} parent=1 // pred_region
      _
    $region125: #{forward.1} parent=1 // pred_fallthru
      _
    // Predicated region
    $region126: #{forward.1} parent=1 // pred_check
      _
    $region127: #{forward.1} parent=1 // pred_check_branch
      %168 = sbr.rel (0) target = $region129
    $region128: #{forward.1} parent=1 // pred_region
      _
    $region129: #{forward.1} parent=1 // pred_fallthru
      _
    // Predicated region
    $region130: #{forward.1} parent=1 // pred_check
      _
    $region131: #{forward.1} parent=1 // pred_check_branch
      %170 = sbr.rel (0) target = $region133
    $region132: #{forward.1} parent=1 // pred_region
      _
    $region133: #{forward.1} parent=1 // pred_fallthru
      _
    // Predicated region
    $region134: #{forward.1} parent=1 // pred_check
      _
    $region135: #{forward.1} parent=1 // pred_check_branch
      %172 = sbr.rel (0) target = $region137
    $region136: #{forward.1} parent=1 // pred_region
      _
    $region137: #{forward.1} parent=1 // pred_fallthru
      _
    // Predicated region
    $region138: #{forward.1} parent=1 // pred_check
      _
    $region139: #{forward.1} parent=1 // pred_check_branch
      %174 = sbr.rel (0) target = $region141
    $region140: #{forward.1} parent=1 // pred_region
      _
    $region141: #{forward.1} parent=1 // pred_fallthru
      _
    // Predicated region
    $region142: #{forward.1} parent=1 // pred_check
      _
    $region143: #{forward.1} parent=1 // pred_check_branch
      %176 = sbr.rel (0) target = $region145
    $region144: #{forward.1} parent=1 // pred_region
      _
    $region145: #{forward.1} parent=1 // pred_fallthru
      _
    // Predicated region
    $region146: #{forward.1} parent=1 // pred_check
      _
    $region147: #{forward.1} parent=1 // pred_check_branch
      %178 = sbr.rel (0) target = $region149
    $region148: #{forward.1} parent=1 // pred_region
      _
    $region149: #{forward.1} parent=1 // pred_fallthru
      _
    // Predicated region
    $region150: #{forward.1} parent=1 // pred_check
      _
    $region151: #{forward.1} parent=1 // pred_check_branch
      %180 = sbr.rel (0) target = $region153
    $region152: #{forward.1} parent=1 // pred_region
      _
    $region153: #{forward.1} parent=1 // pred_fallthru
      _
    // Predicated region
    $region154: #{forward.1} parent=1 // pred_check
      _
    $region155: #{forward.1} parent=1 // pred_check_branch
      %182 = sbr.rel (0) target = $region157
    $region156: #{forward.1} parent=1 // pred_region
      _
    $region157: #{forward.1} parent=1 // pred_fallthru
      _
    // Predicated region
    $region158: #{forward.1} parent=1 // pred_check
      _
    $region159: #{forward.1} parent=1 // pred_check_branch
      %184 = sbr.rel (0) target = $region161
    $region160: #{forward.1} parent=1 // pred_region
      _
    $region161: #{forward.1} parent=1 // pred_fallthru
      _
    // Predicated region
    $region162: #{forward.1} parent=1 // pred_check
      _
    $region163: #{forward.1} parent=1 // pred_check_branch
      %186 = sbr.rel (0) target = $region165
    $region164: #{forward.1} parent=1 // pred_region
      _
    $region165: #{forward.1} parent=1 // pred_fallthru
      _
    // Predicated region
    $region166: #{forward.1} parent=1 // pred_check
      _
    $region167: #{forward.1} parent=1 // pred_check_branch
      %188 = sbr.rel (0) target = $region169
    $region168: #{forward.1} parent=1 // pred_region
      _
    $region169: #{forward.1} parent=1 // pred_fallthru
      _
    // Predicated region
    $region170: #{forward.1} parent=1 // pred_check
      _
    $region171: #{forward.1} parent=1 // pred_check_branch
      %190 = sbr.rel (0) target = $region173
    $region172: #{forward.1} parent=1 // pred_region
      _
    $region173: #{forward.1} parent=1 // pred_fallthru
      _
    // Predicated region
    $region174: #{forward.1} parent=1 // pred_check
      _
    $region175: #{forward.1} parent=1 // pred_check_branch
      %192 = sbr.rel (0) target = $region177
    $region176: #{forward.1} parent=1 // pred_region
      _
    $region177: #{forward.1} parent=1 // pred_fallthru
      _
    // Predicated region
    $region178: #{forward.1} parent=1 // pred_check
      _
    $region179: #{forward.1} parent=1 // pred_check_branch
      %194 = sbr.rel (0) target = $region181
    $region180: #{forward.1} parent=1 // pred_region
      _
    $region181: #{forward.1} parent=1 // pred_fallthru
      _
    // Predicated region
    $region182: #{forward.1} parent=1 // pred_check
      _
    $region183: #{forward.1} parent=1 // pred_check_branch
      %196 = sbr.rel (0) target = $region185
    $region184: #{forward.1} parent=1 // pred_region
      _
    $region185: #{forward.1} parent=1 // pred_fallthru
      _
    // Predicated region
    $region186: #{forward.1} parent=1 // pred_check
      _
    $region187: #{forward.1} parent=1 // pred_check_branch
      %198 = sbr.rel (0) target = $region189
    $region188: #{forward.1} parent=1 // pred_region
      _
    $region189: #{forward.1} parent=1 // pred_fallthru
      _
    // Predicated region
    $region190: #{forward.1} parent=1 // pred_check
      _
    $region191: #{forward.1} parent=1 // pred_check_branch
      %200 = sbr.rel (0) target = $region193
    $region192: #{forward.1} parent=1 // pred_region
      _
    $region193: #{forward.1} parent=1 // pred_fallthru
      _
    %v201 = vld [vmem:[%s1] sm:$0xff]
    %v202 = vld [vmem:[%s1 + $0x8] sm:$0xff]
    %v203 = vld [vmem:[%s1 + $0x10] sm:$0xff]
    %v204 = vld [vmem:[%s1 + $0x18] sm:$0xff]
    %v205 = vlaneseq
    %v206 = vand.u32 %v205, 127
    %v207 = vlaneseq
    %v208 = vshrl.u32 %v207, 7
    %v209 = vadd.s32 %v208, 8
    %v210 = vadd.s32 %v208, 16
    %v211 = vadd.s32 %v208, 24
    %v212 = vadd.s32 %v208, 4294967295
    %v213 = vadd.s32 %v209, 4294967295
    %v214 = vadd.s32 %v210, 4294967295
    %v215 = vadd.s32 %v211, 4294967295
    %vm216 = vcmp.eq.s32.totalorder %v206, %v212
    %vm217 = vcmp.eq.s32.totalorder %v206, %v213
    %vm218 = vcmp.eq.s32.totalorder %v206, %v214
    %vm219 = vcmp.eq.s32.totalorder %v206, %v215
    %v220 = vsel %vm216, 1, 0
    %v221 = vsel %vm217, 1, 0
    %v222 = vsel %vm218, 1, 0
    %v223 = vsel %vm219, 1, 0
    %v224 = vcvt.s32.f32 %v220
    %v225 = vcvt.s32.f32 %v221
    %v226 = vcvt.s32.f32 %v222
    %v227 = vcvt.s32.f32 %v223
    %vm228 = vcmask 261120
    %v230 = vsel %vm228, %v224, 0
    %v233 = vsel %vm228, %v225, 0
    %v236 = vsel %vm228, %v226, 0
    %v239 = vsel %vm228, %v227, 0
    %241 = vmatpush.msra.mxu0 0.0
    %242 = vmatpush.msra.mxu0 0.0
    %243 = vmatpush.msra.mxu0 0.0
    %244 = vmatpush.msra.mxu0 0.0
    %245 = vmatpush.msra.mxu0 0.0
    %246 = vmatpush.msra.mxu0 0.0
    %247 = vmatpush.msra.mxu0 0.0
    %248 = vmatpush.msra.mxu0 0.0
    %249 = vmatpush.msra.mxu0 0.0
    %250 = vmatpush.msra.mxu0 0.0
    %251 = vmatpush.msra.mxu0 0.0
    %252 = vmatpush.msra.mxu0 0.0
    %253 = vmatpush.msra.mxu0 %v204
    %254 = vmatpush.msra.mxu0 %v203
    %255 = vmatpush.msra.mxu0 %v202
    %256 = vmatpush.msra.mxu0 %v201
    %257 = vmatmul.f32.gmra.mxu0 %v230
    %v258 = vpop.f32.mrf.mxu0
    %v259 = vadd.f32 0.0, %v258
    %260 = vmatmul.f32.gmra.mxu0 %v233
    %v261 = vpop.f32.mrf.mxu0
    %v262 = vadd.f32 0.0, %v261
    %263 = vmatmul.f32.gmra.mxu0 %v236
    %v264 = vpop.f32.mrf.mxu0
    %v265 = vadd.f32 0.0, %v264
    %266 = vmatmul.f32.gmra.mxu0 %v239
    %v267 = vpop.f32.mrf.mxu0
    %v268 = vadd.f32 0.0, %v267
    %269 = vdwg.mxu0
    %v270 = vld [vmem:[%s5] sm:$0x1f]
    %s271 = scalar_lea.vmem %s5, 8
    %v272 = vld [vmem:[%s271] sm:$0x1f]
    %vm273 = vcmask 39936
    %v275 = vsel %vm273, %v201, 0
    %v278 = vsel %vm273, %v202, 0
    %v281 = vsel %vm273, %v203, 0
    %v284 = vsel %vm273, %v204, 0
    %vm286 = vcmask 1044480
    %v288 = vsel %vm286, %v272, 0
    %290 = vmatpush.msra.mxu0 0.0
    %291 = vmatpush.msra.mxu0 0.0
    %292 = vmatpush.msra.mxu0 0.0
    %293 = vmatpush.msra.mxu0 0.0
    %294 = vmatpush.msra.mxu0 0.0
    %295 = vmatpush.msra.mxu0 0.0
    %296 = vmatpush.msra.mxu0 0.0
    %297 = vmatpush.msra.mxu0 0.0
    %298 = vmatpush.msra.mxu0 0.0
    %299 = vmatpush.msra.mxu0 0.0
    %300 = vmatpush.msra.mxu0 0.0
    %301 = vmatpush.msra.mxu0 0.0
    %302 = vmatpush.msra.mxu0 0.0
    %303 = vmatpush.msra.mxu0 0.0
    %304 = vmatpush.msra.mxu0 0.0
    %305 = vmatpush.msra.mxu0 %v288
    %306 = vmatmul.f32.gmra.mxu0 %v275
    %v307 = vpop.f32.mrf.mxu0
    %v308 = vadd.f32 0.0, %v307
    %309 = vmatmul.f32.gmra.mxu0 %v278
    %v310 = vpop.f32.mrf.mxu0
    %v311 = vadd.f32 0.0, %v310
    %312 = vmatmul.f32.gmra.mxu0 %v281
    %v313 = vpop.f32.mrf.mxu0
    %v314 = vadd.f32 0.0, %v313
    %315 = vmatmul.f32.gmra.mxu0 %v284
    %v316 = vpop.f32.mrf.mxu0
    %v317 = vadd.f32 0.0, %v316
    %318 = vdwg.mxu0
    %v320 = vsel %vm273, %v259, 0
    %v323 = vsel %vm273, %v262, 0
    %v326 = vsel %vm273, %v265, 0
    %v329 = vsel %vm273, %v268, 0
    %v332 = vsel %vm286, %v270, 0
    %334 = vmatpush.msra.mxu0 0.0
    %335 = vmatpush.msra.mxu0 0.0
    %336 = vmatpush.msra.mxu0 0.0
    %337 = vmatpush.msra.mxu0 0.0
    %338 = vmatpush.msra.mxu0 0.0
    %339 = vmatpush.msra.mxu0 0.0
    %340 = vmatpush.msra.mxu0 0.0
    %341 = vmatpush.msra.mxu0 0.0
    %342 = vmatpush.msra.mxu0 0.0
    %343 = vmatpush.msra.mxu0 0.0
    %344 = vmatpush.msra.mxu0 0.0
    %345 = vmatpush.msra.mxu0 0.0
    %346 = vmatpush.msra.mxu0 0.0
    %347 = vmatpush.msra.mxu0 0.0
    %348 = vmatpush.msra.mxu0 0.0
    %349 = vmatpush.msra.mxu0 %v332
    %350 = vmatmul.f32.gmra.mxu0 %v320
    %v351 = vpop.f32.mrf.mxu0
    %v352 = vadd.f32 %v308, %v351
    %353 = vmatmul.f32.gmra.mxu0 %v323
    %v354 = vpop.f32.mrf.mxu0
    %v355 = vadd.f32 %v311, %v354
    %356 = vmatmul.f32.gmra.mxu0 %v326
    %v357 = vpop.f32.mrf.mxu0
    %v358 = vadd.f32 %v314, %v357
    %359 = vmatmul.f32.gmra.mxu0 %v329
    %v360 = vpop.f32.mrf.mxu0
    %v361 = vadd.f32 %v317, %v360
    %362 = vdwg.mxu0
    %v363 = vadd.s32 %v208, 1
    %v364 = vadd.s32 %v209, 1
    %v365 = vadd.s32 %v210, 1
    %v366 = vadd.s32 %v211, 1
    %vm367 = vcmp.eq.s32.totalorder %v206, %v363
    %vm368 = vcmp.eq.s32.totalorder %v206, %v364
    %vm369 = vcmp.eq.s32.totalorder %v206, %v365
    %vm370 = vcmp.eq.s32.totalorder %v206, %v366
    %v371 = vsel %vm367, 1, 0
    %v372 = vsel %vm368, 1, 0
    %v373 = vsel %vm369, 1, 0
    %v374 = vsel %vm370, 1, 0
    %v375 = vcvt.s32.f32 %v371
    %v376 = vcvt.s32.f32 %v372
    %v377 = vcvt.s32.f32 %v373
    %v378 = vcvt.s32.f32 %v374
    %v380 = vsel %vm228, %v375, 0
    %v383 = vsel %vm228, %v376, 0
    %v386 = vsel %vm228, %v377, 0
    %v389 = vsel %vm228, %v378, 0
    %391 = vmatpush.msra.mxu0 0.0
    %392 = vmatpush.msra.mxu0 0.0
    %393 = vmatpush.msra.mxu0 0.0
    %394 = vmatpush.msra.mxu0 0.0
    %395 = vmatpush.msra.mxu0 0.0
    %396 = vmatpush.msra.mxu0 0.0
    %397 = vmatpush.msra.mxu0 0.0
    %398 = vmatpush.msra.mxu0 0.0
    %399 = vmatpush.msra.mxu0 0.0
    %400 = vmatpush.msra.mxu0 0.0
    %401 = vmatpush.msra.mxu0 0.0
    %402 = vmatpush.msra.mxu0 0.0
    %403 = vmatpush.msra.mxu0 %v204
    %404 = vmatpush.msra.mxu0 %v203
    %405 = vmatpush.msra.mxu0 %v202
    %406 = vmatpush.msra.mxu0 %v201
    %407 = vmatmul.f32.gmra.mxu0 %v380
    %v408 = vpop.f32.mrf.mxu0
    %v409 = vadd.f32 0.0, %v408
    %410 = vmatmul.f32.gmra.mxu0 %v383
    %v411 = vpop.f32.mrf.mxu0
    %v412 = vadd.f32 0.0, %v411
    %413 = vmatmul.f32.gmra.mxu0 %v386
    %v414 = vpop.f32.mrf.mxu0
    %v415 = vadd.f32 0.0, %v414
    %416 = vmatmul.f32.gmra.mxu0 %v389
    %v417 = vpop.f32.mrf.mxu0
    %v418 = vadd.f32 0.0, %v417
    %419 = vdwg.mxu0
    %s420 = scalar_lea.vmem %s5, 16
    %v421 = vld [vmem:[%s420] sm:$0x1f]
    %v423 = vsel %vm273, %v409, 0
    %v426 = vsel %vm273, %v412, 0
    %v429 = vsel %vm273, %v415, 0
    %v432 = vsel %vm273, %v418, 0
    %v435 = vsel %vm286, %v421, 0
    %437 = vmatpush.msra.mxu0 0.0
    %438 = vmatpush.msra.mxu0 0.0
    %439 = vmatpush.msra.mxu0 0.0
    %440 = vmatpush.msra.mxu0 0.0
    %441 = vmatpush.msra.mxu0 0.0
    %442 = vmatpush.msra.mxu0 0.0
    %443 = vmatpush.msra.mxu0 0.0
    %444 = vmatpush.msra.mxu0 0.0
    %445 = vmatpush.msra.mxu0 0.0
    %446 = vmatpush.msra.mxu0 0.0
    %447 = vmatpush.msra.mxu0 0.0
    %448 = vmatpush.msra.mxu0 0.0
    %449 = vmatpush.msra.mxu0 0.0
    %450 = vmatpush.msra.mxu0 0.0
    %451 = vmatpush.msra.mxu0 0.0
    %452 = vmatpush.msra.mxu0 %v435
    %453 = vmatmul.f32.gmra.mxu0 %v423
    %v454 = vpop.f32.mrf.mxu0
    %v455 = vadd.f32 0.0, %v454
    %456 = vmatmul.f32.gmra.mxu0 %v426
    %v457 = vpop.f32.mrf.mxu0
    %v458 = vadd.f32 0.0, %v457
    %459 = vmatmul.f32.gmra.mxu0 %v429
    %v460 = vpop.f32.mrf.mxu0
    %v461 = vadd.f32 0.0, %v460
    %462 = vmatmul.f32.gmra.mxu0 %v432
    %v463 = vpop.f32.mrf.mxu0
    %v464 = vadd.f32 0.0, %v463
    %465 = vdwg.mxu0
    %v466 = vadd.f32 %v352, %v455
    %v467 = vadd.f32 %v355, %v458
    %v468 = vadd.f32 %v358, %v461
    %v469 = vadd.f32 %v361, %v464
    %v470 = vld [vmem:[%s7] sm:$0x1]
    %v472 = vperm.slane %v470, 0
    %v474 = vadd.f32 %v466, %v472
    %v475 = vadd.f32 %v467, %v472
    %v476 = vadd.f32 %v468, %v472
    %v477 = vadd.f32 %v469, %v472
    %vm478 = vcmask 64512
    %v479 = vsel %vm478, %v474, 0.0
    %v480 = vsel %vm478, %v475, 0.0
    %v481 = vadd.f32 %v479, %v480
    %v482 = vsel %vm478, %v476, 0.0
    %v483 = vadd.f32 %v481, %v482
    %v484 = vsel %vm478, %v477, 0.0
    %v485 = vadd.f32 %v483, %v484
    %v486 = vrot.slane %v485, 4
    %v487 = vadd.f32 %v485, %v486
    %v488 = vrot.slane %v487, 2
    %v489 = vadd.f32 %v487, %v488
    %v490 = vrot.slane %v489, 1
    %v491 = vadd.f32 %v489, %v490
    %v492 = vrcp.pop 32.0
    %v493 = vmul.f32 32.0, %v492
    %v494 = vsub.f32 1.0, %v493
    %v495 = vmul.f32 %v492, %v494
    %v496 = vadd.f32 %v492, %v495
    %vm497 = vweird.f32 %v492
    %v498 = vsel %vm497, %v492, %v496
    %v499 = vmul.f32 %v491, %v498
    %v500 = vld [vmem:[%s9] sm:$0xff]
    %v501 = vld [vmem:[%s11] sm:$0x1]
    %v503 = vsel %vm478, %v499, 0
    %505 = vmatpush.msra.mxu0 0.0
    %506 = vmatpush.msra.mxu0 0.0
    %507 = vmatpush.msra.mxu0 0.0
    %508 = vmatpush.msra.mxu0 0.0
    %509 = vmatpush.msra.mxu0 0.0
    %510 = vmatpush.msra.mxu0 0.0
    %511 = vmatpush.msra.mxu0 0.0
    %512 = vmatpush.msra.mxu0 0.0
    %513 = vmatpush.msra.mxu0 0.0
    %514 = vmatpush.msra.mxu0 0.0
    %515 = vmatpush.msra.mxu0 0.0
    %516 = vmatpush.msra.mxu0 0.0
    %517 = vmatpush.msra.mxu0 0.0
    %518 = vmatpush.msra.mxu0 0.0
    %519 = vmatpush.msra.mxu0 0.0
    %520 = vmatpush.msra.mxu0 %v500
    %521 = vmatmul.f32.gmra.mxu0 %v503
    %v522 = vpop.f32.mrf.mxu0
    %v523 = vadd.f32 %v501, %v522
    %524 = vdwg.mxu0
    %v525 = vmax.f32 %v523, 0.0
    %v526 = vld [vmem:[%s13] sm:$0xf]
    %v527 = vld [vmem:[%s15] sm:$0x1]
    %vm528 = vcmask 31744
    %v530 = vsel %vm528, %v525, 0
    %vm532 = vcmask 1043456
    %v534 = vsel %vm532, %v526, 0
    %536 = vmatpush.msra.mxu0 0.0
    %537 = vmatpush.msra.mxu0 0.0
    %538 = vmatpush.msra.mxu0 0.0
    %539 = vmatpush.msra.mxu0 0.0
    %540 = vmatpush.msra.mxu0 0.0
    %541 = vmatpush.msra.mxu0 0.0
    %542 = vmatpush.msra.mxu0 0.0
    %543 = vmatpush.msra.mxu0 0.0
    %544 = vmatpush.msra.mxu0 0.0
    %545 = vmatpush.msra.mxu0 0.0
    %546 = vmatpush.msra.mxu0 0.0
    %547 = vmatpush.msra.mxu0 0.0
    %548 = vmatpush.msra.mxu0 0.0
    %549 = vmatpush.msra.mxu0 0.0
    %550 = vmatpush.msra.mxu0 0.0
    %551 = vmatpush.msra.mxu0 %v534
    %552 = vmatmul.f32.gmra.mxu0 %v530
    %v553 = vpop.f32.mrf.mxu0
    %v554 = vadd.f32 %v527, %v553
    %555 = vdwg.mxu0
    %vm556 = vcmask 57344
    %v557 = vsel %vm556, %v554, -inf
    %558 = vmax.xlane.f32.xlu0 %v557
    %v559 = vpop.xlane.xlu0 %558
    %v560 = vsub.f32 %v554, %v559
    %v561 = vmul.f32 %v560, 1.442695
    %v562 = vpow.pop %v561
    %v563 = vsel %vm556, %v562, 0.0
    %564 = vadd.xlane.f32.xlu0 %v563
    %v565 = vpop.xlane.xlu0 %564
    %v566 = vrcp.pop %v565
    %v567 = vmul.f32 %v562, %v566
    %v568 = vperm.slane %v567, 0
    %v569 = vmul.f32 %v474, %v568
    %v570 = vmul.f32 %v475, %v568
    %v571 = vmul.f32 %v476, %v568
    %v572 = vmul.f32 %v477, %v568
    %v573 = vmul.u32 %v208, 2
    %v574 = vmul.u32 %v209, 2
    %vm575 = vcmp.eq.s32.totalorder %v206, %v573
    %vm576 = vcmp.eq.s32.totalorder %v206, %v574
    %v577 = vsel %vm575, 1, 0
    %v578 = vsel %vm576, 1, 0
    %v579 = vcvt.s32.f32 %v577
    %v580 = vcvt.s32.f32 %v578
    %v582 = vsel %vm228, %v579, 0
    %v585 = vsel %vm228, %v580, 0
    %587 = vmatpush.msra.mxu0 0.0
    %588 = vmatpush.msra.mxu0 0.0
    %589 = vmatpush.msra.mxu0 0.0
    %590 = vmatpush.msra.mxu0 0.0
    %591 = vmatpush.msra.mxu0 0.0
    %592 = vmatpush.msra.mxu0 0.0
    %593 = vmatpush.msra.mxu0 0.0
    %594 = vmatpush.msra.mxu0 0.0
    %595 = vmatpush.msra.mxu0 0.0
    %596 = vmatpush.msra.mxu0 0.0
    %597 = vmatpush.msra.mxu0 0.0
    %598 = vmatpush.msra.mxu0 0.0
    %599 = vmatpush.msra.mxu0 %v572
    %600 = vmatpush.msra.mxu0 %v571
    %601 = vmatpush.msra.mxu0 %v570
    %602 = vmatpush.msra.mxu0 %v569
    %603 = vmatmul.f32.gmra.mxu0 %v582
    %v604 = vpop.f32.mrf.mxu0
    %v605 = vadd.f32 0.0, %v604
    %606 = vmatmul.f32.gmra.mxu0 %v585
    %v607 = vpop.f32.mrf.mxu0
    %v608 = vadd.f32 0.0, %v607
    %609 = vdwg.mxu0
    %v610 = vadd.s32 %v573, 1
    %v611 = vadd.s32 %v574, 1
    %vm612 = vcmp.eq.s32.totalorder %v206, %v610
    %vm613 = vcmp.eq.s32.totalorder %v206, %v611
    %v614 = vsel %vm612, 1, 0
    %v615 = vsel %vm613, 1, 0
    %v616 = vcvt.s32.f32 %v614
    %v617 = vcvt.s32.f32 %v615
    %v619 = vsel %vm228, %v616, 0
    %v622 = vsel %vm228, %v617, 0
    %624 = vmatpush.msra.mxu0 0.0
    %625 = vmatpush.msra.mxu0 0.0
    %626 = vmatpush.msra.mxu0 0.0
    %627 = vmatpush.msra.mxu0 0.0
    %628 = vmatpush.msra.mxu0 0.0
    %629 = vmatpush.msra.mxu0 0.0
    %630 = vmatpush.msra.mxu0 0.0
    %631 = vmatpush.msra.mxu0 0.0
    %632 = vmatpush.msra.mxu0 0.0
    %633 = vmatpush.msra.mxu0 0.0
    %634 = vmatpush.msra.mxu0 0.0
    %635 = vmatpush.msra.mxu0 0.0
    %636 = vmatpush.msra.mxu0 %v572
    %637 = vmatpush.msra.mxu0 %v571
    %638 = vmatpush.msra.mxu0 %v570
    %639 = vmatpush.msra.mxu0 %v569
    %640 = vmatmul.f32.gmra.mxu0 %v619
    %v641 = vpop.f32.mrf.mxu0
    %v642 = vadd.f32 0.0, %v641
    %643 = vmatmul.f32.gmra.mxu0 %v622
    %v644 = vpop.f32.mrf.mxu0
    %v645 = vadd.f32 0.0, %v644
    %646 = vdwg.mxu0
    %v647 = vmax.f32 %v605, %v642
    %v648 = vmax.f32 %v608, %v645
    %vm649 = vcmask 130048
    %v650 = vsel %vm649, %v224, 0
    %v652 = vsel %vm649, %v225, 0
    %654 = vmatpush.msra.mxu0 0.0
    %655 = vmatpush.msra.mxu0 0.0
    %656 = vmatpush.msra.mxu0 0.0
    %657 = vmatpush.msra.mxu0 0.0
    %658 = vmatpush.msra.mxu0 0.0
    %659 = vmatpush.msra.mxu0 0.0
    %660 = vmatpush.msra.mxu0 0.0
    %661 = vmatpush.msra.mxu0 0.0
    %662 = vmatpush.msra.mxu0 0.0
    %663 = vmatpush.msra.mxu0 0.0
    %664 = vmatpush.msra.mxu0 0.0
    %665 = vmatpush.msra.mxu0 0.0
    %666 = vmatpush.msra.mxu0 0.0
    %667 = vmatpush.msra.mxu0 0.0
    %668 = vmatpush.msra.mxu0 %v648
    %669 = vmatpush.msra.mxu0 %v647
    %670 = vmatmul.f32.gmra.mxu0 %v650
    %v671 = vpop.f32.mrf.mxu0
    %v672 = vadd.f32 0.0, %v671
    %673 = vmatmul.f32.gmra.mxu0 %v652
    %v674 = vpop.f32.mrf.mxu0
    %v675 = vadd.f32 0.0, %v674
    %676 = vdwg.mxu0
    %v677 = vld [vmem:[%s17] sm:$0xff]
    %s678 = scalar_lea.vmem %s17, 8
    %v679 = vld [vmem:[%s678] sm:$0xff]
    %v681 = vsel %vm478, %v647, 0
    %v684 = vsel %vm478, %v648, 0
    %686 = vmatpush.msra.mxu0 0.0
    %687 = vmatpush.msra.mxu0 0.0
    %688 = vmatpush.msra.mxu0 0.0
    %689 = vmatpush.msra.mxu0 0.0
    %690 = vmatpush.msra.mxu0 0.0
    %691 = vmatpush.msra.mxu0 0.0
    %692 = vmatpush.msra.mxu0 0.0
    %693 = vmatpush.msra.mxu0 0.0
    %694 = vmatpush.msra.mxu0 0.0
    %695 = vmatpush.msra.mxu0 0.0
    %696 = vmatpush.msra.mxu0 0.0
    %697 = vmatpush.msra.mxu0 0.0
    %698 = vmatpush.msra.mxu0 0.0
    %699 = vmatpush.msra.mxu0 0.0
    %700 = vmatpush.msra.mxu0 0.0
    %701 = vmatpush.msra.mxu0 %v679
    %702 = vmatmul.f32.gmra.mxu0 %v681
    %v703 = vpop.f32.mrf.mxu0
    %v704 = vadd.f32 0.0, %v703
    %705 = vmatmul.f32.gmra.mxu0 %v684
    %v706 = vpop.f32.mrf.mxu0
    %v707 = vadd.f32 0.0, %v706
    %708 = vdwg.mxu0
    %v710 = vsel %vm478, %v672, 0
    %v713 = vsel %vm478, %v675, 0
    %715 = vmatpush.msra.mxu0 0.0
    %716 = vmatpush.msra.mxu0 0.0
    %717 = vmatpush.msra.mxu0 0.0
    %718 = vmatpush.msra.mxu0 0.0
    %719 = vmatpush.msra.mxu0 0.0
    %720 = vmatpush.msra.mxu0 0.0
    %721 = vmatpush.msra.mxu0 0.0
    %722 = vmatpush.msra.mxu0 0.0
    %723 = vmatpush.msra.mxu0 0.0
    %724 = vmatpush.msra.mxu0 0.0
    %725 = vmatpush.msra.mxu0 0.0
    %726 = vmatpush.msra.mxu0 0.0
    %727 = vmatpush.msra.mxu0 0.0
    %728 = vmatpush.msra.mxu0 0.0
    %729 = vmatpush.msra.mxu0 0.0
    %730 = vmatpush.msra.mxu0 %v677
    %731 = vmatmul.f32.gmra.mxu0 %v710
    %v732 = vpop.f32.mrf.mxu0
    %v733 = vadd.f32 %v704, %v732
    %734 = vmatmul.f32.gmra.mxu0 %v713
    %v735 = vpop.f32.mrf.mxu0
    %v736 = vadd.f32 %v707, %v735
    %737 = vdwg.mxu0
    %v738 = vsel %vm649, %v375, 0
    %v740 = vsel %vm649, %v376, 0
    %742 = vmatpush.msra.mxu0 0.0
    %743 = vmatpush.msra.mxu0 0.0
    %744 = vmatpush.msra.mxu0 0.0
    %745 = vmatpush.msra.mxu0 0.0
    %746 = vmatpush.msra.mxu0 0.0
    %747 = vmatpush.msra.mxu0 0.0
    %748 = vmatpush.msra.mxu0 0.0
    %749 = vmatpush.msra.mxu0 0.0
    %750 = vmatpush.msra.mxu0 0.0
    %751 = vmatpush.msra.mxu0 0.0
    %752 = vmatpush.msra.mxu0 0.0
    %753 = vmatpush.msra.mxu0 0.0
    %754 = vmatpush.msra.mxu0 0.0
    %755 = vmatpush.msra.mxu0 0.0
    %756 = vmatpush.msra.mxu0 %v648
    %757 = vmatpush.msra.mxu0 %v647
    %758 = vmatmul.f32.gmra.mxu0 %v738
    %v759 = vpop.f32.mrf.mxu0
    %v760 = vadd.f32 0.0, %v759
    %761 = vmatmul.f32.gmra.mxu0 %v740
    %v762 = vpop.f32.mrf.mxu0
    %v763 = vadd.f32 0.0, %v762
    %764 = vdwg.mxu0
    %s765 = scalar_lea.vmem %s17, 16
    %v766 = vld [vmem:[%s765] sm:$0xff]
    %v768 = vsel %vm478, %v760, 0
    %v771 = vsel %vm478, %v763, 0
    %773 = vmatpush.msra.mxu0 0.0
    %774 = vmatpush.msra.mxu0 0.0
    %775 = vmatpush.msra.mxu0 0.0
    %776 = vmatpush.msra.mxu0 0.0
    %777 = vmatpush.msra.mxu0 0.0
    %778 = vmatpush.msra.mxu0 0.0
    %779 = vmatpush.msra.mxu0 0.0
    %780 = vmatpush.msra.mxu0 0.0
    %781 = vmatpush.msra.mxu0 0.0
    %782 = vmatpush.msra.mxu0 0.0
    %783 = vmatpush.msra.mxu0 0.0
    %784 = vmatpush.msra.mxu0 0.0
    %785 = vmatpush.msra.mxu0 0.0
    %786 = vmatpush.msra.mxu0 0.0
    %787 = vmatpush.msra.mxu0 0.0
    %788 = vmatpush.msra.mxu0 %v766
    %789 = vmatmul.f32.gmra.mxu0 %v768
    %v790 = vpop.f32.mrf.mxu0
    %v791 = vadd.f32 0.0, %v790
    %792 = vmatmul.f32.gmra.mxu0 %v771
    %v793 = vpop.f32.mrf.mxu0
    %v794 = vadd.f32 0.0, %v793
    %795 = vdwg.mxu0
    %v796 = vadd.f32 %v733, %v791
    %v797 = vadd.f32 %v736, %v794
    %v798 = vld [vmem:[%s19] sm:$0x1]
    %v800 = vperm.slane %v798, 0
    %v802 = vadd.f32 %v796, %v800
    %v803 = vadd.f32 %v797, %v800
    %v804 = vsel %vm649, %v802, 0.0
    %v805 = vsel %vm649, %v803, 0.0
    %v806 = vadd.f32 %v804, %v805
    %v807 = vrot.slane %v806, 4
    %v808 = vadd.f32 %v806, %v807
    %v809 = vrot.slane %v808, 2
    %v810 = vadd.f32 %v808, %v809
    %v811 = vrot.slane %v810, 1
    %v812 = vadd.f32 %v810, %v811
    %v813 = vrcp.pop 16.0
    %v814 = vmul.f32 16.0, %v813
    %v815 = vsub.f32 1.0, %v814
    %v816 = vmul.f32 %v813, %v815
    %v817 = vadd.f32 %v813, %v816
    %vm818 = vweird.f32 %v813
    %v819 = vsel %vm818, %v813, %v817
    %v820 = vmul.f32 %v812, %v819
    %v821 = vld [vmem:[%s21] sm:$0xff]
    %v822 = vld [vmem:[%s21 + $0x8] sm:$0xff]
    %v823 = vld [vmem:[%s23] sm:$0x1]
    %v825 = vsel %vm649, %v820, 0
    %827 = vmatpush.msra.mxu0 0.0
    %828 = vmatpush.msra.mxu0 0.0
    %829 = vmatpush.msra.mxu0 0.0
    %830 = vmatpush.msra.mxu0 0.0
    %831 = vmatpush.msra.mxu0 0.0
    %832 = vmatpush.msra.mxu0 0.0
    %833 = vmatpush.msra.mxu0 0.0
    %834 = vmatpush.msra.mxu0 0.0
    %835 = vmatpush.msra.mxu0 0.0
    %836 = vmatpush.msra.mxu0 0.0
    %837 = vmatpush.msra.mxu0 0.0
    %838 = vmatpush.msra.mxu0 0.0
    %839 = vmatpush.msra.mxu0 0.0
    %840 = vmatpush.msra.mxu0 0.0
    %841 = vmatpush.msra.mxu0 %v822
    %842 = vmatpush.msra.mxu0 %v821
    %843 = vmatmul.f32.gmra.mxu0 %v825
    %v844 = vpop.f32.mrf.mxu0
    %v845 = vadd.f32 %v823, %v844
    %846 = vdwg.mxu0
    %v847 = vmax.f32 %v845, 0.0
    %v848 = vld [vmem:[%s25] sm:$0xff]
    %v849 = vld [vmem:[%s27] sm:$0x1]
    %v851 = vsel %vm478, %v847, 0
    %853 = vmatpush.msra.mxu0 0.0
    %854 = vmatpush.msra.mxu0 0.0
    %855 = vmatpush.msra.mxu0 0.0
    %856 = vmatpush.msra.mxu0 0.0
    %857 = vmatpush.msra.mxu0 0.0
    %858 = vmatpush.msra.mxu0 0.0
    %859 = vmatpush.msra.mxu0 0.0
    %860 = vmatpush.msra.mxu0 0.0
    %861 = vmatpush.msra.mxu0 0.0
    %862 = vmatpush.msra.mxu0 0.0
    %863 = vmatpush.msra.mxu0 0.0
    %864 = vmatpush.msra.mxu0 0.0
    %865 = vmatpush.msra.mxu0 0.0
    %866 = vmatpush.msra.mxu0 0.0
    %867 = vmatpush.msra.mxu0 0.0
    %868 = vmatpush.msra.mxu0 %v848
    %869 = vmatmul.f32.gmra.mxu0 %v851
    %v870 = vpop.f32.mrf.mxu0
    %v871 = vadd.f32 %v849, %v870
    %872 = vdwg.mxu0
    %vm873 = vcmask 122880
    %v874 = vsel %vm873, %v871, -inf
    %875 = vmax.xlane.f32.xlu0 %v874
    %v876 = vpop.xlane.xlu0 %875
    %v877 = vsub.f32 %v871, %v876
    %v878 = vmul.f32 %v877, 1.442695
    %v879 = vpow.pop %v878
    %v880 = vsel %vm873, %v879, 0.0
    %881 = vadd.xlane.f32.xlu0 %v880
    %v882 = vpop.xlane.xlu0 %881
    %v883 = vrcp.pop %v882
    %v884 = vmul.f32 %v879, %v883
    %v885 = vperm.slane %v884, 0
    %v886 = vmul.f32 %v802, %v885
    %v887 = vmul.f32 %v803, %v885
    %v888 = vsel %vm649, %v579, 0
    %890 = vmatpush.msra.mxu0 0.0
    %891 = vmatpush.msra.mxu0 0.0
    %892 = vmatpush.msra.mxu0 0.0
    %893 = vmatpush.msra.mxu0 0.0
    %894 = vmatpush.msra.mxu0 0.0
    %895 = vmatpush.msra.mxu0 0.0
    %896 = vmatpush.msra.mxu0 0.0
    %897 = vmatpush.msra.mxu0 0.0
    %898 = vmatpush.msra.mxu0 0.0
    %899 = vmatpush.msra.mxu0 0.0
    %900 = vmatpush.msra.mxu0 0.0
    %901 = vmatpush.msra.mxu0 0.0
    %902 = vmatpush.msra.mxu0 0.0
    %903 = vmatpush.msra.mxu0 0.0
    %904 = vmatpush.msra.mxu0 %v887
    %905 = vmatpush.msra.mxu0 %v886
    %906 = vmatmul.f32.gmra.mxu0 %v888
    %v907 = vpop.f32.mrf.mxu0
    %v908 = vadd.f32 0.0, %v907
    %909 = vdwg.mxu0
    %v910 = vsel %vm649, %v616, 0
    %912 = vmatpush.msra.mxu0 0.0
    %913 = vmatpush.msra.mxu0 0.0
    %914 = vmatpush.msra.mxu0 0.0
    %915 = vmatpush.msra.mxu0 0.0
    %916 = vmatpush.msra.mxu0 0.0
    %917 = vmatpush.msra.mxu0 0.0
    %918 = vmatpush.msra.mxu0 0.0
    %919 = vmatpush.msra.mxu0 0.0
    %920 = vmatpush.msra.mxu0 0.0
    %921 = vmatpush.msra.mxu0 0.0
    %922 = vmatpush.msra.mxu0 0.0
    %923 = vmatpush.msra.mxu0 0.0
    %924 = vmatpush.msra.mxu0 0.0
    %925 = vmatpush.msra.mxu0 0.0
    %926 = vmatpush.msra.mxu0 %v887
    %927 = vmatpush.msra.mxu0 %v886
    %928 = vmatmul.f32.gmra.mxu0 %v910
    %v929 = vpop.f32.mrf.mxu0
    %v930 = vadd.f32 0.0, %v929
    %931 = vdwg.mxu0
    %v932 = vmax.f32 %v908, %v930
    %v933 = vld [vmem:[%s29] sm:$0xff]
    %v934 = vld [vmem:[%s29 + $0x8] sm:$0xff]
    %v935 = vld [vmem:[%s33] sm:$0x1]
    %v937 = vperm.slane %v935, 0
    %v940 = vsel %vm649, %v932, 0
    %942 = vmatpush.msra.mxu0 0.0
    %943 = vmatpush.msra.mxu0 0.0
    %944 = vmatpush.msra.mxu0 0.0
    %945 = vmatpush.msra.mxu0 0.0
    %946 = vmatpush.msra.mxu0 0.0
    %947 = vmatpush.msra.mxu0 0.0
    %948 = vmatpush.msra.mxu0 0.0
    %949 = vmatpush.msra.mxu0 0.0
    %950 = vmatpush.msra.mxu0 0.0
    %951 = vmatpush.msra.mxu0 0.0
    %952 = vmatpush.msra.mxu0 0.0
    %953 = vmatpush.msra.mxu0 0.0
    %954 = vmatpush.msra.mxu0 0.0
    %955 = vmatpush.msra.mxu0 0.0
    %956 = vmatpush.msra.mxu0 %v934
    %957 = vmatpush.msra.mxu0 %v933
    %958 = vmatmul.f32.gmra.mxu0 %v940
    %v959 = vpop.f32.mrf.mxu0
    %v960 = vadd.f32 %v937, %v959
    %961 = vdwg.mxu0
    %v962 = vld [vmem:[%s35] sm:$0xff]
    %v963 = vld [vmem:[%s35 + $0x8] sm:$0xff]
    %v964 = vld [vmem:[%s39] sm:$0x1]
    %v966 = vperm.slane %v964, 0
    %968 = vmatpush.msra.mxu0 0.0
    %969 = vmatpush.msra.mxu0 0.0
    %970 = vmatpush.msra.mxu0 0.0
    %971 = vmatpush.msra.mxu0 0.0
    %972 = vmatpush.msra.mxu0 0.0
    %973 = vmatpush.msra.mxu0 0.0
    %974 = vmatpush.msra.mxu0 0.0
    %975 = vmatpush.msra.mxu0 0.0
    %976 = vmatpush.msra.mxu0 0.0
    %977 = vmatpush.msra.mxu0 0.0
    %978 = vmatpush.msra.mxu0 0.0
    %979 = vmatpush.msra.mxu0 0.0
    %980 = vmatpush.msra.mxu0 0.0
    %981 = vmatpush.msra.mxu0 0.0
    %982 = vmatpush.msra.mxu0 %v963
    %983 = vmatpush.msra.mxu0 %v962
    %984 = vmatmul.f32.gmra.mxu0 %v940
    %v985 = vpop.f32.mrf.mxu0
    %v986 = vadd.f32 %v966, %v985
    %987 = vdwg.mxu0
    %v988 = vld [vmem:[%s31] sm:$0xff]
    %v989 = vld [vmem:[%s31 + $0x8] sm:$0xff]
    %v990 = vld [vmem:[%s37] sm:$0xff]
    %v991 = vld [vmem:[%s37 + $0x8] sm:$0xff]
    %v993 = vsel %vm649, 0.0, 0
    %995 = vmatpush.msra.mxu0 0.0
    %996 = vmatpush.msra.mxu0 0.0
    %997 = vmatpush.msra.mxu0 0.0
    %998 = vmatpush.msra.mxu0 0.0
    %999 = vmatpush.msra.mxu0 0.0
    %1000 = vmatpush.msra.mxu0 0.0
    %1001 = vmatpush.msra.mxu0 0.0
    %1002 = vmatpush.msra.mxu0 0.0
    %1003 = vmatpush.msra.mxu0 0.0
    %1004 = vmatpush.msra.mxu0 0.0
    %1005 = vmatpush.msra.mxu0 0.0
    %1006 = vmatpush.msra.mxu0 0.0
    %1007 = vmatpush.msra.mxu0 0.0
    %1008 = vmatpush.msra.mxu0 0.0
    %1009 = vmatpush.msra.mxu0 %v989
    %1010 = vmatpush.msra.mxu0 %v988
    %1011 = vmatmul.f32.gmra.mxu0 %v993
    %v1012 = vpop.f32.mrf.mxu0
    %v1013 = vadd.f32 0.0, %v1012
    %1014 = vdwg.mxu0
    %v1015 = vadd.f32 %v960, %v1013
    %1016 = vmatpush.msra.mxu0 0.0
    %1017 = vmatpush.msra.mxu0 0.0
    %1018 = vmatpush.msra.mxu0 0.0
    %1019 = vmatpush.msra.mxu0 0.0
    %1020 = vmatpush.msra.mxu0 0.0
    %1021 = vmatpush.msra.mxu0 0.0
    %1022 = vmatpush.msra.mxu0 0.0
    %1023 = vmatpush.msra.mxu0 0.0
    %1024 = vmatpush.msra.mxu0 0.0
    %1025 = vmatpush.msra.mxu0 0.0
    %1026 = vmatpush.msra.mxu0 0.0
    %1027 = vmatpush.msra.mxu0 0.0
    %1028 = vmatpush.msra.mxu0 0.0
    %1029 = vmatpush.msra.mxu0 0.0
    %1030 = vmatpush.msra.mxu0 %v991
    %1031 = vmatpush.msra.mxu0 %v990
    %1032 = vmatmul.f32.gmra.mxu0 %v993
    %v1033 = vpop.f32.mrf.mxu0
    %v1034 = vadd.f32 0.0, %v1033
    %1035 = vdwg.mxu0
    %v1037 = vrot.slane %v1034, 1
    %v1039 = vadd.f32 %v986, %v1037
    %v1040 = vsub.f32 0.0, %v1015
    %v1041 = vmul.f32 %v1040, 1.442695
    %v1042 = vpow.pop %v1041
    %v1043 = vadd.f32 %v1042, 1.0
    %v1044 = vrcp.pop %v1043
    %v1045 = vmul.f32 %v1043, %v1044
    %v1046 = vsub.f32 1.0, %v1045
    %v1047 = vmul.f32 %v1044, %v1046
    %v1048 = vadd.f32 %v1044, %v1047
    %vm1049 = vweird.f32 %v1043
    %vm1050 = vweird.f32 %v1044
    %vm1051 = vmor %vm1049, %vm1050
    %v1052 = vsel %vm1051, %v1044, %v1048
    %v1053 = vand.u32 2147483647, %v1043
    %vm1054 = vcmp.eq.f32.partialorder %v1053, 8.507059e+37
    %v1055 = vand.u32 %v1043, 2147483648
    %v1056 = vor.u32 1.1754944e-38, %v1055
    %v1057 = vsel %vm1054, %v1056, %v1052
    %v1058 = vmul.f32 1.0, %v1057
    %v1059 = vsub.f32 0.0, %v1039
    %v1060 = vmul.f32 %v1059, 1.442695
    %v1061 = vpow.pop %v1060
    %v1062 = vadd.f32 %v1061, 1.0
    %v1063 = vrcp.pop %v1062
    %v1064 = vmul.f32 %v1062, %v1063
    %v1065 = vsub.f32 1.0, %v1064
    %v1066 = vmul.f32 %v1063, %v1065
    %v1067 = vadd.f32 %v1063, %v1066
    %vm1068 = vweird.f32 %v1062
    %vm1069 = vweird.f32 %v1063
    %vm1070 = vmor %vm1068, %vm1069
    %v1071 = vsel %vm1070, %v1063, %v1067
    %v1072 = vand.u32 2147483647, %v1062
    %vm1073 = vcmp.eq.f32.partialorder %v1072, 8.507059e+37
    %v1074 = vand.u32 %v1062, 2147483648
    %v1075 = vor.u32 1.1754944e-38, %v1074
    %v1076 = vsel %vm1073, %v1075, %v1071
    %v1077 = vmul.f32 1.0, %v1076
    %v1078 = vtanh.pop %v1015
    %v1079 = vtanh.pop %v1039
    %v1080 = vmul.f32 %v1058, 0.0
    %1082 = vrot.lane.b32.xlu0 %v1078, 96
    %v1083 = vpop.permute.xlu0 %1082
    %v1085 = vmul.f32 %v1058, %v1083
    %1087 = vrot.lane.b32.xlu0 %v1085, 16
    %v1088 = vpop.permute.xlu0 %1087
    %v1090 = vadd.f32 %v1080, %v1088
    %v1091 = vmul.f32 %v1077, 0.0
    %1093 = vrot.lane.b32.xlu0 %v1079, 96
    %v1094 = vpop.permute.xlu0 %1093
    %v1096 = vmul.f32 %v1077, %v1094
    %1098 = vrot.lane.b32.xlu0 %v1096, 16
    %v1099 = vpop.permute.xlu0 %1098
    %v1101 = vadd.f32 %v1091, %v1099
    %v1102 = vtanh.pop %v1090
    %1104 = vrot.lane.b32.xlu0 %v1102, 32
    %v1105 = vpop.permute.xlu0 %1104
    %v1107 = vmul.f32 %v1058, %v1105
    %v1108 = vtanh.pop %v1101
    %1110 = vrot.lane.b32.xlu0 %v1108, 32
    %v1111 = vpop.permute.xlu0 %1110
    %v1113 = vmul.f32 %v1077, %v1111
    %1115 = vrot.lane.b32.xlu0 %v1107, 80
    %v1116 = vpop.permute.xlu0 %1115
    %1118 = vst.msk [vmem:[#allocation2] sm:$0x1] %vm873, %v1116
    %1120 = vrot.lane.b32.xlu0 %v1113, 80
    %v1121 = vpop.permute.xlu0 %1120
    %vm1123 = vcmask 130055
    %1124 = vst.msk [vmem:[#allocation3] sm:$0x80] %vm1123, %v1121
    %v1125 = vsel %vm649, %v1116, 0
    %1127 = vmatpush.msra.mxu0 0.0
    %1128 = vmatpush.msra.mxu0 0.0
    %1129 = vmatpush.msra.mxu0 0.0
    %1130 = vmatpush.msra.mxu0 0.0
    %1131 = vmatpush.msra.mxu0 0.0
    %1132 = vmatpush.msra.mxu0 0.0
    %1133 = vmatpush.msra.mxu0 0.0
    %1134 = vmatpush.msra.mxu0 0.0
    %1135 = vmatpush.msra.mxu0 0.0
    %1136 = vmatpush.msra.mxu0 0.0
    %1137 = vmatpush.msra.mxu0 0.0
    %1138 = vmatpush.msra.mxu0 0.0
    %1139 = vmatpush.msra.mxu0 0.0
    %1140 = vmatpush.msra.mxu0 0.0
    %1141 = vmatpush.msra.mxu0 %v989
    %1142 = vmatpush.msra.mxu0 %v988
    %1143 = vmatmul.f32.gmra.mxu0 %v1125
    %v1144 = vpop.f32.mrf.mxu0
    %v1145 = vadd.f32 0.0, %v1144
    %1146 = vdwg.mxu0
    %v1148 = vrot.slane %v1145, 7
    %v1150 = vadd.f32 %v960, %v1148
    %v1151 = vrot.slane %v1113, 7
    %1152 = vrot.lane.b32.xlu0 %v1151, 80
    %v1153 = vpop.permute.xlu0 %1152
    %v1154 = vsel %vm649, %v1153, 0
    %1156 = vmatpush.msra.mxu0 0.0
    %1157 = vmatpush.msra.mxu0 0.0
    %1158 = vmatpush.msra.mxu0 0.0
    %1159 = vmatpush.msra.mxu0 0.0
    %1160 = vmatpush.msra.mxu0 0.0
    %1161 = vmatpush.msra.mxu0 0.0
    %1162 = vmatpush.msra.mxu0 0.0
    %1163 = vmatpush.msra.mxu0 0.0
    %1164 = vmatpush.msra.mxu0 0.0
    %1165 = vmatpush.msra.mxu0 0.0
    %1166 = vmatpush.msra.mxu0 0.0
    %1167 = vmatpush.msra.mxu0 0.0
    %1168 = vmatpush.msra.mxu0 0.0
    %1169 = vmatpush.msra.mxu0 0.0
    %1170 = vmatpush.msra.mxu0 %v991
    %1171 = vmatpush.msra.mxu0 %v990
    %1172 = vmatmul.f32.gmra.mxu0 %v1154
    %v1173 = vpop.f32.mrf.mxu0
    %v1174 = vadd.f32 0.0, %v1173
    %1175 = vdwg.mxu0
    %v1177 = vrot.slane %v1174, 2
    %v1179 = vadd.f32 %v986, %v1177
    %v1180 = vsub.f32 0.0, %v1150
    %v1181 = vmul.f32 %v1180, 1.442695
    %v1182 = vpow.pop %v1181
    %v1183 = vadd.f32 %v1182, 1.0
    %v1184 = vrcp.pop %v1183
    %v1185 = vmul.f32 %v1183, %v1184
    %v1186 = vsub.f32 1.0, %v1185
    %v1187 = vmul.f32 %v1184, %v1186
    %v1188 = vadd.f32 %v1184, %v1187
    %vm1189 = vweird.f32 %v1183
    %vm1190 = vweird.f32 %v1184
    %vm1191 = vmor %vm1189, %vm1190
    %v1192 = vsel %vm1191, %v1184, %v1188
    %v1193 = vand.u32 2147483647, %v1183
    %vm1194 = vcmp.eq.f32.partialorder %v1193, 8.507059e+37
    %v1195 = vand.u32 %v1183, 2147483648
    %v1196 = vor.u32 1.1754944e-38, %v1195
    %v1197 = vsel %vm1194, %v1196, %v1192
    %v1198 = vmul.f32 1.0, %v1197
    %v1199 = vsub.f32 0.0, %v1179
    %v1200 = vmul.f32 %v1199, 1.442695
    %v1201 = vpow.pop %v1200
    %v1202 = vadd.f32 %v1201, 1.0
    %v1203 = vrcp.pop %v1202
    %v1204 = vmul.f32 %v1202, %v1203
    %v1205 = vsub.f32 1.0, %v1204
    %v1206 = vmul.f32 %v1203, %v1205
    %v1207 = vadd.f32 %v1203, %v1206
    %vm1208 = vweird.f32 %v1202
    %vm1209 = vweird.f32 %v1203
    %vm1210 = vmor %vm1208, %vm1209
    %v1211 = vsel %vm1210, %v1203, %v1207
    %v1212 = vand.u32 2147483647, %v1202
    %vm1213 = vcmp.eq.f32.partialorder %v1212, 8.507059e+37
    %v1214 = vand.u32 %v1202, 2147483648
    %v1215 = vor.u32 1.1754944e-38, %v1214
    %v1216 = vsel %vm1213, %v1215, %v1211
    %v1217 = vmul.f32 1.0, %v1216
    %v1218 = vtanh.pop %v1150
    %v1219 = vtanh.pop %v1179
    %v1221 = vrot.slane %v1090, 7
    %v1223 = vmul.f32 %v1198, %v1221
    %1225 = vrot.lane.b32.xlu0 %v1218, 96
    %v1226 = vpop.permute.xlu0 %1225
    %v1228 = vmul.f32 %v1198, %v1226
    %1230 = vrot.lane.b32.xlu0 %v1228, 16
    %v1231 = vpop.permute.xlu0 %1230
    %v1233 = vadd.f32 %v1223, %v1231
    %v1235 = vrot.slane %v1101, 1
    %v1237 = vmul.f32 %v1217, %v1235
    %1239 = vrot.lane.b32.xlu0 %v1219, 96
    %v1240 = vpop.permute.xlu0 %1239
    %v1242 = vmul.f32 %v1217, %v1240
    %1244 = vrot.lane.b32.xlu0 %v1242, 16
    %v1245 = vpop.permute.xlu0 %1244
    %v1247 = vadd.f32 %v1237, %v1245
    %v1248 = vtanh.pop %v1233
    %1250 = vrot.lane.b32.xlu0 %v1248, 32
    %v1251 = vpop.permute.xlu0 %1250
    %v1253 = vmul.f32 %v1198, %v1251
    %v1254 = vtanh.pop %v1247
    %1256 = vrot.lane.b32.xlu0 %v1254, 32
    %v1257 = vpop.permute.xlu0 %1256
    %v1259 = vmul.f32 %v1217, %v1257
    %1261 = vrot.lane.b32.xlu0 %v1253, 80
    %v1262 = vpop.permute.xlu0 %1261
    %vm1264 = vcmask 123905
    %1265 = vst.msk [vmem:[#allocation2] sm:$0x2] %vm1264, %v1262
    %1267 = vrot.lane.b32.xlu0 %v1259, 80
    %v1268 = vpop.permute.xlu0 %1267
    %vm1270 = vcmask 129030
    %1271 = vst.msk [vmem:[#allocation3] sm:$0x40] %vm1270, %v1268
    %v1272 = vrot.slane %v1253, 1
    %1273 = vrot.lane.b32.xlu0 %v1272, 80
    %v1274 = vpop.permute.xlu0 %1273
    %v1275 = vsel %vm649, %v1274, 0
    %1277 = vmatpush.msra.mxu0 0.0
    %1278 = vmatpush.msra.mxu0 0.0
    %1279 = vmatpush.msra.mxu0 0.0
    %1280 = vmatpush.msra.mxu0 0.0
    %1281 = vmatpush.msra.mxu0 0.0
    %1282 = vmatpush.msra.mxu0 0.0
    %1283 = vmatpush.msra.mxu0 0.0
    %1284 = vmatpush.msra.mxu0 0.0
    %1285 = vmatpush.msra.mxu0 0.0
    %1286 = vmatpush.msra.mxu0 0.0
    %1287 = vmatpush.msra.mxu0 0.0
    %1288 = vmatpush.msra.mxu0 0.0
    %1289 = vmatpush.msra.mxu0 0.0
    %1290 = vmatpush.msra.mxu0 0.0
    %1291 = vmatpush.msra.mxu0 %v989
    %1292 = vmatpush.msra.mxu0 %v988
    %1293 = vmatmul.f32.gmra.mxu0 %v1275
    %v1294 = vpop.f32.mrf.mxu0
    %v1295 = vadd.f32 0.0, %v1294
    %1296 = vdwg.mxu0
    %v1298 = vrot.slane %v1295, 6
    %v1300 = vadd.f32 %v960, %v1298
    %v1301 = vrot.slane %v1259, 6
    %1302 = vrot.lane.b32.xlu0 %v1301, 80
    %v1303 = vpop.permute.xlu0 %1302
    %v1304 = vsel %vm649, %v1303, 0
    %1306 = vmatpush.msra.mxu0 0.0
    %1307 = vmatpush.msra.mxu0 0.0
    %1308 = vmatpush.msra.mxu0 0.0
    %1309 = vmatpush.msra.mxu0 0.0
    %1310 = vmatpush.msra.mxu0 0.0
    %1311 = vmatpush.msra.mxu0 0.0
    %1312 = vmatpush.msra.mxu0 0.0
    %1313 = vmatpush.msra.mxu0 0.0
    %1314 = vmatpush.msra.mxu0 0.0
    %1315 = vmatpush.msra.mxu0 0.0
    %1316 = vmatpush.msra.mxu0 0.0
    %1317 = vmatpush.msra.mxu0 0.0
    %1318 = vmatpush.msra.mxu0 0.0
    %1319 = vmatpush.msra.mxu0 0.0
    %1320 = vmatpush.msra.mxu0 %v991
    %1321 = vmatpush.msra.mxu0 %v990
    %1322 = vmatmul.f32.gmra.mxu0 %v1304
    %v1323 = vpop.f32.mrf.mxu0
    %v1324 = vadd.f32 0.0, %v1323
    %1325 = vdwg.mxu0
    %v1327 = vrot.slane %v1324, 3
    %v1329 = vadd.f32 %v986, %v1327
    %v1330 = vsub.f32 0.0, %v1300
    %v1331 = vmul.f32 %v1330, 1.442695
    %v1332 = vpow.pop %v1331
    %v1333 = vadd.f32 %v1332, 1.0
    %v1334 = vrcp.pop %v1333
    %v1335 = vmul.f32 %v1333, %v1334
    %v1336 = vsub.f32 1.0, %v1335
    %v1337 = vmul.f32 %v1334, %v1336
    %v1338 = vadd.f32 %v1334, %v1337
    %vm1339 = vweird.f32 %v1333
    %vm1340 = vweird.f32 %v1334
    %vm1341 = vmor %vm1339, %vm1340
    %v1342 = vsel %vm1341, %v1334, %v1338
    %v1343 = vand.u32 2147483647, %v1333
    %vm1344 = vcmp.eq.f32.partialorder %v1343, 8.507059e+37
    %v1345 = vand.u32 %v1333, 2147483648
    %v1346 = vor.u32 1.1754944e-38, %v1345
    %v1347 = vsel %vm1344, %v1346, %v1342
    %v1348 = vmul.f32 1.0, %v1347
    %v1349 = vsub.f32 0.0, %v1329
    %v1350 = vmul.f32 %v1349, 1.442695
    %v1351 = vpow.pop %v1350
    %v1352 = vadd.f32 %v1351, 1.0
    %v1353 = vrcp.pop %v1352
    %v1354 = vmul.f32 %v1352, %v1353
    %v1355 = vsub.f32 1.0, %v1354
    %v1356 = vmul.f32 %v1353, %v1355
    %v1357 = vadd.f32 %v1353, %v1356
    %vm1358 = vweird.f32 %v1352
    %vm1359 = vweird.f32 %v1353
    %vm1360 = vmor %vm1358, %vm1359
    %v1361 = vsel %vm1360, %v1353, %v1357
    %v1362 = vand.u32 2147483647, %v1352
    %vm1363 = vcmp.eq.f32.partialorder %v1362, 8.507059e+37
    %v1364 = vand.u32 %v1352, 2147483648
    %v1365 = vor.u32 1.1754944e-38, %v1364
    %v1366 = vsel %vm1363, %v1365, %v1361
    %v1367 = vmul.f32 1.0, %v1366
    %v1368 = vtanh.pop %v1300
    %v1369 = vtanh.pop %v1329
    %v1371 = vrot.slane %v1233, 7
    %v1373 = vmul.f32 %v1348, %v1371
    %1375 = vrot.lane.b32.xlu0 %v1368, 96
    %v1376 = vpop.permute.xlu0 %1375
    %v1378 = vmul.f32 %v1348, %v1376
    %1380 = vrot.lane.b32.xlu0 %v1378, 16
    %v1381 = vpop.permute.xlu0 %1380
    %v1383 = vadd.f32 %v1373, %v1381
    %v1385 = vrot.slane %v1247, 1
    %v1387 = vmul.f32 %v1367, %v1385
    %1389 = vrot.lane.b32.xlu0 %v1369, 96
    %v1390 = vpop.permute.xlu0 %1389
    %v1392 = vmul.f32 %v1367, %v1390
    %1394 = vrot.lane.b32.xlu0 %v1392, 16
    %v1395 = vpop.permute.xlu0 %1394
    %v1397 = vadd.f32 %v1387, %v1395
    %v1398 = vtanh.pop %v1383
    %1400 = vrot.lane.b32.xlu0 %v1398, 32
    %v1401 = vpop.permute.xlu0 %1400
    %v1403 = vmul.f32 %v1348, %v1401
    %v1404 = vtanh.pop %v1397
    %1406 = vrot.lane.b32.xlu0 %v1404, 32
    %v1407 = vpop.permute.xlu0 %1406
    %v1409 = vmul.f32 %v1367, %v1407
    %1411 = vrot.lane.b32.xlu0 %v1403, 80
    %v1412 = vpop.permute.xlu0 %1411
    %vm1414 = vcmask 124930
    %1415 = vst.msk [vmem:[#allocation2] sm:$0x4] %vm1414, %v1412
    %1417 = vrot.lane.b32.xlu0 %v1409, 80
    %v1418 = vpop.permute.xlu0 %1417
    %vm1420 = vcmask 128005
    %1421 = vst.msk [vmem:[#allocation3] sm:$0x20] %vm1420, %v1418
    %v1422 = vrot.slane %v1403, 2
    %1423 = vrot.lane.b32.xlu0 %v1422, 80
    %v1424 = vpop.permute.xlu0 %1423
    %v1425 = vsel %vm649, %v1424, 0
    %1427 = vmatpush.msra.mxu0 0.0
    %1428 = vmatpush.msra.mxu0 0.0
    %1429 = vmatpush.msra.mxu0 0.0
    %1430 = vmatpush.msra.mxu0 0.0
    %1431 = vmatpush.msra.mxu0 0.0
    %1432 = vmatpush.msra.mxu0 0.0
    %1433 = vmatpush.msra.mxu0 0.0
    %1434 = vmatpush.msra.mxu0 0.0
    %1435 = vmatpush.msra.mxu0 0.0
    %1436 = vmatpush.msra.mxu0 0.0
    %1437 = vmatpush.msra.mxu0 0.0
    %1438 = vmatpush.msra.mxu0 0.0
    %1439 = vmatpush.msra.mxu0 0.0
    %1440 = vmatpush.msra.mxu0 0.0
    %1441 = vmatpush.msra.mxu0 %v989
    %1442 = vmatpush.msra.mxu0 %v988
    %1443 = vmatmul.f32.gmra.mxu0 %v1425
    %v1444 = vpop.f32.mrf.mxu0
    %v1445 = vadd.f32 0.0, %v1444
    %1446 = vdwg.mxu0
    %v1448 = vrot.slane %v1445, 5
    %v1450 = vadd.f32 %v960, %v1448
    %v1451 = vrot.slane %v1409, 5
    %1452 = vrot.lane.b32.xlu0 %v1451, 80
    %v1453 = vpop.permute.xlu0 %1452
    %v1454 = vsel %vm649, %v1453, 0
    %1456 = vmatpush.msra.mxu0 0.0
    %1457 = vmatpush.msra.mxu0 0.0
    %1458 = vmatpush.msra.mxu0 0.0
    %1459 = vmatpush.msra.mxu0 0.0
    %1460 = vmatpush.msra.mxu0 0.0
    %1461 = vmatpush.msra.mxu0 0.0
    %1462 = vmatpush.msra.mxu0 0.0
    %1463 = vmatpush.msra.mxu0 0.0
    %1464 = vmatpush.msra.mxu0 0.0
    %1465 = vmatpush.msra.mxu0 0.0
    %1466 = vmatpush.msra.mxu0 0.0
    %1467 = vmatpush.msra.mxu0 0.0
    %1468 = vmatpush.msra.mxu0 0.0
    %1469 = vmatpush.msra.mxu0 0.0
    %1470 = vmatpush.msra.mxu0 %v991
    %1471 = vmatpush.msra.mxu0 %v990
    %1472 = vmatmul.f32.gmra.mxu0 %v1454
    %v1473 = vpop.f32.mrf.mxu0
    %v1474 = vadd.f32 0.0, %v1473
    %1475 = vdwg.mxu0
    %v1477 = vrot.slane %v1474, 4
    %v1479 = vadd.f32 %v986, %v1477
    %v1480 = vsub.f32 0.0, %v1450
    %v1481 = vmul.f32 %v1480, 1.442695
    %v1482 = vpow.pop %v1481
    %v1483 = vadd.f32 %v1482, 1.0
    %v1484 = vrcp.pop %v1483
    %v1485 = vmul.f32 %v1483, %v1484
    %v1486 = vsub.f32 1.0, %v1485
    %v1487 = vmul.f32 %v1484, %v1486
    %v1488 = vadd.f32 %v1484, %v1487
    %vm1489 = vweird.f32 %v1483
    %vm1490 = vweird.f32 %v1484
    %vm1491 = vmor %vm1489, %vm1490
    %v1492 = vsel %vm1491, %v1484, %v1488
    %v1493 = vand.u32 2147483647, %v1483
    %vm1494 = vcmp.eq.f32.partialorder %v1493, 8.507059e+37
    %v1495 = vand.u32 %v1483, 2147483648
    %v1496 = vor.u32 1.1754944e-38, %v1495
    %v1497 = vsel %vm1494, %v1496, %v1492
    %v1498 = vmul.f32 1.0, %v1497
    %v1499 = vsub.f32 0.0, %v1479
    %v1500 = vmul.f32 %v1499, 1.442695
    %v1501 = vpow.pop %v1500
    %v1502 = vadd.f32 %v1501, 1.0
    %v1503 = vrcp.pop %v1502
    %v1504 = vmul.f32 %v1502, %v1503
    %v1505 = vsub.f32 1.0, %v1504
    %v1506 = vmul.f32 %v1503, %v1505
    %v1507 = vadd.f32 %v1503, %v1506
    %vm1508 = vweird.f32 %v1502
    %vm1509 = vweird.f32 %v1503
    %vm1510 = vmor %vm1508, %vm1509
    %v1511 = vsel %vm1510, %v1503, %v1507
    %v1512 = vand.u32 2147483647, %v1502
    %vm1513 = vcmp.eq.f32.partialorder %v1512, 8.507059e+37
    %v1514 = vand.u32 %v1502, 2147483648
    %v1515 = vor.u32 1.1754944e-38, %v1514
    %v1516 = vsel %vm1513, %v1515, %v1511
    %v1517 = vmul.f32 1.0, %v1516
    %v1518 = vtanh.pop %v1450
    %v1519 = vtanh.pop %v1479
    %v1521 = vrot.slane %v1383, 7
    %v1523 = vmul.f32 %v1498, %v1521
    %1525 = vrot.lane.b32.xlu0 %v1518, 96
    %v1526 = vpop.permute.xlu0 %1525
    %v1528 = vmul.f32 %v1498, %v1526
    %1530 = vrot.lane.b32.xlu0 %v1528, 16
    %v1531 = vpop.permute.xlu0 %1530
    %v1533 = vadd.f32 %v1523, %v1531
    %v1535 = vrot.slane %v1397, 1
    %v1537 = vmul.f32 %v1517, %v1535
    %1539 = vrot.lane.b32.xlu0 %v1519, 96
    %v1540 = vpop.permute.xlu0 %1539
    %v1542 = vmul.f32 %v1517, %v1540
    %1544 = vrot.lane.b32.xlu0 %v1542, 16
    %v1545 = vpop.permute.xlu0 %1544
    %v1547 = vadd.f32 %v1537, %v1545
    %v1548 = vtanh.pop %v1533
    %1550 = vrot.lane.b32.xlu0 %v1548, 32
    %v1551 = vpop.permute.xlu0 %1550
    %v1553 = vmul.f32 %v1498, %v1551
    %v1554 = vtanh.pop %v1547
    %1556 = vrot.lane.b32.xlu0 %v1554, 32
    %v1557 = vpop.permute.xlu0 %1556
    %v1559 = vmul.f32 %v1517, %v1557
    %1561 = vrot.lane.b32.xlu0 %v1553, 80
    %v1562 = vpop.permute.xlu0 %1561
    %vm1564 = vcmask 125955
    %1565 = vst.msk [vmem:[#allocation2] sm:$0x8] %vm1564, %v1562
    %1567 = vrot.lane.b32.xlu0 %v1559, 80
    %v1568 = vpop.permute.xlu0 %1567
    %vm1570 = vcmask 126980
    %1571 = vst.msk [vmem:[#allocation3] sm:$0x10] %vm1570, %v1568
    %v1572 = vrot.slane %v1553, 3
    %1573 = vrot.lane.b32.xlu0 %v1572, 80
    %v1574 = vpop.permute.xlu0 %1573
    %v1575 = vsel %vm649, %v1574, 0
    %1577 = vmatpush.msra.mxu0 0.0
    %1578 = vmatpush.msra.mxu0 0.0
    %1579 = vmatpush.msra.mxu0 0.0
    %1580 = vmatpush.msra.mxu0 0.0
    %1581 = vmatpush.msra.mxu0 0.0
    %1582 = vmatpush.msra.mxu0 0.0
    %1583 = vmatpush.msra.mxu0 0.0
    %1584 = vmatpush.msra.mxu0 0.0
    %1585 = vmatpush.msra.mxu0 0.0
    %1586 = vmatpush.msra.mxu0 0.0
    %1587 = vmatpush.msra.mxu0 0.0
    %1588 = vmatpush.msra.mxu0 0.0
    %1589 = vmatpush.msra.mxu0 0.0
    %1590 = vmatpush.msra.mxu0 0.0
    %1591 = vmatpush.msra.mxu0 %v989
    %1592 = vmatpush.msra.mxu0 %v988
    %1593 = vmatmul.f32.gmra.mxu0 %v1575
    %v1594 = vpop.f32.mrf.mxu0
    %v1595 = vadd.f32 0.0, %v1594
    %1596 = vdwg.mxu0
    %v1598 = vrot.slane %v1595, 4
    %v1600 = vadd.f32 %v960, %v1598
    %v1601 = vrot.slane %v1559, 4
    %1602 = vrot.lane.b32.xlu0 %v1601, 80
    %v1603 = vpop.permute.xlu0 %1602
    %v1604 = vsel %vm649, %v1603, 0
    %1606 = vmatpush.msra.mxu0 0.0
    %1607 = vmatpush.msra.mxu0 0.0
    %1608 = vmatpush.msra.mxu0 0.0
    %1609 = vmatpush.msra.mxu0 0.0
    %1610 = vmatpush.msra.mxu0 0.0
    %1611 = vmatpush.msra.mxu0 0.0
    %1612 = vmatpush.msra.mxu0 0.0
    %1613 = vmatpush.msra.mxu0 0.0
    %1614 = vmatpush.msra.mxu0 0.0
    %1615 = vmatpush.msra.mxu0 0.0
    %1616 = vmatpush.msra.mxu0 0.0
    %1617 = vmatpush.msra.mxu0 0.0
    %1618 = vmatpush.msra.mxu0 0.0
    %1619 = vmatpush.msra.mxu0 0.0
    %1620 = vmatpush.msra.mxu0 %v991
    %1621 = vmatpush.msra.mxu0 %v990
    %1622 = vmatmul.f32.gmra.mxu0 %v1604
    %v1623 = vpop.f32.mrf.mxu0
    %v1624 = vadd.f32 0.0, %v1623
    %1625 = vdwg.mxu0
    %v1627 = vrot.slane %v1624, 5
    %v1629 = vadd.f32 %v986, %v1627
    %v1630 = vsub.f32 0.0, %v1600
    %v1631 = vmul.f32 %v1630, 1.442695
    %v1632 = vpow.pop %v1631
    %v1633 = vadd.f32 %v1632, 1.0
    %v1634 = vrcp.pop %v1633
    %v1635 = vmul.f32 %v1633, %v1634
    %v1636 = vsub.f32 1.0, %v1635
    %v1637 = vmul.f32 %v1634, %v1636
    %v1638 = vadd.f32 %v1634, %v1637
    %vm1639 = vweird.f32 %v1633
    %vm1640 = vweird.f32 %v1634
    %vm1641 = vmor %vm1639, %vm1640
    %v1642 = vsel %vm1641, %v1634, %v1638
    %v1643 = vand.u32 2147483647, %v1633
    %vm1644 = vcmp.eq.f32.partialorder %v1643, 8.507059e+37
    %v1645 = vand.u32 %v1633, 2147483648
    %v1646 = vor.u32 1.1754944e-38, %v1645
    %v1647 = vsel %vm1644, %v1646, %v1642
    %v1648 = vmul.f32 1.0, %v1647
    %v1649 = vsub.f32 0.0, %v1629
    %v1650 = vmul.f32 %v1649, 1.442695
    %v1651 = vpow.pop %v1650
    %v1652 = vadd.f32 %v1651, 1.0
    %v1653 = vrcp.pop %v1652
    %v1654 = vmul.f32 %v1652, %v1653
    %v1655 = vsub.f32 1.0, %v1654
    %v1656 = vmul.f32 %v1653, %v1655
    %v1657 = vadd.f32 %v1653, %v1656
    %vm1658 = vweird.f32 %v1652
    %vm1659 = vweird.f32 %v1653
    %vm1660 = vmor %vm1658, %vm1659
    %v1661 = vsel %vm1660, %v1653, %v1657
    %v1662 = vand.u32 2147483647, %v1652
    %vm1663 = vcmp.eq.f32.partialorder %v1662, 8.507059e+37
    %v1664 = vand.u32 %v1652, 2147483648
    %v1665 = vor.u32 1.1754944e-38, %v1664
    %v1666 = vsel %vm1663, %v1665, %v1661
    %v1667 = vmul.f32 1.0, %v1666
    %v1668 = vtanh.pop %v1600
    %v1669 = vtanh.pop %v1629
    %v1671 = vrot.slane %v1533, 7
    %v1673 = vmul.f32 %v1648, %v1671
    %1675 = vrot.lane.b32.xlu0 %v1668, 96
    %v1676 = vpop.permute.xlu0 %1675
    %v1678 = vmul.f32 %v1648, %v1676
    %1680 = vrot.lane.b32.xlu0 %v1678, 16
    %v1681 = vpop.permute.xlu0 %1680
    %v1683 = vadd.f32 %v1673, %v1681
    %v1685 = vrot.slane %v1547, 1
    %v1687 = vmul.f32 %v1667, %v1685
    %1689 = vrot.lane.b32.xlu0 %v1669, 96
    %v1690 = vpop.permute.xlu0 %1689
    %v1692 = vmul.f32 %v1667, %v1690
    %1694 = vrot.lane.b32.xlu0 %v1692, 16
    %v1695 = vpop.permute.xlu0 %1694
    %v1697 = vadd.f32 %v1687, %v1695
    %v1698 = vtanh.pop %v1683
    %1700 = vrot.lane.b32.xlu0 %v1698, 32
    %v1701 = vpop.permute.xlu0 %1700
    %v1703 = vmul.f32 %v1648, %v1701
    %v1704 = vtanh.pop %v1697
    %1706 = vrot.lane.b32.xlu0 %v1704, 32
    %v1707 = vpop.permute.xlu0 %1706
    %v1709 = vmul.f32 %v1667, %v1707
    %1711 = vrot.lane.b32.xlu0 %v1703, 80
    %v1712 = vpop.permute.xlu0 %1711
    %1714 = vst.msk [vmem:[#allocation2] sm:$0x10] %vm1570, %v1712
    %1716 = vrot.lane.b32.xlu0 %v1709, 80
    %v1717 = vpop.permute.xlu0 %1716
    %1719 = vst.msk [vmem:[#allocation3] sm:$0x8] %vm1564, %v1717
    %v1720 = vrot.slane %v1703, 4
    %1721 = vrot.lane.b32.xlu0 %v1720, 80
    %v1722 = vpop.permute.xlu0 %1721
    %v1723 = vsel %vm649, %v1722, 0
    %1725 = vmatpush.msra.mxu0 0.0
    %1726 = vmatpush.msra.mxu0 0.0
    %1727 = vmatpush.msra.mxu0 0.0
    %1728 = vmatpush.msra.mxu0 0.0
    %1729 = vmatpush.msra.mxu0 0.0
    %1730 = vmatpush.msra.mxu0 0.0
    %1731 = vmatpush.msra.mxu0 0.0
    %1732 = vmatpush.msra.mxu0 0.0
    %1733 = vmatpush.msra.mxu0 0.0
    %1734 = vmatpush.msra.mxu0 0.0
    %1735 = vmatpush.msra.mxu0 0.0
    %1736 = vmatpush.msra.mxu0 0.0
    %1737 = vmatpush.msra.mxu0 0.0
    %1738 = vmatpush.msra.mxu0 0.0
    %1739 = vmatpush.msra.mxu0 %v989
    %1740 = vmatpush.msra.mxu0 %v988
    %1741 = vmatmul.f32.gmra.mxu0 %v1723
    %v1742 = vpop.f32.mrf.mxu0
    %v1743 = vadd.f32 0.0, %v1742
    %1744 = vdwg.mxu0
    %v1746 = vrot.slane %v1743, 3
    %v1748 = vadd.f32 %v960, %v1746
    %v1749 = vrot.slane %v1709, 3
    %1750 = vrot.lane.b32.xlu0 %v1749, 80
    %v1751 = vpop.permute.xlu0 %1750
    %v1752 = vsel %vm649, %v1751, 0
    %1754 = vmatpush.msra.mxu0 0.0
    %1755 = vmatpush.msra.mxu0 0.0
    %1756 = vmatpush.msra.mxu0 0.0
    %1757 = vmatpush.msra.mxu0 0.0
    %1758 = vmatpush.msra.mxu0 0.0
    %1759 = vmatpush.msra.mxu0 0.0
    %1760 = vmatpush.msra.mxu0 0.0
    %1761 = vmatpush.msra.mxu0 0.0
    %1762 = vmatpush.msra.mxu0 0.0
    %1763 = vmatpush.msra.mxu0 0.0
    %1764 = vmatpush.msra.mxu0 0.0
    %1765 = vmatpush.msra.mxu0 0.0
    %1766 = vmatpush.msra.mxu0 0.0
    %1767 = vmatpush.msra.mxu0 0.0
    %1768 = vmatpush.msra.mxu0 %v991
    %1769 = vmatpush.msra.mxu0 %v990
    %1770 = vmatmul.f32.gmra.mxu0 %v1752
    %v1771 = vpop.f32.mrf.mxu0
    %v1772 = vadd.f32 0.0, %v1771
    %1773 = vdwg.mxu0
    %v1775 = vrot.slane %v1772, 6
    %v1777 = vadd.f32 %v986, %v1775
    %v1778 = vsub.f32 0.0, %v1748
    %v1779 = vmul.f32 %v1778, 1.442695
    %v1780 = vpow.pop %v1779
    %v1781 = vadd.f32 %v1780, 1.0
    %v1782 = vrcp.pop %v1781
    %v1783 = vmul.f32 %v1781, %v1782
    %v1784 = vsub.f32 1.0, %v1783
    %v1785 = vmul.f32 %v1782, %v1784
    %v1786 = vadd.f32 %v1782, %v1785
    %vm1787 = vweird.f32 %v1781
    %vm1788 = vweird.f32 %v1782
    %vm1789 = vmor %vm1787, %vm1788
    %v1790 = vsel %vm1789, %v1782, %v1786
    %v1791 = vand.u32 2147483647, %v1781
    %vm1792 = vcmp.eq.f32.partialorder %v1791, 8.507059e+37
    %v1793 = vand.u32 %v1781, 2147483648
    %v1794 = vor.u32 1.1754944e-38, %v1793
    %v1795 = vsel %vm1792, %v1794, %v1790
    %v1796 = vmul.f32 1.0, %v1795
    %v1797 = vsub.f32 0.0, %v1777
    %v1798 = vmul.f32 %v1797, 1.442695
    %v1799 = vpow.pop %v1798
    %v1800 = vadd.f32 %v1799, 1.0
    %v1801 = vrcp.pop %v1800
    %v1802 = vmul.f32 %v1800, %v1801
    %v1803 = vsub.f32 1.0, %v1802
    %v1804 = vmul.f32 %v1801, %v1803
    %v1805 = vadd.f32 %v1801, %v1804
    %vm1806 = vweird.f32 %v1800
    %vm1807 = vweird.f32 %v1801
    %vm1808 = vmor %vm1806, %vm1807
    %v1809 = vsel %vm1808, %v1801, %v1805
    %v1810 = vand.u32 2147483647, %v1800
    %vm1811 = vcmp.eq.f32.partialorder %v1810, 8.507059e+37
    %v1812 = vand.u32 %v1800, 2147483648
    %v1813 = vor.u32 1.1754944e-38, %v1812
    %v1814 = vsel %vm1811, %v1813, %v1809
    %v1815 = vmul.f32 1.0, %v1814
    %v1816 = vtanh.pop %v1748
    %v1817 = vtanh.pop %v1777
    %v1819 = vrot.slane %v1683, 7
    %v1821 = vmul.f32 %v1796, %v1819
    %1823 = vrot.lane.b32.xlu0 %v1816, 96
    %v1824 = vpop.permute.xlu0 %1823
    %v1826 = vmul.f32 %v1796, %v1824
    %1828 = vrot.lane.b32.xlu0 %v1826, 16
    %v1829 = vpop.permute.xlu0 %1828
    %v1831 = vadd.f32 %v1821, %v1829
    %v1833 = vrot.slane %v1697, 1
    %v1835 = vmul.f32 %v1815, %v1833
    %1837 = vrot.lane.b32.xlu0 %v1817, 96
    %v1838 = vpop.permute.xlu0 %1837
    %v1840 = vmul.f32 %v1815, %v1838
    %1842 = vrot.lane.b32.xlu0 %v1840, 16
    %v1843 = vpop.permute.xlu0 %1842
    %v1845 = vadd.f32 %v1835, %v1843
    %v1846 = vtanh.pop %v1831
    %1848 = vrot.lane.b32.xlu0 %v1846, 32
    %v1849 = vpop.permute.xlu0 %1848
    %v1851 = vmul.f32 %v1796, %v1849
    %v1852 = vtanh.pop %v1845
    %1854 = vrot.lane.b32.xlu0 %v1852, 32
    %v1855 = vpop.permute.xlu0 %1854
    %v1857 = vmul.f32 %v1815, %v1855
    %1859 = vrot.lane.b32.xlu0 %v1851, 80
    %v1860 = vpop.permute.xlu0 %1859
    %1862 = vst.msk [vmem:[#allocation2] sm:$0x20] %vm1420, %v1860
    %1864 = vrot.lane.b32.xlu0 %v1857, 80
    %v1865 = vpop.permute.xlu0 %1864
    %1867 = vst.msk [vmem:[#allocation3] sm:$0x4] %vm1414, %v1865
    %v1868 = vrot.slane %v1851, 5
    %1869 = vrot.lane.b32.xlu0 %v1868, 80
    %v1870 = vpop.permute.xlu0 %1869
    %v1871 = vsel %vm649, %v1870, 0
    %1873 = vmatpush.msra.mxu0 0.0
    %1874 = vmatpush.msra.mxu0 0.0
    %1875 = vmatpush.msra.mxu0 0.0
    %1876 = vmatpush.msra.mxu0 0.0
    %1877 = vmatpush.msra.mxu0 0.0
    %1878 = vmatpush.msra.mxu0 0.0
    %1879 = vmatpush.msra.mxu0 0.0
    %1880 = vmatpush.msra.mxu0 0.0
    %1881 = vmatpush.msra.mxu0 0.0
    %1882 = vmatpush.msra.mxu0 0.0
    %1883 = vmatpush.msra.mxu0 0.0
    %1884 = vmatpush.msra.mxu0 0.0
    %1885 = vmatpush.msra.mxu0 0.0
    %1886 = vmatpush.msra.mxu0 0.0
    %1887 = vmatpush.msra.mxu0 %v989
    %1888 = vmatpush.msra.mxu0 %v988
    %1889 = vmatmul.f32.gmra.mxu0 %v1871
    %v1890 = vpop.f32.mrf.mxu0
    %v1891 = vadd.f32 0.0, %v1890
    %1892 = vdwg.mxu0
    %v1894 = vrot.slane %v1891, 2
    %v1896 = vadd.f32 %v960, %v1894
    %v1897 = vrot.slane %v1857, 2
    %1898 = vrot.lane.b32.xlu0 %v1897, 80
    %v1899 = vpop.permute.xlu0 %1898
    %v1900 = vsel %vm649, %v1899, 0
    %1902 = vmatpush.msra.mxu0 0.0
    %1903 = vmatpush.msra.mxu0 0.0
    %1904 = vmatpush.msra.mxu0 0.0
    %1905 = vmatpush.msra.mxu0 0.0
    %1906 = vmatpush.msra.mxu0 0.0
    %1907 = vmatpush.msra.mxu0 0.0
    %1908 = vmatpush.msra.mxu0 0.0
    %1909 = vmatpush.msra.mxu0 0.0
    %1910 = vmatpush.msra.mxu0 0.0
    %1911 = vmatpush.msra.mxu0 0.0
    %1912 = vmatpush.msra.mxu0 0.0
    %1913 = vmatpush.msra.mxu0 0.0
    %1914 = vmatpush.msra.mxu0 0.0
    %1915 = vmatpush.msra.mxu0 0.0
    %1916 = vmatpush.msra.mxu0 %v991
    %1917 = vmatpush.msra.mxu0 %v990
    %1918 = vmatmul.f32.gmra.mxu0 %v1900
    %v1919 = vpop.f32.mrf.mxu0
    %v1920 = vadd.f32 0.0, %v1919
    %1921 = vdwg.mxu0
    %v1923 = vrot.slane %v1920, 7
    %v1925 = vadd.f32 %v986, %v1923
    %v1926 = vsub.f32 0.0, %v1896
    %v1927 = vmul.f32 %v1926, 1.442695
    %v1928 = vpow.pop %v1927
    %v1929 = vadd.f32 %v1928, 1.0
    %v1930 = vrcp.pop %v1929
    %v1931 = vmul.f32 %v1929, %v1930
    %v1932 = vsub.f32 1.0, %v1931
    %v1933 = vmul.f32 %v1930, %v1932
    %v1934 = vadd.f32 %v1930, %v1933
    %vm1935 = vweird.f32 %v1929
    %vm1936 = vweird.f32 %v1930
    %vm1937 = vmor %vm1935, %vm1936
    %v1938 = vsel %vm1937, %v1930, %v1934
    %v1939 = vand.u32 2147483647, %v1929
    %vm1940 = vcmp.eq.f32.partialorder %v1939, 8.507059e+37
    %v1941 = vand.u32 %v1929, 2147483648
    %v1942 = vor.u32 1.1754944e-38, %v1941
    %v1943 = vsel %vm1940, %v1942, %v1938
    %v1944 = vmul.f32 1.0, %v1943
    %v1945 = vsub.f32 0.0, %v1925
    %v1946 = vmul.f32 %v1945, 1.442695
    %v1947 = vpow.pop %v1946
    %v1948 = vadd.f32 %v1947, 1.0
    %v1949 = vrcp.pop %v1948
    %v1950 = vmul.f32 %v1948, %v1949
    %v1951 = vsub.f32 1.0, %v1950
    %v1952 = vmul.f32 %v1949, %v1951
    %v1953 = vadd.f32 %v1949, %v1952
    %vm1954 = vweird.f32 %v1948
    %vm1955 = vweird.f32 %v1949
    %vm1956 = vmor %vm1954, %vm1955
    %v1957 = vsel %vm1956, %v1949, %v1953
    %v1958 = vand.u32 2147483647, %v1948
    %vm1959 = vcmp.eq.f32.partialorder %v1958, 8.507059e+37
    %v1960 = vand.u32 %v1948, 2147483648
    %v1961 = vor.u32 1.1754944e-38, %v1960
    %v1962 = vsel %vm1959, %v1961, %v1957
    %v1963 = vmul.f32 1.0, %v1962
    %v1964 = vtanh.pop %v1896
    %v1965 = vtanh.pop %v1925
    %v1967 = vrot.slane %v1831, 7
    %v1969 = vmul.f32 %v1944, %v1967
    %1971 = vrot.lane.b32.xlu0 %v1964, 96
    %v1972 = vpop.permute.xlu0 %1971
    %v1974 = vmul.f32 %v1944, %v1972
    %1976 = vrot.lane.b32.xlu0 %v1974, 16
    %v1977 = vpop.permute.xlu0 %1976
    %v1979 = vadd.f32 %v1969, %v1977
    %v1981 = vrot.slane %v1845, 1
    %v1983 = vmul.f32 %v1963, %v1981
    %1985 = vrot.lane.b32.xlu0 %v1965, 96
    %v1986 = vpop.permute.xlu0 %1985
    %v1988 = vmul.f32 %v1963, %v1986
    %1990 = vrot.lane.b32.xlu0 %v1988, 16
    %v1991 = vpop.permute.xlu0 %1990
    %v1993 = vadd.f32 %v1983, %v1991
    %v1994 = vtanh.pop %v1979
    %1996 = vrot.lane.b32.xlu0 %v1994, 32
    %v1997 = vpop.permute.xlu0 %1996
    %v1999 = vmul.f32 %v1944, %v1997
    %v2000 = vtanh.pop %v1993
    %2002 = vrot.lane.b32.xlu0 %v2000, 32
    %v2003 = vpop.permute.xlu0 %2002
    %v2005 = vmul.f32 %v1963, %v2003
    %2007 = vrot.lane.b32.xlu0 %v1999, 80
    %v2008 = vpop.permute.xlu0 %2007
    %2010 = vst.msk [vmem:[#allocation2] sm:$0x40] %vm1270, %v2008
    %2012 = vrot.lane.b32.xlu0 %v2005, 80
    %v2013 = vpop.permute.xlu0 %2012
    %2015 = vst.msk [vmem:[#allocation3] sm:$0x2] %vm1264, %v2013
    %v2016 = vrot.slane %v1999, 6
    %2017 = vrot.lane.b32.xlu0 %v2016, 80
    %v2018 = vpop.permute.xlu0 %2017
    %v2019 = vsel %vm649, %v2018, 0
    %2021 = vmatpush.msra.mxu0 0.0
    %2022 = vmatpush.msra.mxu0 0.0
    %2023 = vmatpush.msra.mxu0 0.0
    %2024 = vmatpush.msra.mxu0 0.0
    %2025 = vmatpush.msra.mxu0 0.0
    %2026 = vmatpush.msra.mxu0 0.0
    %2027 = vmatpush.msra.mxu0 0.0
    %2028 = vmatpush.msra.mxu0 0.0
    %2029 = vmatpush.msra.mxu0 0.0
    %2030 = vmatpush.msra.mxu0 0.0
    %2031 = vmatpush.msra.mxu0 0.0
    %2032 = vmatpush.msra.mxu0 0.0
    %2033 = vmatpush.msra.mxu0 0.0
    %2034 = vmatpush.msra.mxu0 0.0
    %2035 = vmatpush.msra.mxu0 %v989
    %2036 = vmatpush.msra.mxu0 %v988
    %2037 = vmatmul.f32.gmra.mxu0 %v2019
    %v2038 = vpop.f32.mrf.mxu0
    %v2039 = vadd.f32 0.0, %v2038
    %2040 = vdwg.mxu0
    %v2042 = vrot.slane %v2039, 1
    %v2044 = vadd.f32 %v960, %v2042
    %v2045 = vrot.slane %v2005, 1
    %2046 = vrot.lane.b32.xlu0 %v2045, 80
    %v2047 = vpop.permute.xlu0 %2046
    %v2048 = vsel %vm649, %v2047, 0
    %2050 = vmatpush.msra.mxu0 0.0
    %2051 = vmatpush.msra.mxu0 0.0
    %2052 = vmatpush.msra.mxu0 0.0
    %2053 = vmatpush.msra.mxu0 0.0
    %2054 = vmatpush.msra.mxu0 0.0
    %2055 = vmatpush.msra.mxu0 0.0
    %2056 = vmatpush.msra.mxu0 0.0
    %2057 = vmatpush.msra.mxu0 0.0
    %2058 = vmatpush.msra.mxu0 0.0
    %2059 = vmatpush.msra.mxu0 0.0
    %2060 = vmatpush.msra.mxu0 0.0
    %2061 = vmatpush.msra.mxu0 0.0
    %2062 = vmatpush.msra.mxu0 0.0
    %2063 = vmatpush.msra.mxu0 0.0
    %2064 = vmatpush.msra.mxu0 %v991
    %2065 = vmatpush.msra.mxu0 %v990
    %2066 = vmatmul.f32.gmra.mxu0 %v2048
    %v2067 = vpop.f32.mrf.mxu0
    %v2068 = vadd.f32 0.0, %v2067
    %2069 = vdwg.mxu0
    %v2070 = vadd.f32 %v986, %v2068
    %v2071 = vsub.f32 0.0, %v2044
    %v2072 = vmul.f32 %v2071, 1.442695
    %v2073 = vpow.pop %v2072
    %v2074 = vadd.f32 %v2073, 1.0
    %v2075 = vrcp.pop %v2074
    %v2076 = vmul.f32 %v2074, %v2075
    %v2077 = vsub.f32 1.0, %v2076
    %v2078 = vmul.f32 %v2075, %v2077
    %v2079 = vadd.f32 %v2075, %v2078
    %vm2080 = vweird.f32 %v2074
    %vm2081 = vweird.f32 %v2075
    %vm2082 = vmor %vm2080, %vm2081
    %v2083 = vsel %vm2082, %v2075, %v2079
    %v2084 = vand.u32 2147483647, %v2074
    %vm2085 = vcmp.eq.f32.partialorder %v2084, 8.507059e+37
    %v2086 = vand.u32 %v2074, 2147483648
    %v2087 = vor.u32 1.1754944e-38, %v2086
    %v2088 = vsel %vm2085, %v2087, %v2083
    %v2089 = vmul.f32 1.0, %v2088
    %v2090 = vsub.f32 0.0, %v2070
    %v2091 = vmul.f32 %v2090, 1.442695
    %v2092 = vpow.pop %v2091
    %v2093 = vadd.f32 %v2092, 1.0
    %v2094 = vrcp.pop %v2093
    %v2095 = vmul.f32 %v2093, %v2094
    %v2096 = vsub.f32 1.0, %v2095
    %v2097 = vmul.f32 %v2094, %v2096
    %v2098 = vadd.f32 %v2094, %v2097
    %vm2099 = vweird.f32 %v2093
    %vm2100 = vweird.f32 %v2094
    %vm2101 = vmor %vm2099, %vm2100
    %v2102 = vsel %vm2101, %v2094, %v2098
    %v2103 = vand.u32 2147483647, %v2093
    %vm2104 = vcmp.eq.f32.partialorder %v2103, 8.507059e+37
    %v2105 = vand.u32 %v2093, 2147483648
    %v2106 = vor.u32 1.1754944e-38, %v2105
    %v2107 = vsel %vm2104, %v2106, %v2102
    %v2108 = vmul.f32 1.0, %v2107
    %v2109 = vtanh.pop %v2044
    %v2110 = vtanh.pop %v2070
    %v2112 = vrot.slane %v1979, 7
    %v2114 = vmul.f32 %v2089, %v2112
    %2116 = vrot.lane.b32.xlu0 %v2109, 96
    %v2117 = vpop.permute.xlu0 %2116
    %v2119 = vmul.f32 %v2089, %v2117
    %2121 = vrot.lane.b32.xlu0 %v2119, 16
    %v2122 = vpop.permute.xlu0 %2121
    %v2124 = vadd.f32 %v2114, %v2122
    %v2126 = vrot.slane %v1993, 1
    %v2128 = vmul.f32 %v2108, %v2126
    %2130 = vrot.lane.b32.xlu0 %v2110, 96
    %v2131 = vpop.permute.xlu0 %2130
    %v2133 = vmul.f32 %v2108, %v2131
    %2135 = vrot.lane.b32.xlu0 %v2133, 16
    %v2136 = vpop.permute.xlu0 %2135
    %v2138 = vadd.f32 %v2128, %v2136
    %v2139 = vtanh.pop %v2124
    %2141 = vrot.lane.b32.xlu0 %v2139, 32
    %v2142 = vpop.permute.xlu0 %2141
    %v2144 = vmul.f32 %v2089, %v2142
    %v2145 = vtanh.pop %v2138
    %2147 = vrot.lane.b32.xlu0 %v2145, 32
    %v2148 = vpop.permute.xlu0 %2147
    %v2150 = vmul.f32 %v2108, %v2148
    %2152 = vrot.lane.b32.xlu0 %v2144, 80
    %v2153 = vpop.permute.xlu0 %2152
    %2155 = vst.msk [vmem:[#allocation2] sm:$0x80] %vm1123, %v2153
    %2157 = vrot.lane.b32.xlu0 %v2150, 80
    %v2158 = vpop.permute.xlu0 %2157
    %2160 = vst.msk [vmem:[#allocation3] sm:$0x1] %vm873, %v2158
    %v2161 = vld [vmem:[#allocation2] sm:$0xff]
    %v2162 = vld [vmem:[#allocation3] sm:$0xff]
    %v2163 = vld [vmem:[%s41] sm:$0xff]
    %v2164 = vld [vmem:[%s41 + $0x8] sm:$0xff]
    %v2165 = vld [vmem:[%s41 + $0x10] sm:$0xff]
    %v2166 = vld [vmem:[%s41 + $0x18] sm:$0xff]
    %v2167 = vld [vmem:[%s47] sm:$0xff]
    %v2168 = vld [vmem:[%s47 + $0x8] sm:$0xff]
    %v2169 = vld [vmem:[%s47 + $0x10] sm:$0xff]
    %v2170 = vld [vmem:[%s47 + $0x18] sm:$0xff]
    %v2172 = vsel %vm649, %v2162, 0
    %2174 = vmatpush.msra.mxu0 0.0
    %2175 = vmatpush.msra.mxu0 0.0
    %2176 = vmatpush.msra.mxu0 0.0
    %2177 = vmatpush.msra.mxu0 0.0
    %2178 = vmatpush.msra.mxu0 0.0
    %2179 = vmatpush.msra.mxu0 0.0
    %2180 = vmatpush.msra.mxu0 0.0
    %2181 = vmatpush.msra.mxu0 0.0
    %2182 = vmatpush.msra.mxu0 0.0
    %2183 = vmatpush.msra.mxu0 0.0
    %2184 = vmatpush.msra.mxu0 0.0
    %2185 = vmatpush.msra.mxu0 0.0
    %2186 = vmatpush.msra.mxu0 0.0
    %2187 = vmatpush.msra.mxu0 0.0
    %2188 = vmatpush.msra.mxu0 %v2166
    %2189 = vmatpush.msra.mxu0 %v2165
    %2190 = vmatmul.f32.gmra.mxu0 %v2172
    %v2191 = vpop.f32.mrf.mxu0
    %v2192 = vadd.f32 0.0, %v2191
    %2193 = vdwg.mxu0
    %v2195 = vsel %vm649, %v2161, 0
    %2197 = vmatpush.msra.mxu0 0.0
    %2198 = vmatpush.msra.mxu0 0.0
    %2199 = vmatpush.msra.mxu0 0.0
    %2200 = vmatpush.msra.mxu0 0.0
    %2201 = vmatpush.msra.mxu0 0.0
    %2202 = vmatpush.msra.mxu0 0.0
    %2203 = vmatpush.msra.mxu0 0.0
    %2204 = vmatpush.msra.mxu0 0.0
    %2205 = vmatpush.msra.mxu0 0.0
    %2206 = vmatpush.msra.mxu0 0.0
    %2207 = vmatpush.msra.mxu0 0.0
    %2208 = vmatpush.msra.mxu0 0.0
    %2209 = vmatpush.msra.mxu0 0.0
    %2210 = vmatpush.msra.mxu0 0.0
    %2211 = vmatpush.msra.mxu0 %v2164
    %2212 = vmatpush.msra.mxu0 %v2163
    %2213 = vmatmul.f32.gmra.mxu0 %v2195
    %v2214 = vpop.f32.mrf.mxu0
    %v2215 = vadd.f32 %v2192, %v2214
    %2216 = vdwg.mxu0
    %v2217 = vld [vmem:[%s45] sm:$0x1]
    %v2219 = vperm.slane %v2217, 0
    %v2221 = vadd.f32 %v2215, %v2219
    %2222 = vmatpush.msra.mxu0 0.0
    %2223 = vmatpush.msra.mxu0 0.0
    %2224 = vmatpush.msra.mxu0 0.0
    %2225 = vmatpush.msra.mxu0 0.0
    %2226 = vmatpush.msra.mxu0 0.0
    %2227 = vmatpush.msra.mxu0 0.0
    %2228 = vmatpush.msra.mxu0 0.0
    %2229 = vmatpush.msra.mxu0 0.0
    %2230 = vmatpush.msra.mxu0 0.0
    %2231 = vmatpush.msra.mxu0 0.0
    %2232 = vmatpush.msra.mxu0 0.0
    %2233 = vmatpush.msra.mxu0 0.0
    %2234 = vmatpush.msra.mxu0 0.0
    %2235 = vmatpush.msra.mxu0 0.0
    %2236 = vmatpush.msra.mxu0 %v2170
    %2237 = vmatpush.msra.mxu0 %v2169
    %2238 = vmatmul.f32.gmra.mxu0 %v2172
    %v2239 = vpop.f32.mrf.mxu0
    %v2240 = vadd.f32 0.0, %v2239
    %2241 = vdwg.mxu0
    %2242 = vmatpush.msra.mxu0 0.0
    %2243 = vmatpush.msra.mxu0 0.0
    %2244 = vmatpush.msra.mxu0 0.0
    %2245 = vmatpush.msra.mxu0 0.0
    %2246 = vmatpush.msra.mxu0 0.0
    %2247 = vmatpush.msra.mxu0 0.0
    %2248 = vmatpush.msra.mxu0 0.0
    %2249 = vmatpush.msra.mxu0 0.0
    %2250 = vmatpush.msra.mxu0 0.0
    %2251 = vmatpush.msra.mxu0 0.0
    %2252 = vmatpush.msra.mxu0 0.0
    %2253 = vmatpush.msra.mxu0 0.0
    %2254 = vmatpush.msra.mxu0 0.0
    %2255 = vmatpush.msra.mxu0 0.0
    %2256 = vmatpush.msra.mxu0 %v2168
    %2257 = vmatpush.msra.mxu0 %v2167
    %2258 = vmatmul.f32.gmra.mxu0 %v2195
    %v2259 = vpop.f32.mrf.mxu0
    %v2260 = vadd.f32 %v2240, %v2259
    %2261 = vdwg.mxu0
    %v2262 = vld [vmem:[%s51] sm:$0x1]
    %v2264 = vperm.slane %v2262, 0
    %v2266 = vadd.f32 %v2260, %v2264
    %v2267 = vld [vmem:[%s43] sm:$0xff]
    %v2268 = vld [vmem:[%s43 + $0x8] sm:$0xff]
    %v2269 = vld [vmem:[%s49] sm:$0xff]
    %v2270 = vld [vmem:[%s49 + $0x8] sm:$0xff]
    %2271 = vmatpush.msra.mxu0 0.0
    %2272 = vmatpush.msra.mxu0 0.0
    %2273 = vmatpush.msra.mxu0 0.0
    %2274 = vmatpush.msra.mxu0 0.0
    %2275 = vmatpush.msra.mxu0 0.0
    %2276 = vmatpush.msra.mxu0 0.0
    %2277 = vmatpush.msra.mxu0 0.0
    %2278 = vmatpush.msra.mxu0 0.0
    %2279 = vmatpush.msra.mxu0 0.0
    %2280 = vmatpush.msra.mxu0 0.0
    %2281 = vmatpush.msra.mxu0 0.0
    %2282 = vmatpush.msra.mxu0 0.0
    %2283 = vmatpush.msra.mxu0 0.0
    %2284 = vmatpush.msra.mxu0 0.0
    %2285 = vmatpush.msra.mxu0 %v2268
    %2286 = vmatpush.msra.mxu0 %v2267
    %2287 = vmatmul.f32.gmra.mxu0 %v993
    %v2288 = vpop.f32.mrf.mxu0
    %v2289 = vadd.f32 0.0, %v2288
    %2290 = vdwg.mxu0
    %v2291 = vadd.f32 %v2221, %v2289
    %2292 = vmatpush.msra.mxu0 0.0
    %2293 = vmatpush.msra.mxu0 0.0
    %2294 = vmatpush.msra.mxu0 0.0
    %2295 = vmatpush.msra.mxu0 0.0
    %2296 = vmatpush.msra.mxu0 0.0
    %2297 = vmatpush.msra.mxu0 0.0
    %2298 = vmatpush.msra.mxu0 0.0
    %2299 = vmatpush.msra.mxu0 0.0
    %2300 = vmatpush.msra.mxu0 0.0
    %2301 = vmatpush.msra.mxu0 0.0
    %2302 = vmatpush.msra.mxu0 0.0
    %2303 = vmatpush.msra.mxu0 0.0
    %2304 = vmatpush.msra.mxu0 0.0
    %2305 = vmatpush.msra.mxu0 0.0
    %2306 = vmatpush.msra.mxu0 %v2270
    %2307 = vmatpush.msra.mxu0 %v2269
    %2308 = vmatmul.f32.gmra.mxu0 %v993
    %v2309 = vpop.f32.mrf.mxu0
    %v2310 = vadd.f32 0.0, %v2309
    %2311 = vdwg.mxu0
    %v2313 = vrot.slane %v2310, 1
    %v2315 = vadd.f32 %v2266, %v2313
    %v2316 = vsub.f32 0.0, %v2291
    %v2317 = vmul.f32 %v2316, 1.442695
    %v2318 = vpow.pop %v2317
    %v2319 = vadd.f32 %v2318, 1.0
    %v2320 = vrcp.pop %v2319
    %v2321 = vmul.f32 %v2319, %v2320
    %v2322 = vsub.f32 1.0, %v2321
    %v2323 = vmul.f32 %v2320, %v2322
    %v2324 = vadd.f32 %v2320, %v2323
    %vm2325 = vweird.f32 %v2319
    %vm2326 = vweird.f32 %v2320
    %vm2327 = vmor %vm2325, %vm2326
    %v2328 = vsel %vm2327, %v2320, %v2324
    %v2329 = vand.u32 2147483647, %v2319
    %vm2330 = vcmp.eq.f32.partialorder %v2329, 8.507059e+37
    %v2331 = vand.u32 %v2319, 2147483648
    %v2332 = vor.u32 1.1754944e-38, %v2331
    %v2333 = vsel %vm2330, %v2332, %v2328
    %v2334 = vmul.f32 1.0, %v2333
    %v2335 = vsub.f32 0.0, %v2315
    %v2336 = vmul.f32 %v2335, 1.442695
    %v2337 = vpow.pop %v2336
    %v2338 = vadd.f32 %v2337, 1.0
    %v2339 = vrcp.pop %v2338
    %v2340 = vmul.f32 %v2338, %v2339
    %v2341 = vsub.f32 1.0, %v2340
    %v2342 = vmul.f32 %v2339, %v2341
    %v2343 = vadd.f32 %v2339, %v2342
    %vm2344 = vweird.f32 %v2338
    %vm2345 = vweird.f32 %v2339
    %vm2346 = vmor %vm2344, %vm2345
    %v2347 = vsel %vm2346, %v2339, %v2343
    %v2348 = vand.u32 2147483647, %v2338
    %vm2349 = vcmp.eq.f32.partialorder %v2348, 8.507059e+37
    %v2350 = vand.u32 %v2338, 2147483648
    %v2351 = vor.u32 1.1754944e-38, %v2350
    %v2352 = vsel %vm2349, %v2351, %v2347
    %v2353 = vmul.f32 1.0, %v2352
    %v2354 = vtanh.pop %v2291
    %v2355 = vtanh.pop %v2315
    %v2356 = vmul.f32 %v2334, 0.0
    %2358 = vrot.lane.b32.xlu0 %v2354, 96
    %v2359 = vpop.permute.xlu0 %2358
    %v2361 = vmul.f32 %v2334, %v2359
    %2363 = vrot.lane.b32.xlu0 %v2361, 16
    %v2364 = vpop.permute.xlu0 %2363
    %v2366 = vadd.f32 %v2356, %v2364
    %v2367 = vmul.f32 %v2353, 0.0
    %2369 = vrot.lane.b32.xlu0 %v2355, 96
    %v2370 = vpop.permute.xlu0 %2369
    %v2372 = vmul.f32 %v2353, %v2370
    %2374 = vrot.lane.b32.xlu0 %v2372, 16
    %v2375 = vpop.permute.xlu0 %2374
    %v2377 = vadd.f32 %v2367, %v2375
    %v2378 = vtanh.pop %v2366
    %2380 = vrot.lane.b32.xlu0 %v2378, 32
    %v2381 = vpop.permute.xlu0 %2380
    %v2383 = vmul.f32 %v2334, %v2381
    %v2384 = vtanh.pop %v2377
    %2386 = vrot.lane.b32.xlu0 %v2384, 32
    %v2387 = vpop.permute.xlu0 %2386
    %v2389 = vmul.f32 %v2353, %v2387
    %2391 = vrot.lane.b32.xlu0 %v2383, 80
    %v2392 = vpop.permute.xlu0 %2391
    %2394 = vst.msk [vmem:[#allocation4] sm:$0x1] %vm873, %v2392
    %2396 = vrot.lane.b32.xlu0 %v2389, 80
    %v2397 = vpop.permute.xlu0 %2396
    %2399 = vst.msk [vmem:[#allocation5] sm:$0x80] %vm1123, %v2397
    %v2400 = vsel %vm649, %v2392, 0
    %2402 = vmatpush.msra.mxu0 0.0
    %2403 = vmatpush.msra.mxu0 0.0
    %2404 = vmatpush.msra.mxu0 0.0
    %2405 = vmatpush.msra.mxu0 0.0
    %2406 = vmatpush.msra.mxu0 0.0
    %2407 = vmatpush.msra.mxu0 0.0
    %2408 = vmatpush.msra.mxu0 0.0
    %2409 = vmatpush.msra.mxu0 0.0
    %2410 = vmatpush.msra.mxu0 0.0
    %2411 = vmatpush.msra.mxu0 0.0
    %2412 = vmatpush.msra.mxu0 0.0
    %2413 = vmatpush.msra.mxu0 0.0
    %2414 = vmatpush.msra.mxu0 0.0
    %2415 = vmatpush.msra.mxu0 0.0
    %2416 = vmatpush.msra.mxu0 %v2268
    %2417 = vmatpush.msra.mxu0 %v2267
    %2418 = vmatmul.f32.gmra.mxu0 %v2400
    %v2419 = vpop.f32.mrf.mxu0
    %v2420 = vadd.f32 0.0, %v2419
    %2421 = vdwg.mxu0
    %v2423 = vrot.slane %v2420, 7
    %v2425 = vadd.f32 %v2221, %v2423
    %v2426 = vrot.slane %v2389, 7
    %2427 = vrot.lane.b32.xlu0 %v2426, 80
    %v2428 = vpop.permute.xlu0 %2427
    %v2429 = vsel %vm649, %v2428, 0
    %2431 = vmatpush.msra.mxu0 0.0
    %2432 = vmatpush.msra.mxu0 0.0
    %2433 = vmatpush.msra.mxu0 0.0
    %2434 = vmatpush.msra.mxu0 0.0
    %2435 = vmatpush.msra.mxu0 0.0
    %2436 = vmatpush.msra.mxu0 0.0
    %2437 = vmatpush.msra.mxu0 0.0
    %2438 = vmatpush.msra.mxu0 0.0
    %2439 = vmatpush.msra.mxu0 0.0
    %2440 = vmatpush.msra.mxu0 0.0
    %2441 = vmatpush.msra.mxu0 0.0
    %2442 = vmatpush.msra.mxu0 0.0
    %2443 = vmatpush.msra.mxu0 0.0
    %2444 = vmatpush.msra.mxu0 0.0
    %2445 = vmatpush.msra.mxu0 %v2270
    %2446 = vmatpush.msra.mxu0 %v2269
    %2447 = vmatmul.f32.gmra.mxu0 %v2429
    %v2448 = vpop.f32.mrf.mxu0
    %v2449 = vadd.f32 0.0, %v2448
    %2450 = vdwg.mxu0
    %v2452 = vrot.slane %v2449, 2
    %v2454 = vadd.f32 %v2266, %v2452
    %v2455 = vsub.f32 0.0, %v2425
    %v2456 = vmul.f32 %v2455, 1.442695
    %v2457 = vpow.pop %v2456
    %v2458 = vadd.f32 %v2457, 1.0
    %v2459 = vrcp.pop %v2458
    %v2460 = vmul.f32 %v2458, %v2459
    %v2461 = vsub.f32 1.0, %v2460
    %v2462 = vmul.f32 %v2459, %v2461
    %v2463 = vadd.f32 %v2459, %v2462
    %vm2464 = vweird.f32 %v2458
    %vm2465 = vweird.f32 %v2459
    %vm2466 = vmor %vm2464, %vm2465
    %v2467 = vsel %vm2466, %v2459, %v2463
    %v2468 = vand.u32 2147483647, %v2458
    %vm2469 = vcmp.eq.f32.partialorder %v2468, 8.507059e+37
    %v2470 = vand.u32 %v2458, 2147483648
    %v2471 = vor.u32 1.1754944e-38, %v2470
    %v2472 = vsel %vm2469, %v2471, %v2467
    %v2473 = vmul.f32 1.0, %v2472
    %v2474 = vsub.f32 0.0, %v2454
    %v2475 = vmul.f32 %v2474, 1.442695
    %v2476 = vpow.pop %v2475
    %v2477 = vadd.f32 %v2476, 1.0
    %v2478 = vrcp.pop %v2477
    %v2479 = vmul.f32 %v2477, %v2478
    %v2480 = vsub.f32 1.0, %v2479
    %v2481 = vmul.f32 %v2478, %v2480
    %v2482 = vadd.f32 %v2478, %v2481
    %vm2483 = vweird.f32 %v2477
    %vm2484 = vweird.f32 %v2478
    %vm2485 = vmor %vm2483, %vm2484
    %v2486 = vsel %vm2485, %v2478, %v2482
    %v2487 = vand.u32 2147483647, %v2477
    %vm2488 = vcmp.eq.f32.partialorder %v2487, 8.507059e+37
    %v2489 = vand.u32 %v2477, 2147483648
    %v2490 = vor.u32 1.1754944e-38, %v2489
    %v2491 = vsel %vm2488, %v2490, %v2486
    %v2492 = vmul.f32 1.0, %v2491
    %v2493 = vtanh.pop %v2425
    %v2494 = vtanh.pop %v2454
    %v2496 = vrot.slane %v2366, 7
    %v2498 = vmul.f32 %v2473, %v2496
    %2500 = vrot.lane.b32.xlu0 %v2493, 96
    %v2501 = vpop.permute.xlu0 %2500
    %v2503 = vmul.f32 %v2473, %v2501
    %2505 = vrot.lane.b32.xlu0 %v2503, 16
    %v2506 = vpop.permute.xlu0 %2505
    %v2508 = vadd.f32 %v2498, %v2506
    %v2510 = vrot.slane %v2377, 1
    %v2512 = vmul.f32 %v2492, %v2510
    %2514 = vrot.lane.b32.xlu0 %v2494, 96
    %v2515 = vpop.permute.xlu0 %2514
    %v2517 = vmul.f32 %v2492, %v2515
    %2519 = vrot.lane.b32.xlu0 %v2517, 16
    %v2520 = vpop.permute.xlu0 %2519
    %v2522 = vadd.f32 %v2512, %v2520
    %v2523 = vtanh.pop %v2508
    %2525 = vrot.lane.b32.xlu0 %v2523, 32
    %v2526 = vpop.permute.xlu0 %2525
    %v2528 = vmul.f32 %v2473, %v2526
    %v2529 = vtanh.pop %v2522
    %2531 = vrot.lane.b32.xlu0 %v2529, 32
    %v2532 = vpop.permute.xlu0 %2531
    %v2534 = vmul.f32 %v2492, %v2532
    %2536 = vrot.lane.b32.xlu0 %v2528, 80
    %v2537 = vpop.permute.xlu0 %2536
    %2539 = vst.msk [vmem:[#allocation4] sm:$0x2] %vm1264, %v2537
    %2541 = vrot.lane.b32.xlu0 %v2534, 80
    %v2542 = vpop.permute.xlu0 %2541
    %2544 = vst.msk [vmem:[#allocation5] sm:$0x40] %vm1270, %v2542
    %v2545 = vrot.slane %v2528, 1
    %2546 = vrot.lane.b32.xlu0 %v2545, 80
    %v2547 = vpop.permute.xlu0 %2546
    %v2548 = vsel %vm649, %v2547, 0
    %2550 = vmatpush.msra.mxu0 0.0
    %2551 = vmatpush.msra.mxu0 0.0
    %2552 = vmatpush.msra.mxu0 0.0
    %2553 = vmatpush.msra.mxu0 0.0
    %2554 = vmatpush.msra.mxu0 0.0
    %2555 = vmatpush.msra.mxu0 0.0
    %2556 = vmatpush.msra.mxu0 0.0
    %2557 = vmatpush.msra.mxu0 0.0
    %2558 = vmatpush.msra.mxu0 0.0
    %2559 = vmatpush.msra.mxu0 0.0
    %2560 = vmatpush.msra.mxu0 0.0
    %2561 = vmatpush.msra.mxu0 0.0
    %2562 = vmatpush.msra.mxu0 0.0
    %2563 = vmatpush.msra.mxu0 0.0
    %2564 = vmatpush.msra.mxu0 %v2268
    %2565 = vmatpush.msra.mxu0 %v2267
    %2566 = vmatmul.f32.gmra.mxu0 %v2548
    %v2567 = vpop.f32.mrf.mxu0
    %v2568 = vadd.f32 0.0, %v2567
    %2569 = vdwg.mxu0
    %v2571 = vrot.slane %v2568, 6
    %v2573 = vadd.f32 %v2221, %v2571
    %v2574 = vrot.slane %v2534, 6
    %2575 = vrot.lane.b32.xlu0 %v2574, 80
    %v2576 = vpop.permute.xlu0 %2575
    %v2577 = vsel %vm649, %v2576, 0
    %2579 = vmatpush.msra.mxu0 0.0
    %2580 = vmatpush.msra.mxu0 0.0
    %2581 = vmatpush.msra.mxu0 0.0
    %2582 = vmatpush.msra.mxu0 0.0
    %2583 = vmatpush.msra.mxu0 0.0
    %2584 = vmatpush.msra.mxu0 0.0
    %2585 = vmatpush.msra.mxu0 0.0
    %2586 = vmatpush.msra.mxu0 0.0
    %2587 = vmatpush.msra.mxu0 0.0
    %2588 = vmatpush.msra.mxu0 0.0
    %2589 = vmatpush.msra.mxu0 0.0
    %2590 = vmatpush.msra.mxu0 0.0
    %2591 = vmatpush.msra.mxu0 0.0
    %2592 = vmatpush.msra.mxu0 0.0
    %2593 = vmatpush.msra.mxu0 %v2270
    %2594 = vmatpush.msra.mxu0 %v2269
    %2595 = vmatmul.f32.gmra.mxu0 %v2577
    %v2596 = vpop.f32.mrf.mxu0
    %v2597 = vadd.f32 0.0, %v2596
    %2598 = vdwg.mxu0
    %v2600 = vrot.slane %v2597, 3
    %v2602 = vadd.f32 %v2266, %v2600
    %v2603 = vsub.f32 0.0, %v2573
    %v2604 = vmul.f32 %v2603, 1.442695
    %v2605 = vpow.pop %v2604
    %v2606 = vadd.f32 %v2605, 1.0
    %v2607 = vrcp.pop %v2606
    %v2608 = vmul.f32 %v2606, %v2607
    %v2609 = vsub.f32 1.0, %v2608
    %v2610 = vmul.f32 %v2607, %v2609
    %v2611 = vadd.f32 %v2607, %v2610
    %vm2612 = vweird.f32 %v2606
    %vm2613 = vweird.f32 %v2607
    %vm2614 = vmor %vm2612, %vm2613
    %v2615 = vsel %vm2614, %v2607, %v2611
    %v2616 = vand.u32 2147483647, %v2606
    %vm2617 = vcmp.eq.f32.partialorder %v2616, 8.507059e+37
    %v2618 = vand.u32 %v2606, 2147483648
    %v2619 = vor.u32 1.1754944e-38, %v2618
    %v2620 = vsel %vm2617, %v2619, %v2615
    %v2621 = vmul.f32 1.0, %v2620
    %v2622 = vsub.f32 0.0, %v2602
    %v2623 = vmul.f32 %v2622, 1.442695
    %v2624 = vpow.pop %v2623
    %v2625 = vadd.f32 %v2624, 1.0
    %v2626 = vrcp.pop %v2625
    %v2627 = vmul.f32 %v2625, %v2626
    %v2628 = vsub.f32 1.0, %v2627
    %v2629 = vmul.f32 %v2626, %v2628
    %v2630 = vadd.f32 %v2626, %v2629
    %vm2631 = vweird.f32 %v2625
    %vm2632 = vweird.f32 %v2626
    %vm2633 = vmor %vm2631, %vm2632
    %v2634 = vsel %vm2633, %v2626, %v2630
    %v2635 = vand.u32 2147483647, %v2625
    %vm2636 = vcmp.eq.f32.partialorder %v2635, 8.507059e+37
    %v2637 = vand.u32 %v2625, 2147483648
    %v2638 = vor.u32 1.1754944e-38, %v2637
    %v2639 = vsel %vm2636, %v2638, %v2634
    %v2640 = vmul.f32 1.0, %v2639
    %v2641 = vtanh.pop %v2573
    %v2642 = vtanh.pop %v2602
    %v2644 = vrot.slane %v2508, 7
    %v2646 = vmul.f32 %v2621, %v2644
    %2648 = vrot.lane.b32.xlu0 %v2641, 96
    %v2649 = vpop.permute.xlu0 %2648
    %v2651 = vmul.f32 %v2621, %v2649
    %2653 = vrot.lane.b32.xlu0 %v2651, 16
    %v2654 = vpop.permute.xlu0 %2653
    %v2656 = vadd.f32 %v2646, %v2654
    %v2658 = vrot.slane %v2522, 1
    %v2660 = vmul.f32 %v2640, %v2658
    %2662 = vrot.lane.b32.xlu0 %v2642, 96
    %v2663 = vpop.permute.xlu0 %2662
    %v2665 = vmul.f32 %v2640, %v2663
    %2667 = vrot.lane.b32.xlu0 %v2665, 16
    %v2668 = vpop.permute.xlu0 %2667
    %v2670 = vadd.f32 %v2660, %v2668
    %v2671 = vtanh.pop %v2656
    %2673 = vrot.lane.b32.xlu0 %v2671, 32
    %v2674 = vpop.permute.xlu0 %2673
    %v2676 = vmul.f32 %v2621, %v2674
    %v2677 = vtanh.pop %v2670
    %2679 = vrot.lane.b32.xlu0 %v2677, 32
    %v2680 = vpop.permute.xlu0 %2679
    %v2682 = vmul.f32 %v2640, %v2680
    %2684 = vrot.lane.b32.xlu0 %v2676, 80
    %v2685 = vpop.permute.xlu0 %2684
    %2687 = vst.msk [vmem:[#allocation4] sm:$0x4] %vm1414, %v2685
    %2689 = vrot.lane.b32.xlu0 %v2682, 80
    %v2690 = vpop.permute.xlu0 %2689
    %2692 = vst.msk [vmem:[#allocation5] sm:$0x20] %vm1420, %v2690
    %v2693 = vrot.slane %v2676, 2
    %2694 = vrot.lane.b32.xlu0 %v2693, 80
    %v2695 = vpop.permute.xlu0 %2694
    %v2696 = vsel %vm649, %v2695, 0
    %2698 = vmatpush.msra.mxu0 0.0
    %2699 = vmatpush.msra.mxu0 0.0
    %2700 = vmatpush.msra.mxu0 0.0
    %2701 = vmatpush.msra.mxu0 0.0
    %2702 = vmatpush.msra.mxu0 0.0
    %2703 = vmatpush.msra.mxu0 0.0
    %2704 = vmatpush.msra.mxu0 0.0
    %2705 = vmatpush.msra.mxu0 0.0
    %2706 = vmatpush.msra.mxu0 0.0
    %2707 = vmatpush.msra.mxu0 0.0
    %2708 = vmatpush.msra.mxu0 0.0
    %2709 = vmatpush.msra.mxu0 0.0
    %2710 = vmatpush.msra.mxu0 0.0
    %2711 = vmatpush.msra.mxu0 0.0
    %2712 = vmatpush.msra.mxu0 %v2268
    %2713 = vmatpush.msra.mxu0 %v2267
    %2714 = vmatmul.f32.gmra.mxu0 %v2696
    %v2715 = vpop.f32.mrf.mxu0
    %v2716 = vadd.f32 0.0, %v2715
    %2717 = vdwg.mxu0
    %v2719 = vrot.slane %v2716, 5
    %v2721 = vadd.f32 %v2221, %v2719
    %v2722 = vrot.slane %v2682, 5
    %2723 = vrot.lane.b32.xlu0 %v2722, 80
    %v2724 = vpop.permute.xlu0 %2723
    %v2725 = vsel %vm649, %v2724, 0
    %2727 = vmatpush.msra.mxu0 0.0
    %2728 = vmatpush.msra.mxu0 0.0
    %2729 = vmatpush.msra.mxu0 0.0
    %2730 = vmatpush.msra.mxu0 0.0
    %2731 = vmatpush.msra.mxu0 0.0
    %2732 = vmatpush.msra.mxu0 0.0
    %2733 = vmatpush.msra.mxu0 0.0
    %2734 = vmatpush.msra.mxu0 0.0
    %2735 = vmatpush.msra.mxu0 0.0
    %2736 = vmatpush.msra.mxu0 0.0
    %2737 = vmatpush.msra.mxu0 0.0
    %2738 = vmatpush.msra.mxu0 0.0
    %2739 = vmatpush.msra.mxu0 0.0
    %2740 = vmatpush.msra.mxu0 0.0
    %2741 = vmatpush.msra.mxu0 %v2270
    %2742 = vmatpush.msra.mxu0 %v2269
    %2743 = vmatmul.f32.gmra.mxu0 %v2725
    %v2744 = vpop.f32.mrf.mxu0
    %v2745 = vadd.f32 0.0, %v2744
    %2746 = vdwg.mxu0
    %v2748 = vrot.slane %v2745, 4
    %v2750 = vadd.f32 %v2266, %v2748
    %v2751 = vsub.f32 0.0, %v2721
    %v2752 = vmul.f32 %v2751, 1.442695
    %v2753 = vpow.pop %v2752
    %v2754 = vadd.f32 %v2753, 1.0
    %v2755 = vrcp.pop %v2754
    %v2756 = vmul.f32 %v2754, %v2755
    %v2757 = vsub.f32 1.0, %v2756
    %v2758 = vmul.f32 %v2755, %v2757
    %v2759 = vadd.f32 %v2755, %v2758
    %vm2760 = vweird.f32 %v2754
    %vm2761 = vweird.f32 %v2755
    %vm2762 = vmor %vm2760, %vm2761
    %v2763 = vsel %vm2762, %v2755, %v2759
    %v2764 = vand.u32 2147483647, %v2754
    %vm2765 = vcmp.eq.f32.partialorder %v2764, 8.507059e+37
    %v2766 = vand.u32 %v2754, 2147483648
    %v2767 = vor.u32 1.1754944e-38, %v2766
    %v2768 = vsel %vm2765, %v2767, %v2763
    %v2769 = vmul.f32 1.0, %v2768
    %v2770 = vsub.f32 0.0, %v2750
    %v2771 = vmul.f32 %v2770, 1.442695
    %v2772 = vpow.pop %v2771
    %v2773 = vadd.f32 %v2772, 1.0
    %v2774 = vrcp.pop %v2773
    %v2775 = vmul.f32 %v2773, %v2774
    %v2776 = vsub.f32 1.0, %v2775
    %v2777 = vmul.f32 %v2774, %v2776
    %v2778 = vadd.f32 %v2774, %v2777
    %vm2779 = vweird.f32 %v2773
    %vm2780 = vweird.f32 %v2774
    %vm2781 = vmor %vm2779, %vm2780
    %v2782 = vsel %vm2781, %v2774, %v2778
    %v2783 = vand.u32 2147483647, %v2773
    %vm2784 = vcmp.eq.f32.partialorder %v2783, 8.507059e+37
    %v2785 = vand.u32 %v2773, 2147483648
    %v2786 = vor.u32 1.1754944e-38, %v2785
    %v2787 = vsel %vm2784, %v2786, %v2782
    %v2788 = vmul.f32 1.0, %v2787
    %v2789 = vtanh.pop %v2721
    %v2790 = vtanh.pop %v2750
    %v2792 = vrot.slane %v2656, 7
    %v2794 = vmul.f32 %v2769, %v2792
    %2796 = vrot.lane.b32.xlu0 %v2789, 96
    %v2797 = vpop.permute.xlu0 %2796
    %v2799 = vmul.f32 %v2769, %v2797
    %2801 = vrot.lane.b32.xlu0 %v2799, 16
    %v2802 = vpop.permute.xlu0 %2801
    %v2804 = vadd.f32 %v2794, %v2802
    %v2806 = vrot.slane %v2670, 1
    %v2808 = vmul.f32 %v2788, %v2806
    %2810 = vrot.lane.b32.xlu0 %v2790, 96
    %v2811 = vpop.permute.xlu0 %2810
    %v2813 = vmul.f32 %v2788, %v2811
    %2815 = vrot.lane.b32.xlu0 %v2813, 16
    %v2816 = vpop.permute.xlu0 %2815
    %v2818 = vadd.f32 %v2808, %v2816
    %v2819 = vtanh.pop %v2804
    %2821 = vrot.lane.b32.xlu0 %v2819, 32
    %v2822 = vpop.permute.xlu0 %2821
    %v2824 = vmul.f32 %v2769, %v2822
    %v2825 = vtanh.pop %v2818
    %2827 = vrot.lane.b32.xlu0 %v2825, 32
    %v2828 = vpop.permute.xlu0 %2827
    %v2830 = vmul.f32 %v2788, %v2828
    %2832 = vrot.lane.b32.xlu0 %v2824, 80
    %v2833 = vpop.permute.xlu0 %2832
    %2835 = vst.msk [vmem:[#allocation4] sm:$0x8] %vm1564, %v2833
    %2837 = vrot.lane.b32.xlu0 %v2830, 80
    %v2838 = vpop.permute.xlu0 %2837
    %2840 = vst.msk [vmem:[#allocation5] sm:$0x10] %vm1570, %v2838
    %v2841 = vrot.slane %v2824, 3
    %2842 = vrot.lane.b32.xlu0 %v2841, 80
    %v2843 = vpop.permute.xlu0 %2842
    %v2844 = vsel %vm649, %v2843, 0
    %2846 = vmatpush.msra.mxu0 0.0
    %2847 = vmatpush.msra.mxu0 0.0
    %2848 = vmatpush.msra.mxu0 0.0
    %2849 = vmatpush.msra.mxu0 0.0
    %2850 = vmatpush.msra.mxu0 0.0
    %2851 = vmatpush.msra.mxu0 0.0
    %2852 = vmatpush.msra.mxu0 0.0
    %2853 = vmatpush.msra.mxu0 0.0
    %2854 = vmatpush.msra.mxu0 0.0
    %2855 = vmatpush.msra.mxu0 0.0
    %2856 = vmatpush.msra.mxu0 0.0
    %2857 = vmatpush.msra.mxu0 0.0
    %2858 = vmatpush.msra.mxu0 0.0
    %2859 = vmatpush.msra.mxu0 0.0
    %2860 = vmatpush.msra.mxu0 %v2268
    %2861 = vmatpush.msra.mxu0 %v2267
    %2862 = vmatmul.f32.gmra.mxu0 %v2844
    %v2863 = vpop.f32.mrf.mxu0
    %v2864 = vadd.f32 0.0, %v2863
    %2865 = vdwg.mxu0
    %v2867 = vrot.slane %v2864, 4
    %v2869 = vadd.f32 %v2221, %v2867
    %v2870 = vrot.slane %v2830, 4
    %2871 = vrot.lane.b32.xlu0 %v2870, 80
    %v2872 = vpop.permute.xlu0 %2871
    %v2873 = vsel %vm649, %v2872, 0
    %2875 = vmatpush.msra.mxu0 0.0
    %2876 = vmatpush.msra.mxu0 0.0
    %2877 = vmatpush.msra.mxu0 0.0
    %2878 = vmatpush.msra.mxu0 0.0
    %2879 = vmatpush.msra.mxu0 0.0
    %2880 = vmatpush.msra.mxu0 0.0
    %2881 = vmatpush.msra.mxu0 0.0
    %2882 = vmatpush.msra.mxu0 0.0
    %2883 = vmatpush.msra.mxu0 0.0
    %2884 = vmatpush.msra.mxu0 0.0
    %2885 = vmatpush.msra.mxu0 0.0
    %2886 = vmatpush.msra.mxu0 0.0
    %2887 = vmatpush.msra.mxu0 0.0
    %2888 = vmatpush.msra.mxu0 0.0
    %2889 = vmatpush.msra.mxu0 %v2270
    %2890 = vmatpush.msra.mxu0 %v2269
    %2891 = vmatmul.f32.gmra.mxu0 %v2873
    %v2892 = vpop.f32.mrf.mxu0
    %v2893 = vadd.f32 0.0, %v2892
    %2894 = vdwg.mxu0
    %v2896 = vrot.slane %v2893, 5
    %v2898 = vadd.f32 %v2266, %v2896
    %v2899 = vsub.f32 0.0, %v2869
    %v2900 = vmul.f32 %v2899, 1.442695
    %v2901 = vpow.pop %v2900
    %v2902 = vadd.f32 %v2901, 1.0
    %v2903 = vrcp.pop %v2902
    %v2904 = vmul.f32 %v2902, %v2903
    %v2905 = vsub.f32 1.0, %v2904
    %v2906 = vmul.f32 %v2903, %v2905
    %v2907 = vadd.f32 %v2903, %v2906
    %vm2908 = vweird.f32 %v2902
    %vm2909 = vweird.f32 %v2903
    %vm2910 = vmor %vm2908, %vm2909
    %v2911 = vsel %vm2910, %v2903, %v2907
    %v2912 = vand.u32 2147483647, %v2902
    %vm2913 = vcmp.eq.f32.partialorder %v2912, 8.507059e+37
    %v2914 = vand.u32 %v2902, 2147483648
    %v2915 = vor.u32 1.1754944e-38, %v2914
    %v2916 = vsel %vm2913, %v2915, %v2911
    %v2917 = vmul.f32 1.0, %v2916
    %v2918 = vsub.f32 0.0, %v2898
    %v2919 = vmul.f32 %v2918, 1.442695
    %v2920 = vpow.pop %v2919
    %v2921 = vadd.f32 %v2920, 1.0
    %v2922 = vrcp.pop %v2921
    %v2923 = vmul.f32 %v2921, %v2922
    %v2924 = vsub.f32 1.0, %v2923
    %v2925 = vmul.f32 %v2922, %v2924
    %v2926 = vadd.f32 %v2922, %v2925
    %vm2927 = vweird.f32 %v2921
    %vm2928 = vweird.f32 %v2922
    %vm2929 = vmor %vm2927, %vm2928
    %v2930 = vsel %vm2929, %v2922, %v2926
    %v2931 = vand.u32 2147483647, %v2921
    %vm2932 = vcmp.eq.f32.partialorder %v2931, 8.507059e+37
    %v2933 = vand.u32 %v2921, 2147483648
    %v2934 = vor.u32 1.1754944e-38, %v2933
    %v2935 = vsel %vm2932, %v2934, %v2930
    %v2936 = vmul.f32 1.0, %v2935
    %v2937 = vtanh.pop %v2869
    %v2938 = vtanh.pop %v2898
    %v2940 = vrot.slane %v2804, 7
    %v2942 = vmul.f32 %v2917, %v2940
    %2944 = vrot.lane.b32.xlu0 %v2937, 96
    %v2945 = vpop.permute.xlu0 %2944
    %v2947 = vmul.f32 %v2917, %v2945
    %2949 = vrot.lane.b32.xlu0 %v2947, 16
    %v2950 = vpop.permute.xlu0 %2949
    %v2952 = vadd.f32 %v2942, %v2950
    %v2954 = vrot.slane %v2818, 1
    %v2956 = vmul.f32 %v2936, %v2954
    %2958 = vrot.lane.b32.xlu0 %v2938, 96
    %v2959 = vpop.permute.xlu0 %2958
    %v2961 = vmul.f32 %v2936, %v2959
    %2963 = vrot.lane.b32.xlu0 %v2961, 16
    %v2964 = vpop.permute.xlu0 %2963
    %v2966 = vadd.f32 %v2956, %v2964
    %v2967 = vtanh.pop %v2952
    %2969 = vrot.lane.b32.xlu0 %v2967, 32
    %v2970 = vpop.permute.xlu0 %2969
    %v2972 = vmul.f32 %v2917, %v2970
    %v2973 = vtanh.pop %v2966
    %2975 = vrot.lane.b32.xlu0 %v2973, 32
    %v2976 = vpop.permute.xlu0 %2975
    %v2978 = vmul.f32 %v2936, %v2976
    %2980 = vrot.lane.b32.xlu0 %v2972, 80
    %v2981 = vpop.permute.xlu0 %2980
    %2983 = vst.msk [vmem:[#allocation4] sm:$0x10] %vm1570, %v2981
    %2985 = vrot.lane.b32.xlu0 %v2978, 80
    %v2986 = vpop.permute.xlu0 %2985
    %2988 = vst.msk [vmem:[#allocation5] sm:$0x8] %vm1564, %v2986
    %v2989 = vrot.slane %v2972, 4
    %2990 = vrot.lane.b32.xlu0 %v2989, 80
    %v2991 = vpop.permute.xlu0 %2990
    %v2992 = vsel %vm649, %v2991, 0
    %2994 = vmatpush.msra.mxu0 0.0
    %2995 = vmatpush.msra.mxu0 0.0
    %2996 = vmatpush.msra.mxu0 0.0
    %2997 = vmatpush.msra.mxu0 0.0
    %2998 = vmatpush.msra.mxu0 0.0
    %2999 = vmatpush.msra.mxu0 0.0
    %3000 = vmatpush.msra.mxu0 0.0
    %3001 = vmatpush.msra.mxu0 0.0
    %3002 = vmatpush.msra.mxu0 0.0
    %3003 = vmatpush.msra.mxu0 0.0
    %3004 = vmatpush.msra.mxu0 0.0
    %3005 = vmatpush.msra.mxu0 0.0
    %3006 = vmatpush.msra.mxu0 0.0
    %3007 = vmatpush.msra.mxu0 0.0
    %3008 = vmatpush.msra.mxu0 %v2268
    %3009 = vmatpush.msra.mxu0 %v2267
    %3010 = vmatmul.f32.gmra.mxu0 %v2992
    %v3011 = vpop.f32.mrf.mxu0
    %v3012 = vadd.f32 0.0, %v3011
    %3013 = vdwg.mxu0
    %v3015 = vrot.slane %v3012, 3
    %v3017 = vadd.f32 %v2221, %v3015
    %v3018 = vrot.slane %v2978, 3
    %3019 = vrot.lane.b32.xlu0 %v3018, 80
    %v3020 = vpop.permute.xlu0 %3019
    %v3021 = vsel %vm649, %v3020, 0
    %3023 = vmatpush.msra.mxu0 0.0
    %3024 = vmatpush.msra.mxu0 0.0
    %3025 = vmatpush.msra.mxu0 0.0
    %3026 = vmatpush.msra.mxu0 0.0
    %3027 = vmatpush.msra.mxu0 0.0
    %3028 = vmatpush.msra.mxu0 0.0
    %3029 = vmatpush.msra.mxu0 0.0
    %3030 = vmatpush.msra.mxu0 0.0
    %3031 = vmatpush.msra.mxu0 0.0
    %3032 = vmatpush.msra.mxu0 0.0
    %3033 = vmatpush.msra.mxu0 0.0
    %3034 = vmatpush.msra.mxu0 0.0
    %3035 = vmatpush.msra.mxu0 0.0
    %3036 = vmatpush.msra.mxu0 0.0
    %3037 = vmatpush.msra.mxu0 %v2270
    %3038 = vmatpush.msra.mxu0 %v2269
    %3039 = vmatmul.f32.gmra.mxu0 %v3021
    %v3040 = vpop.f32.mrf.mxu0
    %v3041 = vadd.f32 0.0, %v3040
    %3042 = vdwg.mxu0
    %v3044 = vrot.slane %v3041, 6
    %v3046 = vadd.f32 %v2266, %v3044
    %v3047 = vsub.f32 0.0, %v3017
    %v3048 = vmul.f32 %v3047, 1.442695
    %v3049 = vpow.pop %v3048
    %v3050 = vadd.f32 %v3049, 1.0
    %v3051 = vrcp.pop %v3050
    %v3052 = vmul.f32 %v3050, %v3051
    %v3053 = vsub.f32 1.0, %v3052
    %v3054 = vmul.f32 %v3051, %v3053
    %v3055 = vadd.f32 %v3051, %v3054
    %vm3056 = vweird.f32 %v3050
    %vm3057 = vweird.f32 %v3051
    %vm3058 = vmor %vm3056, %vm3057
    %v3059 = vsel %vm3058, %v3051, %v3055
    %v3060 = vand.u32 2147483647, %v3050
    %vm3061 = vcmp.eq.f32.partialorder %v3060, 8.507059e+37
    %v3062 = vand.u32 %v3050, 2147483648
    %v3063 = vor.u32 1.1754944e-38, %v3062
    %v3064 = vsel %vm3061, %v3063, %v3059
    %v3065 = vmul.f32 1.0, %v3064
    %v3066 = vsub.f32 0.0, %v3046
    %v3067 = vmul.f32 %v3066, 1.442695
    %v3068 = vpow.pop %v3067
    %v3069 = vadd.f32 %v3068, 1.0
    %v3070 = vrcp.pop %v3069
    %v3071 = vmul.f32 %v3069, %v3070
    %v3072 = vsub.f32 1.0, %v3071
    %v3073 = vmul.f32 %v3070, %v3072
    %v3074 = vadd.f32 %v3070, %v3073
    %vm3075 = vweird.f32 %v3069
    %vm3076 = vweird.f32 %v3070
    %vm3077 = vmor %vm3075, %vm3076
    %v3078 = vsel %vm3077, %v3070, %v3074
    %v3079 = vand.u32 2147483647, %v3069
    %vm3080 = vcmp.eq.f32.partialorder %v3079, 8.507059e+37
    %v3081 = vand.u32 %v3069, 2147483648
    %v3082 = vor.u32 1.1754944e-38, %v3081
    %v3083 = vsel %vm3080, %v3082, %v3078
    %v3084 = vmul.f32 1.0, %v3083
    %v3085 = vtanh.pop %v3017
    %v3086 = vtanh.pop %v3046
    %v3088 = vrot.slane %v2952, 7
    %v3090 = vmul.f32 %v3065, %v3088
    %3092 = vrot.lane.b32.xlu0 %v3085, 96
    %v3093 = vpop.permute.xlu0 %3092
    %v3095 = vmul.f32 %v3065, %v3093
    %3097 = vrot.lane.b32.xlu0 %v3095, 16
    %v3098 = vpop.permute.xlu0 %3097
    %v3100 = vadd.f32 %v3090, %v3098
    %v3102 = vrot.slane %v2966, 1
    %v3104 = vmul.f32 %v3084, %v3102
    %3106 = vrot.lane.b32.xlu0 %v3086, 96
    %v3107 = vpop.permute.xlu0 %3106
    %v3109 = vmul.f32 %v3084, %v3107
    %3111 = vrot.lane.b32.xlu0 %v3109, 16
    %v3112 = vpop.permute.xlu0 %3111
    %v3114 = vadd.f32 %v3104, %v3112
    %v3115 = vtanh.pop %v3100
    %3117 = vrot.lane.b32.xlu0 %v3115, 32
    %v3118 = vpop.permute.xlu0 %3117
    %v3120 = vmul.f32 %v3065, %v3118
    %v3121 = vtanh.pop %v3114
    %3123 = vrot.lane.b32.xlu0 %v3121, 32
    %v3124 = vpop.permute.xlu0 %3123
    %v3126 = vmul.f32 %v3084, %v3124
    %3128 = vrot.lane.b32.xlu0 %v3120, 80
    %v3129 = vpop.permute.xlu0 %3128
    %3131 = vst.msk [vmem:[#allocation4] sm:$0x20] %vm1420, %v3129
    %3133 = vrot.lane.b32.xlu0 %v3126, 80
    %v3134 = vpop.permute.xlu0 %3133
    %3136 = vst.msk [vmem:[#allocation5] sm:$0x4] %vm1414, %v3134
    %v3137 = vrot.slane %v3120, 5
    %3138 = vrot.lane.b32.xlu0 %v3137, 80
    %v3139 = vpop.permute.xlu0 %3138
    %v3140 = vsel %vm649, %v3139, 0
    %3142 = vmatpush.msra.mxu0 0.0
    %3143 = vmatpush.msra.mxu0 0.0
    %3144 = vmatpush.msra.mxu0 0.0
    %3145 = vmatpush.msra.mxu0 0.0
    %3146 = vmatpush.msra.mxu0 0.0
    %3147 = vmatpush.msra.mxu0 0.0
    %3148 = vmatpush.msra.mxu0 0.0
    %3149 = vmatpush.msra.mxu0 0.0
    %3150 = vmatpush.msra.mxu0 0.0
    %3151 = vmatpush.msra.mxu0 0.0
    %3152 = vmatpush.msra.mxu0 0.0
    %3153 = vmatpush.msra.mxu0 0.0
    %3154 = vmatpush.msra.mxu0 0.0
    %3155 = vmatpush.msra.mxu0 0.0
    %3156 = vmatpush.msra.mxu0 %v2268
    %3157 = vmatpush.msra.mxu0 %v2267
    %3158 = vmatmul.f32.gmra.mxu0 %v3140
    %v3159 = vpop.f32.mrf.mxu0
    %v3160 = vadd.f32 0.0, %v3159
    %3161 = vdwg.mxu0
    %v3163 = vrot.slane %v3160, 2
    %v3165 = vadd.f32 %v2221, %v3163
    %v3166 = vrot.slane %v3126, 2
    %3167 = vrot.lane.b32.xlu0 %v3166, 80
    %v3168 = vpop.permute.xlu0 %3167
    %v3169 = vsel %vm649, %v3168, 0
    %3171 = vmatpush.msra.mxu0 0.0
    %3172 = vmatpush.msra.mxu0 0.0
    %3173 = vmatpush.msra.mxu0 0.0
    %3174 = vmatpush.msra.mxu0 0.0
    %3175 = vmatpush.msra.mxu0 0.0
    %3176 = vmatpush.msra.mxu0 0.0
    %3177 = vmatpush.msra.mxu0 0.0
    %3178 = vmatpush.msra.mxu0 0.0
    %3179 = vmatpush.msra.mxu0 0.0
    %3180 = vmatpush.msra.mxu0 0.0
    %3181 = vmatpush.msra.mxu0 0.0
    %3182 = vmatpush.msra.mxu0 0.0
    %3183 = vmatpush.msra.mxu0 0.0
    %3184 = vmatpush.msra.mxu0 0.0
    %3185 = vmatpush.msra.mxu0 %v2270
    %3186 = vmatpush.msra.mxu0 %v2269
    %3187 = vmatmul.f32.gmra.mxu0 %v3169
    %v3188 = vpop.f32.mrf.mxu0
    %v3189 = vadd.f32 0.0, %v3188
    %3190 = vdwg.mxu0
    %v3192 = vrot.slane %v3189, 7
    %v3194 = vadd.f32 %v2266, %v3192
    %v3195 = vsub.f32 0.0, %v3165
    %v3196 = vmul.f32 %v3195, 1.442695
    %v3197 = vpow.pop %v3196
    %v3198 = vadd.f32 %v3197, 1.0
    %v3199 = vrcp.pop %v3198
    %v3200 = vmul.f32 %v3198, %v3199
    %v3201 = vsub.f32 1.0, %v3200
    %v3202 = vmul.f32 %v3199, %v3201
    %v3203 = vadd.f32 %v3199, %v3202
    %vm3204 = vweird.f32 %v3198
    %vm3205 = vweird.f32 %v3199
    %vm3206 = vmor %vm3204, %vm3205
    %v3207 = vsel %vm3206, %v3199, %v3203
    %v3208 = vand.u32 2147483647, %v3198
    %vm3209 = vcmp.eq.f32.partialorder %v3208, 8.507059e+37
    %v3210 = vand.u32 %v3198, 2147483648
    %v3211 = vor.u32 1.1754944e-38, %v3210
    %v3212 = vsel %vm3209, %v3211, %v3207
    %v3213 = vmul.f32 1.0, %v3212
    %v3214 = vsub.f32 0.0, %v3194
    %v3215 = vmul.f32 %v3214, 1.442695
    %v3216 = vpow.pop %v3215
    %v3217 = vadd.f32 %v3216, 1.0
    %v3218 = vrcp.pop %v3217
    %v3219 = vmul.f32 %v3217, %v3218
    %v3220 = vsub.f32 1.0, %v3219
    %v3221 = vmul.f32 %v3218, %v3220
    %v3222 = vadd.f32 %v3218, %v3221
    %vm3223 = vweird.f32 %v3217
    %vm3224 = vweird.f32 %v3218
    %vm3225 = vmor %vm3223, %vm3224
    %v3226 = vsel %vm3225, %v3218, %v3222
    %v3227 = vand.u32 2147483647, %v3217
    %vm3228 = vcmp.eq.f32.partialorder %v3227, 8.507059e+37
    %v3229 = vand.u32 %v3217, 2147483648
    %v3230 = vor.u32 1.1754944e-38, %v3229
    %v3231 = vsel %vm3228, %v3230, %v3226
    %v3232 = vmul.f32 1.0, %v3231
    %v3233 = vtanh.pop %v3165
    %v3234 = vtanh.pop %v3194
    %v3236 = vrot.slane %v3100, 7
    %v3238 = vmul.f32 %v3213, %v3236
    %3240 = vrot.lane.b32.xlu0 %v3233, 96
    %v3241 = vpop.permute.xlu0 %3240
    %v3243 = vmul.f32 %v3213, %v3241
    %3245 = vrot.lane.b32.xlu0 %v3243, 16
    %v3246 = vpop.permute.xlu0 %3245
    %v3248 = vadd.f32 %v3238, %v3246
    %v3250 = vrot.slane %v3114, 1
    %v3252 = vmul.f32 %v3232, %v3250
    %3254 = vrot.lane.b32.xlu0 %v3234, 96
    %v3255 = vpop.permute.xlu0 %3254
    %v3257 = vmul.f32 %v3232, %v3255
    %3259 = vrot.lane.b32.xlu0 %v3257, 16
    %v3260 = vpop.permute.xlu0 %3259
    %v3262 = vadd.f32 %v3252, %v3260
    %v3263 = vtanh.pop %v3248
    %3265 = vrot.lane.b32.xlu0 %v3263, 32
    %v3266 = vpop.permute.xlu0 %3265
    %v3268 = vmul.f32 %v3213, %v3266
    %v3269 = vtanh.pop %v3262
    %3271 = vrot.lane.b32.xlu0 %v3269, 32
    %v3272 = vpop.permute.xlu0 %3271
    %v3274 = vmul.f32 %v3232, %v3272
    %3276 = vrot.lane.b32.xlu0 %v3268, 80
    %v3277 = vpop.permute.xlu0 %3276
    %3279 = vst.msk [vmem:[#allocation4] sm:$0x40] %vm1270, %v3277
    %3281 = vrot.lane.b32.xlu0 %v3274, 80
    %v3282 = vpop.permute.xlu0 %3281
    %3284 = vst.msk [vmem:[#allocation5] sm:$0x2] %vm1264, %v3282
    %v3285 = vrot.slane %v3268, 6
    %3286 = vrot.lane.b32.xlu0 %v3285, 80
    %v3287 = vpop.permute.xlu0 %3286
    %v3288 = vsel %vm649, %v3287, 0
    %3290 = vmatpush.msra.mxu0 0.0
    %3291 = vmatpush.msra.mxu0 0.0
    %3292 = vmatpush.msra.mxu0 0.0
    %3293 = vmatpush.msra.mxu0 0.0
    %3294 = vmatpush.msra.mxu0 0.0
    %3295 = vmatpush.msra.mxu0 0.0
    %3296 = vmatpush.msra.mxu0 0.0
    %3297 = vmatpush.msra.mxu0 0.0
    %3298 = vmatpush.msra.mxu0 0.0
    %3299 = vmatpush.msra.mxu0 0.0
    %3300 = vmatpush.msra.mxu0 0.0
    %3301 = vmatpush.msra.mxu0 0.0
    %3302 = vmatpush.msra.mxu0 0.0
    %3303 = vmatpush.msra.mxu0 0.0
    %3304 = vmatpush.msra.mxu0 %v2268
    %3305 = vmatpush.msra.mxu0 %v2267
    %3306 = vmatmul.f32.gmra.mxu0 %v3288
    %v3307 = vpop.f32.mrf.mxu0
    %v3308 = vadd.f32 0.0, %v3307
    %3309 = vdwg.mxu0
    %v3311 = vrot.slane %v3308, 1
    %v3313 = vadd.f32 %v2221, %v3311
    %v3314 = vrot.slane %v3274, 1
    %3315 = vrot.lane.b32.xlu0 %v3314, 80
    %v3316 = vpop.permute.xlu0 %3315
    %v3317 = vsel %vm649, %v3316, 0
    %3319 = vmatpush.msra.mxu0 0.0
    %3320 = vmatpush.msra.mxu0 0.0
    %3321 = vmatpush.msra.mxu0 0.0
    %3322 = vmatpush.msra.mxu0 0.0
    %3323 = vmatpush.msra.mxu0 0.0
    %3324 = vmatpush.msra.mxu0 0.0
    %3325 = vmatpush.msra.mxu0 0.0
    %3326 = vmatpush.msra.mxu0 0.0
    %3327 = vmatpush.msra.mxu0 0.0
    %3328 = vmatpush.msra.mxu0 0.0
    %3329 = vmatpush.msra.mxu0 0.0
    %3330 = vmatpush.msra.mxu0 0.0
    %3331 = vmatpush.msra.mxu0 0.0
    %3332 = vmatpush.msra.mxu0 0.0
    %3333 = vmatpush.msra.mxu0 %v2270
    %3334 = vmatpush.msra.mxu0 %v2269
    %3335 = vmatmul.f32.gmra.mxu0 %v3317
    %v3336 = vpop.f32.mrf.mxu0
    %v3337 = vadd.f32 0.0, %v3336
    %3338 = vdwg.mxu0
    %v3339 = vadd.f32 %v2266, %v3337
    %v3340 = vsub.f32 0.0, %v3313
    %v3341 = vmul.f32 %v3340, 1.442695
    %v3342 = vpow.pop %v3341
    %v3343 = vadd.f32 %v3342, 1.0
    %v3344 = vrcp.pop %v3343
    %v3345 = vmul.f32 %v3343, %v3344
    %v3346 = vsub.f32 1.0, %v3345
    %v3347 = vmul.f32 %v3344, %v3346
    %v3348 = vadd.f32 %v3344, %v3347
    %vm3349 = vweird.f32 %v3343
    %vm3350 = vweird.f32 %v3344
    %vm3351 = vmor %vm3349, %vm3350
    %v3352 = vsel %vm3351, %v3344, %v3348
    %v3353 = vand.u32 2147483647, %v3343
    %vm3354 = vcmp.eq.f32.partialorder %v3353, 8.507059e+37
    %v3355 = vand.u32 %v3343, 2147483648
    %v3356 = vor.u32 1.1754944e-38, %v3355
    %v3357 = vsel %vm3354, %v3356, %v3352
    %v3358 = vmul.f32 1.0, %v3357
    %v3359 = vsub.f32 0.0, %v3339
    %v3360 = vmul.f32 %v3359, 1.442695
    %v3361 = vpow.pop %v3360
    %v3362 = vadd.f32 %v3361, 1.0
    %v3363 = vrcp.pop %v3362
    %v3364 = vmul.f32 %v3362, %v3363
    %v3365 = vsub.f32 1.0, %v3364
    %v3366 = vmul.f32 %v3363, %v3365
    %v3367 = vadd.f32 %v3363, %v3366
    %vm3368 = vweird.f32 %v3362
    %vm3369 = vweird.f32 %v3363
    %vm3370 = vmor %vm3368, %vm3369
    %v3371 = vsel %vm3370, %v3363, %v3367
    %v3372 = vand.u32 2147483647, %v3362
    %vm3373 = vcmp.eq.f32.partialorder %v3372, 8.507059e+37
    %v3374 = vand.u32 %v3362, 2147483648
    %v3375 = vor.u32 1.1754944e-38, %v3374
    %v3376 = vsel %vm3373, %v3375, %v3371
    %v3377 = vmul.f32 1.0, %v3376
    %v3378 = vtanh.pop %v3313
    %v3379 = vtanh.pop %v3339
    %v3381 = vrot.slane %v3248, 7
    %v3383 = vmul.f32 %v3358, %v3381
    %3385 = vrot.lane.b32.xlu0 %v3378, 96
    %v3386 = vpop.permute.xlu0 %3385
    %v3388 = vmul.f32 %v3358, %v3386
    %3390 = vrot.lane.b32.xlu0 %v3388, 16
    %v3391 = vpop.permute.xlu0 %3390
    %v3393 = vadd.f32 %v3383, %v3391
    %v3395 = vrot.slane %v3262, 1
    %v3397 = vmul.f32 %v3377, %v3395
    %3399 = vrot.lane.b32.xlu0 %v3379, 96
    %v3400 = vpop.permute.xlu0 %3399
    %v3402 = vmul.f32 %v3377, %v3400
    %3404 = vrot.lane.b32.xlu0 %v3402, 16
    %v3405 = vpop.permute.xlu0 %3404
    %v3407 = vadd.f32 %v3397, %v3405
    %v3408 = vtanh.pop %v3393
    %3410 = vrot.lane.b32.xlu0 %v3408, 32
    %v3411 = vpop.permute.xlu0 %3410
    %v3413 = vmul.f32 %v3358, %v3411
    %v3414 = vtanh.pop %v3407
    %3416 = vrot.lane.b32.xlu0 %v3414, 32
    %v3417 = vpop.permute.xlu0 %3416
    %v3419 = vmul.f32 %v3377, %v3417
    %3421 = vrot.lane.b32.xlu0 %v3413, 80
    %v3422 = vpop.permute.xlu0 %3421
    %3424 = vst.msk [vmem:[#allocation4] sm:$0x80] %vm1123, %v3422
    %3426 = vrot.lane.b32.xlu0 %v3419, 80
    %v3427 = vpop.permute.xlu0 %3426
    %3429 = vst.msk [vmem:[#allocation5] sm:$0x1] %vm873, %v3427
    %v3430 = vld [vmem:[#allocation4] sm:$0xff]
    %v3431 = vld [vmem:[#allocation5] sm:$0xff]
    %v3432 = vsel %vm649, %v3430, 0.0
    %3433 = vadd.xlane.f32.xlu0 %v3432
    %v3434 = vpop.xlane.xlu0 %3433
    %v3435 = vsel %vm649, %v3431, 0.0
    %3436 = vadd.xlane.f32.xlu0 %v3435
    %v3437 = vpop.xlane.xlu0 %3436
    %v3438 = vadd.f32 %v3434, %v3437
    %v3439 = vmul.f32 %v3438, 0.03125
    %v3440 = vsub.f32 %v3430, %v3439
    %v3441 = vsub.f32 %v3431, %v3439
    %v3442 = vmul.f32 %v3440, %v3440
    %v3443 = vsel %vm649, %v3442, 0.0
    %3444 = vadd.xlane.f32.xlu0 %v3443
    %v3445 = vpop.xlane.xlu0 %3444
    %v3446 = vmul.f32 %v3441, %v3441
    %v3447 = vsel %vm649, %v3446, 0.0
    %3448 = vadd.xlane.f32.xlu0 %v3447
    %v3449 = vpop.xlane.xlu0 %3448
    %v3450 = vadd.f32 %v3445, %v3449
    %v3451 = vmul.f32 %v3450, 0.03125
    %v3452 = vld [vmem:[%s53] sm:$0x1]
    %v3453 = vld [vmem:[%s55] sm:$0x1]
    %v3454 = vadd.f32 %v3451, 1e-05
    %v3455 = vrsqrt.pop %v3454
    %v3456 = vmul.f32 %v3455, %v3454
    %v3457 = vmul.f32 %v3456, %v3455
    %v3458 = vmul.f32 0.5, %v3457
    %v3459 = vsub.f32 1.5, %v3458
    %v3460 = vmul.f32 %v3455, %v3459
    %vm3461 = vweird.f32 %v3454
    %vm3462 = vweird.f32 %v3455
    %vm3463 = vmor %vm3461, %vm3462
    %v3464 = vsel %vm3463, %v3455, %v3460
    %v3465 = vmul.f32 %v3441, %v3464
    %v3467 = vperm.slane %v3452, 0
    %3468 = vrot.lane.b32.xlu0 %v3467, 112
    %v3469 = vpop.permute.xlu0 %3468
    %v3471 = vmul.f32 %v3465, %v3469
    %v3473 = vperm.slane %v3453, 0
    %3474 = vrot.lane.b32.xlu0 %v3473, 112
    %v3475 = vpop.permute.xlu0 %3474
    %v3477 = vadd.f32 %v3471, %v3475
    %v3478 = vld [vmem:[%s3] sm:$0xff]
    %v3479 = vld [vmem:[%s3 + $0x8] sm:$0xff]
    %v3480 = vld [vmem:[%s3 + $0x10] sm:$0xff]
    %v3481 = vld [vmem:[%s3 + $0x18] sm:$0xff]
    %3486 = vrot.lane.b32.xlu0 %v3478, 4
    %v3487 = vpop.permute.xlu0 %3486
    %3488 = vrot.lane.b32.xlu0 %v3479, 4
    %v3489 = vpop.permute.xlu0 %3488
    %3490 = vrot.lane.b32.xlu0 %v3480, 4
    %v3491 = vpop.permute.xlu0 %3490
    %3492 = vrot.lane.b32.xlu0 %v3481, 4
    %v3493 = vpop.permute.xlu0 %3492
    %v3498 = vadd.f32 %v201, %v3487
    %v3499 = vadd.f32 %v202, %v3489
    %v3500 = vadd.f32 %v203, %v3491
    %v3501 = vadd.f32 %v204, %v3493
    %v3502 = vld [vmem:[%s57] sm:$0xff]
    %v3503 = vld [vmem:[%s57 + $0x8] sm:$0xff]
    %v3504 = vld [vmem:[%s57 + $0x10] sm:$0xff]
    %v3505 = vld [vmem:[%s57 + $0x18] sm:$0xff]
    %v3506 = vld [vmem:[%s59] sm:$0xff]
    %v3507 = vld [vmem:[%s59 + $0x8] sm:$0xff]
    %v3508 = vld [vmem:[%s59 + $0x10] sm:$0xff]
    %v3509 = vld [vmem:[%s59 + $0x18] sm:$0xff]
    %3514 = vrot.lane.b32.xlu0 %v3498, 124
    %v3515 = vpop.permute.xlu0 %3514
    %3516 = vrot.lane.b32.xlu0 %v3499, 124
    %v3517 = vpop.permute.xlu0 %3516
    %3518 = vrot.lane.b32.xlu0 %v3500, 124
    %v3519 = vpop.permute.xlu0 %3518
    %3520 = vrot.lane.b32.xlu0 %v3501, 124
    %v3521 = vpop.permute.xlu0 %3520
    %v3527 = vsel %vm228, %v3502, 0
    %v3530 = vsel %vm228, %v3503, 0
    %v3533 = vsel %vm228, %v3504, 0
    %v3536 = vsel %vm228, %v3505, 0
    %3538 = vmatpush.msra.mxu0 0.0
    %3539 = vmatpush.msra.mxu0 0.0
    %3540 = vmatpush.msra.mxu0 0.0
    %3541 = vmatpush.msra.mxu0 0.0
    %3542 = vmatpush.msra.mxu0 0.0
    %3543 = vmatpush.msra.mxu0 0.0
    %3544 = vmatpush.msra.mxu0 0.0
    %3545 = vmatpush.msra.mxu0 0.0
    %3546 = vmatpush.msra.mxu0 0.0
    %3547 = vmatpush.msra.mxu0 0.0
    %3548 = vmatpush.msra.mxu0 0.0
    %3549 = vmatpush.msra.mxu0 0.0
    %3550 = vmatpush.msra.mxu0 %v3521
    %3551 = vmatpush.msra.mxu0 %v3519
    %3552 = vmatpush.msra.mxu0 %v3517
    %3553 = vmatpush.msra.mxu0 %v3515
    %3554 = vmatmul.f32.gmra.mxu0 %v3527
    %v3555 = vpop.f32.mrf.mxu0
    %v3556 = vadd.f32 %v3506, %v3555
    %3557 = vmatmul.f32.gmra.mxu0 %v3530
    %v3558 = vpop.f32.mrf.mxu0
    %v3559 = vadd.f32 %v3507, %v3558
    %3560 = vmatmul.f32.gmra.mxu0 %v3533
    %v3561 = vpop.f32.mrf.mxu0
    %v3562 = vadd.f32 %v3508, %v3561
    %3563 = vmatmul.f32.gmra.mxu0 %v3536
    %v3564 = vpop.f32.mrf.mxu0
    %v3565 = vadd.f32 %v3509, %v3564
    %3566 = vdwg.mxu0
    %v3567 = vld [vmem:[%s61] sm:$0xff]
    %v3568 = vld [vmem:[%s61 + $0x8] sm:$0xff]
    %v3569 = vld [vmem:[%s61 + $0x10] sm:$0xff]
    %v3570 = vld [vmem:[%s61 + $0x18] sm:$0xff]
    %v3571 = vld [vmem:[%s63] sm:$0xff]
    %v3572 = vld [vmem:[%s63 + $0x8] sm:$0xff]
    %v3573 = vld [vmem:[%s63 + $0x10] sm:$0xff]
    %v3574 = vld [vmem:[%s63 + $0x18] sm:$0xff]
    %v3576 = vsel %vm228, %v3567, 0
    %v3579 = vsel %vm228, %v3568, 0
    %v3582 = vsel %vm228, %v3569, 0
    %v3585 = vsel %vm228, %v3570, 0
    %3587 = vmatpush.msra.mxu0 0.0
    %3588 = vmatpush.msra.mxu0 0.0
    %3589 = vmatpush.msra.mxu0 0.0
    %3590 = vmatpush.msra.mxu0 0.0
    %3591 = vmatpush.msra.mxu0 0.0
    %3592 = vmatpush.msra.mxu0 0.0
    %3593 = vmatpush.msra.mxu0 0.0
    %3594 = vmatpush.msra.mxu0 0.0
    %3595 = vmatpush.msra.mxu0 0.0
    %3596 = vmatpush.msra.mxu0 0.0
    %3597 = vmatpush.msra.mxu0 0.0
    %3598 = vmatpush.msra.mxu0 0.0
    %3599 = vmatpush.msra.mxu0 %v3565
    %3600 = vmatpush.msra.mxu0 %v3562
    %3601 = vmatpush.msra.mxu0 %v3559
    %3602 = vmatpush.msra.mxu0 %v3556
    %3603 = vmatmul.f32.gmra.mxu0 %v3576
    %v3604 = vpop.f32.mrf.mxu0
    %v3605 = vadd.f32 %v3571, %v3604
    %3606 = vmatmul.f32.gmra.mxu0 %v3579
    %v3607 = vpop.f32.mrf.mxu0
    %v3608 = vadd.f32 %v3572, %v3607
    %3609 = vmatmul.f32.gmra.mxu0 %v3582
    %v3610 = vpop.f32.mrf.mxu0
    %v3611 = vadd.f32 %v3573, %v3610
    %3612 = vmatmul.f32.gmra.mxu0 %v3585
    %v3613 = vpop.f32.mrf.mxu0
    %v3614 = vadd.f32 %v3574, %v3613
    %3615 = vdwg.mxu0
    %3620 = vrot.lane.b32.xlu0 %v3605, 4
    %v3621 = vpop.permute.xlu0 %3620
    %3622 = vrot.lane.b32.xlu0 %v3608, 4
    %v3623 = vpop.permute.xlu0 %3622
    %3624 = vrot.lane.b32.xlu0 %v3611, 4
    %v3625 = vpop.permute.xlu0 %3624
    %3626 = vrot.lane.b32.xlu0 %v3614, 4
    %v3627 = vpop.permute.xlu0 %3626
    %v3632 = vadd.f32 %v3498, %v3621
    %v3633 = vadd.f32 %v3499, %v3623
    %v3634 = vadd.f32 %v3500, %v3625
    %v3635 = vadd.f32 %v3501, %v3627
    %v3636 = vld [vmem:[%s65] sm:$0xff]
    %v3637 = vld [vmem:[%s65 + $0x8] sm:$0xff]
    %v3638 = vld [vmem:[%s65 + $0x10] sm:$0xff]
    %v3639 = vld [vmem:[%s65 + $0x18] sm:$0xff]
    %v3640 = vld [vmem:[%s67] sm:$0xff]
    %v3641 = vld [vmem:[%s67 + $0x8] sm:$0xff]
    %v3642 = vld [vmem:[%s67 + $0x10] sm:$0xff]
    %v3643 = vld [vmem:[%s67 + $0x18] sm:$0xff]
    %vm3644 = vcmask 39968
    %v3645 = vsel %vm3644, %v3632, 0.0
    %v3646 = vsel %vm3644, %v3633, 0.0
    %v3647 = vadd.f32 %v3645, %v3646
    %v3648 = vsel %vm3644, %v3634, 0.0
    %v3649 = vadd.f32 %v3647, %v3648
    %v3650 = vsel %vm3644, %v3635, 0.0
    %v3651 = vadd.f32 %v3649, %v3650
    %v3652 = vrot.slane %v3651, 4
    %v3653 = vadd.f32 %v3651, %v3652
    %v3654 = vrot.slane %v3653, 2
    %v3655 = vadd.f32 %v3653, %v3654
    %v3656 = vrot.slane %v3655, 1
    %v3657 = vadd.f32 %v3655, %v3656
    %v3658 = vmul.f32 %v3657, %v498
    %v3659 = vsub.f32 %v3632, %v3658
    %v3660 = vsub.f32 %v3633, %v3658
    %v3661 = vsub.f32 %v3634, %v3658
    %v3662 = vsub.f32 %v3635, %v3658
    %v3663 = vmul.f32 %v3659, %v3659
    %v3664 = vmul.f32 %v3660, %v3660
    %v3665 = vmul.f32 %v3661, %v3661
    %v3666 = vmul.f32 %v3662, %v3662
    %v3667 = vsel %vm3644, %v3663, 0.0
    %v3668 = vsel %vm3644, %v3664, 0.0
    %v3669 = vadd.f32 %v3667, %v3668
    %v3670 = vsel %vm3644, %v3665, 0.0
    %v3671 = vadd.f32 %v3669, %v3670
    %v3672 = vsel %vm3644, %v3666, 0.0
    %v3673 = vadd.f32 %v3671, %v3672
    %v3674 = vrot.slane %v3673, 4
    %v3675 = vadd.f32 %v3673, %v3674
    %v3676 = vrot.slane %v3675, 2
    %v3677 = vadd.f32 %v3675, %v3676
    %v3678 = vrot.slane %v3677, 1
    %v3679 = vadd.f32 %v3677, %v3678
    %v3680 = vmul.f32 %v3679, %v498
    %v3681 = vadd.f32 %v3680, 1e-05
    %v3682 = vrsqrt.pop %v3681
    %v3683 = vmul.f32 %v3682, %v3681
    %v3684 = vmul.f32 %v3683, %v3682
    %v3685 = vmul.f32 0.5, %v3684
    %v3686 = vsub.f32 1.5, %v3685
    %v3687 = vmul.f32 %v3682, %v3686
    %vm3688 = vweird.f32 %v3681
    %vm3689 = vweird.f32 %v3682
    %vm3690 = vmor %vm3688, %vm3689
    %v3691 = vsel %vm3690, %v3682, %v3687
    %v3692 = vmul.f32 %v3659, %v3691
    %v3693 = vmul.f32 %v3660, %v3691
    %v3694 = vmul.f32 %v3661, %v3691
    %v3695 = vmul.f32 %v3662, %v3691
    %3700 = vrot.lane.b32.xlu0 %v3636, 4
    %v3701 = vpop.permute.xlu0 %3700
    %3702 = vrot.lane.b32.xlu0 %v3637, 4
    %v3703 = vpop.permute.xlu0 %3702
    %3704 = vrot.lane.b32.xlu0 %v3638, 4
    %v3705 = vpop.permute.xlu0 %3704
    %3706 = vrot.lane.b32.xlu0 %v3639, 4
    %v3707 = vpop.permute.xlu0 %3706
    %v3712 = vmul.f32 %v3692, %v3701
    %v3713 = vmul.f32 %v3693, %v3703
    %v3714 = vmul.f32 %v3694, %v3705
    %v3715 = vmul.f32 %v3695, %v3707
    %3720 = vrot.lane.b32.xlu0 %v3640, 4
    %v3721 = vpop.permute.xlu0 %3720
    %3722 = vrot.lane.b32.xlu0 %v3641, 4
    %v3723 = vpop.permute.xlu0 %3722
    %3724 = vrot.lane.b32.xlu0 %v3642, 4
    %v3725 = vpop.permute.xlu0 %3724
    %3726 = vrot.lane.b32.xlu0 %v3643, 4
    %v3727 = vpop.permute.xlu0 %3726
    %v3732 = vadd.f32 %v3712, %v3721
    %v3733 = vadd.f32 %v3713, %v3723
    %v3734 = vadd.f32 %v3714, %v3725
    %v3735 = vadd.f32 %v3715, %v3727
    %v3736 = vld [vmem:[%s69] sm:$0xff]
    %v3737 = vld [vmem:[%s69 + $0x8] sm:$0xff]
    %v3738 = vld [vmem:[%s69 + $0x10] sm:$0xff]
    %v3739 = vld [vmem:[%s69 + $0x18] sm:$0xff]
    %v3740 = vld [vmem:[%s69 + $0x20] sm:$0xff]
    %v3741 = vld [vmem:[%s69 + $0x28] sm:$0xff]
    %v3742 = vld [vmem:[%s69 + $0x30] sm:$0xff]
    %v3743 = vld [vmem:[%s69 + $0x38] sm:$0xff]
    %v3744 = vld [vmem:[%s71] sm:$0xff]
    %v3745 = vld [vmem:[%s71 + $0x8] sm:$0xff]
    %v3746 = vld [vmem:[%s71 + $0x10] sm:$0xff]
    %v3747 = vld [vmem:[%s71 + $0x18] sm:$0xff]
    %v3748 = vld [vmem:[%s71 + $0x20] sm:$0xff]
    %v3749 = vld [vmem:[%s71 + $0x28] sm:$0xff]
    %v3750 = vld [vmem:[%s71 + $0x30] sm:$0xff]
    %v3751 = vld [vmem:[%s71 + $0x38] sm:$0xff]
    %3756 = vrot.lane.b32.xlu0 %v3732, 124
    %v3757 = vpop.permute.xlu0 %3756
    %3758 = vrot.lane.b32.xlu0 %v3733, 124
    %v3759 = vpop.permute.xlu0 %3758
    %3760 = vrot.lane.b32.xlu0 %v3734, 124
    %v3761 = vpop.permute.xlu0 %3760
    %3762 = vrot.lane.b32.xlu0 %v3735, 124
    %v3763 = vpop.permute.xlu0 %3762
    %v3769 = vsel %vm228, %v3736, 0
    %v3772 = vsel %vm228, %v3737, 0
    %v3775 = vsel %vm228, %v3738, 0
    %v3778 = vsel %vm228, %v3739, 0
    %v3781 = vsel %vm228, %v3740, 0
    %v3784 = vsel %vm228, %v3741, 0
    %v3787 = vsel %vm228, %v3742, 0
    %v3790 = vsel %vm228, %v3743, 0
    %3792 = vmatpush.msra.mxu0 0.0
    %3793 = vmatpush.msra.mxu0 0.0
    %3794 = vmatpush.msra.mxu0 0.0
    %3795 = vmatpush.msra.mxu0 0.0
    %3796 = vmatpush.msra.mxu0 0.0
    %3797 = vmatpush.msra.mxu0 0.0
    %3798 = vmatpush.msra.mxu0 0.0
    %3799 = vmatpush.msra.mxu0 0.0
    %3800 = vmatpush.msra.mxu0 0.0
    %3801 = vmatpush.msra.mxu0 0.0
    %3802 = vmatpush.msra.mxu0 0.0
    %3803 = vmatpush.msra.mxu0 0.0
    %3804 = vmatpush.msra.mxu0 %v3763
    %3805 = vmatpush.msra.mxu0 %v3761
    %3806 = vmatpush.msra.mxu0 %v3759
    %3807 = vmatpush.msra.mxu0 %v3757
    %3808 = vmatmul.f32.gmra.mxu0 %v3769
    %v3809 = vpop.f32.mrf.mxu0
    %v3810 = vadd.f32 %v3744, %v3809
    %3811 = vmatmul.f32.gmra.mxu0 %v3772
    %v3812 = vpop.f32.mrf.mxu0
    %v3813 = vadd.f32 %v3745, %v3812
    %3814 = vmatmul.f32.gmra.mxu0 %v3775
    %v3815 = vpop.f32.mrf.mxu0
    %v3816 = vadd.f32 %v3746, %v3815
    %3817 = vmatmul.f32.gmra.mxu0 %v3778
    %v3818 = vpop.f32.mrf.mxu0
    %v3819 = vadd.f32 %v3747, %v3818
    %3820 = vmatmul.f32.gmra.mxu0 %v3781
    %v3821 = vpop.f32.mrf.mxu0
    %v3822 = vadd.f32 %v3748, %v3821
    %3823 = vmatmul.f32.gmra.mxu0 %v3784
    %v3824 = vpop.f32.mrf.mxu0
    %v3825 = vadd.f32 %v3749, %v3824
    %3826 = vmatmul.f32.gmra.mxu0 %v3787
    %v3827 = vpop.f32.mrf.mxu0
    %v3828 = vadd.f32 %v3750, %v3827
    %3829 = vmatmul.f32.gmra.mxu0 %v3790
    %v3830 = vpop.f32.mrf.mxu0
    %v3831 = vadd.f32 %v3751, %v3830
    %3832 = vdwg.mxu0
    %v3833 = vmul.f32 %v3810, 0.5
    %v3834 = vmul.f32 %v3813, 0.5
    %v3835 = vmul.f32 %v3816, 0.5
    %v3836 = vmul.f32 %v3819, 0.5
    %v3837 = vmul.f32 %v3822, 0.5
    %v3838 = vmul.f32 %v3825, 0.5
    %v3839 = vmul.f32 %v3828, 0.5
    %v3840 = vmul.f32 %v3831, 0.5
    %v3841 = vmul.f32 %v3810, 0.70710677
    %v3842 = vmul.f32 %v3813, 0.70710677
    %v3843 = vmul.f32 %v3816, 0.70710677
    %v3844 = vmul.f32 %v3819, 0.70710677
    %v3845 = vmul.f32 %v3822, 0.70710677
    %v3846 = vmul.f32 %v3825, 0.70710677
    %v3847 = vmul.f32 %v3828, 0.70710677
    %v3848 = vmul.f32 %v3831, 0.70710677
    %vm3849 = vcmp.ge.f32.partialorder %v3841, 0.0
    %vm3850 = vcmp.ge.f32.partialorder %v3842, 0.0
    %vm3851 = vcmp.ge.f32.partialorder %v3843, 0.0
    %vm3852 = vcmp.ge.f32.partialorder %v3844, 0.0
    %vm3853 = vcmp.ge.f32.partialorder %v3845, 0.0
    %vm3854 = vcmp.ge.f32.partialorder %v3846, 0.0
    %vm3855 = vcmp.ge.f32.partialorder %v3847, 0.0
    %vm3856 = vcmp.ge.f32.partialorder %v3848, 0.0
    %v3857 = vsub.f32 0.0, %v3841
    %v3858 = vsub.f32 0.0, %v3842
    %v3859 = vsub.f32 0.0, %v3843
    %v3860 = vsub.f32 0.0, %v3844
    %v3861 = vsub.f32 0.0, %v3845
    %v3862 = vsub.f32 0.0, %v3846
    %v3863 = vsub.f32 0.0, %v3847
    %v3864 = vsub.f32 0.0, %v3848
    %v3865 = vsel %vm3849, %v3841, %v3857
    %v3866 = vsel %vm3850, %v3842, %v3858
    %v3867 = vsel %vm3851, %v3843, %v3859
    %v3868 = vsel %vm3852, %v3844, %v3860
    %v3869 = vsel %vm3853, %v3845, %v3861
    %v3870 = vsel %vm3854, %v3846, %v3862
    %v3871 = vsel %vm3855, %v3847, %v3863
    %v3872 = vsel %vm3856, %v3848, %v3864
    %v3873 = vmul.f32 %v3865, 0.3275911
    %v3874 = vmul.f32 %v3866, 0.3275911
    %v3875 = vmul.f32 %v3867, 0.3275911
    %v3876 = vmul.f32 %v3868, 0.3275911
    %v3877 = vmul.f32 %v3869, 0.3275911
    %v3878 = vmul.f32 %v3870, 0.3275911
    %v3879 = vmul.f32 %v3871, 0.3275911
    %v3880 = vmul.f32 %v3872, 0.3275911
    %v3881 = vadd.f32 %v3873, 1.0
    %v3882 = vadd.f32 %v3874, 1.0
    %v3883 = vadd.f32 %v3875, 1.0
    %v3884 = vadd.f32 %v3876, 1.0
    %v3885 = vadd.f32 %v3877, 1.0
    %v3886 = vadd.f32 %v3878, 1.0
    %v3887 = vadd.f32 %v3879, 1.0
    %v3888 = vadd.f32 %v3880, 1.0
    %v3889 = vrcp.pop %v3881
    %v3890 = vmul.f32 %v3881, %v3889
    %v3891 = vsub.f32 1.0, %v3890
    %v3892 = vmul.f32 %v3889, %v3891
    %v3893 = vadd.f32 %v3889, %v3892
    %vm3894 = vweird.f32 %v3881
    %vm3895 = vweird.f32 %v3889
    %vm3896 = vmor %vm3894, %vm3895
    %v3897 = vsel %vm3896, %v3889, %v3893
    %v3898 = vand.u32 2147483647, %v3881
    %vm3899 = vcmp.eq.f32.partialorder %v3898, 8.507059e+37
    %v3900 = vand.u32 %v3881, 2147483648
    %v3901 = vor.u32 1.1754944e-38, %v3900
    %v3902 = vsel %vm3899, %v3901, %v3897
    %v3903 = vmul.f32 1.0, %v3902
    %v3904 = vrcp.pop %v3882
    %v3905 = vmul.f32 %v3882, %v3904
    %v3906 = vsub.f32 1.0, %v3905
    %v3907 = vmul.f32 %v3904, %v3906
    %v3908 = vadd.f32 %v3904, %v3907
    %vm3909 = vweird.f32 %v3882
    %vm3910 = vweird.f32 %v3904
    %vm3911 = vmor %vm3909, %vm3910
    %v3912 = vsel %vm3911, %v3904, %v3908
    %v3913 = vand.u32 2147483647, %v3882
    %vm3914 = vcmp.eq.f32.partialorder %v3913, 8.507059e+37
    %v3915 = vand.u32 %v3882, 2147483648
    %v3916 = vor.u32 1.1754944e-38, %v3915
    %v3917 = vsel %vm3914, %v3916, %v3912
    %v3918 = vmul.f32 1.0, %v3917
    %v3919 = vrcp.pop %v3883
    %v3920 = vmul.f32 %v3883, %v3919
    %v3921 = vsub.f32 1.0, %v3920
    %v3922 = vmul.f32 %v3919, %v3921
    %v3923 = vadd.f32 %v3919, %v3922
    %vm3924 = vweird.f32 %v3883
    %vm3925 = vweird.f32 %v3919
    %vm3926 = vmor %vm3924, %vm3925
    %v3927 = vsel %vm3926, %v3919, %v3923
    %v3928 = vand.u32 2147483647, %v3883
    %vm3929 = vcmp.eq.f32.partialorder %v3928, 8.507059e+37
    %v3930 = vand.u32 %v3883, 2147483648
    %v3931 = vor.u32 1.1754944e-38, %v3930
    %v3932 = vsel %vm3929, %v3931, %v3927
    %v3933 = vmul.f32 1.0, %v3932
    %v3934 = vrcp.pop %v3884
    %v3935 = vmul.f32 %v3884, %v3934
    %v3936 = vsub.f32 1.0, %v3935
    %v3937 = vmul.f32 %v3934, %v3936
    %v3938 = vadd.f32 %v3934, %v3937
    %vm3939 = vweird.f32 %v3884
    %vm3940 = vweird.f32 %v3934
    %vm3941 = vmor %vm3939, %vm3940
    %v3942 = vsel %vm3941, %v3934, %v3938
    %v3943 = vand.u32 2147483647, %v3884
    %vm3944 = vcmp.eq.f32.partialorder %v3943, 8.507059e+37
    %v3945 = vand.u32 %v3884, 2147483648
    %v3946 = vor.u32 1.1754944e-38, %v3945
    %v3947 = vsel %vm3944, %v3946, %v3942
    %v3948 = vmul.f32 1.0, %v3947
    %v3949 = vrcp.pop %v3885
    %v3950 = vmul.f32 %v3885, %v3949
    %v3951 = vsub.f32 1.0, %v3950
    %v3952 = vmul.f32 %v3949, %v3951
    %v3953 = vadd.f32 %v3949, %v3952
    %vm3954 = vweird.f32 %v3885
    %vm3955 = vweird.f32 %v3949
    %vm3956 = vmor %vm3954, %vm3955
    %v3957 = vsel %vm3956, %v3949, %v3953
    %v3958 = vand.u32 2147483647, %v3885
    %vm3959 = vcmp.eq.f32.partialorder %v3958, 8.507059e+37
    %v3960 = vand.u32 %v3885, 2147483648
    %v3961 = vor.u32 1.1754944e-38, %v3960
    %v3962 = vsel %vm3959, %v3961, %v3957
    %v3963 = vmul.f32 1.0, %v3962
    %v3964 = vrcp.pop %v3886
    %v3965 = vmul.f32 %v3886, %v3964
    %v3966 = vsub.f32 1.0, %v3965
    %v3967 = vmul.f32 %v3964, %v3966
    %v3968 = vadd.f32 %v3964, %v3967
    %vm3969 = vweird.f32 %v3886
    %vm3970 = vweird.f32 %v3964
    %vm3971 = vmor %vm3969, %vm3970
    %v3972 = vsel %vm3971, %v3964, %v3968
    %v3973 = vand.u32 2147483647, %v3886
    %vm3974 = vcmp.eq.f32.partialorder %v3973, 8.507059e+37
    %v3975 = vand.u32 %v3886, 2147483648
    %v3976 = vor.u32 1.1754944e-38, %v3975
    %v3977 = vsel %vm3974, %v3976, %v3972
    %v3978 = vmul.f32 1.0, %v3977
    %v3979 = vrcp.pop %v3887
    %v3980 = vmul.f32 %v3887, %v3979
    %v3981 = vsub.f32 1.0, %v3980
    %v3982 = vmul.f32 %v3979, %v3981
    %v3983 = vadd.f32 %v3979, %v3982
    %vm3984 = vweird.f32 %v3887
    %vm3985 = vweird.f32 %v3979
    %vm3986 = vmor %vm3984, %vm3985
    %v3987 = vsel %vm3986, %v3979, %v3983
    %v3988 = vand.u32 2147483647, %v3887
    %vm3989 = vcmp.eq.f32.partialorder %v3988, 8.507059e+37
    %v3990 = vand.u32 %v3887, 2147483648
    %v3991 = vor.u32 1.1754944e-38, %v3990
    %v3992 = vsel %vm3989, %v3991, %v3987
    %v3993 = vmul.f32 1.0, %v3992
    %v3994 = vrcp.pop %v3888
    %v3995 = vmul.f32 %v3888, %v3994
    %v3996 = vsub.f32 1.0, %v3995
    %v3997 = vmul.f32 %v3994, %v3996
    %v3998 = vadd.f32 %v3994, %v3997
    %vm3999 = vweird.f32 %v3888
    %vm4000 = vweird.f32 %v3994
    %vm4001 = vmor %vm3999, %vm4000
    %v4002 = vsel %vm4001, %v3994, %v3998
    %v4003 = vand.u32 2147483647, %v3888
    %vm4004 = vcmp.eq.f32.partialorder %v4003, 8.507059e+37
    %v4005 = vand.u32 %v3888, 2147483648
    %v4006 = vor.u32 1.1754944e-38, %v4005
    %v4007 = vsel %vm4004, %v4006, %v4002
    %v4008 = vmul.f32 1.0, %v4007
    %v4009 = vmul.f32 %v3903, 1.0614054
    %v4010 = vmul.f32 %v3918, 1.0614054
    %v4011 = vmul.f32 %v3933, 1.0614054
    %v4012 = vmul.f32 %v3948, 1.0614054
    %v4013 = vmul.f32 %v3963, 1.0614054
    %v4014 = vmul.f32 %v3978, 1.0614054
    %v4015 = vmul.f32 %v3993, 1.0614054
    %v4016 = vmul.f32 %v4008, 1.0614054
    %v4017 = vadd.f32 %v4009, -1.4531521
    %v4018 = vadd.f32 %v4010, -1.4531521
    %v4019 = vadd.f32 %v4011, -1.4531521
    %v4020 = vadd.f32 %v4012, -1.4531521
    %v4021 = vadd.f32 %v4013, -1.4531521
    %v4022 = vadd.f32 %v4014, -1.4531521
    %v4023 = vadd.f32 %v4015, -1.4531521
    %v4024 = vadd.f32 %v4016, -1.4531521
    %v4025 = vmul.f32 %v4017, %v3903
    %v4026 = vmul.f32 %v4018, %v3918
    %v4027 = vmul.f32 %v4019, %v3933
    %v4028 = vmul.f32 %v4020, %v3948
    %v4029 = vmul.f32 %v4021, %v3963
    %v4030 = vmul.f32 %v4022, %v3978
    %v4031 = vmul.f32 %v4023, %v3993
    %v4032 = vmul.f32 %v4024, %v4008
    %v4033 = vadd.f32 %v4025, 1.4214138
    %v4034 = vadd.f32 %v4026, 1.4214138
    %v4035 = vadd.f32 %v4027, 1.4214138
    %v4036 = vadd.f32 %v4028, 1.4214138
    %v4037 = vadd.f32 %v4029, 1.4214138
    %v4038 = vadd.f32 %v4030, 1.4214138
    %v4039 = vadd.f32 %v4031, 1.4214138
    %v4040 = vadd.f32 %v4032, 1.4214138
    %v4041 = vmul.f32 %v4033, %v3903
    %v4042 = vmul.f32 %v4034, %v3918
    %v4043 = vmul.f32 %v4035, %v3933
    %v4044 = vmul.f32 %v4036, %v3948
    %v4045 = vmul.f32 %v4037, %v3963
    %v4046 = vmul.f32 %v4038, %v3978
    %v4047 = vmul.f32 %v4039, %v3993
    %v4048 = vmul.f32 %v4040, %v4008
    %v4049 = vadd.f32 %v4041, -0.28449672
    %v4050 = vadd.f32 %v4042, -0.28449672
    %v4051 = vadd.f32 %v4043, -0.28449672
    %v4052 = vadd.f32 %v4044, -0.28449672
    %v4053 = vadd.f32 %v4045, -0.28449672
    %v4054 = vadd.f32 %v4046, -0.28449672
    %v4055 = vadd.f32 %v4047, -0.28449672
    %v4056 = vadd.f32 %v4048, -0.28449672
    %v4057 = vmul.f32 %v4049, %v3903
    %v4058 = vmul.f32 %v4050, %v3918
    %v4059 = vmul.f32 %v4051, %v3933
    %v4060 = vmul.f32 %v4052, %v3948
    %v4061 = vmul.f32 %v4053, %v3963
    %v4062 = vmul.f32 %v4054, %v3978
    %v4063 = vmul.f32 %v4055, %v3993
    %v4064 = vmul.f32 %v4056, %v4008
    %v4065 = vadd.f32 %v4057, 0.2548296
    %v4066 = vadd.f32 %v4058, 0.2548296
    %v4067 = vadd.f32 %v4059, 0.2548296
    %v4068 = vadd.f32 %v4060, 0.2548296
    %v4069 = vadd.f32 %v4061, 0.2548296
    %v4070 = vadd.f32 %v4062, 0.2548296
    %v4071 = vadd.f32 %v4063, 0.2548296
    %v4072 = vadd.f32 %v4064, 0.2548296
    %v4073 = vmul.f32 %v4065, %v3903
    %v4074 = vmul.f32 %v4066, %v3918
    %v4075 = vmul.f32 %v4067, %v3933
    %v4076 = vmul.f32 %v4068, %v3948
    %v4077 = vmul.f32 %v4069, %v3963
    %v4078 = vmul.f32 %v4070, %v3978
    %v4079 = vmul.f32 %v4071, %v3993
    %v4080 = vmul.f32 %v4072, %v4008
    %v4081 = vsub.f32 0.0, %v3865
    %v4082 = vsub.f32 0.0, %v3866
    %v4083 = vsub.f32 0.0, %v3867
    %v4084 = vsub.f32 0.0, %v3868
    %v4085 = vsub.f32 0.0, %v3869
    %v4086 = vsub.f32 0.0, %v3870
    %v4087 = vsub.f32 0.0, %v3871
    %v4088 = vsub.f32 0.0, %v3872
    %v4089 = vmul.f32 %v4081, %v3865
    %v4090 = vmul.f32 %v4082, %v3866
    %v4091 = vmul.f32 %v4083, %v3867
    %v4092 = vmul.f32 %v4084, %v3868
    %v4093 = vmul.f32 %v4085, %v3869
    %v4094 = vmul.f32 %v4086, %v3870
    %v4095 = vmul.f32 %v4087, %v3871
    %v4096 = vmul.f32 %v4088, %v3872
    %v4097 = vmul.f32 %v4089, 1.442695
    %v4098 = vpow.pop %v4097
    %v4099 = vmul.f32 %v4090, 1.442695
    %v4100 = vpow.pop %v4099
    %v4101 = vmul.f32 %v4091, 1.442695
    %v4102 = vpow.pop %v4101
    %v4103 = vmul.f32 %v4092, 1.442695
    %v4104 = vpow.pop %v4103
    %v4105 = vmul.f32 %v4093, 1.442695
    %v4106 = vpow.pop %v4105
    %v4107 = vmul.f32 %v4094, 1.442695
    %v4108 = vpow.pop %v4107
    %v4109 = vmul.f32 %v4095, 1.442695
    %v4110 = vpow.pop %v4109
    %v4111 = vmul.f32 %v4096, 1.442695
    %v4112 = vpow.pop %v4111
    %v4113 = vmul.f32 %v4073, %v4098
    %v4114 = vmul.f32 %v4074, %v4100
    %v4115 = vmul.f32 %v4075, %v4102
    %v4116 = vmul.f32 %v4076, %v4104
    %v4117 = vmul.f32 %v4077, %v4106
    %v4118 = vmul.f32 %v4078, %v4108
    %v4119 = vmul.f32 %v4079, %v4110
    %v4120 = vmul.f32 %v4080, %v4112
    %v4121 = vsub.f32 1.0, %v4113
    %v4122 = vsub.f32 1.0, %v4114
    %v4123 = vsub.f32 1.0, %v4115
    %v4124 = vsub.f32 1.0, %v4116
    %v4125 = vsub.f32 1.0, %v4117
    %v4126 = vsub.f32 1.0, %v4118
    %v4127 = vsub.f32 1.0, %v4119
    %v4128 = vsub.f32 1.0, %v4120
    %v4129 = vsub.f32 0.0, %v4121
    %v4130 = vsub.f32 0.0, %v4122
    %v4131 = vsub.f32 0.0, %v4123
    %v4132 = vsub.f32 0.0, %v4124
    %v4133 = vsub.f32 0.0, %v4125
    %v4134 = vsub.f32 0.0, %v4126
    %v4135 = vsub.f32 0.0, %v4127
    %v4136 = vsub.f32 0.0, %v4128
    %v4137 = vsel %vm3849, %v4121, %v4129
    %v4138 = vsel %vm3850, %v4122, %v4130
    %v4139 = vsel %vm3851, %v4123, %v4131
    %v4140 = vsel %vm3852, %v4124, %v4132
    %v4141 = vsel %vm3853, %v4125, %v4133
    %v4142 = vsel %vm3854, %v4126, %v4134
    %v4143 = vsel %vm3855, %v4127, %v4135
    %v4144 = vsel %vm3856, %v4128, %v4136
    %v4145 = vadd.f32 %v4137, 1.0
    %v4146 = vadd.f32 %v4138, 1.0
    %v4147 = vadd.f32 %v4139, 1.0
    %v4148 = vadd.f32 %v4140, 1.0
    %v4149 = vadd.f32 %v4141, 1.0
    %v4150 = vadd.f32 %v4142, 1.0
    %v4151 = vadd.f32 %v4143, 1.0
    %v4152 = vadd.f32 %v4144, 1.0
    %v4153 = vmul.f32 %v3833, %v4145
    %v4154 = vmul.f32 %v3834, %v4146
    %v4155 = vmul.f32 %v3835, %v4147
    %v4156 = vmul.f32 %v3836, %v4148
    %v4157 = vmul.f32 %v3837, %v4149
    %v4158 = vmul.f32 %v3838, %v4150
    %v4159 = vmul.f32 %v3839, %v4151
    %v4160 = vmul.f32 %v3840, %v4152
    %v4161 = vld [vmem:[%s73] sm:$0xff]
    %v4162 = vld [vmem:[%s73 + $0x8] sm:$0xff]
    %v4163 = vld [vmem:[%s73 + $0x10] sm:$0xff]
    %v4164 = vld [vmem:[%s73 + $0x18] sm:$0xff]
    %v4165 = vld [vmem:[%s75] sm:$0xff]
    %v4166 = vld [vmem:[%s75 + $0x8] sm:$0xff]
    %v4167 = vld [vmem:[%s75 + $0x10] sm:$0xff]
    %v4168 = vld [vmem:[%s75 + $0x18] sm:$0xff]
    %vm4169 = vcmask 523264
    %v4171 = vsel %vm4169, %v4161, 0
    %v4174 = vsel %vm4169, %v4162, 0
    %v4177 = vsel %vm4169, %v4163, 0
    %v4180 = vsel %vm4169, %v4164, 0
    %4182 = vmatpush.msra.mxu0 0.0
    %4183 = vmatpush.msra.mxu0 0.0
    %4184 = vmatpush.msra.mxu0 0.0
    %4185 = vmatpush.msra.mxu0 0.0
    %4186 = vmatpush.msra.mxu0 0.0
    %4187 = vmatpush.msra.mxu0 0.0
    %4188 = vmatpush.msra.mxu0 0.0
    %4189 = vmatpush.msra.mxu0 0.0
    %4190 = vmatpush.msra.mxu0 %v4160
    %4191 = vmatpush.msra.mxu0 %v4159
    %4192 = vmatpush.msra.mxu0 %v4158
    %4193 = vmatpush.msra.mxu0 %v4157
    %4194 = vmatpush.msra.mxu0 %v4156
    %4195 = vmatpush.msra.mxu0 %v4155
    %4196 = vmatpush.msra.mxu0 %v4154
    %4197 = vmatpush.msra.mxu0 %v4153
    %4198 = vmatmul.f32.gmra.mxu0 %v4171
    %v4199 = vpop.f32.mrf.mxu0
    %v4200 = vadd.f32 %v4165, %v4199
    %4201 = vmatmul.f32.gmra.mxu0 %v4174
    %v4202 = vpop.f32.mrf.mxu0
    %v4203 = vadd.f32 %v4166, %v4202
    %4204 = vmatmul.f32.gmra.mxu0 %v4177
    %v4205 = vpop.f32.mrf.mxu0
    %v4206 = vadd.f32 %v4167, %v4205
    %4207 = vmatmul.f32.gmra.mxu0 %v4180
    %v4208 = vpop.f32.mrf.mxu0
    %v4209 = vadd.f32 %v4168, %v4208
    %4210 = vdwg.mxu0
    %4215 = vrot.lane.b32.xlu0 %v4200, 4
    %v4216 = vpop.permute.xlu0 %4215
    %4217 = vrot.lane.b32.xlu0 %v4203, 4
    %v4218 = vpop.permute.xlu0 %4217
    %4219 = vrot.lane.b32.xlu0 %v4206, 4
    %v4220 = vpop.permute.xlu0 %4219
    %4221 = vrot.lane.b32.xlu0 %v4209, 4
    %v4222 = vpop.permute.xlu0 %4221
    %v4227 = vadd.f32 %v3732, %v4216
    %v4228 = vadd.f32 %v3733, %v4218
    %v4229 = vadd.f32 %v3734, %v4220
    %v4230 = vadd.f32 %v3735, %v4222
    %v4231 = vld [vmem:[%s77] sm:$0xff]
    %v4232 = vld [vmem:[%s77 + $0x8] sm:$0xff]
    %v4233 = vld [vmem:[%s77 + $0x10] sm:$0xff]
    %v4234 = vld [vmem:[%s77 + $0x18] sm:$0xff]
    %v4235 = vld [vmem:[%s79] sm:$0xff]
    %v4236 = vld [vmem:[%s79 + $0x8] sm:$0xff]
    %v4237 = vld [vmem:[%s79 + $0x10] sm:$0xff]
    %v4238 = vld [vmem:[%s79 + $0x18] sm:$0xff]
    %v4239 = vsel %vm3644, %v4227, 0.0
    %v4240 = vsel %vm3644, %v4228, 0.0
    %v4241 = vadd.f32 %v4239, %v4240
    %v4242 = vsel %vm3644, %v4229, 0.0
    %v4243 = vadd.f32 %v4241, %v4242
    %v4244 = vsel %vm3644, %v4230, 0.0
    %v4245 = vadd.f32 %v4243, %v4244
    %v4246 = vrot.slane %v4245, 4
    %v4247 = vadd.f32 %v4245, %v4246
    %v4248 = vrot.slane %v4247, 2
    %v4249 = vadd.f32 %v4247, %v4248
    %v4250 = vrot.slane %v4249, 1
    %v4251 = vadd.f32 %v4249, %v4250
    %v4252 = vmul.f32 %v4251, %v498
    %v4253 = vsub.f32 %v4227, %v4252
    %v4254 = vsub.f32 %v4228, %v4252
    %v4255 = vsub.f32 %v4229, %v4252
    %v4256 = vsub.f32 %v4230, %v4252
    %v4257 = vmul.f32 %v4253, %v4253
    %v4258 = vmul.f32 %v4254, %v4254
    %v4259 = vmul.f32 %v4255, %v4255
    %v4260 = vmul.f32 %v4256, %v4256
    %v4261 = vsel %vm3644, %v4257, 0.0
    %v4262 = vsel %vm3644, %v4258, 0.0
    %v4263 = vadd.f32 %v4261, %v4262
    %v4264 = vsel %vm3644, %v4259, 0.0
    %v4265 = vadd.f32 %v4263, %v4264
    %v4266 = vsel %vm3644, %v4260, 0.0
    %v4267 = vadd.f32 %v4265, %v4266
    %v4268 = vrot.slane %v4267, 4
    %v4269 = vadd.f32 %v4267, %v4268
    %v4270 = vrot.slane %v4269, 2
    %v4271 = vadd.f32 %v4269, %v4270
    %v4272 = vrot.slane %v4271, 1
    %v4273 = vadd.f32 %v4271, %v4272
    %v4274 = vmul.f32 %v4273, %v498
    %v4275 = vadd.f32 %v4274, 1e-05
    %v4276 = vrsqrt.pop %v4275
    %v4277 = vmul.f32 %v4276, %v4275
    %v4278 = vmul.f32 %v4277, %v4276
    %v4279 = vmul.f32 0.5, %v4278
    %v4280 = vsub.f32 1.5, %v4279
    %v4281 = vmul.f32 %v4276, %v4280
    %vm4282 = vweird.f32 %v4275
    %vm4283 = vweird.f32 %v4276
    %vm4284 = vmor %vm4282, %vm4283
    %v4285 = vsel %vm4284, %v4276, %v4281
    %v4286 = vmul.f32 %v4253, %v4285
    %v4287 = vmul.f32 %v4254, %v4285
    %v4288 = vmul.f32 %v4255, %v4285
    %v4289 = vmul.f32 %v4256, %v4285
    %4294 = vrot.lane.b32.xlu0 %v4231, 4
    %v4295 = vpop.permute.xlu0 %4294
    %4296 = vrot.lane.b32.xlu0 %v4232, 4
    %v4297 = vpop.permute.xlu0 %4296
    %4298 = vrot.lane.b32.xlu0 %v4233, 4
    %v4299 = vpop.permute.xlu0 %4298
    %4300 = vrot.lane.b32.xlu0 %v4234, 4
    %v4301 = vpop.permute.xlu0 %4300
    %v4306 = vmul.f32 %v4286, %v4295
    %v4307 = vmul.f32 %v4287, %v4297
    %v4308 = vmul.f32 %v4288, %v4299
    %v4309 = vmul.f32 %v4289, %v4301
    %4314 = vrot.lane.b32.xlu0 %v4235, 4
    %v4315 = vpop.permute.xlu0 %4314
    %4316 = vrot.lane.b32.xlu0 %v4236, 4
    %v4317 = vpop.permute.xlu0 %4316
    %4318 = vrot.lane.b32.xlu0 %v4237, 4
    %v4319 = vpop.permute.xlu0 %4318
    %4320 = vrot.lane.b32.xlu0 %v4238, 4
    %v4321 = vpop.permute.xlu0 %4320
    %v4326 = vadd.f32 %v4306, %v4315
    %v4327 = vadd.f32 %v4307, %v4317
    %v4328 = vadd.f32 %v4308, %v4319
    %v4329 = vadd.f32 %v4309, %v4321
    %v4330 = vld [vmem:[%s81] sm:$0xff]
    %v4331 = vld [vmem:[%s81 + $0x8] sm:$0xff]
    %v4332 = vld [vmem:[%s81 + $0x10] sm:$0xff]
    %v4333 = vld [vmem:[%s81 + $0x18] sm:$0xff]
    %v4334 = vld [vmem:[%s81 + $0x20] sm:$0xff]
    %v4335 = vld [vmem:[%s81 + $0x28] sm:$0xff]
    %v4336 = vld [vmem:[%s81 + $0x30] sm:$0xff]
    %v4337 = vld [vmem:[%s81 + $0x38] sm:$0xff]
    %v4338 = vld [vmem:[%s83] sm:$0xff]
    %v4339 = vld [vmem:[%s83 + $0x8] sm:$0xff]
    %v4340 = vld [vmem:[%s83 + $0x10] sm:$0xff]
    %v4341 = vld [vmem:[%s83 + $0x18] sm:$0xff]
    %v4342 = vld [vmem:[%s83 + $0x20] sm:$0xff]
    %v4343 = vld [vmem:[%s83 + $0x28] sm:$0xff]
    %v4344 = vld [vmem:[%s83 + $0x30] sm:$0xff]
    %v4345 = vld [vmem:[%s83 + $0x38] sm:$0xff]
    %4347 = vrot.lane.b32.xlu0 %v3477, 113
    %v4348 = vpop.permute.xlu0 %4347
    %v4351 = vsel %vm478, %v4338, 0
    %v4354 = vsel %vm478, %v4339, 0
    %v4357 = vsel %vm478, %v4340, 0
    %v4360 = vsel %vm478, %v4341, 0
    %v4363 = vsel %vm478, %v4342, 0
    %v4366 = vsel %vm478, %v4343, 0
    %v4369 = vsel %vm478, %v4344, 0
    %v4372 = vsel %vm478, %v4345, 0
    %4374 = vmatpush.msra.mxu0 0.0
    %4375 = vmatpush.msra.mxu0 0.0
    %4376 = vmatpush.msra.mxu0 0.0
    %4377 = vmatpush.msra.mxu0 0.0
    %4378 = vmatpush.msra.mxu0 0.0
    %4379 = vmatpush.msra.mxu0 0.0
    %4380 = vmatpush.msra.mxu0 0.0
    %4381 = vmatpush.msra.mxu0 0.0
    %4382 = vmatpush.msra.mxu0 0.0
    %4383 = vmatpush.msra.mxu0 0.0
    %4384 = vmatpush.msra.mxu0 0.0
    %4385 = vmatpush.msra.mxu0 0.0
    %4386 = vmatpush.msra.mxu0 0.0
    %4387 = vmatpush.msra.mxu0 0.0
    %4388 = vmatpush.msra.mxu0 0.0
    %4389 = vmatpush.msra.mxu0 %v4348
    %4390 = vmatmul.f32.gmra.mxu0 %v4351
    %v4391 = vpop.f32.mrf.mxu0
    %v4392 = vadd.f32 0.0, %v4391
    %4393 = vmatmul.f32.gmra.mxu0 %v4354
    %v4394 = vpop.f32.mrf.mxu0
    %v4395 = vadd.f32 0.0, %v4394
    %4396 = vmatmul.f32.gmra.mxu0 %v4357
    %v4397 = vpop.f32.mrf.mxu0
    %v4398 = vadd.f32 0.0, %v4397
    %4399 = vmatmul.f32.gmra.mxu0 %v4360
    %v4400 = vpop.f32.mrf.mxu0
    %v4401 = vadd.f32 0.0, %v4400
    %4402 = vmatmul.f32.gmra.mxu0 %v4363
    %v4403 = vpop.f32.mrf.mxu0
    %v4404 = vadd.f32 0.0, %v4403
    %4405 = vmatmul.f32.gmra.mxu0 %v4366
    %v4406 = vpop.f32.mrf.mxu0
    %v4407 = vadd.f32 0.0, %v4406
    %4408 = vmatmul.f32.gmra.mxu0 %v4369
    %v4409 = vpop.f32.mrf.mxu0
    %v4410 = vadd.f32 0.0, %v4409
    %4411 = vmatmul.f32.gmra.mxu0 %v4372
    %v4412 = vpop.f32.mrf.mxu0
    %v4413 = vadd.f32 0.0, %v4412
    %4414 = vdwg.mxu0
    %4415 = vrot.lane.b32.xlu0 %v932, 113
    %v4416 = vpop.permute.xlu0 %4415
    %v4419 = vsel %vm478, %v4330, 0
    %v4422 = vsel %vm478, %v4331, 0
    %v4425 = vsel %vm478, %v4332, 0
    %v4428 = vsel %vm478, %v4333, 0
    %v4431 = vsel %vm478, %v4334, 0
    %v4434 = vsel %vm478, %v4335, 0
    %v4437 = vsel %vm478, %v4336, 0
    %v4440 = vsel %vm478, %v4337, 0
    %4442 = vmatpush.msra.mxu0 0.0
    %4443 = vmatpush.msra.mxu0 0.0
    %4444 = vmatpush.msra.mxu0 0.0
    %4445 = vmatpush.msra.mxu0 0.0
    %4446 = vmatpush.msra.mxu0 0.0
    %4447 = vmatpush.msra.mxu0 0.0
    %4448 = vmatpush.msra.mxu0 0.0
    %4449 = vmatpush.msra.mxu0 0.0
    %4450 = vmatpush.msra.mxu0 0.0
    %4451 = vmatpush.msra.mxu0 0.0
    %4452 = vmatpush.msra.mxu0 0.0
    %4453 = vmatpush.msra.mxu0 0.0
    %4454 = vmatpush.msra.mxu0 0.0
    %4455 = vmatpush.msra.mxu0 0.0
    %4456 = vmatpush.msra.mxu0 0.0
    %4457 = vmatpush.msra.mxu0 %v4416
    %4458 = vmatmul.f32.gmra.mxu0 %v4419
    %v4459 = vpop.f32.mrf.mxu0
    %v4460 = vadd.f32 %v4392, %v4459
    %4461 = vmatmul.f32.gmra.mxu0 %v4422
    %v4462 = vpop.f32.mrf.mxu0
    %v4463 = vadd.f32 %v4395, %v4462
    %4464 = vmatmul.f32.gmra.mxu0 %v4425
    %v4465 = vpop.f32.mrf.mxu0
    %v4466 = vadd.f32 %v4398, %v4465
    %4467 = vmatmul.f32.gmra.mxu0 %v4428
    %v4468 = vpop.f32.mrf.mxu0
    %v4469 = vadd.f32 %v4401, %v4468
    %4470 = vmatmul.f32.gmra.mxu0 %v4431
    %v4471 = vpop.f32.mrf.mxu0
    %v4472 = vadd.f32 %v4404, %v4471
    %4473 = vmatmul.f32.gmra.mxu0 %v4434
    %v4474 = vpop.f32.mrf.mxu0
    %v4475 = vadd.f32 %v4407, %v4474
    %4476 = vmatmul.f32.gmra.mxu0 %v4437
    %v4477 = vpop.f32.mrf.mxu0
    %v4478 = vadd.f32 %v4410, %v4477
    %4479 = vmatmul.f32.gmra.mxu0 %v4440
    %v4480 = vpop.f32.mrf.mxu0
    %v4481 = vadd.f32 %v4413, %v4480
    %4482 = vdwg.mxu0
    %v4483 = vld [vmem:[%s85] sm:$0xff]
    %v4484 = vld [vmem:[%s85 + $0x8] sm:$0xff]
    %v4485 = vld [vmem:[%s85 + $0x10] sm:$0xff]
    %v4486 = vld [vmem:[%s85 + $0x18] sm:$0xff]
    %v4487 = vld [vmem:[%s85 + $0x20] sm:$0xff]
    %v4488 = vld [vmem:[%s85 + $0x28] sm:$0xff]
    %v4489 = vld [vmem:[%s85 + $0x30] sm:$0xff]
    %v4490 = vld [vmem:[%s85 + $0x38] sm:$0xff]
    %4495 = vrot.lane.b32.xlu0 %v4326, 124
    %v4496 = vpop.permute.xlu0 %4495
    %4497 = vrot.lane.b32.xlu0 %v4327, 124
    %v4498 = vpop.permute.xlu0 %4497
    %4499 = vrot.lane.b32.xlu0 %v4328, 124
    %v4500 = vpop.permute.xlu0 %4499
    %4501 = vrot.lane.b32.xlu0 %v4329, 124
    %v4502 = vpop.permute.xlu0 %4501
    %v4508 = vsel %vm228, %v4483, 0
    %v4511 = vsel %vm228, %v4484, 0
    %v4514 = vsel %vm228, %v4485, 0
    %v4517 = vsel %vm228, %v4486, 0
    %v4520 = vsel %vm228, %v4487, 0
    %v4523 = vsel %vm228, %v4488, 0
    %v4526 = vsel %vm228, %v4489, 0
    %v4529 = vsel %vm228, %v4490, 0
    %4531 = vmatpush.msra.mxu0 0.0
    %4532 = vmatpush.msra.mxu0 0.0
    %4533 = vmatpush.msra.mxu0 0.0
    %4534 = vmatpush.msra.mxu0 0.0
    %4535 = vmatpush.msra.mxu0 0.0
    %4536 = vmatpush.msra.mxu0 0.0
    %4537 = vmatpush.msra.mxu0 0.0
    %4538 = vmatpush.msra.mxu0 0.0
    %4539 = vmatpush.msra.mxu0 0.0
    %4540 = vmatpush.msra.mxu0 0.0
    %4541 = vmatpush.msra.mxu0 0.0
    %4542 = vmatpush.msra.mxu0 0.0
    %4543 = vmatpush.msra.mxu0 %v4502
    %4544 = vmatpush.msra.mxu0 %v4500
    %4545 = vmatpush.msra.mxu0 %v4498
    %4546 = vmatpush.msra.mxu0 %v4496
    %4547 = vmatmul.f32.gmra.mxu0 %v4508
    %v4548 = vpop.f32.mrf.mxu0
    %v4549 = vadd.f32 0.0, %v4548
    %4550 = vmatmul.f32.gmra.mxu0 %v4511
    %v4551 = vpop.f32.mrf.mxu0
    %v4552 = vadd.f32 0.0, %v4551
    %4553 = vmatmul.f32.gmra.mxu0 %v4514
    %v4554 = vpop.f32.mrf.mxu0
    %v4555 = vadd.f32 0.0, %v4554
    %4556 = vmatmul.f32.gmra.mxu0 %v4517
    %v4557 = vpop.f32.mrf.mxu0
    %v4558 = vadd.f32 0.0, %v4557
    %4559 = vmatmul.f32.gmra.mxu0 %v4520
    %v4560 = vpop.f32.mrf.mxu0
    %v4561 = vadd.f32 0.0, %v4560
    %4562 = vmatmul.f32.gmra.mxu0 %v4523
    %v4563 = vpop.f32.mrf.mxu0
    %v4564 = vadd.f32 0.0, %v4563
    %4565 = vmatmul.f32.gmra.mxu0 %v4526
    %v4566 = vpop.f32.mrf.mxu0
    %v4567 = vadd.f32 0.0, %v4566
    %4568 = vmatmul.f32.gmra.mxu0 %v4529
    %v4569 = vpop.f32.mrf.mxu0
    %v4570 = vadd.f32 0.0, %v4569
    %4571 = vdwg.mxu0
    %v4572 = vadd.f32 %v4460, %v4549
    %v4573 = vadd.f32 %v4463, %v4552
    %v4574 = vadd.f32 %v4466, %v4555
    %v4575 = vadd.f32 %v4469, %v4558
    %v4576 = vadd.f32 %v4472, %v4561
    %v4577 = vadd.f32 %v4475, %v4564
    %v4578 = vadd.f32 %v4478, %v4567
    %v4579 = vadd.f32 %v4481, %v4570
    %v4580 = vld [vmem:[%s87] sm:$0xff]
    %v4581 = vld [vmem:[%s87 + $0x8] sm:$0xff]
    %v4582 = vld [vmem:[%s87 + $0x10] sm:$0xff]
    %v4583 = vld [vmem:[%s87 + $0x18] sm:$0xff]
    %v4584 = vld [vmem:[%s87 + $0x20] sm:$0xff]
    %v4585 = vld [vmem:[%s87 + $0x28] sm:$0xff]
    %v4586 = vld [vmem:[%s87 + $0x30] sm:$0xff]
    %v4587 = vld [vmem:[%s87 + $0x38] sm:$0xff]
    %v4588 = vadd.f32 %v4572, %v4580
    %v4589 = vadd.f32 %v4573, %v4581
    %v4590 = vadd.f32 %v4574, %v4582
    %v4591 = vadd.f32 %v4575, %v4583
    %v4592 = vadd.f32 %v4576, %v4584
    %v4593 = vadd.f32 %v4577, %v4585
    %v4594 = vadd.f32 %v4578, %v4586
    %v4595 = vadd.f32 %v4579, %v4587
    %v4596 = vmax.f32 %v4588, 0.0
    %v4597 = vmax.f32 %v4589, 0.0
    %v4598 = vmax.f32 %v4590, 0.0
    %v4599 = vmax.f32 %v4591, 0.0
    %v4600 = vmax.f32 %v4592, 0.0
    %v4601 = vmax.f32 %v4593, 0.0
    %v4602 = vmax.f32 %v4594, 0.0
    %v4603 = vmax.f32 %v4595, 0.0
    %v4604 = vld [vmem:[%s89] sm:$0xff]
    %v4605 = vld [vmem:[%s89 + $0x8] sm:$0xff]
    %v4606 = vld [vmem:[%s89 + $0x10] sm:$0xff]
    %v4607 = vld [vmem:[%s89 + $0x18] sm:$0xff]
    %v4608 = vld [vmem:[%s89 + $0x20] sm:$0xff]
    %v4609 = vld [vmem:[%s89 + $0x28] sm:$0xff]
    %v4610 = vld [vmem:[%s89 + $0x30] sm:$0xff]
    %v4611 = vld [vmem:[%s89 + $0x38] sm:$0xff]
    %v4612 = vld [vmem:[%s89 + $0x40] sm:$0xff]
    %v4613 = vld [vmem:[%s89 + $0x48] sm:$0xff]
    %v4614 = vld [vmem:[%s89 + $0x50] sm:$0xff]
    %v4615 = vld [vmem:[%s89 + $0x58] sm:$0xff]
    %v4616 = vld [vmem:[%s89 + $0x60] sm:$0xff]
    %v4617 = vld [vmem:[%s89 + $0x68] sm:$0xff]
    %v4618 = vld [vmem:[%s89 + $0x70] sm:$0xff]
    %v4619 = vld [vmem:[%s89 + $0x78] sm:$0xff]
    %v4620 = vld [vmem:[%s91] sm:$0xff]
    %v4621 = vld [vmem:[%s91 + $0x8] sm:$0xff]
    %v4622 = vld [vmem:[%s91 + $0x10] sm:$0xff]
    %v4623 = vld [vmem:[%s91 + $0x18] sm:$0xff]
    %v4624 = vld [vmem:[%s91 + $0x20] sm:$0xff]
    %v4625 = vld [vmem:[%s91 + $0x28] sm:$0xff]
    %v4626 = vld [vmem:[%s91 + $0x30] sm:$0xff]
    %v4627 = vld [vmem:[%s91 + $0x38] sm:$0xff]
    %v4628 = vld [vmem:[%s91 + $0x40] sm:$0xff]
    %v4629 = vld [vmem:[%s91 + $0x48] sm:$0xff]
    %v4630 = vld [vmem:[%s91 + $0x50] sm:$0xff]
    %v4631 = vld [vmem:[%s91 + $0x58] sm:$0xff]
    %v4632 = vld [vmem:[%s91 + $0x60] sm:$0xff]
    %v4633 = vld [vmem:[%s91 + $0x68] sm:$0xff]
    %v4634 = vld [vmem:[%s91 + $0x70] sm:$0xff]
    %v4635 = vld [vmem:[%s91 + $0x78] sm:$0xff]
    %v4637 = vsel %vm4169, %v4604, 0
    %v4640 = vsel %vm4169, %v4605, 0
    %v4643 = vsel %vm4169, %v4606, 0
    %v4646 = vsel %vm4169, %v4607, 0
    %v4649 = vsel %vm4169, %v4608, 0
    %v4652 = vsel %vm4169, %v4609, 0
    %v4655 = vsel %vm4169, %v4610, 0
    %v4658 = vsel %vm4169, %v4611, 0
    %v4661 = vsel %vm4169, %v4612, 0
    %v4664 = vsel %vm4169, %v4613, 0
    %v4667 = vsel %vm4169, %v4614, 0
    %v4670 = vsel %vm4169, %v4615, 0
    %v4673 = vsel %vm4169, %v4616, 0
    %v4676 = vsel %vm4169, %v4617, 0
    %v4679 = vsel %vm4169, %v4618, 0
    %v4682 = vsel %vm4169, %v4619, 0
    %4684 = vmatpush.msra.mxu0 0.0
    %4685 = vmatpush.msra.mxu0 0.0
    %4686 = vmatpush.msra.mxu0 0.0
    %4687 = vmatpush.msra.mxu0 0.0
    %4688 = vmatpush.msra.mxu0 0.0
    %4689 = vmatpush.msra.mxu0 0.0
    %4690 = vmatpush.msra.mxu0 0.0
    %4691 = vmatpush.msra.mxu0 0.0
    %4692 = vmatpush.msra.mxu0 %v4603
    %4693 = vmatpush.msra.mxu0 %v4602
    %4694 = vmatpush.msra.mxu0 %v4601
    %4695 = vmatpush.msra.mxu0 %v4600
    %4696 = vmatpush.msra.mxu0 %v4599
    %4697 = vmatpush.msra.mxu0 %v4598
    %4698 = vmatpush.msra.mxu0 %v4597
    %4699 = vmatpush.msra.mxu0 %v4596
    %4700 = vmatmul.f32.gmra.mxu0 %v4637
    %v4701 = vpop.f32.mrf.mxu0
    %v4702 = vadd.f32 %v4620, %v4701
    %4703 = vmatmul.f32.gmra.mxu0 %v4640
    %v4704 = vpop.f32.mrf.mxu0
    %v4705 = vadd.f32 %v4621, %v4704
    %4706 = vmatmul.f32.gmra.mxu0 %v4643
    %v4707 = vpop.f32.mrf.mxu0
    %v4708 = vadd.f32 %v4622, %v4707
    %4709 = vmatmul.f32.gmra.mxu0 %v4646
    %v4710 = vpop.f32.mrf.mxu0
    %v4711 = vadd.f32 %v4623, %v4710
    %4712 = vmatmul.f32.gmra.mxu0 %v4649
    %v4713 = vpop.f32.mrf.mxu0
    %v4714 = vadd.f32 %v4624, %v4713
    %4715 = vmatmul.f32.gmra.mxu0 %v4652
    %v4716 = vpop.f32.mrf.mxu0
    %v4717 = vadd.f32 %v4625, %v4716
    %4718 = vmatmul.f32.gmra.mxu0 %v4655
    %v4719 = vpop.f32.mrf.mxu0
    %v4720 = vadd.f32 %v4626, %v4719
    %4721 = vmatmul.f32.gmra.mxu0 %v4658
    %v4722 = vpop.f32.mrf.mxu0
    %v4723 = vadd.f32 %v4627, %v4722
    %4724 = vmatmul.f32.gmra.mxu0 %v4661
    %v4725 = vpop.f32.mrf.mxu0
    %v4726 = vadd.f32 %v4628, %v4725
    %4727 = vmatmul.f32.gmra.mxu0 %v4664
    %v4728 = vpop.f32.mrf.mxu0
    %v4729 = vadd.f32 %v4629, %v4728
    %4730 = vmatmul.f32.gmra.mxu0 %v4667
    %v4731 = vpop.f32.mrf.mxu0
    %v4732 = vadd.f32 %v4630, %v4731
    %4733 = vmatmul.f32.gmra.mxu0 %v4670
    %v4734 = vpop.f32.mrf.mxu0
    %v4735 = vadd.f32 %v4631, %v4734
    %4736 = vmatmul.f32.gmra.mxu0 %v4673
    %v4737 = vpop.f32.mrf.mxu0
    %v4738 = vadd.f32 %v4632, %v4737
    %4739 = vmatmul.f32.gmra.mxu0 %v4676
    %v4740 = vpop.f32.mrf.mxu0
    %v4741 = vadd.f32 %v4633, %v4740
    %4742 = vmatmul.f32.gmra.mxu0 %v4679
    %v4743 = vpop.f32.mrf.mxu0
    %v4744 = vadd.f32 %v4634, %v4743
    %4745 = vmatmul.f32.gmra.mxu0 %v4682
    %v4746 = vpop.f32.mrf.mxu0
    %v4747 = vadd.f32 %v4635, %v4746
    %4748 = vdwg.mxu0
    %v4749 = vmax.f32 %v4702, 0.0
    %v4750 = vmax.f32 %v4705, 0.0
    %v4751 = vmax.f32 %v4708, 0.0
    %v4752 = vmax.f32 %v4711, 0.0
    %v4753 = vmax.f32 %v4714, 0.0
    %v4754 = vmax.f32 %v4717, 0.0
    %v4755 = vmax.f32 %v4720, 0.0
    %v4756 = vmax.f32 %v4723, 0.0
    %v4757 = vmax.f32 %v4726, 0.0
    %v4758 = vmax.f32 %v4729, 0.0
    %v4759 = vmax.f32 %v4732, 0.0
    %v4760 = vmax.f32 %v4735, 0.0
    %v4761 = vmax.f32 %v4738, 0.0
    %v4762 = vmax.f32 %v4741, 0.0
    %v4763 = vmax.f32 %v4744, 0.0
    %v4764 = vmax.f32 %v4747, 0.0
    %v4765 = vld [vmem:[%s93] sm:$0x1]
    %v4766 = vld [vmem:[#allocation6] sm:$0x1]
    %4767 = vmatpush.msra.mxu0 %v4764
    %4768 = vmatpush.msra.mxu0 %v4763
    %4769 = vmatpush.msra.mxu0 %v4762
    %4770 = vmatpush.msra.mxu0 %v4761
    %4771 = vmatpush.msra.mxu0 %v4760
    %4772 = vmatpush.msra.mxu0 %v4759
    %4773 = vmatpush.msra.mxu0 %v4758
    %4774 = vmatpush.msra.mxu0 %v4757
    %4775 = vmatpush.msra.mxu0 %v4756
    %4776 = vmatpush.msra.mxu0 %v4755
    %4777 = vmatpush.msra.mxu0 %v4754
    %4778 = vmatpush.msra.mxu0 %v4753
    %4779 = vmatpush.msra.mxu0 %v4752
    %4780 = vmatpush.msra.mxu0 %v4751
    %4781 = vmatpush.msra.mxu0 %v4750
    %4782 = vmatpush.msra.mxu0 %v4749
    %4783 = vmatmul.f32.gmra.mxu0 %v4765
    %v4784 = vpop.f32.mrf.mxu0
    %v4785 = vadd.f32 %v4766, %v4784
    %4786 = vdwg.mxu0
    %vm4787 = vcmask 0
    %4788 = vst.msk [vmem:[#allocation7] sm:$0x1] %vm4787, %v4785
    // Predicated region
    $region194: #{forward.1} parent=1 // pred_check
      _
    $region195: #{forward.1} parent=1 // pred_check_branch
      %4790 = sbr.rel (0) target = $region197
    $region196: #{forward.1} parent=1 // pred_region
      %4792 = vsyncadd [#allocation8], 0
      %s4794 = sshll.u32 [#allocation7], 4
      %s4795 = int_to_ptr.vmem [resolvable:$true] %s4794
      %s4796 = sshll.u32 %s97, 4
      %s4797 = int_to_ptr.hbm [resolvable:$true] %s4796
      %4799 = dma.vmem_to_hbm [thread:$0]  %s4795, 16, %s4797, [#allocation8]
    $region197: #{forward.1} parent=1 // pred_fallthru
      _
    // Predicated region
    $region198: #{forward.1} parent=1 // pred_check
      _
    $region199: #{forward.1} parent=1 // pred_check_branch
      %4801 = sbr.rel (0) target = $region201
    $region200: #{forward.1} parent=1 // pred_region
      %4803 = dma.done [#allocation8], 16
    $region201: #{forward.1} parent=1 // pred_fallthru
      _
    %4804 = vsyncpa [#allocation8], 1

</llo_original>
